<compile_context>
chip_gen: v5e
topology: v5e:2x2
jax: 0.10.0
libtpu: 0.0.40
codegen_flags: <defaults>
</compile_context>

<pallas_src>
import functools
import math

import jax
import jax.numpy as jnp
from jax import lax
from jax.experimental import pallas as pl
from jax.experimental.pallas import tpu as pltpu

# ----------------------------------------------------------------------------
# Model hyper-parameters (consistent with the module's constructor)
# ----------------------------------------------------------------------------
NUM_TASKS      = 3
EMBED_DIM      = 32
TASK_DIM       = 16
D_MODEL        = EMBED_DIM + TASK_DIM          # 48
NUM_ENC_LAYERS = 2
NUM_DEC_LAYERS = 4
NUM_HEADS      = 4
HEAD_DIM       = D_MODEL // NUM_HEADS          # 12 (real head dim, sets softmax scale)
HEAD_DIM_PAD   = 16                            # padded head dim for lane alignment
ENC_FFN        = D_MODEL * 8                   # 384
DEC_FFN        = D_MODEL * 4                   # 192
TRANSMIT_DIM   = 16
VOCAB_SIZE     = 64
LANE_PAD       = 128                           # lane-dense output width
MAX_SEQ_LEN    = 64
DEC_MAX_SEQ    = 300
PAD_TOKEN_ID   = 0
SNR_DB         = 15.0
LN_EPS         = 1e-5

# Whole-array-in-VMEM spec (no grid => all weights/activations VMEM-resident)
_VMEM = pl.BlockSpec(memory_space=pltpu.MemorySpace.VMEM)


# ----------------------------------------------------------------------------
# In-kernel building blocks (traced inline inside the two pallas_calls)
# ----------------------------------------------------------------------------
def _mm(x, w, b=None):
    """bf16 matmul with f32 MXU accumulation (+ optional f32 bias)."""
    acc = jnp.dot(x.astype(jnp.bfloat16), w.astype(jnp.bfloat16),
                  preferred_element_type=jnp.float32)
    if b is not None:
        acc = acc + b
    return acc


def _layernorm(x, g, b):
    mu = jnp.mean(x, axis=-1, keepdims=True)
    var = jnp.mean((x - mu) ** 2, axis=-1, keepdims=True)
    return (x - mu) * lax.rsqrt(var + LN_EPS) * g + b


def _transformer_layer(x, mask3, wqkv, bqkv, wo, bo, ln1g, ln1b,
                       w1, b1, w2, b2, ln2g, ln2b, B, S):
    """Post-norm transformer layer on [M, D] activations, head-major padded QKV.

    x:     [B*S, D] f32
    mask3: [B, 1, S] additive key-padding bias (or None for unmasked attention)
    wqkv:  [D, 3*H*HEAD_DIM_PAD] bf16 (head-major, zero padded cols per head)
    wo:    [H*HEAD_DIM_PAD, D]   bf16 (zero padded rows per head)
    """
    HDp = NUM_HEADS * HEAD_DIM_PAD
    qkv = _mm(x, wqkv, bqkv)                                  # [M, 3*HDp] f32
    scale = 1.0 / math.sqrt(HEAD_DIM)

    head_outs = []
    for h in range(NUM_HEADS):                                # H=4, tiny unroll
        c = h * HEAD_DIM_PAD
        # 16-lane aligned slices; none cross a 128-lane tile boundary.
        q = qkv[:, c:c + HEAD_DIM_PAD].reshape(B, S, HEAD_DIM_PAD)
        k = qkv[:, HDp + c:HDp + c + HEAD_DIM_PAD].reshape(B, S, HEAD_DIM_PAD)
        v = qkv[:, 2 * HDp + c:2 * HDp + c + HEAD_DIM_PAD].reshape(B, S, HEAD_DIM_PAD)

        s = jnp.einsum('bqd,bkd->bqk',
                       q.astype(jnp.bfloat16), k.astype(jnp.bfloat16),
                       preferred_element_type=jnp.float32) * scale
        if mask3 is not None:
            s = s + mask3                                     # key-padding mask
        # TODO(synk): a fully padded row degenerates to a uniform softmax here,
        #             unlike PyTorch key_padding_mask (NaN); fine for this input.
        s = s - jnp.max(s, axis=-1, keepdims=True)
        p = jnp.exp(s)
        p = p / jnp.sum(p, axis=-1, keepdims=True)            # f32 softmax

        o = jnp.einsum('bqk,bkd->bqd',
                       p.astype(jnp.bfloat16), v.astype(jnp.bfloat16),
                       preferred_element_type=jnp.float32)
        head_outs.append(o.reshape(B * S, HEAD_DIM_PAD))

    attn = jnp.concatenate(head_outs, axis=-1)                # [M, H*HEAD_DIM_PAD]
    attn = _mm(attn, wo, bo)                                  # [M, D]

    h1 = _layernorm(x + attn, ln1g, ln1b)                     # residual + LN1 (f32)
    ff = jnp.maximum(_mm(h1, w1, b1), 0.0)                    # FFN (ReLU)
    ff = _mm(ff, w2, b2)
    return _layernorm(h1 + ff, ln2g, ln2b)                    # residual + LN2 (f32)


# ----------------------------------------------------------------------------
# Pallas kernel 1: text proj + encoder stack + channel encoder MLP
# ----------------------------------------------------------------------------
def _pre_channel_kernel(emb_ref, task_ref, mask_ref, txt_w_ref, txt_b_ref,
                        wqkv_ref, bqkv_ref, wo_ref, bo_ref,
                        ln1g_ref, ln1b_ref, w1_ref, b1_ref, w2_ref, b2_ref,
                        ln2g_ref, ln2b_ref,
                        ce_w1_ref, ce_b1_ref, ce_w2_ref, ce_b2_ref,
                        o_ref, *, B, S):
    M = B * S
    text = _mm(emb_ref[...], txt_w_ref[...], txt_b_ref[...])          # [M, E]
    task = jnp.broadcast_to(task_ref[...], (M, TASK_DIM))             # [M, T]
    x = jnp.concatenate([text, task], axis=-1)                        # [M, D]
    mask3 = mask_ref[...]                                             # [B, 1, S]

    for l in range(NUM_ENC_LAYERS):                                   # stacked weights
        x = _transformer_layer(x, mask3,
                               wqkv_ref[l], bqkv_ref[l], wo_ref[l], bo_ref[l],
                               ln1g_ref[l], ln1b_ref[l],
                               w1_ref[l], b1_ref[l], w2_ref[l], b2_ref[l],
                               ln2g_ref[l], ln2b_ref[l], B, S)

    # channel encoder MLP; output padded to LANE_PAD lanes (dense store)
    h = jnp.maximum(_mm(x, ce_w1_ref[...], ce_b1_ref[...]), 0.0)
    o_ref[...] = _mm(h, ce_w2_ref[...], ce_b2_ref[...])               # [M, 128]


def pre_channel_call(emb, task_row, mask_bias3, params, B, S):
    M = B * S
    enc = params["enc"]
    kern = functools.partial(_pre_channel_kernel, B=B, S=S)
    return pl.pallas_call(
        kern,
        out_shape=jax.ShapeDtypeStruct((M, LANE_PAD), jnp.float32),
        in_specs=[_VMEM] * 21,
        out_specs=_VMEM,
    )(emb, task_row, mask_bias3, params["txt_w"], params["txt_b"],
      enc["wqkv"], enc["bqkv"], enc["wo"], enc["bo"],
      enc["ln1g"], enc["ln1b"], enc["w1"], enc["b1"], enc["w2"], enc["b2"],
      enc["ln2g"], enc["ln2b"],
      params["ce_w1"], params["ce_b1"], params["ce_w2"], params["ce_b2"])


# ----------------------------------------------------------------------------
# Pallas kernel 2: channel decoder MLP + decoder stack + task output head
# ----------------------------------------------------------------------------
def _post_channel_kernel(rx_ref, pos_ref,
                         cd_w1_ref, cd_b1_ref, cd_w2_ref, cd_b2_ref,
                         wqkv_ref, bqkv_ref, wo_ref, bo_ref,
                         ln1g_ref, ln1b_ref, w1_ref, b1_ref, w2_ref, b2_ref,
                         ln2g_ref, ln2b_ref,
                         head_w_ref, head_b_ref,
                         o_ref, *, B, S):
    # channel decoder MLP
    h = jnp.maximum(_mm(rx_ref[...], cd_w1_ref[...], cd_b1_ref[...]), 0.0)
    x = _mm(h, cd_w2_ref[...], cd_b2_ref[...]) + pos_ref[...]         # [M, D]

    for l in range(NUM_DEC_LAYERS):                                   # unmasked decoder
        x = _transformer_layer(x, None,
                               wqkv_ref[l], bqkv_ref[l], wo_ref[l], bo_ref[l],
                               ln1g_ref[l], ln1b_ref[l],
                               w1_ref[l], b1_ref[l], w2_ref[l], b2_ref[l],
                               ln2g_ref[l], ln2b_ref[l], B, S)

    # task-specific output head, padded to LANE_PAD lanes (dense store)
    o_ref[...] = _mm(x, head_w_ref[...], head_b_ref[...])             # [M, 128]


def post_channel_call(rx2d, pos_dec, params, task_id, B, S):
    M = B * S
    dec = params["dec"]
    kern = functools.partial(_post_channel_kernel, B=B, S=S)
    return pl.pallas_call(
        kern,
        out_shape=jax.ShapeDtypeStruct((M, LANE_PAD), jnp.float32),
        in_specs=[_VMEM] * 20,
        out_specs=_VMEM,
    )(rx2d, pos_dec,
      params["cd_w1"], params["cd_b1"], params["cd_w2"], params["cd_b2"],
      dec["wqkv"], dec["bqkv"], dec["wo"], dec["bo"],
      dec["ln1g"], dec["ln1b"], dec["w1"], dec["b1"], dec["w2"], dec["b2"],
      dec["ln2g"], dec["ln2b"],
      params["head_w"][task_id], params["head_b"][task_id])


# ----------------------------------------------------------------------------
# Physical channel (plain JAX: complex math + RNG, trivial cost)
# ----------------------------------------------------------------------------
def physical_channel(x, snr_db, key):
    """ComplexWirelessChannel, fading='none': pair real dims -> complex,
    add AWGN at given SNR; returns (rx_real, x_complex, y_noisy)."""
    half = x.shape[-1] // 2
    xc = x[..., :half] + 1j * x[..., half:]
    sig_pow = jnp.mean(jnp.abs(xc) ** 2)
    snr_lin = 10.0 ** (snr_db / 10.0)
    noise_pow = sig_pow / snr_lin
    kr, ki = jax.random.split(key)
    noise = jnp.sqrt(noise_pow / 2.0) * (
        jax.random.normal(kr, xc.shape) + 1j * jax.random.normal(ki, xc.shape))
    yc = xc + noise
    rx = jnp.concatenate([jnp.real(yc), jnp.imag(yc)], axis=-1)
    return rx, xc, yc


# ----------------------------------------------------------------------------
# Parameter initialization (deterministic; bf16 matmul weights, f32 rest)
# ----------------------------------------------------------------------------
def _linear_init(key, din, dout, scale=0.02):
    kw, kb = jax.random.split(key)
    w = scale * jax.random.normal(kw, (din, dout), jnp.float32)
    b = scale * jax.random.normal(kb, (dout,), jnp.float32)
    return w, b


def _to_head_major_cols(w, b):
    """[d, H*Dh] / [H*Dh] -> [d, H*Dhp] / [1, H*Dhp] (zero-padded per head)."""
    d = w.shape[0]
    w_p = jnp.zeros((d, NUM_HEADS * HEAD_DIM_PAD), jnp.float32)
    b_p = jnp.zeros((1, NUM_HEADS * HEAD_DIM_PAD), jnp.float32)
    for h in range(NUM_HEADS):
        w_p = w_p.at[:, h * HEAD_DIM_PAD:h * HEAD_DIM_PAD + HEAD_DIM].set(
            w[:, h * HEAD_DIM:(h + 1) * HEAD_DIM])
        b_p = b_p.at[0, h * HEAD_DIM_PAD:h * HEAD_DIM_PAD + HEAD_DIM].set(
            b[h * HEAD_DIM:(h + 1) * HEAD_DIM])
    return w_p, b_p


def _to_head_major_rows(w):
    """[H*Dh, d] -> [H*Dhp, d] (zero-padded rows per head)."""
    d = w.shape[1]
    w_p = jnp.zeros((NUM_HEADS * HEAD_DIM_PAD, d), jnp.float32)
    for h in range(NUM_HEADS):
        w_p = w_p.at[h * HEAD_DIM_PAD:h * HEAD_DIM_PAD + HEAD_DIM, :].set(
            w[h * HEAD_DIM:(h + 1) * HEAD_DIM, :])
    return w_p


def _layer_params(key, d, ffn):
    ks = jax.random.split(key, 6)
    wq, bq = _linear_init(ks[0], d, d)
    wk, bk = _linear_init(ks[1], d, d)
    wv, bv = _linear_init(ks[2], d, d)
    wo, bo = _linear_init(ks[3], d, d)
    w1, b1 = _linear_init(ks[4], d, ffn)
    w2, b2 = _linear_init(ks[5], ffn, d)
    wq_p, bq_p = _to_head_major_cols(wq, bq)
    wk_p, bk_p = _to_head_major_cols(wk, bk)
    wv_p, bv_p = _to_head_major_cols(wv, bv)
    wo_p = _to_head_major_rows(wo)
    return {
        "wqkv": jnp.concatenate([wq_p, wk_p, wv_p], axis=1).astype(jnp.bfloat16),
        "bqkv": jnp.concatenate([bq_p, bk_p, bv_p], axis=1),
        "wo": wo_p.astype(jnp.bfloat16), "bo": bo.reshape(1, d),
        "w1": w1.astype(jnp.bfloat16), "b1": b1.reshape(1, ffn),
        "w2": w2.astype(jnp.bfloat16), "b2": b2.reshape(1, d),
        "ln1g": jnp.ones((1, d), jnp.float32), "ln1b": jnp.zeros((1, d), jnp.float32),
        "ln2g": jnp.ones((1, d), jnp.float32), "ln2b": jnp.zeros((1, d), jnp.float32),
    }


def _stack_layers(layers):
    return {k: jnp.stack([lyr[k] for lyr in layers], axis=0) for k in layers[0]}


def init_params(key):
    ks = jax.random.split(key, 16)
    p = {}
    # "BERT" text encoder (synthetic): token + positional embedding + projection
    p["tok_emb"] = 0.02 * jax.random.normal(ks[0], (VOCAB_SIZE, EMBED_DIM), jnp.float32)
    p["pos_emb"] = 0.02 * jax.random.normal(ks[1], (MAX_SEQ_LEN, EMBED_DIM), jnp.float32)
    txt_w, txt_b = _linear_init(ks[2], EMBED_DIM, EMBED_DIM)
    p["txt_w"] = txt_w.astype(jnp.bfloat16)
    p["txt_b"] = txt_b.reshape(1, EMBED_DIM)
    # Task prompt
    p["task_emb"] = 0.02 * jax.random.normal(ks[3], (NUM_TASKS, TASK_DIM), jnp.float32)
    # Task-conditioned encoder transformer (stacked on a layer axis)
    p["enc"] = _stack_layers([_layer_params(k, D_MODEL, ENC_FFN)
                              for k in jax.random.split(ks[4], NUM_ENC_LAYERS)])
    # Channel encoder MLP (output padded to 128 lanes for a dense store)
    ce_w1, ce_b1 = _linear_init(ks[5], D_MODEL, D_MODEL * 4)
    ce_w2, ce_b2 = _linear_init(ks[6], D_MODEL * 4, TRANSMIT_DIM)
    p["ce_w1"] = ce_w1.astype(jnp.bfloat16)
    p["ce_b1"] = ce_b1.reshape(1, -1)
    p["ce_w2"] = (jnp.zeros((D_MODEL * 4, LANE_PAD), jnp.float32)
                  .at[:, :TRANSMIT_DIM].set(ce_w2)).astype(jnp.bfloat16)
    p["ce_b2"] = jnp.zeros((1, LANE_PAD), jnp.float32).at[0, :TRANSMIT_DIM].set(ce_b2)
    # Channel decoder MLP
    cd_w1, cd_b1 = _linear_init(ks[7], TRANSMIT_DIM, D_MODEL * 4)
    cd_w2, cd_b2 = _linear_init(ks[8], D_MODEL * 4, D_MODEL)
    p["cd_w1"] = cd_w1.astype(jnp.bfloat16)
    p["cd_b1"] = cd_b1.reshape(1, -1)
    p["cd_w2"] = cd_w2.astype(jnp.bfloat16)
    p["cd_b2"] = cd_b2.reshape(1, -1)
    # Semantic decoder transformer (+ positional embedding up to 300)
    p["dec_pos"] = 0.02 * jax.random.normal(ks[9], (DEC_MAX_SEQ, D_MODEL), jnp.float32)
    p["dec"] = _stack_layers([_layer_params(k, D_MODEL, DEC_FFN)
                              for k in jax.random.split(ks[10], NUM_DEC_LAYERS)])
    # Multi-task output heads, zero-padded to 128 lanes (lane-dense stores)
    hw = 0.02 * jax.random.normal(ks[11], (NUM_TASKS, D_MODEL, VOCAB_SIZE), jnp.float32)
    hb = 0.02 * jax.random.normal(ks[12], (NUM_TASKS, VOCAB_SIZE), jnp.float32)
    p["head_w"] = (jnp.zeros((NUM_TASKS, D_MODEL, LANE_PAD), jnp.float32)
                   .at[..., :VOCAB_SIZE].set(hw)).astype(jnp.bfloat16)
    p["head_b"] = (jnp.zeros((NUM_TASKS, 1, LANE_PAD), jnp.float32)
                   .at[:, 0, :VOCAB_SIZE].set(hb))
    return p


# ----------------------------------------------------------------------------
# Full forward pass (mirrors Transformer_SemCom_XL.forward)
# ----------------------------------------------------------------------------
def forward(params, input_ids, attn_mask, task_id, snr_db, noise_key):
    B, S = input_ids.shape           # NOTE: S is a multiple of 8 for clean layouts
    M = B * S

    # --- text encoder (embedding gather in plain JAX; projection in kernel 1) ---
    tok = params["tok_emb"][input_ids]                        # (B, S, E)
    pos = params["pos_emb"][:S][None, :, :]                   # (1, S, E)
    emb = (tok + pos).reshape(M, EMBED_DIM)
    input_lengths = attn_mask.sum(axis=1)

    # --- task prompt (single row, broadcast inside the kernel) ---
    task_row = params["task_emb"][task_id][None, :]           # (1, task_dim)

    # --- key-padding mask bias for the encoder attention ---
    mask_bias3 = ((1.0 - attn_mask.astype(jnp.float32)) * (-1e9))[:, None, :]  # (B,1,S)

    # --- kernel 1: encoder stack + channel encoder (one fused pallas_call) ---
    ce = pre_channel_call(emb, task_row, mask_bias3, params, B, S)[:, :TRANSMIT_DIM]
    ce3 = ce.reshape(B, S, TRANSMIT_DIM)

    # --- physical (AWGN) channel ---
    rx, x_complex, y_noisy = physical_channel(ce3, snr_db, noise_key)

    # --- kernel 2: channel decoder + decoder stack + head (one fused pallas_call) ---
    pos_dec = jnp.tile(params["dec_pos"][:S], (B, 1))         # (M, D)
    logits_pad = post_channel_call(rx.reshape(M, TRANSMIT_DIM), pos_dec,
                                   params, task_id, B, S)
    logits = logits_pad[:, :VOCAB_SIZE].reshape(B, S, VOCAB_SIZE)

    return logits, input_ids, input_lengths, x_complex, y_noisy


# ----------------------------------------------------------------------------
if __name__ == "__main__":
    key = jax.random.PRNGKey(0)
    k_param, k_tok, k_noise = jax.random.split(key, 3)

    B, S = 2, 8
    params = init_params(k_param)

    # synthetic "tokenized text": deterministic token ids + attention mask
    input_ids = jax.random.randint(k_tok, (B, S), 1, VOCAB_SIZE, dtype=jnp.int32)
    attn_mask = jnp.ones((B, S), jnp.int32)
    attn_mask = attn_mask.at[1, -2:].set(0)                   # pad last 2 tokens
    input_ids = jnp.where(attn_mask == 1, input_ids, PAD_TOKEN_ID)

    task_id = 1

    forward_jit = jax.jit(forward, static_argnums=(3,))
    out, ids, lengths, x_complex, y_noisy = forward_jit(
        params, input_ids, attn_mask, task_id, SNR_DB, k_noise)

    jax.block_until_ready((out, ids, lengths, x_complex, y_noisy))

    assert out.shape == (B, S, VOCAB_SIZE)
    assert ids.shape == (B, S)
    assert lengths.shape == (B,)
    assert x_complex.shape == (B, S, TRANSMIT_DIM // 2)
    assert y_noisy.shape == (B, S, TRANSMIT_DIM // 2)
    assert bool(jnp.all(jnp.isfinite(out)))
    print("KERNEL_OK")
</pallas_src>

<mosaic_0001>
module attributes {stable_mosaic.version = 11 : i64} {
  func.func @_pre_channel_kernel(%arg0: memref<16x32xf32, #tpu.memory_space<vmem>>, %arg1: memref<1x16xf32, #tpu.memory_space<vmem>>, %arg2: memref<2x1x8xf32, #tpu.memory_space<vmem>>, %arg3: memref<32x32xbf16, #tpu.memory_space<vmem>>, %arg4: memref<1x32xf32, #tpu.memory_space<vmem>>, %arg5: memref<2x48x192xbf16, #tpu.memory_space<vmem>>, %arg6: memref<2x1x192xf32, #tpu.memory_space<vmem>>, %arg7: memref<2x64x48xbf16, #tpu.memory_space<vmem>>, %arg8: memref<2x1x48xf32, #tpu.memory_space<vmem>>, %arg9: memref<2x1x48xf32, #tpu.memory_space<vmem>>, %arg10: memref<2x1x48xf32, #tpu.memory_space<vmem>>, %arg11: memref<2x48x384xbf16, #tpu.memory_space<vmem>>, %arg12: memref<2x1x384xf32, #tpu.memory_space<vmem>>, %arg13: memref<2x384x48xbf16, #tpu.memory_space<vmem>>, %arg14: memref<2x1x48xf32, #tpu.memory_space<vmem>>, %arg15: memref<2x1x48xf32, #tpu.memory_space<vmem>>, %arg16: memref<2x1x48xf32, #tpu.memory_space<vmem>>, %arg17: memref<48x192xbf16, #tpu.memory_space<vmem>>, %arg18: memref<1x192xf32, #tpu.memory_space<vmem>>, %arg19: memref<192x128xbf16, #tpu.memory_space<vmem>>, %arg20: memref<1x128xf32, #tpu.memory_space<vmem>>, %arg21: memref<16x128xf32, #tpu.memory_space<vmem>>) attributes {dimension_semantics = [], scalar_prefetch = 0 : i64, scratch_operands = 0 : i64, tpu.core_type = #tpu.core_type<tc>} {
    %c0 = arith.constant 0 : index
    %c0_0 = arith.constant 0 : index
    %0 = vector.load %arg0[%c0, %c0_0] : memref<16x32xf32, #tpu.memory_space<vmem>>, vector<16x32xf32>
    %c0_1 = arith.constant 0 : index
    %c0_2 = arith.constant 0 : index
    %1 = vector.load %arg3[%c0_1, %c0_2] : memref<32x32xbf16, #tpu.memory_space<vmem>>, vector<32x32xbf16>
    %c0_3 = arith.constant 0 : index
    %c0_4 = arith.constant 0 : index
    %2 = vector.load %arg4[%c0_3, %c0_4] : memref<1x32xf32, #tpu.memory_space<vmem>>, vector<1x32xf32>
    %3 = arith.truncf %0 : vector<16x32xf32> to vector<16x32xbf16>
    %cst = arith.constant dense<0.000000e+00> : vector<16x32xf32>
    %4 = tpu.matmul %3, %1, %cst {dimension_numbers = #tpu.dot_dimension_numbers<[1], [0], [0], [1], [0, 0, 1, 1], [], []>} : vector<16x32xbf16>, vector<32x32xbf16>, vector<16x32xf32> -> vector<16x32xf32>
    %5 = vector.broadcast %2 : vector<1x32xf32> to vector<16x32xf32>
    %6 = arith.addf %4, %5 : vector<16x32xf32>
    %c0_5 = arith.constant 0 : index
    %c0_6 = arith.constant 0 : index
    %7 = vector.load %arg1[%c0_5, %c0_6] : memref<1x16xf32, #tpu.memory_space<vmem>>, vector<1x16xf32>
    %8 = vector.shape_cast %7 : vector<1x16xf32> to vector<1x16xf32>
    %9 = vector.broadcast %8 : vector<1x16xf32> to vector<16x16xf32>
    %10 = tpu.concatenate %6, %9 in 1 : vector<16x32xf32>, vector<16x16xf32> -> vector<16x48xf32>
    %c0_7 = arith.constant 0 : index
    %c0_8 = arith.constant 0 : index
    %c0_9 = arith.constant 0 : index
    %11 = vector.load %arg2[%c0_7, %c0_8, %c0_9] : memref<2x1x8xf32, #tpu.memory_space<vmem>>, vector<2x1x8xf32>
    %c0_10 = arith.constant 0 : index
    %c0_11 = arith.constant 0 : index
    %c0_12 = arith.constant 0 : index
    %12 = vector.load %arg5[%c0_10, %c0_11, %c0_12] : memref<2x48x192xbf16, #tpu.memory_space<vmem>>, vector<1x48x192xbf16>
    %13 = vector.shape_cast %12 : vector<1x48x192xbf16> to vector<48x192xbf16>
    %c0_13 = arith.constant 0 : index
    %c0_14 = arith.constant 0 : index
    %c0_15 = arith.constant 0 : index
    %14 = vector.load %arg6[%c0_13, %c0_14, %c0_15] : memref<2x1x192xf32, #tpu.memory_space<vmem>>, vector<1x1x192xf32>
    %15 = vector.shape_cast %14 : vector<1x1x192xf32> to vector<1x192xf32>
    %c0_16 = arith.constant 0 : index
    %c0_17 = arith.constant 0 : index
    %c0_18 = arith.constant 0 : index
    %16 = vector.load %arg7[%c0_16, %c0_17, %c0_18] : memref<2x64x48xbf16, #tpu.memory_space<vmem>>, vector<1x64x48xbf16>
    %17 = vector.shape_cast %16 : vector<1x64x48xbf16> to vector<64x48xbf16>
    %c0_19 = arith.constant 0 : index
    %c0_20 = arith.constant 0 : index
    %c0_21 = arith.constant 0 : index
    %18 = vector.load %arg8[%c0_19, %c0_20, %c0_21] : memref<2x1x48xf32, #tpu.memory_space<vmem>>, vector<1x1x48xf32>
    %19 = vector.shape_cast %18 : vector<1x1x48xf32> to vector<1x48xf32>
    %c0_22 = arith.constant 0 : index
    %c0_23 = arith.constant 0 : index
    %c0_24 = arith.constant 0 : index
    %20 = vector.load %arg9[%c0_22, %c0_23, %c0_24] : memref<2x1x48xf32, #tpu.memory_space<vmem>>, vector<1x1x48xf32>
    %21 = vector.shape_cast %20 : vector<1x1x48xf32> to vector<1x48xf32>
    %c0_25 = arith.constant 0 : index
    %c0_26 = arith.constant 0 : index
    %c0_27 = arith.constant 0 : index
    %22 = vector.load %arg10[%c0_25, %c0_26, %c0_27] : memref<2x1x48xf32, #tpu.memory_space<vmem>>, vector<1x1x48xf32>
    %23 = vector.shape_cast %22 : vector<1x1x48xf32> to vector<1x48xf32>
    %c0_28 = arith.constant 0 : index
    %c0_29 = arith.constant 0 : index
    %c0_30 = arith.constant 0 : index
    %24 = vector.load %arg11[%c0_28, %c0_29, %c0_30] : memref<2x48x384xbf16, #tpu.memory_space<vmem>>, vector<1x48x384xbf16>
    %25 = vector.shape_cast %24 : vector<1x48x384xbf16> to vector<48x384xbf16>
    %c0_31 = arith.constant 0 : index
    %c0_32 = arith.constant 0 : index
    %c0_33 = arith.constant 0 : index
    %26 = vector.load %arg12[%c0_31, %c0_32, %c0_33] : memref<2x1x384xf32, #tpu.memory_space<vmem>>, vector<1x1x384xf32>
    %27 = vector.shape_cast %26 : vector<1x1x384xf32> to vector<1x384xf32>
    %c0_34 = arith.constant 0 : index
    %c0_35 = arith.constant 0 : index
    %c0_36 = arith.constant 0 : index
    %28 = vector.load %arg13[%c0_34, %c0_35, %c0_36] : memref<2x384x48xbf16, #tpu.memory_space<vmem>>, vector<1x384x48xbf16>
    %29 = vector.shape_cast %28 : vector<1x384x48xbf16> to vector<384x48xbf16>
    %c0_37 = arith.constant 0 : index
    %c0_38 = arith.constant 0 : index
    %c0_39 = arith.constant 0 : index
    %30 = vector.load %arg14[%c0_37, %c0_38, %c0_39] : memref<2x1x48xf32, #tpu.memory_space<vmem>>, vector<1x1x48xf32>
    %31 = vector.shape_cast %30 : vector<1x1x48xf32> to vector<1x48xf32>
    %c0_40 = arith.constant 0 : index
    %c0_41 = arith.constant 0 : index
    %c0_42 = arith.constant 0 : index
    %32 = vector.load %arg15[%c0_40, %c0_41, %c0_42] : memref<2x1x48xf32, #tpu.memory_space<vmem>>, vector<1x1x48xf32>
    %33 = vector.shape_cast %32 : vector<1x1x48xf32> to vector<1x48xf32>
    %c0_43 = arith.constant 0 : index
    %c0_44 = arith.constant 0 : index
    %c0_45 = arith.constant 0 : index
    %34 = vector.load %arg16[%c0_43, %c0_44, %c0_45] : memref<2x1x48xf32, #tpu.memory_space<vmem>>, vector<1x1x48xf32>
    %35 = vector.shape_cast %34 : vector<1x1x48xf32> to vector<1x48xf32>
    %36 = arith.truncf %10 : vector<16x48xf32> to vector<16x48xbf16>
    %cst_46 = arith.constant dense<0.000000e+00> : vector<16x192xf32>
    %37 = tpu.matmul %36, %13, %cst_46 {dimension_numbers = #tpu.dot_dimension_numbers<[1], [0], [0], [1], [0, 0, 1, 1], [], []>} : vector<16x48xbf16>, vector<48x192xbf16>, vector<16x192xf32> -> vector<16x192xf32>
    %38 = vector.broadcast %15 : vector<1x192xf32> to vector<16x192xf32>
    %39 = arith.addf %37, %38 : vector<16x192xf32>
    %40 = vector.extract_strided_slice %39 {offsets = [0, 0], sizes = [16, 16], strides = [1, 1]} : vector<16x192xf32> to vector<16x16xf32>
    %41 = vector.shape_cast %40 : vector<16x16xf32> to vector<2x8x16xf32>
    %42 = vector.extract_strided_slice %39 {offsets = [0, 64], sizes = [16, 16], strides = [1, 1]} : vector<16x192xf32> to vector<16x16xf32>
    %43 = vector.shape_cast %42 : vector<16x16xf32> to vector<2x8x16xf32>
    %44 = vector.extract_strided_slice %39 {offsets = [0, 128], sizes = [16, 16], strides = [1, 1]} : vector<16x192xf32> to vector<16x16xf32>
    %45 = vector.shape_cast %44 : vector<16x16xf32> to vector<2x8x16xf32>
    %46 = arith.truncf %41 : vector<2x8x16xf32> to vector<2x8x16xbf16>
    %47 = arith.truncf %43 : vector<2x8x16xf32> to vector<2x8x16xbf16>
    "tpu.trace_start"() <{level = 10 : i32, message = "bqd,bkd->bqk"}> : () -> ()
    %cst_47 = arith.constant dense<0.000000e+00> : vector<2x8x8xf32>
    %48 = tpu.matmul %46, %47, %cst_47 {dimension_numbers = #tpu.dot_dimension_numbers<[2], [2], [1], [1], [0, 0, 0, 1, 1, 1], [0], [0]>} : vector<2x8x16xbf16>, vector<2x8x16xbf16>, vector<2x8x8xf32> -> vector<2x8x8xf32>
    "tpu.trace_stop"() : () -> ()
    %cst_48 = arith.constant 0.288675129 : f32
    %49 = vector.broadcast %cst_48 : f32 to vector<2x8x8xf32>
    %50 = arith.mulf %48, %49 : vector<2x8x8xf32>
    %51 = vector.broadcast %11 : vector<2x1x8xf32> to vector<2x8x8xf32>
    %52 = arith.addf %50, %51 : vector<2x8x8xf32>
    %cst_49 = arith.constant dense<0xFF800000> : vector<2x8xf32>
    %53 = vector.multi_reduction <maximumf>, %52, %cst_49 [2] : vector<2x8x8xf32> to vector<2x8xf32>
    %54 = vector.shape_cast %53 : vector<2x8xf32> to vector<2x8x1xf32>
    %55 = vector.broadcast %54 : vector<2x8x1xf32> to vector<2x8x8xf32>
    %56 = arith.subf %52, %55 : vector<2x8x8xf32>
    %57 = math.exp %56 : vector<2x8x8xf32>
    %cst_50 = arith.constant dense<0.000000e+00> : vector<2x8xf32>
    %58 = vector.multi_reduction <add>, %57, %cst_50 [2] : vector<2x8x8xf32> to vector<2x8xf32>
    %59 = vector.shape_cast %58 : vector<2x8xf32> to vector<2x8x1xf32>
    %60 = vector.broadcast %59 : vector<2x8x1xf32> to vector<2x8x8xf32>
    %61 = arith.divf %57, %60 : vector<2x8x8xf32>
    %62 = arith.truncf %61 : vector<2x8x8xf32> to vector<2x8x8xbf16>
    %63 = arith.truncf %45 : vector<2x8x16xf32> to vector<2x8x16xbf16>
    "tpu.trace_start"() <{level = 10 : i32, message = "bqk,bkd->bqd"}> : () -> ()
    %cst_51 = arith.constant dense<0.000000e+00> : vector<2x8x16xf32>
    %64 = tpu.matmul %62, %63, %cst_51 {dimension_numbers = #tpu.dot_dimension_numbers<[2], [1], [1], [2], [0, 0, 0, 1, 1, 2], [0], [0]>} : vector<2x8x8xbf16>, vector<2x8x16xbf16>, vector<2x8x16xf32> -> vector<2x8x16xf32>
    "tpu.trace_stop"() : () -> ()
    %65 = vector.shape_cast %64 : vector<2x8x16xf32> to vector<16x16xf32>
    %66 = vector.extract_strided_slice %39 {offsets = [0, 16], sizes = [16, 16], strides = [1, 1]} : vector<16x192xf32> to vector<16x16xf32>
    %67 = vector.shape_cast %66 : vector<16x16xf32> to vector<2x8x16xf32>
    %68 = vector.extract_strided_slice %39 {offsets = [0, 80], sizes = [16, 16], strides = [1, 1]} : vector<16x192xf32> to vector<16x16xf32>
    %69 = vector.shape_cast %68 : vector<16x16xf32> to vector<2x8x16xf32>
    %70 = vector.extract_strided_slice %39 {offsets = [0, 144], sizes = [16, 16], strides = [1, 1]} : vector<16x192xf32> to vector<16x16xf32>
    %71 = vector.shape_cast %70 : vector<16x16xf32> to vector<2x8x16xf32>
    %72 = arith.truncf %67 : vector<2x8x16xf32> to vector<2x8x16xbf16>
    %73 = arith.truncf %69 : vector<2x8x16xf32> to vector<2x8x16xbf16>
    "tpu.trace_start"() <{level = 10 : i32, message = "bqd,bkd->bqk"}> : () -> ()
    %cst_52 = arith.constant dense<0.000000e+00> : vector<2x8x8xf32>
    %74 = tpu.matmul %72, %73, %cst_52 {dimension_numbers = #tpu.dot_dimension_numbers<[2], [2], [1], [1], [0, 0, 0, 1, 1, 1], [0], [0]>} : vector<2x8x16xbf16>, vector<2x8x16xbf16>, vector<2x8x8xf32> -> vector<2x8x8xf32>
    "tpu.trace_stop"() : () -> ()
    %cst_53 = arith.constant 0.288675129 : f32
    %75 = vector.broadcast %cst_53 : f32 to vector<2x8x8xf32>
    %76 = arith.mulf %74, %75 : vector<2x8x8xf32>
    %77 = vector.broadcast %11 : vector<2x1x8xf32> to vector<2x8x8xf32>
    %78 = arith.addf %76, %77 : vector<2x8x8xf32>
    %cst_54 = arith.constant dense<0xFF800000> : vector<2x8xf32>
    %79 = vector.multi_reduction <maximumf>, %78, %cst_54 [2] : vector<2x8x8xf32> to vector<2x8xf32>
    %80 = vector.shape_cast %79 : vector<2x8xf32> to vector<2x8x1xf32>
    %81 = vector.broadcast %80 : vector<2x8x1xf32> to vector<2x8x8xf32>
    %82 = arith.subf %78, %81 : vector<2x8x8xf32>
    %83 = math.exp %82 : vector<2x8x8xf32>
    %cst_55 = arith.constant dense<0.000000e+00> : vector<2x8xf32>
    %84 = vector.multi_reduction <add>, %83, %cst_55 [2] : vector<2x8x8xf32> to vector<2x8xf32>
    %85 = vector.shape_cast %84 : vector<2x8xf32> to vector<2x8x1xf32>
    %86 = vector.broadcast %85 : vector<2x8x1xf32> to vector<2x8x8xf32>
    %87 = arith.divf %83, %86 : vector<2x8x8xf32>
    %88 = arith.truncf %87 : vector<2x8x8xf32> to vector<2x8x8xbf16>
    %89 = arith.truncf %71 : vector<2x8x16xf32> to vector<2x8x16xbf16>
    "tpu.trace_start"() <{level = 10 : i32, message = "bqk,bkd->bqd"}> : () -> ()
    %cst_56 = arith.constant dense<0.000000e+00> : vector<2x8x16xf32>
    %90 = tpu.matmul %88, %89, %cst_56 {dimension_numbers = #tpu.dot_dimension_numbers<[2], [1], [1], [2], [0, 0, 0, 1, 1, 2], [0], [0]>} : vector<2x8x8xbf16>, vector<2x8x16xbf16>, vector<2x8x16xf32> -> vector<2x8x16xf32>
    "tpu.trace_stop"() : () -> ()
    %91 = vector.shape_cast %90 : vector<2x8x16xf32> to vector<16x16xf32>
    %92 = vector.extract_strided_slice %39 {offsets = [0, 32], sizes = [16, 16], strides = [1, 1]} : vector<16x192xf32> to vector<16x16xf32>
    %93 = vector.shape_cast %92 : vector<16x16xf32> to vector<2x8x16xf32>
    %94 = vector.extract_strided_slice %39 {offsets = [0, 96], sizes = [16, 16], strides = [1, 1]} : vector<16x192xf32> to vector<16x16xf32>
    %95 = vector.shape_cast %94 : vector<16x16xf32> to vector<2x8x16xf32>
    %96 = vector.extract_strided_slice %39 {offsets = [0, 160], sizes = [16, 16], strides = [1, 1]} : vector<16x192xf32> to vector<16x16xf32>
    %97 = vector.shape_cast %96 : vector<16x16xf32> to vector<2x8x16xf32>
    %98 = arith.truncf %93 : vector<2x8x16xf32> to vector<2x8x16xbf16>
    %99 = arith.truncf %95 : vector<2x8x16xf32> to vector<2x8x16xbf16>
    "tpu.trace_start"() <{level = 10 : i32, message = "bqd,bkd->bqk"}> : () -> ()
    %cst_57 = arith.constant dense<0.000000e+00> : vector<2x8x8xf32>
    %100 = tpu.matmul %98, %99, %cst_57 {dimension_numbers = #tpu.dot_dimension_numbers<[2], [2], [1], [1], [0, 0, 0, 1, 1, 1], [0], [0]>} : vector<2x8x16xbf16>, vector<2x8x16xbf16>, vector<2x8x8xf32> -> vector<2x8x8xf32>
    "tpu.trace_stop"() : () -> ()
    %cst_58 = arith.constant 0.288675129 : f32
    %101 = vector.broadcast %cst_58 : f32 to vector<2x8x8xf32>
    %102 = arith.mulf %100, %101 : vector<2x8x8xf32>
    %103 = vector.broadcast %11 : vector<2x1x8xf32> to vector<2x8x8xf32>
    %104 = arith.addf %102, %103 : vector<2x8x8xf32>
    %cst_59 = arith.constant dense<0xFF800000> : vector<2x8xf32>
    %105 = vector.multi_reduction <maximumf>, %104, %cst_59 [2] : vector<2x8x8xf32> to vector<2x8xf32>
    %106 = vector.shape_cast %105 : vector<2x8xf32> to vector<2x8x1xf32>
    %107 = vector.broadcast %106 : vector<2x8x1xf32> to vector<2x8x8xf32>
    %108 = arith.subf %104, %107 : vector<2x8x8xf32>
    %109 = math.exp %108 : vector<2x8x8xf32>
    %cst_60 = arith.constant dense<0.000000e+00> : vector<2x8xf32>
    %110 = vector.multi_reduction <add>, %109, %cst_60 [2] : vector<2x8x8xf32> to vector<2x8xf32>
    %111 = vector.shape_cast %110 : vector<2x8xf32> to vector<2x8x1xf32>
    %112 = vector.broadcast %111 : vector<2x8x1xf32> to vector<2x8x8xf32>
    %113 = arith.divf %109, %112 : vector<2x8x8xf32>
    %114 = arith.truncf %113 : vector<2x8x8xf32> to vector<2x8x8xbf16>
    %115 = arith.truncf %97 : vector<2x8x16xf32> to vector<2x8x16xbf16>
    "tpu.trace_start"() <{level = 10 : i32, message = "bqk,bkd->bqd"}> : () -> ()
    %cst_61 = arith.constant dense<0.000000e+00> : vector<2x8x16xf32>
    %116 = tpu.matmul %114, %115, %cst_61 {dimension_numbers = #tpu.dot_dimension_numbers<[2], [1], [1], [2], [0, 0, 0, 1, 1, 2], [0], [0]>} : vector<2x8x8xbf16>, vector<2x8x16xbf16>, vector<2x8x16xf32> -> vector<2x8x16xf32>
    "tpu.trace_stop"() : () -> ()
    %117 = vector.shape_cast %116 : vector<2x8x16xf32> to vector<16x16xf32>
    %118 = vector.extract_strided_slice %39 {offsets = [0, 48], sizes = [16, 16], strides = [1, 1]} : vector<16x192xf32> to vector<16x16xf32>
    %119 = vector.shape_cast %118 : vector<16x16xf32> to vector<2x8x16xf32>
    %120 = vector.extract_strided_slice %39 {offsets = [0, 112], sizes = [16, 16], strides = [1, 1]} : vector<16x192xf32> to vector<16x16xf32>
    %121 = vector.shape_cast %120 : vector<16x16xf32> to vector<2x8x16xf32>
    %122 = vector.extract_strided_slice %39 {offsets = [0, 176], sizes = [16, 16], strides = [1, 1]} : vector<16x192xf32> to vector<16x16xf32>
    %123 = vector.shape_cast %122 : vector<16x16xf32> to vector<2x8x16xf32>
    %124 = arith.truncf %119 : vector<2x8x16xf32> to vector<2x8x16xbf16>
    %125 = arith.truncf %121 : vector<2x8x16xf32> to vector<2x8x16xbf16>
    "tpu.trace_start"() <{level = 10 : i32, message = "bqd,bkd->bqk"}> : () -> ()
    %cst_62 = arith.constant dense<0.000000e+00> : vector<2x8x8xf32>
    %126 = tpu.matmul %124, %125, %cst_62 {dimension_numbers = #tpu.dot_dimension_numbers<[2], [2], [1], [1], [0, 0, 0, 1, 1, 1], [0], [0]>} : vector<2x8x16xbf16>, vector<2x8x16xbf16>, vector<2x8x8xf32> -> vector<2x8x8xf32>
    "tpu.trace_stop"() : () -> ()
    %cst_63 = arith.constant 0.288675129 : f32
    %127 = vector.broadcast %cst_63 : f32 to vector<2x8x8xf32>
    %128 = arith.mulf %126, %127 : vector<2x8x8xf32>
    %129 = vector.broadcast %11 : vector<2x1x8xf32> to vector<2x8x8xf32>
    %130 = arith.addf %128, %129 : vector<2x8x8xf32>
    %cst_64 = arith.constant dense<0xFF800000> : vector<2x8xf32>
    %131 = vector.multi_reduction <maximumf>, %130, %cst_64 [2] : vector<2x8x8xf32> to vector<2x8xf32>
    %132 = vector.shape_cast %131 : vector<2x8xf32> to vector<2x8x1xf32>
    %133 = vector.broadcast %132 : vector<2x8x1xf32> to vector<2x8x8xf32>
    %134 = arith.subf %130, %133 : vector<2x8x8xf32>
    %135 = math.exp %134 : vector<2x8x8xf32>
    %cst_65 = arith.constant dense<0.000000e+00> : vector<2x8xf32>
    %136 = vector.multi_reduction <add>, %135, %cst_65 [2] : vector<2x8x8xf32> to vector<2x8xf32>
    %137 = vector.shape_cast %136 : vector<2x8xf32> to vector<2x8x1xf32>
    %138 = vector.broadcast %137 : vector<2x8x1xf32> to vector<2x8x8xf32>
    %139 = arith.divf %135, %138 : vector<2x8x8xf32>
    %140 = arith.truncf %139 : vector<2x8x8xf32> to vector<2x8x8xbf16>
    %141 = arith.truncf %123 : vector<2x8x16xf32> to vector<2x8x16xbf16>
    "tpu.trace_start"() <{level = 10 : i32, message = "bqk,bkd->bqd"}> : () -> ()
    %cst_66 = arith.constant dense<0.000000e+00> : vector<2x8x16xf32>
    %142 = tpu.matmul %140, %141, %cst_66 {dimension_numbers = #tpu.dot_dimension_numbers<[2], [1], [1], [2], [0, 0, 0, 1, 1, 2], [0], [0]>} : vector<2x8x8xbf16>, vector<2x8x16xbf16>, vector<2x8x16xf32> -> vector<2x8x16xf32>
    "tpu.trace_stop"() : () -> ()
    %143 = vector.shape_cast %142 : vector<2x8x16xf32> to vector<16x16xf32>
    %144 = tpu.concatenate %65, %91, %117, %143 in 1 : vector<16x16xf32>, vector<16x16xf32>, vector<16x16xf32>, vector<16x16xf32> -> vector<16x64xf32>
    %145 = arith.truncf %144 : vector<16x64xf32> to vector<16x64xbf16>
    %cst_67 = arith.constant dense<0.000000e+00> : vector<16x48xf32>
    %146 = tpu.matmul %145, %17, %cst_67 {dimension_numbers = #tpu.dot_dimension_numbers<[1], [0], [0], [1], [0, 0, 1, 1], [], []>} : vector<16x64xbf16>, vector<64x48xbf16>, vector<16x48xf32> -> vector<16x48xf32>
    %147 = vector.broadcast %19 : vector<1x48xf32> to vector<16x48xf32>
    %148 = arith.addf %146, %147 : vector<16x48xf32>
    %149 = arith.addf %10, %148 : vector<16x48xf32>
    %cst_68 = arith.constant dense<0.000000e+00> : vector<16xf32>
    %150 = vector.multi_reduction <add>, %149, %cst_68 [1] : vector<16x48xf32> to vector<16xf32>
    %151 = vector.shape_cast %150 : vector<16xf32> to vector<16x1xf32>
    %cst_69 = arith.constant 4.800000e+01 : f32
    %152 = vector.broadcast %cst_69 : f32 to vector<16x1xf32>
    %153 = arith.divf %151, %152 : vector<16x1xf32>
    %154 = vector.broadcast %153 : vector<16x1xf32> to vector<16x48xf32>
    %155 = arith.subf %149, %154 : vector<16x48xf32>
    %156 = arith.mulf %155, %155 : vector<16x48xf32>
    %cst_70 = arith.constant dense<0.000000e+00> : vector<16xf32>
    %157 = vector.multi_reduction <add>, %156, %cst_70 [1] : vector<16x48xf32> to vector<16xf32>
    %158 = vector.shape_cast %157 : vector<16xf32> to vector<16x1xf32>
    %cst_71 = arith.constant 4.800000e+01 : f32
    %159 = vector.broadcast %cst_71 : f32 to vector<16x1xf32>
    %160 = arith.divf %158, %159 : vector<16x1xf32>
    %161 = vector.broadcast %153 : vector<16x1xf32> to vector<16x48xf32>
    %162 = arith.subf %149, %161 : vector<16x48xf32>
    %cst_72 = arith.constant 9.99999974E-6 : f32
    %163 = vector.broadcast %cst_72 : f32 to vector<16x1xf32>
    %164 = arith.addf %160, %163 : vector<16x1xf32>
    %165 = math.rsqrt %164 : vector<16x1xf32>
    %166 = vector.broadcast %165 : vector<16x1xf32> to vector<16x48xf32>
    %167 = arith.mulf %162, %166 : vector<16x48xf32>
    %168 = vector.broadcast %21 : vector<1x48xf32> to vector<16x48xf32>
    %169 = arith.mulf %167, %168 : vector<16x48xf32>
    %170 = vector.broadcast %23 : vector<1x48xf32> to vector<16x48xf32>
    %171 = arith.addf %169, %170 : vector<16x48xf32>
    %172 = arith.truncf %171 : vector<16x48xf32> to vector<16x48xbf16>
    %cst_73 = arith.constant dense<0.000000e+00> : vector<16x384xf32>
    %173 = tpu.matmul %172, %25, %cst_73 {dimension_numbers = #tpu.dot_dimension_numbers<[1], [0], [0], [1], [0, 0, 1, 1], [], []>} : vector<16x48xbf16>, vector<48x384xbf16>, vector<16x384xf32> -> vector<16x384xf32>
    %174 = vector.broadcast %27 : vector<1x384xf32> to vector<16x384xf32>
    %175 = arith.addf %173, %174 : vector<16x384xf32>
    %cst_74 = arith.constant 0.000000e+00 : f32
    %176 = vector.broadcast %cst_74 : f32 to vector<16x384xf32>
    %177 = arith.maximumf %175, %176 : vector<16x384xf32>
    %178 = arith.truncf %177 : vector<16x384xf32> to vector<16x384xbf16>
    %cst_75 = arith.constant dense<0.000000e+00> : vector<16x48xf32>
    %179 = tpu.matmul %178, %29, %cst_75 {dimension_numbers = #tpu.dot_dimension_numbers<[1], [0], [0], [1], [0, 0, 1, 1], [], []>} : vector<16x384xbf16>, vector<384x48xbf16>, vector<16x48xf32> -> vector<16x48xf32>
    %180 = vector.broadcast %31 : vector<1x48xf32> to vector<16x48xf32>
    %181 = arith.addf %179, %180 : vector<16x48xf32>
    %182 = arith.addf %171, %181 : vector<16x48xf32>
    %cst_76 = arith.constant dense<0.000000e+00> : vector<16xf32>
    %183 = vector.multi_reduction <add>, %182, %cst_76 [1] : vector<16x48xf32> to vector<16xf32>
    %184 = vector.shape_cast %183 : vector<16xf32> to vector<16x1xf32>
    %cst_77 = arith.constant 4.800000e+01 : f32
    %185 = vector.broadcast %cst_77 : f32 to vector<16x1xf32>
    %186 = arith.divf %184, %185 : vector<16x1xf32>
    %187 = vector.broadcast %186 : vector<16x1xf32> to vector<16x48xf32>
    %188 = arith.subf %182, %187 : vector<16x48xf32>
    %189 = arith.mulf %188, %188 : vector<16x48xf32>
    %cst_78 = arith.constant dense<0.000000e+00> : vector<16xf32>
    %190 = vector.multi_reduction <add>, %189, %cst_78 [1] : vector<16x48xf32> to vector<16xf32>
    %191 = vector.shape_cast %190 : vector<16xf32> to vector<16x1xf32>
    %cst_79 = arith.constant 4.800000e+01 : f32
    %192 = vector.broadcast %cst_79 : f32 to vector<16x1xf32>
    %193 = arith.divf %191, %192 : vector<16x1xf32>
    %194 = vector.broadcast %186 : vector<16x1xf32> to vector<16x48xf32>
    %195 = arith.subf %182, %194 : vector<16x48xf32>
    %cst_80 = arith.constant 9.99999974E-6 : f32
    %196 = vector.broadcast %cst_80 : f32 to vector<16x1xf32>
    %197 = arith.addf %193, %196 : vector<16x1xf32>
    %198 = math.rsqrt %197 : vector<16x1xf32>
    %199 = vector.broadcast %198 : vector<16x1xf32> to vector<16x48xf32>
    %200 = arith.mulf %195, %199 : vector<16x48xf32>
    %201 = vector.broadcast %33 : vector<1x48xf32> to vector<16x48xf32>
    %202 = arith.mulf %200, %201 : vector<16x48xf32>
    %203 = vector.broadcast %35 : vector<1x48xf32> to vector<16x48xf32>
    %204 = arith.addf %202, %203 : vector<16x48xf32>
    %c1 = arith.constant 1 : index
    %c0_81 = arith.constant 0 : index
    %c0_82 = arith.constant 0 : index
    %205 = vector.load %arg5[%c1, %c0_81, %c0_82] : memref<2x48x192xbf16, #tpu.memory_space<vmem>>, vector<1x48x192xbf16>
    %206 = vector.shape_cast %205 : vector<1x48x192xbf16> to vector<48x192xbf16>
    %c1_83 = arith.constant 1 : index
    %c0_84 = arith.constant 0 : index
    %c0_85 = arith.constant 0 : index
    %207 = vector.load %arg6[%c1_83, %c0_84, %c0_85] : memref<2x1x192xf32, #tpu.memory_space<vmem>>, vector<1x1x192xf32>
    %208 = vector.shape_cast %207 : vector<1x1x192xf32> to vector<1x192xf32>
    %c1_86 = arith.constant 1 : index
    %c0_87 = arith.constant 0 : index
    %c0_88 = arith.constant 0 : index
    %209 = vector.load %arg7[%c1_86, %c0_87, %c0_88] : memref<2x64x48xbf16, #tpu.memory_space<vmem>>, vector<1x64x48xbf16>
    %210 = vector.shape_cast %209 : vector<1x64x48xbf16> to vector<64x48xbf16>
    %c1_89 = arith.constant 1 : index
    %c0_90 = arith.constant 0 : index
    %c0_91 = arith.constant 0 : index
    %211 = vector.load %arg8[%c1_89, %c0_90, %c0_91] : memref<2x1x48xf32, #tpu.memory_space<vmem>>, vector<1x1x48xf32>
    %212 = vector.shape_cast %211 : vector<1x1x48xf32> to vector<1x48xf32>
    %c1_92 = arith.constant 1 : index
    %c0_93 = arith.constant 0 : index
    %c0_94 = arith.constant 0 : index
    %213 = vector.load %arg9[%c1_92, %c0_93, %c0_94] : memref<2x1x48xf32, #tpu.memory_space<vmem>>, vector<1x1x48xf32>
    %214 = vector.shape_cast %213 : vector<1x1x48xf32> to vector<1x48xf32>
    %c1_95 = arith.constant 1 : index
    %c0_96 = arith.constant 0 : index
    %c0_97 = arith.constant 0 : index
    %215 = vector.load %arg10[%c1_95, %c0_96, %c0_97] : memref<2x1x48xf32, #tpu.memory_space<vmem>>, vector<1x1x48xf32>
    %216 = vector.shape_cast %215 : vector<1x1x48xf32> to vector<1x48xf32>
    %c1_98 = arith.constant 1 : index
    %c0_99 = arith.constant 0 : index
    %c0_100 = arith.constant 0 : index
    %217 = vector.load %arg11[%c1_98, %c0_99, %c0_100] : memref<2x48x384xbf16, #tpu.memory_space<vmem>>, vector<1x48x384xbf16>
    %218 = vector.shape_cast %217 : vector<1x48x384xbf16> to vector<48x384xbf16>
    %c1_101 = arith.constant 1 : index
    %c0_102 = arith.constant 0 : index
    %c0_103 = arith.constant 0 : index
    %219 = vector.load %arg12[%c1_101, %c0_102, %c0_103] : memref<2x1x384xf32, #tpu.memory_space<vmem>>, vector<1x1x384xf32>
    %220 = vector.shape_cast %219 : vector<1x1x384xf32> to vector<1x384xf32>
    %c1_104 = arith.constant 1 : index
    %c0_105 = arith.constant 0 : index
    %c0_106 = arith.constant 0 : index
    %221 = vector.load %arg13[%c1_104, %c0_105, %c0_106] : memref<2x384x48xbf16, #tpu.memory_space<vmem>>, vector<1x384x48xbf16>
    %222 = vector.shape_cast %221 : vector<1x384x48xbf16> to vector<384x48xbf16>
    %c1_107 = arith.constant 1 : index
    %c0_108 = arith.constant 0 : index
    %c0_109 = arith.constant 0 : index
    %223 = vector.load %arg14[%c1_107, %c0_108, %c0_109] : memref<2x1x48xf32, #tpu.memory_space<vmem>>, vector<1x1x48xf32>
    %224 = vector.shape_cast %223 : vector<1x1x48xf32> to vector<1x48xf32>
    %c1_110 = arith.constant 1 : index
    %c0_111 = arith.constant 0 : index
    %c0_112 = arith.constant 0 : index
    %225 = vector.load %arg15[%c1_110, %c0_111, %c0_112] : memref<2x1x48xf32, #tpu.memory_space<vmem>>, vector<1x1x48xf32>
    %226 = vector.shape_cast %225 : vector<1x1x48xf32> to vector<1x48xf32>
    %c1_113 = arith.constant 1 : index
    %c0_114 = arith.constant 0 : index
    %c0_115 = arith.constant 0 : index
    %227 = vector.load %arg16[%c1_113, %c0_114, %c0_115] : memref<2x1x48xf32, #tpu.memory_space<vmem>>, vector<1x1x48xf32>
    %228 = vector.shape_cast %227 : vector<1x1x48xf32> to vector<1x48xf32>
    %229 = arith.truncf %204 : vector<16x48xf32> to vector<16x48xbf16>
    %cst_116 = arith.constant dense<0.000000e+00> : vector<16x192xf32>
    %230 = tpu.matmul %229, %206, %cst_116 {dimension_numbers = #tpu.dot_dimension_numbers<[1], [0], [0], [1], [0, 0, 1, 1], [], []>} : vector<16x48xbf16>, vector<48x192xbf16>, vector<16x192xf32> -> vector<16x192xf32>
    %231 = vector.broadcast %208 : vector<1x192xf32> to vector<16x192xf32>
    %232 = arith.addf %230, %231 : vector<16x192xf32>
    %233 = vector.extract_strided_slice %232 {offsets = [0, 0], sizes = [16, 16], strides = [1, 1]} : vector<16x192xf32> to vector<16x16xf32>
    %234 = vector.shape_cast %233 : vector<16x16xf32> to vector<2x8x16xf32>
    %235 = vector.extract_strided_slice %232 {offsets = [0, 64], sizes = [16, 16], strides = [1, 1]} : vector<16x192xf32> to vector<16x16xf32>
    %236 = vector.shape_cast %235 : vector<16x16xf32> to vector<2x8x16xf32>
    %237 = vector.extract_strided_slice %232 {offsets = [0, 128], sizes = [16, 16], strides = [1, 1]} : vector<16x192xf32> to vector<16x16xf32>
    %238 = vector.shape_cast %237 : vector<16x16xf32> to vector<2x8x16xf32>
    %239 = arith.truncf %234 : vector<2x8x16xf32> to vector<2x8x16xbf16>
    %240 = arith.truncf %236 : vector<2x8x16xf32> to vector<2x8x16xbf16>
    "tpu.trace_start"() <{level = 10 : i32, message = "bqd,bkd->bqk"}> : () -> ()
    %cst_117 = arith.constant dense<0.000000e+00> : vector<2x8x8xf32>
    %241 = tpu.matmul %239, %240, %cst_117 {dimension_numbers = #tpu.dot_dimension_numbers<[2], [2], [1], [1], [0, 0, 0, 1, 1, 1], [0], [0]>} : vector<2x8x16xbf16>, vector<2x8x16xbf16>, vector<2x8x8xf32> -> vector<2x8x8xf32>
    "tpu.trace_stop"() : () -> ()
    %cst_118 = arith.constant 0.288675129 : f32
    %242 = vector.broadcast %cst_118 : f32 to vector<2x8x8xf32>
    %243 = arith.mulf %241, %242 : vector<2x8x8xf32>
    %244 = vector.broadcast %11 : vector<2x1x8xf32> to vector<2x8x8xf32>
    %245 = arith.addf %243, %244 : vector<2x8x8xf32>
    %cst_119 = arith.constant dense<0xFF800000> : vector<2x8xf32>
    %246 = vector.multi_reduction <maximumf>, %245, %cst_119 [2] : vector<2x8x8xf32> to vector<2x8xf32>
    %247 = vector.shape_cast %246 : vector<2x8xf32> to vector<2x8x1xf32>
    %248 = vector.broadcast %247 : vector<2x8x1xf32> to vector<2x8x8xf32>
    %249 = arith.subf %245, %248 : vector<2x8x8xf32>
    %250 = math.exp %249 : vector<2x8x8xf32>
    %cst_120 = arith.constant dense<0.000000e+00> : vector<2x8xf32>
    %251 = vector.multi_reduction <add>, %250, %cst_120 [2] : vector<2x8x8xf32> to vector<2x8xf32>
    %252 = vector.shape_cast %251 : vector<2x8xf32> to vector<2x8x1xf32>
    %253 = vector.broadcast %252 : vector<2x8x1xf32> to vector<2x8x8xf32>
    %254 = arith.divf %250, %253 : vector<2x8x8xf32>
    %255 = arith.truncf %254 : vector<2x8x8xf32> to vector<2x8x8xbf16>
    %256 = arith.truncf %238 : vector<2x8x16xf32> to vector<2x8x16xbf16>
    "tpu.trace_start"() <{level = 10 : i32, message = "bqk,bkd->bqd"}> : () -> ()
    %cst_121 = arith.constant dense<0.000000e+00> : vector<2x8x16xf32>
    %257 = tpu.matmul %255, %256, %cst_121 {dimension_numbers = #tpu.dot_dimension_numbers<[2], [1], [1], [2], [0, 0, 0, 1, 1, 2], [0], [0]>} : vector<2x8x8xbf16>, vector<2x8x16xbf16>, vector<2x8x16xf32> -> vector<2x8x16xf32>
    "tpu.trace_stop"() : () -> ()
    %258 = vector.shape_cast %257 : vector<2x8x16xf32> to vector<16x16xf32>
    %259 = vector.extract_strided_slice %232 {offsets = [0, 16], sizes = [16, 16], strides = [1, 1]} : vector<16x192xf32> to vector<16x16xf32>
    %260 = vector.shape_cast %259 : vector<16x16xf32> to vector<2x8x16xf32>
    %261 = vector.extract_strided_slice %232 {offsets = [0, 80], sizes = [16, 16], strides = [1, 1]} : vector<16x192xf32> to vector<16x16xf32>
    %262 = vector.shape_cast %261 : vector<16x16xf32> to vector<2x8x16xf32>
    %263 = vector.extract_strided_slice %232 {offsets = [0, 144], sizes = [16, 16], strides = [1, 1]} : vector<16x192xf32> to vector<16x16xf32>
    %264 = vector.shape_cast %263 : vector<16x16xf32> to vector<2x8x16xf32>
    %265 = arith.truncf %260 : vector<2x8x16xf32> to vector<2x8x16xbf16>
    %266 = arith.truncf %262 : vector<2x8x16xf32> to vector<2x8x16xbf16>
    "tpu.trace_start"() <{level = 10 : i32, message = "bqd,bkd->bqk"}> : () -> ()
    %cst_122 = arith.constant dense<0.000000e+00> : vector<2x8x8xf32>
    %267 = tpu.matmul %265, %266, %cst_122 {dimension_numbers = #tpu.dot_dimension_numbers<[2], [2], [1], [1], [0, 0, 0, 1, 1, 1], [0], [0]>} : vector<2x8x16xbf16>, vector<2x8x16xbf16>, vector<2x8x8xf32> -> vector<2x8x8xf32>
    "tpu.trace_stop"() : () -> ()
    %cst_123 = arith.constant 0.288675129 : f32
    %268 = vector.broadcast %cst_123 : f32 to vector<2x8x8xf32>
    %269 = arith.mulf %267, %268 : vector<2x8x8xf32>
    %270 = vector.broadcast %11 : vector<2x1x8xf32> to vector<2x8x8xf32>
    %271 = arith.addf %269, %270 : vector<2x8x8xf32>
    %cst_124 = arith.constant dense<0xFF800000> : vector<2x8xf32>
    %272 = vector.multi_reduction <maximumf>, %271, %cst_124 [2] : vector<2x8x8xf32> to vector<2x8xf32>
    %273 = vector.shape_cast %272 : vector<2x8xf32> to vector<2x8x1xf32>
    %274 = vector.broadcast %273 : vector<2x8x1xf32> to vector<2x8x8xf32>
    %275 = arith.subf %271, %274 : vector<2x8x8xf32>
    %276 = math.exp %275 : vector<2x8x8xf32>
    %cst_125 = arith.constant dense<0.000000e+00> : vector<2x8xf32>
    %277 = vector.multi_reduction <add>, %276, %cst_125 [2] : vector<2x8x8xf32> to vector<2x8xf32>
    %278 = vector.shape_cast %277 : vector<2x8xf32> to vector<2x8x1xf32>
    %279 = vector.broadcast %278 : vector<2x8x1xf32> to vector<2x8x8xf32>
    %280 = arith.divf %276, %279 : vector<2x8x8xf32>
    %281 = arith.truncf %280 : vector<2x8x8xf32> to vector<2x8x8xbf16>
    %282 = arith.truncf %264 : vector<2x8x16xf32> to vector<2x8x16xbf16>
    "tpu.trace_start"() <{level = 10 : i32, message = "bqk,bkd->bqd"}> : () -> ()
    %cst_126 = arith.constant dense<0.000000e+00> : vector<2x8x16xf32>
    %283 = tpu.matmul %281, %282, %cst_126 {dimension_numbers = #tpu.dot_dimension_numbers<[2], [1], [1], [2], [0, 0, 0, 1, 1, 2], [0], [0]>} : vector<2x8x8xbf16>, vector<2x8x16xbf16>, vector<2x8x16xf32> -> vector<2x8x16xf32>
    "tpu.trace_stop"() : () -> ()
    %284 = vector.shape_cast %283 : vector<2x8x16xf32> to vector<16x16xf32>
    %285 = vector.extract_strided_slice %232 {offsets = [0, 32], sizes = [16, 16], strides = [1, 1]} : vector<16x192xf32> to vector<16x16xf32>
    %286 = vector.shape_cast %285 : vector<16x16xf32> to vector<2x8x16xf32>
    %287 = vector.extract_strided_slice %232 {offsets = [0, 96], sizes = [16, 16], strides = [1, 1]} : vector<16x192xf32> to vector<16x16xf32>
    %288 = vector.shape_cast %287 : vector<16x16xf32> to vector<2x8x16xf32>
    %289 = vector.extract_strided_slice %232 {offsets = [0, 160], sizes = [16, 16], strides = [1, 1]} : vector<16x192xf32> to vector<16x16xf32>
    %290 = vector.shape_cast %289 : vector<16x16xf32> to vector<2x8x16xf32>
    %291 = arith.truncf %286 : vector<2x8x16xf32> to vector<2x8x16xbf16>
    %292 = arith.truncf %288 : vector<2x8x16xf32> to vector<2x8x16xbf16>
    "tpu.trace_start"() <{level = 10 : i32, message = "bqd,bkd->bqk"}> : () -> ()
    %cst_127 = arith.constant dense<0.000000e+00> : vector<2x8x8xf32>
    %293 = tpu.matmul %291, %292, %cst_127 {dimension_numbers = #tpu.dot_dimension_numbers<[2], [2], [1], [1], [0, 0, 0, 1, 1, 1], [0], [0]>} : vector<2x8x16xbf16>, vector<2x8x16xbf16>, vector<2x8x8xf32> -> vector<2x8x8xf32>
    "tpu.trace_stop"() : () -> ()
    %cst_128 = arith.constant 0.288675129 : f32
    %294 = vector.broadcast %cst_128 : f32 to vector<2x8x8xf32>
    %295 = arith.mulf %293, %294 : vector<2x8x8xf32>
    %296 = vector.broadcast %11 : vector<2x1x8xf32> to vector<2x8x8xf32>
    %297 = arith.addf %295, %296 : vector<2x8x8xf32>
    %cst_129 = arith.constant dense<0xFF800000> : vector<2x8xf32>
    %298 = vector.multi_reduction <maximumf>, %297, %cst_129 [2] : vector<2x8x8xf32> to vector<2x8xf32>
    %299 = vector.shape_cast %298 : vector<2x8xf32> to vector<2x8x1xf32>
    %300 = vector.broadcast %299 : vector<2x8x1xf32> to vector<2x8x8xf32>
    %301 = arith.subf %297, %300 : vector<2x8x8xf32>
    %302 = math.exp %301 : vector<2x8x8xf32>
    %cst_130 = arith.constant dense<0.000000e+00> : vector<2x8xf32>
    %303 = vector.multi_reduction <add>, %302, %cst_130 [2] : vector<2x8x8xf32> to vector<2x8xf32>
    %304 = vector.shape_cast %303 : vector<2x8xf32> to vector<2x8x1xf32>
    %305 = vector.broadcast %304 : vector<2x8x1xf32> to vector<2x8x8xf32>
    %306 = arith.divf %302, %305 : vector<2x8x8xf32>
    %307 = arith.truncf %306 : vector<2x8x8xf32> to vector<2x8x8xbf16>
    %308 = arith.truncf %290 : vector<2x8x16xf32> to vector<2x8x16xbf16>
    "tpu.trace_start"() <{level = 10 : i32, message = "bqk,bkd->bqd"}> : () -> ()
    %cst_131 = arith.constant dense<0.000000e+00> : vector<2x8x16xf32>
    %309 = tpu.matmul %307, %308, %cst_131 {dimension_numbers = #tpu.dot_dimension_numbers<[2], [1], [1], [2], [0, 0, 0, 1, 1, 2], [0], [0]>} : vector<2x8x8xbf16>, vector<2x8x16xbf16>, vector<2x8x16xf32> -> vector<2x8x16xf32>
    "tpu.trace_stop"() : () -> ()
    %310 = vector.shape_cast %309 : vector<2x8x16xf32> to vector<16x16xf32>
    %311 = vector.extract_strided_slice %232 {offsets = [0, 48], sizes = [16, 16], strides = [1, 1]} : vector<16x192xf32> to vector<16x16xf32>
    %312 = vector.shape_cast %311 : vector<16x16xf32> to vector<2x8x16xf32>
    %313 = vector.extract_strided_slice %232 {offsets = [0, 112], sizes = [16, 16], strides = [1, 1]} : vector<16x192xf32> to vector<16x16xf32>
    %314 = vector.shape_cast %313 : vector<16x16xf32> to vector<2x8x16xf32>
    %315 = vector.extract_strided_slice %232 {offsets = [0, 176], sizes = [16, 16], strides = [1, 1]} : vector<16x192xf32> to vector<16x16xf32>
    %316 = vector.shape_cast %315 : vector<16x16xf32> to vector<2x8x16xf32>
    %317 = arith.truncf %312 : vector<2x8x16xf32> to vector<2x8x16xbf16>
    %318 = arith.truncf %314 : vector<2x8x16xf32> to vector<2x8x16xbf16>
    "tpu.trace_start"() <{level = 10 : i32, message = "bqd,bkd->bqk"}> : () -> ()
    %cst_132 = arith.constant dense<0.000000e+00> : vector<2x8x8xf32>
    %319 = tpu.matmul %317, %318, %cst_132 {dimension_numbers = #tpu.dot_dimension_numbers<[2], [2], [1], [1], [0, 0, 0, 1, 1, 1], [0], [0]>} : vector<2x8x16xbf16>, vector<2x8x16xbf16>, vector<2x8x8xf32> -> vector<2x8x8xf32>
    "tpu.trace_stop"() : () -> ()
    %cst_133 = arith.constant 0.288675129 : f32
    %320 = vector.broadcast %cst_133 : f32 to vector<2x8x8xf32>
    %321 = arith.mulf %319, %320 : vector<2x8x8xf32>
    %322 = vector.broadcast %11 : vector<2x1x8xf32> to vector<2x8x8xf32>
    %323 = arith.addf %321, %322 : vector<2x8x8xf32>
    %cst_134 = arith.constant dense<0xFF800000> : vector<2x8xf32>
    %324 = vector.multi_reduction <maximumf>, %323, %cst_134 [2] : vector<2x8x8xf32> to vector<2x8xf32>
    %325 = vector.shape_cast %324 : vector<2x8xf32> to vector<2x8x1xf32>
    %326 = vector.broadcast %325 : vector<2x8x1xf32> to vector<2x8x8xf32>
    %327 = arith.subf %323, %326 : vector<2x8x8xf32>
    %328 = math.exp %327 : vector<2x8x8xf32>
    %cst_135 = arith.constant dense<0.000000e+00> : vector<2x8xf32>
    %329 = vector.multi_reduction <add>, %328, %cst_135 [2] : vector<2x8x8xf32> to vector<2x8xf32>
    %330 = vector.shape_cast %329 : vector<2x8xf32> to vector<2x8x1xf32>
    %331 = vector.broadcast %330 : vector<2x8x1xf32> to vector<2x8x8xf32>
    %332 = arith.divf %328, %331 : vector<2x8x8xf32>
    %333 = arith.truncf %332 : vector<2x8x8xf32> to vector<2x8x8xbf16>
    %334 = arith.truncf %316 : vector<2x8x16xf32> to vector<2x8x16xbf16>
    "tpu.trace_start"() <{level = 10 : i32, message = "bqk,bkd->bqd"}> : () -> ()
    %cst_136 = arith.constant dense<0.000000e+00> : vector<2x8x16xf32>
    %335 = tpu.matmul %333, %334, %cst_136 {dimension_numbers = #tpu.dot_dimension_numbers<[2], [1], [1], [2], [0, 0, 0, 1, 1, 2], [0], [0]>} : vector<2x8x8xbf16>, vector<2x8x16xbf16>, vector<2x8x16xf32> -> vector<2x8x16xf32>
    "tpu.trace_stop"() : () -> ()
    %336 = vector.shape_cast %335 : vector<2x8x16xf32> to vector<16x16xf32>
    %337 = tpu.concatenate %258, %284, %310, %336 in 1 : vector<16x16xf32>, vector<16x16xf32>, vector<16x16xf32>, vector<16x16xf32> -> vector<16x64xf32>
    %338 = arith.truncf %337 : vector<16x64xf32> to vector<16x64xbf16>
    %cst_137 = arith.constant dense<0.000000e+00> : vector<16x48xf32>
    %339 = tpu.matmul %338, %210, %cst_137 {dimension_numbers = #tpu.dot_dimension_numbers<[1], [0], [0], [1], [0, 0, 1, 1], [], []>} : vector<16x64xbf16>, vector<64x48xbf16>, vector<16x48xf32> -> vector<16x48xf32>
    %340 = vector.broadcast %212 : vector<1x48xf32> to vector<16x48xf32>
    %341 = arith.addf %339, %340 : vector<16x48xf32>
    %342 = arith.addf %204, %341 : vector<16x48xf32>
    %cst_138 = arith.constant dense<0.000000e+00> : vector<16xf32>
    %343 = vector.multi_reduction <add>, %342, %cst_138 [1] : vector<16x48xf32> to vector<16xf32>
    %344 = vector.shape_cast %343 : vector<16xf32> to vector<16x1xf32>
    %cst_139 = arith.constant 4.800000e+01 : f32
    %345 = vector.broadcast %cst_139 : f32 to vector<16x1xf32>
    %346 = arith.divf %344, %345 : vector<16x1xf32>
    %347 = vector.broadcast %346 : vector<16x1xf32> to vector<16x48xf32>
    %348 = arith.subf %342, %347 : vector<16x48xf32>
    %349 = arith.mulf %348, %348 : vector<16x48xf32>
    %cst_140 = arith.constant dense<0.000000e+00> : vector<16xf32>
    %350 = vector.multi_reduction <add>, %349, %cst_140 [1] : vector<16x48xf32> to vector<16xf32>
    %351 = vector.shape_cast %350 : vector<16xf32> to vector<16x1xf32>
    %cst_141 = arith.constant 4.800000e+01 : f32
    %352 = vector.broadcast %cst_141 : f32 to vector<16x1xf32>
    %353 = arith.divf %351, %352 : vector<16x1xf32>
    %354 = vector.broadcast %346 : vector<16x1xf32> to vector<16x48xf32>
    %355 = arith.subf %342, %354 : vector<16x48xf32>
    %cst_142 = arith.constant 9.99999974E-6 : f32
    %356 = vector.broadcast %cst_142 : f32 to vector<16x1xf32>
    %357 = arith.addf %353, %356 : vector<16x1xf32>
    %358 = math.rsqrt %357 : vector<16x1xf32>
    %359 = vector.broadcast %358 : vector<16x1xf32> to vector<16x48xf32>
    %360 = arith.mulf %355, %359 : vector<16x48xf32>
    %361 = vector.broadcast %214 : vector<1x48xf32> to vector<16x48xf32>
    %362 = arith.mulf %360, %361 : vector<16x48xf32>
    %363 = vector.broadcast %216 : vector<1x48xf32> to vector<16x48xf32>
    %364 = arith.addf %362, %363 : vector<16x48xf32>
    %365 = arith.truncf %364 : vector<16x48xf32> to vector<16x48xbf16>
    %cst_143 = arith.constant dense<0.000000e+00> : vector<16x384xf32>
    %366 = tpu.matmul %365, %218, %cst_143 {dimension_numbers = #tpu.dot_dimension_numbers<[1], [0], [0], [1], [0, 0, 1, 1], [], []>} : vector<16x48xbf16>, vector<48x384xbf16>, vector<16x384xf32> -> vector<16x384xf32>
    %367 = vector.broadcast %220 : vector<1x384xf32> to vector<16x384xf32>
    %368 = arith.addf %366, %367 : vector<16x384xf32>
    %cst_144 = arith.constant 0.000000e+00 : f32
    %369 = vector.broadcast %cst_144 : f32 to vector<16x384xf32>
    %370 = arith.maximumf %368, %369 : vector<16x384xf32>
    %371 = arith.truncf %370 : vector<16x384xf32> to vector<16x384xbf16>
    %cst_145 = arith.constant dense<0.000000e+00> : vector<16x48xf32>
    %372 = tpu.matmul %371, %222, %cst_145 {dimension_numbers = #tpu.dot_dimension_numbers<[1], [0], [0], [1], [0, 0, 1, 1], [], []>} : vector<16x384xbf16>, vector<384x48xbf16>, vector<16x48xf32> -> vector<16x48xf32>
    %373 = vector.broadcast %224 : vector<1x48xf32> to vector<16x48xf32>
    %374 = arith.addf %372, %373 : vector<16x48xf32>
    %375 = arith.addf %364, %374 : vector<16x48xf32>
    %cst_146 = arith.constant dense<0.000000e+00> : vector<16xf32>
    %376 = vector.multi_reduction <add>, %375, %cst_146 [1] : vector<16x48xf32> to vector<16xf32>
    %377 = vector.shape_cast %376 : vector<16xf32> to vector<16x1xf32>
    %cst_147 = arith.constant 4.800000e+01 : f32
    %378 = vector.broadcast %cst_147 : f32 to vector<16x1xf32>
    %379 = arith.divf %377, %378 : vector<16x1xf32>
    %380 = vector.broadcast %379 : vector<16x1xf32> to vector<16x48xf32>
    %381 = arith.subf %375, %380 : vector<16x48xf32>
    %382 = arith.mulf %381, %381 : vector<16x48xf32>
    %cst_148 = arith.constant dense<0.000000e+00> : vector<16xf32>
    %383 = vector.multi_reduction <add>, %382, %cst_148 [1] : vector<16x48xf32> to vector<16xf32>
    %384 = vector.shape_cast %383 : vector<16xf32> to vector<16x1xf32>
    %cst_149 = arith.constant 4.800000e+01 : f32
    %385 = vector.broadcast %cst_149 : f32 to vector<16x1xf32>
    %386 = arith.divf %384, %385 : vector<16x1xf32>
    %387 = vector.broadcast %379 : vector<16x1xf32> to vector<16x48xf32>
    %388 = arith.subf %375, %387 : vector<16x48xf32>
    %cst_150 = arith.constant 9.99999974E-6 : f32
    %389 = vector.broadcast %cst_150 : f32 to vector<16x1xf32>
    %390 = arith.addf %386, %389 : vector<16x1xf32>
    %391 = math.rsqrt %390 : vector<16x1xf32>
    %392 = vector.broadcast %391 : vector<16x1xf32> to vector<16x48xf32>
    %393 = arith.mulf %388, %392 : vector<16x48xf32>
    %394 = vector.broadcast %226 : vector<1x48xf32> to vector<16x48xf32>
    %395 = arith.mulf %393, %394 : vector<16x48xf32>
    %396 = vector.broadcast %228 : vector<1x48xf32> to vector<16x48xf32>
    %397 = arith.addf %395, %396 : vector<16x48xf32>
    %c0_151 = arith.constant 0 : index
    %c0_152 = arith.constant 0 : index
    %398 = vector.load %arg17[%c0_151, %c0_152] : memref<48x192xbf16, #tpu.memory_space<vmem>>, vector<48x192xbf16>
    %c0_153 = arith.constant 0 : index
    %c0_154 = arith.constant 0 : index
    %399 = vector.load %arg18[%c0_153, %c0_154] : memref<1x192xf32, #tpu.memory_space<vmem>>, vector<1x192xf32>
    %400 = arith.truncf %397 : vector<16x48xf32> to vector<16x48xbf16>
    %cst_155 = arith.constant dense<0.000000e+00> : vector<16x192xf32>
    %401 = tpu.matmul %400, %398, %cst_155 {dimension_numbers = #tpu.dot_dimension_numbers<[1], [0], [0], [1], [0, 0, 1, 1], [], []>} : vector<16x48xbf16>, vector<48x192xbf16>, vector<16x192xf32> -> vector<16x192xf32>
    %402 = vector.broadcast %399 : vector<1x192xf32> to vector<16x192xf32>
    %403 = arith.addf %401, %402 : vector<16x192xf32>
    %cst_156 = arith.constant 0.000000e+00 : f32
    %404 = vector.broadcast %cst_156 : f32 to vector<16x192xf32>
    %405 = arith.maximumf %403, %404 : vector<16x192xf32>
    %c0_157 = arith.constant 0 : index
    %c0_158 = arith.constant 0 : index
    %406 = vector.load %arg19[%c0_157, %c0_158] : memref<192x128xbf16, #tpu.memory_space<vmem>>, vector<192x128xbf16>
    %c0_159 = arith.constant 0 : index
    %c0_160 = arith.constant 0 : index
    %407 = vector.load %arg20[%c0_159, %c0_160] : memref<1x128xf32, #tpu.memory_space<vmem>>, vector<1x128xf32>
    %408 = arith.truncf %405 : vector<16x192xf32> to vector<16x192xbf16>
    %cst_161 = arith.constant dense<0.000000e+00> : vector<16x128xf32>
    %409 = tpu.matmul %408, %406, %cst_161 {dimension_numbers = #tpu.dot_dimension_numbers<[1], [0], [0], [1], [0, 0, 1, 1], [], []>} : vector<16x192xbf16>, vector<192x128xbf16>, vector<16x128xf32> -> vector<16x128xf32>
    %410 = vector.broadcast %407 : vector<1x128xf32> to vector<16x128xf32>
    %411 = arith.addf %409, %410 : vector<16x128xf32>
    %c0_162 = arith.constant 0 : index
    %c0_163 = arith.constant 0 : index
    %412 = vector.load %arg21[%c0_162, %c0_163] : memref<16x128xf32, #tpu.memory_space<vmem>>, vector<16x128xf32>
    tpu.vector_store %arg21[%c0_162, %c0_163], %411 {strides = array<i32>} : memref<16x128xf32, #tpu.memory_space<vmem>>, vector<16x128xf32>,
    return
  }
}

module attributes {stable_mosaic.version = 11 : i64} {
  func.func @_post_channel_kernel(%arg0: memref<16x16xf32, #tpu.memory_space<vmem>>, %arg1: memref<16x48xf32, #tpu.memory_space<vmem>>, %arg2: memref<16x192xbf16, #tpu.memory_space<vmem>>, %arg3: memref<1x192xf32, #tpu.memory_space<vmem>>, %arg4: memref<192x48xbf16, #tpu.memory_space<vmem>>, %arg5: memref<1x48xf32, #tpu.memory_space<vmem>>, %arg6: memref<4x48x192xbf16, #tpu.memory_space<vmem>>, %arg7: memref<4x1x192xf32, #tpu.memory_space<vmem>>, %arg8: memref<4x64x48xbf16, #tpu.memory_space<vmem>>, %arg9: memref<4x1x48xf32, #tpu.memory_space<vmem>>, %arg10: memref<4x1x48xf32, #tpu.memory_space<vmem>>, %arg11: memref<4x1x48xf32, #tpu.memory_space<vmem>>, %arg12: memref<4x48x192xbf16, #tpu.memory_space<vmem>>, %arg13: memref<4x1x192xf32, #tpu.memory_space<vmem>>, %arg14: memref<4x192x48xbf16, #tpu.memory_space<vmem>>, %arg15: memref<4x1x48xf32, #tpu.memory_space<vmem>>, %arg16: memref<4x1x48xf32, #tpu.memory_space<vmem>>, %arg17: memref<4x1x48xf32, #tpu.memory_space<vmem>>, %arg18: memref<48x128xbf16, #tpu.memory_space<vmem>>, %arg19: memref<1x128xf32, #tpu.memory_space<vmem>>, %arg20: memref<16x128xf32, #tpu.memory_space<vmem>>) attributes {dimension_semantics = [], scalar_prefetch = 0 : i64, scratch_operands = 0 : i64, tpu.core_type = #tpu.core_type<tc>} {
    %c0 = arith.constant 0 : index
    %c0_0 = arith.constant 0 : index
    %0 = vector.load %arg0[%c0, %c0_0] : memref<16x16xf32, #tpu.memory_space<vmem>>, vector<16x16xf32>
    %c0_1 = arith.constant 0 : index
    %c0_2 = arith.constant 0 : index
    %1 = vector.load %arg2[%c0_1, %c0_2] : memref<16x192xbf16, #tpu.memory_space<vmem>>, vector<16x192xbf16>
    %c0_3 = arith.constant 0 : index
    %c0_4 = arith.constant 0 : index
    %2 = vector.load %arg3[%c0_3, %c0_4] : memref<1x192xf32, #tpu.memory_space<vmem>>, vector<1x192xf32>
    %3 = arith.truncf %0 : vector<16x16xf32> to vector<16x16xbf16>
    %cst = arith.constant dense<0.000000e+00> : vector<16x192xf32>
    %4 = tpu.matmul %3, %1, %cst {dimension_numbers = #tpu.dot_dimension_numbers<[1], [0], [0], [1], [0, 0, 1, 1], [], []>} : vector<16x16xbf16>, vector<16x192xbf16>, vector<16x192xf32> -> vector<16x192xf32>
    %5 = vector.broadcast %2 : vector<1x192xf32> to vector<16x192xf32>
    %6 = arith.addf %4, %5 : vector<16x192xf32>
    %cst_5 = arith.constant 0.000000e+00 : f32
    %7 = vector.broadcast %cst_5 : f32 to vector<16x192xf32>
    %8 = arith.maximumf %6, %7 : vector<16x192xf32>
    %c0_6 = arith.constant 0 : index
    %c0_7 = arith.constant 0 : index
    %9 = vector.load %arg4[%c0_6, %c0_7] : memref<192x48xbf16, #tpu.memory_space<vmem>>, vector<192x48xbf16>
    %c0_8 = arith.constant 0 : index
    %c0_9 = arith.constant 0 : index
    %10 = vector.load %arg5[%c0_8, %c0_9] : memref<1x48xf32, #tpu.memory_space<vmem>>, vector<1x48xf32>
    %11 = arith.truncf %8 : vector<16x192xf32> to vector<16x192xbf16>
    %cst_10 = arith.constant dense<0.000000e+00> : vector<16x48xf32>
    %12 = tpu.matmul %11, %9, %cst_10 {dimension_numbers = #tpu.dot_dimension_numbers<[1], [0], [0], [1], [0, 0, 1, 1], [], []>} : vector<16x192xbf16>, vector<192x48xbf16>, vector<16x48xf32> -> vector<16x48xf32>
    %13 = vector.broadcast %10 : vector<1x48xf32> to vector<16x48xf32>
    %14 = arith.addf %12, %13 : vector<16x48xf32>
    %c0_11 = arith.constant 0 : index
    %c0_12 = arith.constant 0 : index
    %15 = vector.load %arg1[%c0_11, %c0_12] : memref<16x48xf32, #tpu.memory_space<vmem>>, vector<16x48xf32>
    %16 = arith.addf %14, %15 : vector<16x48xf32>
    %c0_13 = arith.constant 0 : index
    %c0_14 = arith.constant 0 : index
    %c0_15 = arith.constant 0 : index
    %17 = vector.load %arg6[%c0_13, %c0_14, %c0_15] : memref<4x48x192xbf16, #tpu.memory_space<vmem>>, vector<1x48x192xbf16>
    %18 = vector.shape_cast %17 : vector<1x48x192xbf16> to vector<48x192xbf16>
    %c0_16 = arith.constant 0 : index
    %c0_17 = arith.constant 0 : index
    %c0_18 = arith.constant 0 : index
    %19 = vector.load %arg7[%c0_16, %c0_17, %c0_18] : memref<4x1x192xf32, #tpu.memory_space<vmem>>, vector<1x1x192xf32>
    %20 = vector.shape_cast %19 : vector<1x1x192xf32> to vector<1x192xf32>
    %c0_19 = arith.constant 0 : index
    %c0_20 = arith.constant 0 : index
    %c0_21 = arith.constant 0 : index
    %21 = vector.load %arg8[%c0_19, %c0_20, %c0_21] : memref<4x64x48xbf16, #tpu.memory_space<vmem>>, vector<1x64x48xbf16>
    %22 = vector.shape_cast %21 : vector<1x64x48xbf16> to vector<64x48xbf16>
    %c0_22 = arith.constant 0 : index
    %c0_23 = arith.constant 0 : index
    %c0_24 = arith.constant 0 : index
    %23 = vector.load %arg9[%c0_22, %c0_23, %c0_24] : memref<4x1x48xf32, #tpu.memory_space<vmem>>, vector<1x1x48xf32>
    %24 = vector.shape_cast %23 : vector<1x1x48xf32> to vector<1x48xf32>
    %c0_25 = arith.constant 0 : index
    %c0_26 = arith.constant 0 : index
    %c0_27 = arith.constant 0 : index
    %25 = vector.load %arg10[%c0_25, %c0_26, %c0_27] : memref<4x1x48xf32, #tpu.memory_space<vmem>>, vector<1x1x48xf32>
    %26 = vector.shape_cast %25 : vector<1x1x48xf32> to vector<1x48xf32>
    %c0_28 = arith.constant 0 : index
    %c0_29 = arith.constant 0 : index
    %c0_30 = arith.constant 0 : index
    %27 = vector.load %arg11[%c0_28, %c0_29, %c0_30] : memref<4x1x48xf32, #tpu.memory_space<vmem>>, vector<1x1x48xf32>
    %28 = vector.shape_cast %27 : vector<1x1x48xf32> to vector<1x48xf32>
    %c0_31 = arith.constant 0 : index
    %c0_32 = arith.constant 0 : index
    %c0_33 = arith.constant 0 : index
    %29 = vector.load %arg12[%c0_31, %c0_32, %c0_33] : memref<4x48x192xbf16, #tpu.memory_space<vmem>>, vector<1x48x192xbf16>
    %30 = vector.shape_cast %29 : vector<1x48x192xbf16> to vector<48x192xbf16>
    %c0_34 = arith.constant 0 : index
    %c0_35 = arith.constant 0 : index
    %c0_36 = arith.constant 0 : index
    %31 = vector.load %arg13[%c0_34, %c0_35, %c0_36] : memref<4x1x192xf32, #tpu.memory_space<vmem>>, vector<1x1x192xf32>
    %32 = vector.shape_cast %31 : vector<1x1x192xf32> to vector<1x192xf32>
    %c0_37 = arith.constant 0 : index
    %c0_38 = arith.constant 0 : index
    %c0_39 = arith.constant 0 : index
    %33 = vector.load %arg14[%c0_37, %c0_38, %c0_39] : memref<4x192x48xbf16, #tpu.memory_space<vmem>>, vector<1x192x48xbf16>
    %34 = vector.shape_cast %33 : vector<1x192x48xbf16> to vector<192x48xbf16>
    %c0_40 = arith.constant 0 : index
    %c0_41 = arith.constant 0 : index
    %c0_42 = arith.constant 0 : index
    %35 = vector.load %arg15[%c0_40, %c0_41, %c0_42] : memref<4x1x48xf32, #tpu.memory_space<vmem>>, vector<1x1x48xf32>
    %36 = vector.shape_cast %35 : vector<1x1x48xf32> to vector<1x48xf32>
    %c0_43 = arith.constant 0 : index
    %c0_44 = arith.constant 0 : index
    %c0_45 = arith.constant 0 : index
    %37 = vector.load %arg16[%c0_43, %c0_44, %c0_45] : memref<4x1x48xf32, #tpu.memory_space<vmem>>, vector<1x1x48xf32>
    %38 = vector.shape_cast %37 : vector<1x1x48xf32> to vector<1x48xf32>
    %c0_46 = arith.constant 0 : index
    %c0_47 = arith.constant 0 : index
    %c0_48 = arith.constant 0 : index
    %39 = vector.load %arg17[%c0_46, %c0_47, %c0_48] : memref<4x1x48xf32, #tpu.memory_space<vmem>>, vector<1x1x48xf32>
    %40 = vector.shape_cast %39 : vector<1x1x48xf32> to vector<1x48xf32>
    %41 = arith.truncf %16 : vector<16x48xf32> to vector<16x48xbf16>
    %cst_49 = arith.constant dense<0.000000e+00> : vector<16x192xf32>
    %42 = tpu.matmul %41, %18, %cst_49 {dimension_numbers = #tpu.dot_dimension_numbers<[1], [0], [0], [1], [0, 0, 1, 1], [], []>} : vector<16x48xbf16>, vector<48x192xbf16>, vector<16x192xf32> -> vector<16x192xf32>
    %43 = vector.broadcast %20 : vector<1x192xf32> to vector<16x192xf32>
    %44 = arith.addf %42, %43 : vector<16x192xf32>
    %45 = vector.extract_strided_slice %44 {offsets = [0, 0], sizes = [16, 16], strides = [1, 1]} : vector<16x192xf32> to vector<16x16xf32>
    %46 = vector.shape_cast %45 : vector<16x16xf32> to vector<2x8x16xf32>
    %47 = vector.extract_strided_slice %44 {offsets = [0, 64], sizes = [16, 16], strides = [1, 1]} : vector<16x192xf32> to vector<16x16xf32>
    %48 = vector.shape_cast %47 : vector<16x16xf32> to vector<2x8x16xf32>
    %49 = vector.extract_strided_slice %44 {offsets = [0, 128], sizes = [16, 16], strides = [1, 1]} : vector<16x192xf32> to vector<16x16xf32>
    %50 = vector.shape_cast %49 : vector<16x16xf32> to vector<2x8x16xf32>
    %51 = arith.truncf %46 : vector<2x8x16xf32> to vector<2x8x16xbf16>
    %52 = arith.truncf %48 : vector<2x8x16xf32> to vector<2x8x16xbf16>
    "tpu.trace_start"() <{level = 10 : i32, message = "bqd,bkd->bqk"}> : () -> ()
    %cst_50 = arith.constant dense<0.000000e+00> : vector<2x8x8xf32>
    %53 = tpu.matmul %51, %52, %cst_50 {dimension_numbers = #tpu.dot_dimension_numbers<[2], [2], [1], [1], [0, 0, 0, 1, 1, 1], [0], [0]>} : vector<2x8x16xbf16>, vector<2x8x16xbf16>, vector<2x8x8xf32> -> vector<2x8x8xf32>
    "tpu.trace_stop"() : () -> ()
    %cst_51 = arith.constant 0.288675129 : f32
    %54 = vector.broadcast %cst_51 : f32 to vector<2x8x8xf32>
    %55 = arith.mulf %53, %54 : vector<2x8x8xf32>
    %cst_52 = arith.constant dense<0xFF800000> : vector<2x8xf32>
    %56 = vector.multi_reduction <maximumf>, %55, %cst_52 [2] : vector<2x8x8xf32> to vector<2x8xf32>
    %57 = vector.shape_cast %56 : vector<2x8xf32> to vector<2x8x1xf32>
    %58 = vector.broadcast %57 : vector<2x8x1xf32> to vector<2x8x8xf32>
    %59 = arith.subf %55, %58 : vector<2x8x8xf32>
    %60 = math.exp %59 : vector<2x8x8xf32>
    %cst_53 = arith.constant dense<0.000000e+00> : vector<2x8xf32>
    %61 = vector.multi_reduction <add>, %60, %cst_53 [2] : vector<2x8x8xf32> to vector<2x8xf32>
    %62 = vector.shape_cast %61 : vector<2x8xf32> to vector<2x8x1xf32>
    %63 = vector.broadcast %62 : vector<2x8x1xf32> to vector<2x8x8xf32>
    %64 = arith.divf %60, %63 : vector<2x8x8xf32>
    %65 = arith.truncf %64 : vector<2x8x8xf32> to vector<2x8x8xbf16>
    %66 = arith.truncf %50 : vector<2x8x16xf32> to vector<2x8x16xbf16>
    "tpu.trace_start"() <{level = 10 : i32, message = "bqk,bkd->bqd"}> : () -> ()
    %cst_54 = arith.constant dense<0.000000e+00> : vector<2x8x16xf32>
    %67 = tpu.matmul %65, %66, %cst_54 {dimension_numbers = #tpu.dot_dimension_numbers<[2], [1], [1], [2], [0, 0, 0, 1, 1, 2], [0], [0]>} : vector<2x8x8xbf16>, vector<2x8x16xbf16>, vector<2x8x16xf32> -> vector<2x8x16xf32>
    "tpu.trace_stop"() : () -> ()
    %68 = vector.shape_cast %67 : vector<2x8x16xf32> to vector<16x16xf32>
    %69 = vector.extract_strided_slice %44 {offsets = [0, 16], sizes = [16, 16], strides = [1, 1]} : vector<16x192xf32> to vector<16x16xf32>
    %70 = vector.shape_cast %69 : vector<16x16xf32> to vector<2x8x16xf32>
    %71 = vector.extract_strided_slice %44 {offsets = [0, 80], sizes = [16, 16], strides = [1, 1]} : vector<16x192xf32> to vector<16x16xf32>
    %72 = vector.shape_cast %71 : vector<16x16xf32> to vector<2x8x16xf32>
    %73 = vector.extract_strided_slice %44 {offsets = [0, 144], sizes = [16, 16], strides = [1, 1]} : vector<16x192xf32> to vector<16x16xf32>
    %74 = vector.shape_cast %73 : vector<16x16xf32> to vector<2x8x16xf32>
    %75 = arith.truncf %70 : vector<2x8x16xf32> to vector<2x8x16xbf16>
    %76 = arith.truncf %72 : vector<2x8x16xf32> to vector<2x8x16xbf16>
    "tpu.trace_start"() <{level = 10 : i32, message = "bqd,bkd->bqk"}> : () -> ()
    %cst_55 = arith.constant dense<0.000000e+00> : vector<2x8x8xf32>
    %77 = tpu.matmul %75, %76, %cst_55 {dimension_numbers = #tpu.dot_dimension_numbers<[2], [2], [1], [1], [0, 0, 0, 1, 1, 1], [0], [0]>} : vector<2x8x16xbf16>, vector<2x8x16xbf16>, vector<2x8x8xf32> -> vector<2x8x8xf32>
    "tpu.trace_stop"() : () -> ()
    %cst_56 = arith.constant 0.288675129 : f32
    %78 = vector.broadcast %cst_56 : f32 to vector<2x8x8xf32>
    %79 = arith.mulf %77, %78 : vector<2x8x8xf32>
    %cst_57 = arith.constant dense<0xFF800000> : vector<2x8xf32>
    %80 = vector.multi_reduction <maximumf>, %79, %cst_57 [2] : vector<2x8x8xf32> to vector<2x8xf32>
    %81 = vector.shape_cast %80 : vector<2x8xf32> to vector<2x8x1xf32>
    %82 = vector.broadcast %81 : vector<2x8x1xf32> to vector<2x8x8xf32>
    %83 = arith.subf %79, %82 : vector<2x8x8xf32>
    %84 = math.exp %83 : vector<2x8x8xf32>
    %cst_58 = arith.constant dense<0.000000e+00> : vector<2x8xf32>
    %85 = vector.multi_reduction <add>, %84, %cst_58 [2] : vector<2x8x8xf32> to vector<2x8xf32>
    %86 = vector.shape_cast %85 : vector<2x8xf32> to vector<2x8x1xf32>
    %87 = vector.broadcast %86 : vector<2x8x1xf32> to vector<2x8x8xf32>
    %88 = arith.divf %84, %87 : vector<2x8x8xf32>
    %89 = arith.truncf %88 : vector<2x8x8xf32> to vector<2x8x8xbf16>
    %90 = arith.truncf %74 : vector<2x8x16xf32> to vector<2x8x16xbf16>
    "tpu.trace_start"() <{level = 10 : i32, message = "bqk,bkd->bqd"}> : () -> ()
    %cst_59 = arith.constant dense<0.000000e+00> : vector<2x8x16xf32>
    %91 = tpu.matmul %89, %90, %cst_59 {dimension_numbers = #tpu.dot_dimension_numbers<[2], [1], [1], [2], [0, 0, 0, 1, 1, 2], [0], [0]>} : vector<2x8x8xbf16>, vector<2x8x16xbf16>, vector<2x8x16xf32> -> vector<2x8x16xf32>
    "tpu.trace_stop"() : () -> ()
    %92 = vector.shape_cast %91 : vector<2x8x16xf32> to vector<16x16xf32>
    %93 = vector.extract_strided_slice %44 {offsets = [0, 32], sizes = [16, 16], strides = [1, 1]} : vector<16x192xf32> to vector<16x16xf32>
    %94 = vector.shape_cast %93 : vector<16x16xf32> to vector<2x8x16xf32>
    %95 = vector.extract_strided_slice %44 {offsets = [0, 96], sizes = [16, 16], strides = [1, 1]} : vector<16x192xf32> to vector<16x16xf32>
    %96 = vector.shape_cast %95 : vector<16x16xf32> to vector<2x8x16xf32>
    %97 = vector.extract_strided_slice %44 {offsets = [0, 160], sizes = [16, 16], strides = [1, 1]} : vector<16x192xf32> to vector<16x16xf32>
    %98 = vector.shape_cast %97 : vector<16x16xf32> to vector<2x8x16xf32>
    %99 = arith.truncf %94 : vector<2x8x16xf32> to vector<2x8x16xbf16>
    %100 = arith.truncf %96 : vector<2x8x16xf32> to vector<2x8x16xbf16>
    "tpu.trace_start"() <{level = 10 : i32, message = "bqd,bkd->bqk"}> : () -> ()
    %cst_60 = arith.constant dense<0.000000e+00> : vector<2x8x8xf32>
    %101 = tpu.matmul %99, %100, %cst_60 {dimension_numbers = #tpu.dot_dimension_numbers<[2], [2], [1], [1], [0, 0, 0, 1, 1, 1], [0], [0]>} : vector<2x8x16xbf16>, vector<2x8x16xbf16>, vector<2x8x8xf32> -> vector<2x8x8xf32>
    "tpu.trace_stop"() : () -> ()
    %cst_61 = arith.constant 0.288675129 : f32
    %102 = vector.broadcast %cst_61 : f32 to vector<2x8x8xf32>
    %103 = arith.mulf %101, %102 : vector<2x8x8xf32>
    %cst_62 = arith.constant dense<0xFF800000> : vector<2x8xf32>
    %104 = vector.multi_reduction <maximumf>, %103, %cst_62 [2] : vector<2x8x8xf32> to vector<2x8xf32>
    %105 = vector.shape_cast %104 : vector<2x8xf32> to vector<2x8x1xf32>
    %106 = vector.broadcast %105 : vector<2x8x1xf32> to vector<2x8x8xf32>
    %107 = arith.subf %103, %106 : vector<2x8x8xf32>
    %108 = math.exp %107 : vector<2x8x8xf32>
    %cst_63 = arith.constant dense<0.000000e+00> : vector<2x8xf32>
    %109 = vector.multi_reduction <add>, %108, %cst_63 [2] : vector<2x8x8xf32> to vector<2x8xf32>
    %110 = vector.shape_cast %109 : vector<2x8xf32> to vector<2x8x1xf32>
    %111 = vector.broadcast %110 : vector<2x8x1xf32> to vector<2x8x8xf32>
    %112 = arith.divf %108, %111 : vector<2x8x8xf32>
    %113 = arith.truncf %112 : vector<2x8x8xf32> to vector<2x8x8xbf16>
    %114 = arith.truncf %98 : vector<2x8x16xf32> to vector<2x8x16xbf16>
    "tpu.trace_start"() <{level = 10 : i32, message = "bqk,bkd->bqd"}> : () -> ()
    %cst_64 = arith.constant dense<0.000000e+00> : vector<2x8x16xf32>
    %115 = tpu.matmul %113, %114, %cst_64 {dimension_numbers = #tpu.dot_dimension_numbers<[2], [1], [1], [2], [0, 0, 0, 1, 1, 2], [0], [0]>} : vector<2x8x8xbf16>, vector<2x8x16xbf16>, vector<2x8x16xf32> -> vector<2x8x16xf32>
    "tpu.trace_stop"() : () -> ()
    %116 = vector.shape_cast %115 : vector<2x8x16xf32> to vector<16x16xf32>
    %117 = vector.extract_strided_slice %44 {offsets = [0, 48], sizes = [16, 16], strides = [1, 1]} : vector<16x192xf32> to vector<16x16xf32>
    %118 = vector.shape_cast %117 : vector<16x16xf32> to vector<2x8x16xf32>
    %119 = vector.extract_strided_slice %44 {offsets = [0, 112], sizes = [16, 16], strides = [1, 1]} : vector<16x192xf32> to vector<16x16xf32>
    %120 = vector.shape_cast %119 : vector<16x16xf32> to vector<2x8x16xf32>
    %121 = vector.extract_strided_slice %44 {offsets = [0, 176], sizes = [16, 16], strides = [1, 1]} : vector<16x192xf32> to vector<16x16xf32>
    %122 = vector.shape_cast %121 : vector<16x16xf32> to vector<2x8x16xf32>
    %123 = arith.truncf %118 : vector<2x8x16xf32> to vector<2x8x16xbf16>
    %124 = arith.truncf %120 : vector<2x8x16xf32> to vector<2x8x16xbf16>
    "tpu.trace_start"() <{level = 10 : i32, message = "bqd,bkd->bqk"}> : () -> ()
    %cst_65 = arith.constant dense<0.000000e+00> : vector<2x8x8xf32>
    %125 = tpu.matmul %123, %124, %cst_65 {dimension_numbers = #tpu.dot_dimension_numbers<[2], [2], [1], [1], [0, 0, 0, 1, 1, 1], [0], [0]>} : vector<2x8x16xbf16>, vector<2x8x16xbf16>, vector<2x8x8xf32> -> vector<2x8x8xf32>
    "tpu.trace_stop"() : () -> ()
    %cst_66 = arith.constant 0.288675129 : f32
    %126 = vector.broadcast %cst_66 : f32 to vector<2x8x8xf32>
    %127 = arith.mulf %125, %126 : vector<2x8x8xf32>
    %cst_67 = arith.constant dense<0xFF800000> : vector<2x8xf32>
    %128 = vector.multi_reduction <maximumf>, %127, %cst_67 [2] : vector<2x8x8xf32> to vector<2x8xf32>
    %129 = vector.shape_cast %128 : vector<2x8xf32> to vector<2x8x1xf32>
    %130 = vector.broadcast %129 : vector<2x8x1xf32> to vector<2x8x8xf32>
    %131 = arith.subf %127, %130 : vector<2x8x8xf32>
    %132 = math.exp %131 : vector<2x8x8xf32>
    %cst_68 = arith.constant dense<0.000000e+00> : vector<2x8xf32>
    %133 = vector.multi_reduction <add>, %132, %cst_68 [2] : vector<2x8x8xf32> to vector<2x8xf32>
    %134 = vector.shape_cast %133 : vector<2x8xf32> to vector<2x8x1xf32>
    %135 = vector.broadcast %134 : vector<2x8x1xf32> to vector<2x8x8xf32>
    %136 = arith.divf %132, %135 : vector<2x8x8xf32>
    %137 = arith.truncf %136 : vector<2x8x8xf32> to vector<2x8x8xbf16>
    %138 = arith.truncf %122 : vector<2x8x16xf32> to vector<2x8x16xbf16>
    "tpu.trace_start"() <{level = 10 : i32, message = "bqk,bkd->bqd"}> : () -> ()
    %cst_69 = arith.constant dense<0.000000e+00> : vector<2x8x16xf32>
    %139 = tpu.matmul %137, %138, %cst_69 {dimension_numbers = #tpu.dot_dimension_numbers<[2], [1], [1], [2], [0, 0, 0, 1, 1, 2], [0], [0]>} : vector<2x8x8xbf16>, vector<2x8x16xbf16>, vector<2x8x16xf32> -> vector<2x8x16xf32>
    "tpu.trace_stop"() : () -> ()
    %140 = vector.shape_cast %139 : vector<2x8x16xf32> to vector<16x16xf32>
    %141 = tpu.concatenate %68, %92, %116, %140 in 1 : vector<16x16xf32>, vector<16x16xf32>, vector<16x16xf32>, vector<16x16xf32> -> vector<16x64xf32>
    %142 = arith.truncf %141 : vector<16x64xf32> to vector<16x64xbf16>
    %cst_70 = arith.constant dense<0.000000e+00> : vector<16x48xf32>
    %143 = tpu.matmul %142, %22, %cst_70 {dimension_numbers = #tpu.dot_dimension_numbers<[1], [0], [0], [1], [0, 0, 1, 1], [], []>} : vector<16x64xbf16>, vector<64x48xbf16>, vector<16x48xf32> -> vector<16x48xf32>
    %144 = vector.broadcast %24 : vector<1x48xf32> to vector<16x48xf32>
    %145 = arith.addf %143, %144 : vector<16x48xf32>
    %146 = arith.addf %16, %145 : vector<16x48xf32>
    %cst_71 = arith.constant dense<0.000000e+00> : vector<16xf32>
    %147 = vector.multi_reduction <add>, %146, %cst_71 [1] : vector<16x48xf32> to vector<16xf32>
    %148 = vector.shape_cast %147 : vector<16xf32> to vector<16x1xf32>
    %cst_72 = arith.constant 4.800000e+01 : f32
    %149 = vector.broadcast %cst_72 : f32 to vector<16x1xf32>
    %150 = arith.divf %148, %149 : vector<16x1xf32>
    %151 = vector.broadcast %150 : vector<16x1xf32> to vector<16x48xf32>
    %152 = arith.subf %146, %151 : vector<16x48xf32>
    %153 = arith.mulf %152, %152 : vector<16x48xf32>
    %cst_73 = arith.constant dense<0.000000e+00> : vector<16xf32>
    %154 = vector.multi_reduction <add>, %153, %cst_73 [1] : vector<16x48xf32> to vector<16xf32>
    %155 = vector.shape_cast %154 : vector<16xf32> to vector<16x1xf32>
    %cst_74 = arith.constant 4.800000e+01 : f32
    %156 = vector.broadcast %cst_74 : f32 to vector<16x1xf32>
    %157 = arith.divf %155, %156 : vector<16x1xf32>
    %158 = vector.broadcast %150 : vector<16x1xf32> to vector<16x48xf32>
    %159 = arith.subf %146, %158 : vector<16x48xf32>
    %cst_75 = arith.constant 9.99999974E-6 : f32
    %160 = vector.broadcast %cst_75 : f32 to vector<16x1xf32>
    %161 = arith.addf %157, %160 : vector<16x1xf32>
    %162 = math.rsqrt %161 : vector<16x1xf32>
    %163 = vector.broadcast %162 : vector<16x1xf32> to vector<16x48xf32>
    %164 = arith.mulf %159, %163 : vector<16x48xf32>
    %165 = vector.broadcast %26 : vector<1x48xf32> to vector<16x48xf32>
    %166 = arith.mulf %164, %165 : vector<16x48xf32>
    %167 = vector.broadcast %28 : vector<1x48xf32> to vector<16x48xf32>
    %168 = arith.addf %166, %167 : vector<16x48xf32>
    %169 = arith.truncf %168 : vector<16x48xf32> to vector<16x48xbf16>
    %cst_76 = arith.constant dense<0.000000e+00> : vector<16x192xf32>
    %170 = tpu.matmul %169, %30, %cst_76 {dimension_numbers = #tpu.dot_dimension_numbers<[1], [0], [0], [1], [0, 0, 1, 1], [], []>} : vector<16x48xbf16>, vector<48x192xbf16>, vector<16x192xf32> -> vector<16x192xf32>
    %171 = vector.broadcast %32 : vector<1x192xf32> to vector<16x192xf32>
    %172 = arith.addf %170, %171 : vector<16x192xf32>
    %cst_77 = arith.constant 0.000000e+00 : f32
    %173 = vector.broadcast %cst_77 : f32 to vector<16x192xf32>
    %174 = arith.maximumf %172, %173 : vector<16x192xf32>
    %175 = arith.truncf %174 : vector<16x192xf32> to vector<16x192xbf16>
    %cst_78 = arith.constant dense<0.000000e+00> : vector<16x48xf32>
    %176 = tpu.matmul %175, %34, %cst_78 {dimension_numbers = #tpu.dot_dimension_numbers<[1], [0], [0], [1], [0, 0, 1, 1], [], []>} : vector<16x192xbf16>, vector<192x48xbf16>, vector<16x48xf32> -> vector<16x48xf32>
    %177 = vector.broadcast %36 : vector<1x48xf32> to vector<16x48xf32>
    %178 = arith.addf %176, %177 : vector<16x48xf32>
    %179 = arith.addf %168, %178 : vector<16x48xf32>
    %cst_79 = arith.constant dense<0.000000e+00> : vector<16xf32>
    %180 = vector.multi_reduction <add>, %179, %cst_79 [1] : vector<16x48xf32> to vector<16xf32>
    %181 = vector.shape_cast %180 : vector<16xf32> to vector<16x1xf32>
    %cst_80 = arith.constant 4.800000e+01 : f32
    %182 = vector.broadcast %cst_80 : f32 to vector<16x1xf32>
    %183 = arith.divf %181, %182 : vector<16x1xf32>
    %184 = vector.broadcast %183 : vector<16x1xf32> to vector<16x48xf32>
    %185 = arith.subf %179, %184 : vector<16x48xf32>
    %186 = arith.mulf %185, %185 : vector<16x48xf32>
    %cst_81 = arith.constant dense<0.000000e+00> : vector<16xf32>
    %187 = vector.multi_reduction <add>, %186, %cst_81 [1] : vector<16x48xf32> to vector<16xf32>
    %188 = vector.shape_cast %187 : vector<16xf32> to vector<16x1xf32>
    %cst_82 = arith.constant 4.800000e+01 : f32
    %189 = vector.broadcast %cst_82 : f32 to vector<16x1xf32>
    %190 = arith.divf %188, %189 : vector<16x1xf32>
    %191 = vector.broadcast %183 : vector<16x1xf32> to vector<16x48xf32>
    %192 = arith.subf %179, %191 : vector<16x48xf32>
    %cst_83 = arith.constant 9.99999974E-6 : f32
    %193 = vector.broadcast %cst_83 : f32 to vector<16x1xf32>
    %194 = arith.addf %190, %193 : vector<16x1xf32>
    %195 = math.rsqrt %194 : vector<16x1xf32>
    %196 = vector.broadcast %195 : vector<16x1xf32> to vector<16x48xf32>
    %197 = arith.mulf %192, %196 : vector<16x48xf32>
    %198 = vector.broadcast %38 : vector<1x48xf32> to vector<16x48xf32>
    %199 = arith.mulf %197, %198 : vector<16x48xf32>
    %200 = vector.broadcast %40 : vector<1x48xf32> to vector<16x48xf32>
    %201 = arith.addf %199, %200 : vector<16x48xf32>
    %c1 = arith.constant 1 : index
    %c0_84 = arith.constant 0 : index
    %c0_85 = arith.constant 0 : index
    %202 = vector.load %arg6[%c1, %c0_84, %c0_85] : memref<4x48x192xbf16, #tpu.memory_space<vmem>>, vector<1x48x192xbf16>
    %203 = vector.shape_cast %202 : vector<1x48x192xbf16> to vector<48x192xbf16>
    %c1_86 = arith.constant 1 : index
    %c0_87 = arith.constant 0 : index
    %c0_88 = arith.constant 0 : index
    %204 = vector.load %arg7[%c1_86, %c0_87, %c0_88] : memref<4x1x192xf32, #tpu.memory_space<vmem>>, vector<1x1x192xf32>
    %205 = vector.shape_cast %204 : vector<1x1x192xf32> to vector<1x192xf32>
    %c1_89 = arith.constant 1 : index
    %c0_90 = arith.constant 0 : index
    %c0_91 = arith.constant 0 : index
    %206 = vector.load %arg8[%c1_89, %c0_90, %c0_91] : memref<4x64x48xbf16, #tpu.memory_space<vmem>>, vector<1x64x48xbf16>
    %207 = vector.shape_cast %206 : vector<1x64x48xbf16> to vector<64x48xbf16>
    %c1_92 = arith.constant 1 : index
    %c0_93 = arith.constant 0 : index
    %c0_94 = arith.constant 0 : index
    %208 = vector.load %arg9[%c1_92, %c0_93, %c0_94] : memref<4x1x48xf32, #tpu.memory_space<vmem>>, vector<1x1x48xf32>
    %209 = vector.shape_cast %208 : vector<1x1x48xf32> to vector<1x48xf32>
    %c1_95 = arith.constant 1 : index
    %c0_96 = arith.constant 0 : index
    %c0_97 = arith.constant 0 : index
    %210 = vector.load %arg10[%c1_95, %c0_96, %c0_97] : memref<4x1x48xf32, #tpu.memory_space<vmem>>, vector<1x1x48xf32>
    %211 = vector.shape_cast %210 : vector<1x1x48xf32> to vector<1x48xf32>
    %c1_98 = arith.constant 1 : index
    %c0_99 = arith.constant 0 : index
    %c0_100 = arith.constant 0 : index
    %212 = vector.load %arg11[%c1_98, %c0_99, %c0_100] : memref<4x1x48xf32, #tpu.memory_space<vmem>>, vector<1x1x48xf32>
    %213 = vector.shape_cast %212 : vector<1x1x48xf32> to vector<1x48xf32>
    %c1_101 = arith.constant 1 : index
    %c0_102 = arith.constant 0 : index
    %c0_103 = arith.constant 0 : index
    %214 = vector.load %arg12[%c1_101, %c0_102, %c0_103] : memref<4x48x192xbf16, #tpu.memory_space<vmem>>, vector<1x48x192xbf16>
    %215 = vector.shape_cast %214 : vector<1x48x192xbf16> to vector<48x192xbf16>
    %c1_104 = arith.constant 1 : index
    %c0_105 = arith.constant 0 : index
    %c0_106 = arith.constant 0 : index
    %216 = vector.load %arg13[%c1_104, %c0_105, %c0_106] : memref<4x1x192xf32, #tpu.memory_space<vmem>>, vector<1x1x192xf32>
    %217 = vector.shape_cast %216 : vector<1x1x192xf32> to vector<1x192xf32>
    %c1_107 = arith.constant 1 : index
    %c0_108 = arith.constant 0 : index
    %c0_109 = arith.constant 0 : index
    %218 = vector.load %arg14[%c1_107, %c0_108, %c0_109] : memref<4x192x48xbf16, #tpu.memory_space<vmem>>, vector<1x192x48xbf16>
    %219 = vector.shape_cast %218 : vector<1x192x48xbf16> to vector<192x48xbf16>
    %c1_110 = arith.constant 1 : index
    %c0_111 = arith.constant 0 : index
    %c0_112 = arith.constant 0 : index
    %220 = vector.load %arg15[%c1_110, %c0_111, %c0_112] : memref<4x1x48xf32, #tpu.memory_space<vmem>>, vector<1x1x48xf32>
    %221 = vector.shape_cast %220 : vector<1x1x48xf32> to vector<1x48xf32>
    %c1_113 = arith.constant 1 : index
    %c0_114 = arith.constant 0 : index
    %c0_115 = arith.constant 0 : index
    %222 = vector.load %arg16[%c1_113, %c0_114, %c0_115] : memref<4x1x48xf32, #tpu.memory_space<vmem>>, vector<1x1x48xf32>
    %223 = vector.shape_cast %222 : vector<1x1x48xf32> to vector<1x48xf32>
    %c1_116 = arith.constant 1 : index
    %c0_117 = arith.constant 0 : index
    %c0_118 = arith.constant 0 : index
    %224 = vector.load %arg17[%c1_116, %c0_117, %c0_118] : memref<4x1x48xf32, #tpu.memory_space<vmem>>, vector<1x1x48xf32>
    %225 = vector.shape_cast %224 : vector<1x1x48xf32> to vector<1x48xf32>
    %226 = arith.truncf %201 : vector<16x48xf32> to vector<16x48xbf16>
    %cst_119 = arith.constant dense<0.000000e+00> : vector<16x192xf32>
    %227 = tpu.matmul %226, %203, %cst_119 {dimension_numbers = #tpu.dot_dimension_numbers<[1], [0], [0], [1], [0, 0, 1, 1], [], []>} : vector<16x48xbf16>, vector<48x192xbf16>, vector<16x192xf32> -> vector<16x192xf32>
    %228 = vector.broadcast %205 : vector<1x192xf32> to vector<16x192xf32>
    %229 = arith.addf %227, %228 : vector<16x192xf32>
    %230 = vector.extract_strided_slice %229 {offsets = [0, 0], sizes = [16, 16], strides = [1, 1]} : vector<16x192xf32> to vector<16x16xf32>
    %231 = vector.shape_cast %230 : vector<16x16xf32> to vector<2x8x16xf32>
    %232 = vector.extract_strided_slice %229 {offsets = [0, 64], sizes = [16, 16], strides = [1, 1]} : vector<16x192xf32> to vector<16x16xf32>
    %233 = vector.shape_cast %232 : vector<16x16xf32> to vector<2x8x16xf32>
    %234 = vector.extract_strided_slice %229 {offsets = [0, 128], sizes = [16, 16], strides = [1, 1]} : vector<16x192xf32> to vector<16x16xf32>
    %235 = vector.shape_cast %234 : vector<16x16xf32> to vector<2x8x16xf32>
    %236 = arith.truncf %231 : vector<2x8x16xf32> to vector<2x8x16xbf16>
    %237 = arith.truncf %233 : vector<2x8x16xf32> to vector<2x8x16xbf16>
    "tpu.trace_start"() <{level = 10 : i32, message = "bqd,bkd->bqk"}> : () -> ()
    %cst_120 = arith.constant dense<0.000000e+00> : vector<2x8x8xf32>
    %238 = tpu.matmul %236, %237, %cst_120 {dimension_numbers = #tpu.dot_dimension_numbers<[2], [2], [1], [1], [0, 0, 0, 1, 1, 1], [0], [0]>} : vector<2x8x16xbf16>, vector<2x8x16xbf16>, vector<2x8x8xf32> -> vector<2x8x8xf32>
    "tpu.trace_stop"() : () -> ()
    %cst_121 = arith.constant 0.288675129 : f32
    %239 = vector.broadcast %cst_121 : f32 to vector<2x8x8xf32>
    %240 = arith.mulf %238, %239 : vector<2x8x8xf32>
    %cst_122 = arith.constant dense<0xFF800000> : vector<2x8xf32>
    %241 = vector.multi_reduction <maximumf>, %240, %cst_122 [2] : vector<2x8x8xf32> to vector<2x8xf32>
    %242 = vector.shape_cast %241 : vector<2x8xf32> to vector<2x8x1xf32>
    %243 = vector.broadcast %242 : vector<2x8x1xf32> to vector<2x8x8xf32>
    %244 = arith.subf %240, %243 : vector<2x8x8xf32>
    %245 = math.exp %244 : vector<2x8x8xf32>
    %cst_123 = arith.constant dense<0.000000e+00> : vector<2x8xf32>
    %246 = vector.multi_reduction <add>, %245, %cst_123 [2] : vector<2x8x8xf32> to vector<2x8xf32>
    %247 = vector.shape_cast %246 : vector<2x8xf32> to vector<2x8x1xf32>
    %248 = vector.broadcast %247 : vector<2x8x1xf32> to vector<2x8x8xf32>
    %249 = arith.divf %245, %248 : vector<2x8x8xf32>
    %250 = arith.truncf %249 : vector<2x8x8xf32> to vector<2x8x8xbf16>
    %251 = arith.truncf %235 : vector<2x8x16xf32> to vector<2x8x16xbf16>
    "tpu.trace_start"() <{level = 10 : i32, message = "bqk,bkd->bqd"}> : () -> ()
    %cst_124 = arith.constant dense<0.000000e+00> : vector<2x8x16xf32>
    %252 = tpu.matmul %250, %251, %cst_124 {dimension_numbers = #tpu.dot_dimension_numbers<[2], [1], [1], [2], [0, 0, 0, 1, 1, 2], [0], [0]>} : vector<2x8x8xbf16>, vector<2x8x16xbf16>, vector<2x8x16xf32> -> vector<2x8x16xf32>
    "tpu.trace_stop"() : () -> ()
    %253 = vector.shape_cast %252 : vector<2x8x16xf32> to vector<16x16xf32>
    %254 = vector.extract_strided_slice %229 {offsets = [0, 16], sizes = [16, 16], strides = [1, 1]} : vector<16x192xf32> to vector<16x16xf32>
    %255 = vector.shape_cast %254 : vector<16x16xf32> to vector<2x8x16xf32>
    %256 = vector.extract_strided_slice %229 {offsets = [0, 80], sizes = [16, 16], strides = [1, 1]} : vector<16x192xf32> to vector<16x16xf32>
    %257 = vector.shape_cast %256 : vector<16x16xf32> to vector<2x8x16xf32>
    %258 = vector.extract_strided_slice %229 {offsets = [0, 144], sizes = [16, 16], strides = [1, 1]} : vector<16x192xf32> to vector<16x16xf32>
    %259 = vector.shape_cast %258 : vector<16x16xf32> to vector<2x8x16xf32>
    %260 = arith.truncf %255 : vector<2x8x16xf32> to vector<2x8x16xbf16>
    %261 = arith.truncf %257 : vector<2x8x16xf32> to vector<2x8x16xbf16>
    "tpu.trace_start"() <{level = 10 : i32, message = "bqd,bkd->bqk"}> : () -> ()
    %cst_125 = arith.constant dense<0.000000e+00> : vector<2x8x8xf32>
    %262 = tpu.matmul %260, %261, %cst_125 {dimension_numbers = #tpu.dot_dimension_numbers<[2], [2], [1], [1], [0, 0, 0, 1, 1, 1], [0], [0]>} : vector<2x8x16xbf16>, vector<2x8x16xbf16>, vector<2x8x8xf32> -> vector<2x8x8xf32>
    "tpu.trace_stop"() : () -> ()
    %cst_126 = arith.constant 0.288675129 : f32
    %263 = vector.broadcast %cst_126 : f32 to vector<2x8x8xf32>
    %264 = arith.mulf %262, %263 : vector<2x8x8xf32>
    %cst_127 = arith.constant dense<0xFF800000> : vector<2x8xf32>
    %265 = vector.multi_reduction <maximumf>, %264, %cst_127 [2] : vector<2x8x8xf32> to vector<2x8xf32>
    %266 = vector.shape_cast %265 : vector<2x8xf32> to vector<2x8x1xf32>
    %267 = vector.broadcast %266 : vector<2x8x1xf32> to vector<2x8x8xf32>
    %268 = arith.subf %264, %267 : vector<2x8x8xf32>
    %269 = math.exp %268 : vector<2x8x8xf32>
    %cst_128 = arith.constant dense<0.000000e+00> : vector<2x8xf32>
    %270 = vector.multi_reduction <add>, %269, %cst_128 [2] : vector<2x8x8xf32> to vector<2x8xf32>
    %271 = vector.shape_cast %270 : vector<2x8xf32> to vector<2x8x1xf32>
    %272 = vector.broadcast %271 : vector<2x8x1xf32> to vector<2x8x8xf32>
    %273 = arith.divf %269, %272 : vector<2x8x8xf32>
    %274 = arith.truncf %273 : vector<2x8x8xf32> to vector<2x8x8xbf16>
    %275 = arith.truncf %259 : vector<2x8x16xf32> to vector<2x8x16xbf16>
    "tpu.trace_start"() <{level = 10 : i32, message = "bqk,bkd->bqd"}> : () -> ()
    %cst_129 = arith.constant dense<0.000000e+00> : vector<2x8x16xf32>
    %276 = tpu.matmul %274, %275, %cst_129 {dimension_numbers = #tpu.dot_dimension_numbers<[2], [1], [1], [2], [0, 0, 0, 1, 1, 2], [0], [0]>} : vector<2x8x8xbf16>, vector<2x8x16xbf16>, vector<2x8x16xf32> -> vector<2x8x16xf32>
    "tpu.trace_stop"() : () -> ()
    %277 = vector.shape_cast %276 : vector<2x8x16xf32> to vector<16x16xf32>
    %278 = vector.extract_strided_slice %229 {offsets = [0, 32], sizes = [16, 16], strides = [1, 1]} : vector<16x192xf32> to vector<16x16xf32>
    %279 = vector.shape_cast %278 : vector<16x16xf32> to vector<2x8x16xf32>
    %280 = vector.extract_strided_slice %229 {offsets = [0, 96], sizes = [16, 16], strides = [1, 1]} : vector<16x192xf32> to vector<16x16xf32>
    %281 = vector.shape_cast %280 : vector<16x16xf32> to vector<2x8x16xf32>
    %282 = vector.extract_strided_slice %229 {offsets = [0, 160], sizes = [16, 16], strides = [1, 1]} : vector<16x192xf32> to vector<16x16xf32>
    %283 = vector.shape_cast %282 : vector<16x16xf32> to vector<2x8x16xf32>
    %284 = arith.truncf %279 : vector<2x8x16xf32> to vector<2x8x16xbf16>
    %285 = arith.truncf %281 : vector<2x8x16xf32> to vector<2x8x16xbf16>
    "tpu.trace_start"() <{level = 10 : i32, message = "bqd,bkd->bqk"}> : () -> ()
    %cst_130 = arith.constant dense<0.000000e+00> : vector<2x8x8xf32>
    %286 = tpu.matmul %284, %285, %cst_130 {dimension_numbers = #tpu.dot_dimension_numbers<[2], [2], [1], [1], [0, 0, 0, 1, 1, 1], [0], [0]>} : vector<2x8x16xbf16>, vector<2x8x16xbf16>, vector<2x8x8xf32> -> vector<2x8x8xf32>
    "tpu.trace_stop"() : () -> ()
    %cst_131 = arith.constant 0.288675129 : f32
    %287 = vector.broadcast %cst_131 : f32 to vector<2x8x8xf32>
    %288 = arith.mulf %286, %287 : vector<2x8x8xf32>
    %cst_132 = arith.constant dense<0xFF800000> : vector<2x8xf32>
    %289 = vector.multi_reduction <maximumf>, %288, %cst_132 [2] : vector<2x8x8xf32> to vector<2x8xf32>
    %290 = vector.shape_cast %289 : vector<2x8xf32> to vector<2x8x1xf32>
    %291 = vector.broadcast %290 : vector<2x8x1xf32> to vector<2x8x8xf32>
    %292 = arith.subf %288, %291 : vector<2x8x8xf32>
    %293 = math.exp %292 : vector<2x8x8xf32>
    %cst_133 = arith.constant dense<0.000000e+00> : vector<2x8xf32>
    %294 = vector.multi_reduction <add>, %293, %cst_133 [2] : vector<2x8x8xf32> to vector<2x8xf32>
    %295 = vector.shape_cast %294 : vector<2x8xf32> to vector<2x8x1xf32>
    %296 = vector.broadcast %295 : vector<2x8x1xf32> to vector<2x8x8xf32>
    %297 = arith.divf %293, %296 : vector<2x8x8xf32>
    %298 = arith.truncf %297 : vector<2x8x8xf32> to vector<2x8x8xbf16>
    %299 = arith.truncf %283 : vector<2x8x16xf32> to vector<2x8x16xbf16>
    "tpu.trace_start"() <{level = 10 : i32, message = "bqk,bkd->bqd"}> : () -> ()
    %cst_134 = arith.constant dense<0.000000e+00> : vector<2x8x16xf32>
    %300 = tpu.matmul %298, %299, %cst_134 {dimension_numbers = #tpu.dot_dimension_numbers<[2], [1], [1], [2], [0, 0, 0, 1, 1, 2], [0], [0]>} : vector<2x8x8xbf16>, vector<2x8x16xbf16>, vector<2x8x16xf32> -> vector<2x8x16xf32>
    "tpu.trace_stop"() : () -> ()
    %301 = vector.shape_cast %300 : vector<2x8x16xf32> to vector<16x16xf32>
    %302 = vector.extract_strided_slice %229 {offsets = [0, 48], sizes = [16, 16], strides = [1, 1]} : vector<16x192xf32> to vector<16x16xf32>
    %303 = vector.shape_cast %302 : vector<16x16xf32> to vector<2x8x16xf32>
    %304 = vector.extract_strided_slice %229 {offsets = [0, 112], sizes = [16, 16], strides = [1, 1]} : vector<16x192xf32> to vector<16x16xf32>
    %305 = vector.shape_cast %304 : vector<16x16xf32> to vector<2x8x16xf32>
    %306 = vector.extract_strided_slice %229 {offsets = [0, 176], sizes = [16, 16], strides = [1, 1]} : vector<16x192xf32> to vector<16x16xf32>
    %307 = vector.shape_cast %306 : vector<16x16xf32> to vector<2x8x16xf32>
    %308 = arith.truncf %303 : vector<2x8x16xf32> to vector<2x8x16xbf16>
    %309 = arith.truncf %305 : vector<2x8x16xf32> to vector<2x8x16xbf16>
    "tpu.trace_start"() <{level = 10 : i32, message = "bqd,bkd->bqk"}> : () -> ()
    %cst_135 = arith.constant dense<0.000000e+00> : vector<2x8x8xf32>
    %310 = tpu.matmul %308, %309, %cst_135 {dimension_numbers = #tpu.dot_dimension_numbers<[2], [2], [1], [1], [0, 0, 0, 1, 1, 1], [0], [0]>} : vector<2x8x16xbf16>, vector<2x8x16xbf16>, vector<2x8x8xf32> -> vector<2x8x8xf32>
    "tpu.trace_stop"() : () -> ()
    %cst_136 = arith.constant 0.288675129 : f32
    %311 = vector.broadcast %cst_136 : f32 to vector<2x8x8xf32>
    %312 = arith.mulf %310, %311 : vector<2x8x8xf32>
    %cst_137 = arith.constant dense<0xFF800000> : vector<2x8xf32>
    %313 = vector.multi_reduction <maximumf>, %312, %cst_137 [2] : vector<2x8x8xf32> to vector<2x8xf32>
    %314 = vector.shape_cast %313 : vector<2x8xf32> to vector<2x8x1xf32>
    %315 = vector.broadcast %314 : vector<2x8x1xf32> to vector<2x8x8xf32>
    %316 = arith.subf %312, %315 : vector<2x8x8xf32>
    %317 = math.exp %316 : vector<2x8x8xf32>
    %cst_138 = arith.constant dense<0.000000e+00> : vector<2x8xf32>
    %318 = vector.multi_reduction <add>, %317, %cst_138 [2] : vector<2x8x8xf32> to vector<2x8xf32>
    %319 = vector.shape_cast %318 : vector<2x8xf32> to vector<2x8x1xf32>
    %320 = vector.broadcast %319 : vector<2x8x1xf32> to vector<2x8x8xf32>
    %321 = arith.divf %317, %320 : vector<2x8x8xf32>
    %322 = arith.truncf %321 : vector<2x8x8xf32> to vector<2x8x8xbf16>
    %323 = arith.truncf %307 : vector<2x8x16xf32> to vector<2x8x16xbf16>
    "tpu.trace_start"() <{level = 10 : i32, message = "bqk,bkd->bqd"}> : () -> ()
    %cst_139 = arith.constant dense<0.000000e+00> : vector<2x8x16xf32>
    %324 = tpu.matmul %322, %323, %cst_139 {dimension_numbers = #tpu.dot_dimension_numbers<[2], [1], [1], [2], [0, 0, 0, 1, 1, 2], [0], [0]>} : vector<2x8x8xbf16>, vector<2x8x16xbf16>, vector<2x8x16xf32> -> vector<2x8x16xf32>
    "tpu.trace_stop"() : () -> ()
    %325 = vector.shape_cast %324 : vector<2x8x16xf32> to vector<16x16xf32>
    %326 = tpu.concatenate %253, %277, %301, %325 in 1 : vector<16x16xf32>, vector<16x16xf32>, vector<16x16xf32>, vector<16x16xf32> -> vector<16x64xf32>
    %327 = arith.truncf %326 : vector<16x64xf32> to vector<16x64xbf16>
    %cst_140 = arith.constant dense<0.000000e+00> : vector<16x48xf32>
    %328 = tpu.matmul %327, %207, %cst_140 {dimension_numbers = #tpu.dot_dimension_numbers<[1], [0], [0], [1], [0, 0, 1, 1], [], []>} : vector<16x64xbf16>, vector<64x48xbf16>, vector<16x48xf32> -> vector<16x48xf32>
    %329 = vector.broadcast %209 : vector<1x48xf32> to vector<16x48xf32>
    %330 = arith.addf %328, %329 : vector<16x48xf32>
    %331 = arith.addf %201, %330 : vector<16x48xf32>
    %cst_141 = arith.constant dense<0.000000e+00> : vector<16xf32>
    %332 = vector.multi_reduction <add>, %331, %cst_141 [1] : vector<16x48xf32> to vector<16xf32>
    %333 = vector.shape_cast %332 : vector<16xf32> to vector<16x1xf32>
    %cst_142 = arith.constant 4.800000e+01 : f32
    %334 = vector.broadcast %cst_142 : f32 to vector<16x1xf32>
    %335 = arith.divf %333, %334 : vector<16x1xf32>
    %336 = vector.broadcast %335 : vector<16x1xf32> to vector<16x48xf32>
    %337 = arith.subf %331, %336 : vector<16x48xf32>
    %338 = arith.mulf %337, %337 : vector<16x48xf32>
    %cst_143 = arith.constant dense<0.000000e+00> : vector<16xf32>
    %339 = vector.multi_reduction <add>, %338, %cst_143 [1] : vector<16x48xf32> to vector<16xf32>
    %340 = vector.shape_cast %339 : vector<16xf32> to vector<16x1xf32>
    %cst_144 = arith.constant 4.800000e+01 : f32
    %341 = vector.broadcast %cst_144 : f32 to vector<16x1xf32>
    %342 = arith.divf %340, %341 : vector<16x1xf32>
    %343 = vector.broadcast %335 : vector<16x1xf32> to vector<16x48xf32>
    %344 = arith.subf %331, %343 : vector<16x48xf32>
    %cst_145 = arith.constant 9.99999974E-6 : f32
    %345 = vector.broadcast %cst_145 : f32 to vector<16x1xf32>
    %346 = arith.addf %342, %345 : vector<16x1xf32>
    %347 = math.rsqrt %346 : vector<16x1xf32>
    %348 = vector.broadcast %347 : vector<16x1xf32> to vector<16x48xf32>
    %349 = arith.mulf %344, %348 : vector<16x48xf32>
    %350 = vector.broadcast %211 : vector<1x48xf32> to vector<16x48xf32>
    %351 = arith.mulf %349, %350 : vector<16x48xf32>
    %352 = vector.broadcast %213 : vector<1x48xf32> to vector<16x48xf32>
    %353 = arith.addf %351, %352 : vector<16x48xf32>
    %354 = arith.truncf %353 : vector<16x48xf32> to vector<16x48xbf16>
    %cst_146 = arith.constant dense<0.000000e+00> : vector<16x192xf32>
    %355 = tpu.matmul %354, %215, %cst_146 {dimension_numbers = #tpu.dot_dimension_numbers<[1], [0], [0], [1], [0, 0, 1, 1], [], []>} : vector<16x48xbf16>, vector<48x192xbf16>, vector<16x192xf32> -> vector<16x192xf32>
    %356 = vector.broadcast %217 : vector<1x192xf32> to vector<16x192xf32>
    %357 = arith.addf %355, %356 : vector<16x192xf32>
    %cst_147 = arith.constant 0.000000e+00 : f32
    %358 = vector.broadcast %cst_147 : f32 to vector<16x192xf32>
    %359 = arith.maximumf %357, %358 : vector<16x192xf32>
    %360 = arith.truncf %359 : vector<16x192xf32> to vector<16x192xbf16>
    %cst_148 = arith.constant dense<0.000000e+00> : vector<16x48xf32>
    %361 = tpu.matmul %360, %219, %cst_148 {dimension_numbers = #tpu.dot_dimension_numbers<[1], [0], [0], [1], [0, 0, 1, 1], [], []>} : vector<16x192xbf16>, vector<192x48xbf16>, vector<16x48xf32> -> vector<16x48xf32>
    %362 = vector.broadcast %221 : vector<1x48xf32> to vector<16x48xf32>
    %363 = arith.addf %361, %362 : vector<16x48xf32>
    %364 = arith.addf %353, %363 : vector<16x48xf32>
    %cst_149 = arith.constant dense<0.000000e+00> : vector<16xf32>
    %365 = vector.multi_reduction <add>, %364, %cst_149 [1] : vector<16x48xf32> to vector<16xf32>
    %366 = vector.shape_cast %365 : vector<16xf32> to vector<16x1xf32>
    %cst_150 = arith.constant 4.800000e+01 : f32
    %367 = vector.broadcast %cst_150 : f32 to vector<16x1xf32>
    %368 = arith.divf %366, %367 : vector<16x1xf32>
    %369 = vector.broadcast %368 : vector<16x1xf32> to vector<16x48xf32>
    %370 = arith.subf %364, %369 : vector<16x48xf32>
    %371 = arith.mulf %370, %370 : vector<16x48xf32>
    %cst_151 = arith.constant dense<0.000000e+00> : vector<16xf32>
    %372 = vector.multi_reduction <add>, %371, %cst_151 [1] : vector<16x48xf32> to vector<16xf32>
    %373 = vector.shape_cast %372 : vector<16xf32> to vector<16x1xf32>
    %cst_152 = arith.constant 4.800000e+01 : f32
    %374 = vector.broadcast %cst_152 : f32 to vector<16x1xf32>
    %375 = arith.divf %373, %374 : vector<16x1xf32>
    %376 = vector.broadcast %368 : vector<16x1xf32> to vector<16x48xf32>
    %377 = arith.subf %364, %376 : vector<16x48xf32>
    %cst_153 = arith.constant 9.99999974E-6 : f32
    %378 = vector.broadcast %cst_153 : f32 to vector<16x1xf32>
    %379 = arith.addf %375, %378 : vector<16x1xf32>
    %380 = math.rsqrt %379 : vector<16x1xf32>
    %381 = vector.broadcast %380 : vector<16x1xf32> to vector<16x48xf32>
    %382 = arith.mulf %377, %381 : vector<16x48xf32>
    %383 = vector.broadcast %223 : vector<1x48xf32> to vector<16x48xf32>
    %384 = arith.mulf %382, %383 : vector<16x48xf32>
    %385 = vector.broadcast %225 : vector<1x48xf32> to vector<16x48xf32>
    %386 = arith.addf %384, %385 : vector<16x48xf32>
    %c2 = arith.constant 2 : index
    %c0_154 = arith.constant 0 : index
    %c0_155 = arith.constant 0 : index
    %387 = vector.load %arg6[%c2, %c0_154, %c0_155] : memref<4x48x192xbf16, #tpu.memory_space<vmem>>, vector<1x48x192xbf16>
    %388 = vector.shape_cast %387 : vector<1x48x192xbf16> to vector<48x192xbf16>
    %c2_156 = arith.constant 2 : index
    %c0_157 = arith.constant 0 : index
    %c0_158 = arith.constant 0 : index
    %389 = vector.load %arg7[%c2_156, %c0_157, %c0_158] : memref<4x1x192xf32, #tpu.memory_space<vmem>>, vector<1x1x192xf32>
    %390 = vector.shape_cast %389 : vector<1x1x192xf32> to vector<1x192xf32>
    %c2_159 = arith.constant 2 : index
    %c0_160 = arith.constant 0 : index
    %c0_161 = arith.constant 0 : index
    %391 = vector.load %arg8[%c2_159, %c0_160, %c0_161] : memref<4x64x48xbf16, #tpu.memory_space<vmem>>, vector<1x64x48xbf16>
    %392 = vector.shape_cast %391 : vector<1x64x48xbf16> to vector<64x48xbf16>
    %c2_162 = arith.constant 2 : index
    %c0_163 = arith.constant 0 : index
    %c0_164 = arith.constant 0 : index
    %393 = vector.load %arg9[%c2_162, %c0_163, %c0_164] : memref<4x1x48xf32, #tpu.memory_space<vmem>>, vector<1x1x48xf32>
    %394 = vector.shape_cast %393 : vector<1x1x48xf32> to vector<1x48xf32>
    %c2_165 = arith.constant 2 : index
    %c0_166 = arith.constant 0 : index
    %c0_167 = arith.constant 0 : index
    %395 = vector.load %arg10[%c2_165, %c0_166, %c0_167] : memref<4x1x48xf32, #tpu.memory_space<vmem>>, vector<1x1x48xf32>
    %396 = vector.shape_cast %395 : vector<1x1x48xf32> to vector<1x48xf32>
    %c2_168 = arith.constant 2 : index
    %c0_169 = arith.constant 0 : index
    %c0_170 = arith.constant 0 : index
    %397 = vector.load %arg11[%c2_168, %c0_169, %c0_170] : memref<4x1x48xf32, #tpu.memory_space<vmem>>, vector<1x1x48xf32>
    %398 = vector.shape_cast %397 : vector<1x1x48xf32> to vector<1x48xf32>
    %c2_171 = arith.constant 2 : index
    %c0_172 = arith.constant 0 : index
    %c0_173 = arith.constant 0 : index
    %399 = vector.load %arg12[%c2_171, %c0_172, %c0_173] : memref<4x48x192xbf16, #tpu.memory_space<vmem>>, vector<1x48x192xbf16>
    %400 = vector.shape_cast %399 : vector<1x48x192xbf16> to vector<48x192xbf16>
    %c2_174 = arith.constant 2 : index
    %c0_175 = arith.constant 0 : index
    %c0_176 = arith.constant 0 : index
    %401 = vector.load %arg13[%c2_174, %c0_175, %c0_176] : memref<4x1x192xf32, #tpu.memory_space<vmem>>, vector<1x1x192xf32>
    %402 = vector.shape_cast %401 : vector<1x1x192xf32> to vector<1x192xf32>
    %c2_177 = arith.constant 2 : index
    %c0_178 = arith.constant 0 : index
    %c0_179 = arith.constant 0 : index
    %403 = vector.load %arg14[%c2_177, %c0_178, %c0_179] : memref<4x192x48xbf16, #tpu.memory_space<vmem>>, vector<1x192x48xbf16>
    %404 = vector.shape_cast %403 : vector<1x192x48xbf16> to vector<192x48xbf16>
    %c2_180 = arith.constant 2 : index
    %c0_181 = arith.constant 0 : index
    %c0_182 = arith.constant 0 : index
    %405 = vector.load %arg15[%c2_180, %c0_181, %c0_182] : memref<4x1x48xf32, #tpu.memory_space<vmem>>, vector<1x1x48xf32>
    %406 = vector.shape_cast %405 : vector<1x1x48xf32> to vector<1x48xf32>
    %c2_183 = arith.constant 2 : index
    %c0_184 = arith.constant 0 : index
    %c0_185 = arith.constant 0 : index
    %407 = vector.load %arg16[%c2_183, %c0_184, %c0_185] : memref<4x1x48xf32, #tpu.memory_space<vmem>>, vector<1x1x48xf32>
    %408 = vector.shape_cast %407 : vector<1x1x48xf32> to vector<1x48xf32>
    %c2_186 = arith.constant 2 : index
    %c0_187 = arith.constant 0 : index
    %c0_188 = arith.constant 0 : index
    %409 = vector.load %arg17[%c2_186, %c0_187, %c0_188] : memref<4x1x48xf32, #tpu.memory_space<vmem>>, vector<1x1x48xf32>
    %410 = vector.shape_cast %409 : vector<1x1x48xf32> to vector<1x48xf32>
    %411 = arith.truncf %386 : vector<16x48xf32> to vector<16x48xbf16>
    %cst_189 = arith.constant dense<0.000000e+00> : vector<16x192xf32>
    %412 = tpu.matmul %411, %388, %cst_189 {dimension_numbers = #tpu.dot_dimension_numbers<[1], [0], [0], [1], [0, 0, 1, 1], [], []>} : vector<16x48xbf16>, vector<48x192xbf16>, vector<16x192xf32> -> vector<16x192xf32>
    %413 = vector.broadcast %390 : vector<1x192xf32> to vector<16x192xf32>
    %414 = arith.addf %412, %413 : vector<16x192xf32>
    %415 = vector.extract_strided_slice %414 {offsets = [0, 0], sizes = [16, 16], strides = [1, 1]} : vector<16x192xf32> to vector<16x16xf32>
    %416 = vector.shape_cast %415 : vector<16x16xf32> to vector<2x8x16xf32>
    %417 = vector.extract_strided_slice %414 {offsets = [0, 64], sizes = [16, 16], strides = [1, 1]} : vector<16x192xf32> to vector<16x16xf32>
    %418 = vector.shape_cast %417 : vector<16x16xf32> to vector<2x8x16xf32>
    %419 = vector.extract_strided_slice %414 {offsets = [0, 128], sizes = [16, 16], strides = [1, 1]} : vector<16x192xf32> to vector<16x16xf32>
    %420 = vector.shape_cast %419 : vector<16x16xf32> to vector<2x8x16xf32>
    %421 = arith.truncf %416 : vector<2x8x16xf32> to vector<2x8x16xbf16>
    %422 = arith.truncf %418 : vector<2x8x16xf32> to vector<2x8x16xbf16>
    "tpu.trace_start"() <{level = 10 : i32, message = "bqd,bkd->bqk"}> : () -> ()
    %cst_190 = arith.constant dense<0.000000e+00> : vector<2x8x8xf32>
    %423 = tpu.matmul %421, %422, %cst_190 {dimension_numbers = #tpu.dot_dimension_numbers<[2], [2], [1], [1], [0, 0, 0, 1, 1, 1], [0], [0]>} : vector<2x8x16xbf16>, vector<2x8x16xbf16>, vector<2x8x8xf32> -> vector<2x8x8xf32>
    "tpu.trace_stop"() : () -> ()
    %cst_191 = arith.constant 0.288675129 : f32
    %424 = vector.broadcast %cst_191 : f32 to vector<2x8x8xf32>
    %425 = arith.mulf %423, %424 : vector<2x8x8xf32>
    %cst_192 = arith.constant dense<0xFF800000> : vector<2x8xf32>
    %426 = vector.multi_reduction <maximumf>, %425, %cst_192 [2] : vector<2x8x8xf32> to vector<2x8xf32>
    %427 = vector.shape_cast %426 : vector<2x8xf32> to vector<2x8x1xf32>
    %428 = vector.broadcast %427 : vector<2x8x1xf32> to vector<2x8x8xf32>
    %429 = arith.subf %425, %428 : vector<2x8x8xf32>
    %430 = math.exp %429 : vector<2x8x8xf32>
    %cst_193 = arith.constant dense<0.000000e+00> : vector<2x8xf32>
    %431 = vector.multi_reduction <add>, %430, %cst_193 [2] : vector<2x8x8xf32> to vector<2x8xf32>
    %432 = vector.shape_cast %431 : vector<2x8xf32> to vector<2x8x1xf32>
    %433 = vector.broadcast %432 : vector<2x8x1xf32> to vector<2x8x8xf32>
    %434 = arith.divf %430, %433 : vector<2x8x8xf32>
    %435 = arith.truncf %434 : vector<2x8x8xf32> to vector<2x8x8xbf16>
    %436 = arith.truncf %420 : vector<2x8x16xf32> to vector<2x8x16xbf16>
    "tpu.trace_start"() <{level = 10 : i32, message = "bqk,bkd->bqd"}> : () -> ()
    %cst_194 = arith.constant dense<0.000000e+00> : vector<2x8x16xf32>
    %437 = tpu.matmul %435, %436, %cst_194 {dimension_numbers = #tpu.dot_dimension_numbers<[2], [1], [1], [2], [0, 0, 0, 1, 1, 2], [0], [0]>} : vector<2x8x8xbf16>, vector<2x8x16xbf16>, vector<2x8x16xf32> -> vector<2x8x16xf32>
    "tpu.trace_stop"() : () -> ()
    %438 = vector.shape_cast %437 : vector<2x8x16xf32> to vector<16x16xf32>
    %439 = vector.extract_strided_slice %414 {offsets = [0, 16], sizes = [16, 16], strides = [1, 1]} : vector<16x192xf32> to vector<16x16xf32>
    %440 = vector.shape_cast %439 : vector<16x16xf32> to vector<2x8x16xf32>
    %441 = vector.extract_strided_slice %414 {offsets = [0, 80], sizes = [16, 16], strides = [1, 1]} : vector<16x192xf32> to vector<16x16xf32>
    %442 = vector.shape_cast %441 : vector<16x16xf32> to vector<2x8x16xf32>
    %443 = vector.extract_strided_slice %414 {offsets = [0, 144], sizes = [16, 16], strides = [1, 1]} : vector<16x192xf32> to vector<16x16xf32>
    %444 = vector.shape_cast %443 : vector<16x16xf32> to vector<2x8x16xf32>
    %445 = arith.truncf %440 : vector<2x8x16xf32> to vector<2x8x16xbf16>
    %446 = arith.truncf %442 : vector<2x8x16xf32> to vector<2x8x16xbf16>
    "tpu.trace_start"() <{level = 10 : i32, message = "bqd,bkd->bqk"}> : () -> ()
    %cst_195 = arith.constant dense<0.000000e+00> : vector<2x8x8xf32>
    %447 = tpu.matmul %445, %446, %cst_195 {dimension_numbers = #tpu.dot_dimension_numbers<[2], [2], [1], [1], [0, 0, 0, 1, 1, 1], [0], [0]>} : vector<2x8x16xbf16>, vector<2x8x16xbf16>, vector<2x8x8xf32> -> vector<2x8x8xf32>
    "tpu.trace_stop"() : () -> ()
    %cst_196 = arith.constant 0.288675129 : f32
    %448 = vector.broadcast %cst_196 : f32 to vector<2x8x8xf32>
    %449 = arith.mulf %447, %448 : vector<2x8x8xf32>
    %cst_197 = arith.constant dense<0xFF800000> : vector<2x8xf32>
    %450 = vector.multi_reduction <maximumf>, %449, %cst_197 [2] : vector<2x8x8xf32> to vector<2x8xf32>
    %451 = vector.shape_cast %450 : vector<2x8xf32> to vector<2x8x1xf32>
    %452 = vector.broadcast %451 : vector<2x8x1xf32> to vector<2x8x8xf32>
    %453 = arith.subf %449, %452 : vector<2x8x8xf32>
    %454 = math.exp %453 : vector<2x8x8xf32>
    %cst_198 = arith.constant dense<0.000000e+00> : vector<2x8xf32>
    %455 = vector.multi_reduction <add>, %454, %cst_198 [2] : vector<2x8x8xf32> to vector<2x8xf32>
    %456 = vector.shape_cast %455 : vector<2x8xf32> to vector<2x8x1xf32>
    %457 = vector.broadcast %456 : vector<2x8x1xf32> to vector<2x8x8xf32>
    %458 = arith.divf %454, %457 : vector<2x8x8xf32>
    %459 = arith.truncf %458 : vector<2x8x8xf32> to vector<2x8x8xbf16>
    %460 = arith.truncf %444 : vector<2x8x16xf32> to vector<2x8x16xbf16>
    "tpu.trace_start"() <{level = 10 : i32, message = "bqk,bkd->bqd"}> : () -> ()
    %cst_199 = arith.constant dense<0.000000e+00> : vector<2x8x16xf32>
    %461 = tpu.matmul %459, %460, %cst_199 {dimension_numbers = #tpu.dot_dimension_numbers<[2], [1], [1], [2], [0, 0, 0, 1, 1, 2], [0], [0]>} : vector<2x8x8xbf16>, vector<2x8x16xbf16>, vector<2x8x16xf32> -> vector<2x8x16xf32>
    "tpu.trace_stop"() : () -> ()
    %462 = vector.shape_cast %461 : vector<2x8x16xf32> to vector<16x16xf32>
    %463 = vector.extract_strided_slice %414 {offsets = [0, 32], sizes = [16, 16], strides = [1, 1]} : vector<16x192xf32> to vector<16x16xf32>
    %464 = vector.shape_cast %463 : vector<16x16xf32> to vector<2x8x16xf32>
    %465 = vector.extract_strided_slice %414 {offsets = [0, 96], sizes = [16, 16], strides = [1, 1]} : vector<16x192xf32> to vector<16x16xf32>
    %466 = vector.shape_cast %465 : vector<16x16xf32> to vector<2x8x16xf32>
    %467 = vector.extract_strided_slice %414 {offsets = [0, 160], sizes = [16, 16], strides = [1, 1]} : vector<16x192xf32> to vector<16x16xf32>
    %468 = vector.shape_cast %467 : vector<16x16xf32> to vector<2x8x16xf32>
    %469 = arith.truncf %464 : vector<2x8x16xf32> to vector<2x8x16xbf16>
    %470 = arith.truncf %466 : vector<2x8x16xf32> to vector<2x8x16xbf16>
    "tpu.trace_start"() <{level = 10 : i32, message = "bqd,bkd->bqk"}> : () -> ()
    %cst_200 = arith.constant dense<0.000000e+00> : vector<2x8x8xf32>
    %471 = tpu.matmul %469, %470, %cst_200 {dimension_numbers = #tpu.dot_dimension_numbers<[2], [2], [1], [1], [0, 0, 0, 1, 1, 1], [0], [0]>} : vector<2x8x16xbf16>, vector<2x8x16xbf16>, vector<2x8x8xf32> -> vector<2x8x8xf32>
    "tpu.trace_stop"() : () -> ()
    %cst_201 = arith.constant 0.288675129 : f32
    %472 = vector.broadcast %cst_201 : f32 to vector<2x8x8xf32>
    %473 = arith.mulf %471, %472 : vector<2x8x8xf32>
    %cst_202 = arith.constant dense<0xFF800000> : vector<2x8xf32>
    %474 = vector.multi_reduction <maximumf>, %473, %cst_202 [2] : vector<2x8x8xf32> to vector<2x8xf32>
    %475 = vector.shape_cast %474 : vector<2x8xf32> to vector<2x8x1xf32>
    %476 = vector.broadcast %475 : vector<2x8x1xf32> to vector<2x8x8xf32>
    %477 = arith.subf %473, %476 : vector<2x8x8xf32>
    %478 = math.exp %477 : vector<2x8x8xf32>
    %cst_203 = arith.constant dense<0.000000e+00> : vector<2x8xf32>
    %479 = vector.multi_reduction <add>, %478, %cst_203 [2] : vector<2x8x8xf32> to vector<2x8xf32>
    %480 = vector.shape_cast %479 : vector<2x8xf32> to vector<2x8x1xf32>
    %481 = vector.broadcast %480 : vector<2x8x1xf32> to vector<2x8x8xf32>
    %482 = arith.divf %478, %481 : vector<2x8x8xf32>
    %483 = arith.truncf %482 : vector<2x8x8xf32> to vector<2x8x8xbf16>
    %484 = arith.truncf %468 : vector<2x8x16xf32> to vector<2x8x16xbf16>
    "tpu.trace_start"() <{level = 10 : i32, message = "bqk,bkd->bqd"}> : () -> ()
    %cst_204 = arith.constant dense<0.000000e+00> : vector<2x8x16xf32>
    %485 = tpu.matmul %483, %484, %cst_204 {dimension_numbers = #tpu.dot_dimension_numbers<[2], [1], [1], [2], [0, 0, 0, 1, 1, 2], [0], [0]>} : vector<2x8x8xbf16>, vector<2x8x16xbf16>, vector<2x8x16xf32> -> vector<2x8x16xf32>
    "tpu.trace_stop"() : () -> ()
    %486 = vector.shape_cast %485 : vector<2x8x16xf32> to vector<16x16xf32>
    %487 = vector.extract_strided_slice %414 {offsets = [0, 48], sizes = [16, 16], strides = [1, 1]} : vector<16x192xf32> to vector<16x16xf32>
    %488 = vector.shape_cast %487 : vector<16x16xf32> to vector<2x8x16xf32>
    %489 = vector.extract_strided_slice %414 {offsets = [0, 112], sizes = [16, 16], strides = [1, 1]} : vector<16x192xf32> to vector<16x16xf32>
    %490 = vector.shape_cast %489 : vector<16x16xf32> to vector<2x8x16xf32>
    %491 = vector.extract_strided_slice %414 {offsets = [0, 176], sizes = [16, 16], strides = [1, 1]} : vector<16x192xf32> to vector<16x16xf32>
    %492 = vector.shape_cast %491 : vector<16x16xf32> to vector<2x8x16xf32>
    %493 = arith.truncf %488 : vector<2x8x16xf32> to vector<2x8x16xbf16>
    %494 = arith.truncf %490 : vector<2x8x16xf32> to vector<2x8x16xbf16>
    "tpu.trace_start"() <{level = 10 : i32, message = "bqd,bkd->bqk"}> : () -> ()
    %cst_205 = arith.constant dense<0.000000e+00> : vector<2x8x8xf32>
    %495 = tpu.matmul %493, %494, %cst_205 {dimension_numbers = #tpu.dot_dimension_numbers<[2], [2], [1], [1], [0, 0, 0, 1, 1, 1], [0], [0]>} : vector<2x8x16xbf16>, vector<2x8x16xbf16>, vector<2x8x8xf32> -> vector<2x8x8xf32>
    "tpu.trace_stop"() : () -> ()
    %cst_206 = arith.constant 0.288675129 : f32
    %496 = vector.broadcast %cst_206 : f32 to vector<2x8x8xf32>
    %497 = arith.mulf %495, %496 : vector<2x8x8xf32>
    %cst_207 = arith.constant dense<0xFF800000> : vector<2x8xf32>
    %498 = vector.multi_reduction <maximumf>, %497, %cst_207 [2] : vector<2x8x8xf32> to vector<2x8xf32>
    %499 = vector.shape_cast %498 : vector<2x8xf32> to vector<2x8x1xf32>
    %500 = vector.broadcast %499 : vector<2x8x1xf32> to vector<2x8x8xf32>
    %501 = arith.subf %497, %500 : vector<2x8x8xf32>
    %502 = math.exp %501 : vector<2x8x8xf32>
    %cst_208 = arith.constant dense<0.000000e+00> : vector<2x8xf32>
    %503 = vector.multi_reduction <add>, %502, %cst_208 [2] : vector<2x8x8xf32> to vector<2x8xf32>
    %504 = vector.shape_cast %503 : vector<2x8xf32> to vector<2x8x1xf32>
    %505 = vector.broadcast %504 : vector<2x8x1xf32> to vector<2x8x8xf32>
    %506 = arith.divf %502, %505 : vector<2x8x8xf32>
    %507 = arith.truncf %506 : vector<2x8x8xf32> to vector<2x8x8xbf16>
    %508 = arith.truncf %492 : vector<2x8x16xf32> to vector<2x8x16xbf16>
    "tpu.trace_start"() <{level = 10 : i32, message = "bqk,bkd->bqd"}> : () -> ()
    %cst_209 = arith.constant dense<0.000000e+00> : vector<2x8x16xf32>
    %509 = tpu.matmul %507, %508, %cst_209 {dimension_numbers = #tpu.dot_dimension_numbers<[2], [1], [1], [2], [0, 0, 0, 1, 1, 2], [0], [0]>} : vector<2x8x8xbf16>, vector<2x8x16xbf16>, vector<2x8x16xf32> -> vector<2x8x16xf32>
    "tpu.trace_stop"() : () -> ()
    %510 = vector.shape_cast %509 : vector<2x8x16xf32> to vector<16x16xf32>
    %511 = tpu.concatenate %438, %462, %486, %510 in 1 : vector<16x16xf32>, vector<16x16xf32>, vector<16x16xf32>, vector<16x16xf32> -> vector<16x64xf32>
    %512 = arith.truncf %511 : vector<16x64xf32> to vector<16x64xbf16>
    %cst_210 = arith.constant dense<0.000000e+00> : vector<16x48xf32>
    %513 = tpu.matmul %512, %392, %cst_210 {dimension_numbers = #tpu.dot_dimension_numbers<[1], [0], [0], [1], [0, 0, 1, 1], [], []>} : vector<16x64xbf16>, vector<64x48xbf16>, vector<16x48xf32> -> vector<16x48xf32>
    %514 = vector.broadcast %394 : vector<1x48xf32> to vector<16x48xf32>
    %515 = arith.addf %513, %514 : vector<16x48xf32>
    %516 = arith.addf %386, %515 : vector<16x48xf32>
    %cst_211 = arith.constant dense<0.000000e+00> : vector<16xf32>
    %517 = vector.multi_reduction <add>, %516, %cst_211 [1] : vector<16x48xf32> to vector<16xf32>
    %518 = vector.shape_cast %517 : vector<16xf32> to vector<16x1xf32>
    %cst_212 = arith.constant 4.800000e+01 : f32
    %519 = vector.broadcast %cst_212 : f32 to vector<16x1xf32>
    %520 = arith.divf %518, %519 : vector<16x1xf32>
    %521 = vector.broadcast %520 : vector<16x1xf32> to vector<16x48xf32>
    %522 = arith.subf %516, %521 : vector<16x48xf32>
    %523 = arith.mulf %522, %522 : vector<16x48xf32>
    %cst_213 = arith.constant dense<0.000000e+00> : vector<16xf32>
    %524 = vector.multi_reduction <add>, %523, %cst_213 [1] : vector<16x48xf32> to vector<16xf32>
    %525 = vector.shape_cast %524 : vector<16xf32> to vector<16x1xf32>
    %cst_214 = arith.constant 4.800000e+01 : f32
    %526 = vector.broadcast %cst_214 : f32 to vector<16x1xf32>
    %527 = arith.divf %525, %526 : vector<16x1xf32>
    %528 = vector.broadcast %520 : vector<16x1xf32> to vector<16x48xf32>
    %529 = arith.subf %516, %528 : vector<16x48xf32>
    %cst_215 = arith.constant 9.99999974E-6 : f32
    %530 = vector.broadcast %cst_215 : f32 to vector<16x1xf32>
    %531 = arith.addf %527, %530 : vector<16x1xf32>
    %532 = math.rsqrt %531 : vector<16x1xf32>
    %533 = vector.broadcast %532 : vector<16x1xf32> to vector<16x48xf32>
    %534 = arith.mulf %529, %533 : vector<16x48xf32>
    %535 = vector.broadcast %396 : vector<1x48xf32> to vector<16x48xf32>
    %536 = arith.mulf %534, %535 : vector<16x48xf32>
    %537 = vector.broadcast %398 : vector<1x48xf32> to vector<16x48xf32>
    %538 = arith.addf %536, %537 : vector<16x48xf32>
    %539 = arith.truncf %538 : vector<16x48xf32> to vector<16x48xbf16>
    %cst_216 = arith.constant dense<0.000000e+00> : vector<16x192xf32>
    %540 = tpu.matmul %539, %400, %cst_216 {dimension_numbers = #tpu.dot_dimension_numbers<[1], [0], [0], [1], [0, 0, 1, 1], [], []>} : vector<16x48xbf16>, vector<48x192xbf16>, vector<16x192xf32> -> vector<16x192xf32>
    %541 = vector.broadcast %402 : vector<1x192xf32> to vector<16x192xf32>
    %542 = arith.addf %540, %541 : vector<16x192xf32>
    %cst_217 = arith.constant 0.000000e+00 : f32
    %543 = vector.broadcast %cst_217 : f32 to vector<16x192xf32>
    %544 = arith.maximumf %542, %543 : vector<16x192xf32>
    %545 = arith.truncf %544 : vector<16x192xf32> to vector<16x192xbf16>
    %cst_218 = arith.constant dense<0.000000e+00> : vector<16x48xf32>
    %546 = tpu.matmul %545, %404, %cst_218 {dimension_numbers = #tpu.dot_dimension_numbers<[1], [0], [0], [1], [0, 0, 1, 1], [], []>} : vector<16x192xbf16>, vector<192x48xbf16>, vector<16x48xf32> -> vector<16x48xf32>
    %547 = vector.broadcast %406 : vector<1x48xf32> to vector<16x48xf32>
    %548 = arith.addf %546, %547 : vector<16x48xf32>
    %549 = arith.addf %538, %548 : vector<16x48xf32>
    %cst_219 = arith.constant dense<0.000000e+00> : vector<16xf32>
    %550 = vector.multi_reduction <add>, %549, %cst_219 [1] : vector<16x48xf32> to vector<16xf32>
    %551 = vector.shape_cast %550 : vector<16xf32> to vector<16x1xf32>
    %cst_220 = arith.constant 4.800000e+01 : f32
    %552 = vector.broadcast %cst_220 : f32 to vector<16x1xf32>
    %553 = arith.divf %551, %552 : vector<16x1xf32>
    %554 = vector.broadcast %553 : vector<16x1xf32> to vector<16x48xf32>
    %555 = arith.subf %549, %554 : vector<16x48xf32>
    %556 = arith.mulf %555, %555 : vector<16x48xf32>
    %cst_221 = arith.constant dense<0.000000e+00> : vector<16xf32>
    %557 = vector.multi_reduction <add>, %556, %cst_221 [1] : vector<16x48xf32> to vector<16xf32>
    %558 = vector.shape_cast %557 : vector<16xf32> to vector<16x1xf32>
    %cst_222 = arith.constant 4.800000e+01 : f32
    %559 = vector.broadcast %cst_222 : f32 to vector<16x1xf32>
    %560 = arith.divf %558, %559 : vector<16x1xf32>
    %561 = vector.broadcast %553 : vector<16x1xf32> to vector<16x48xf32>
    %562 = arith.subf %549, %561 : vector<16x48xf32>
    %cst_223 = arith.constant 9.99999974E-6 : f32
    %563 = vector.broadcast %cst_223 : f32 to vector<16x1xf32>
    %564 = arith.addf %560, %563 : vector<16x1xf32>
    %565 = math.rsqrt %564 : vector<16x1xf32>
    %566 = vector.broadcast %565 : vector<16x1xf32> to vector<16x48xf32>
    %567 = arith.mulf %562, %566 : vector<16x48xf32>
    %568 = vector.broadcast %408 : vector<1x48xf32> to vector<16x48xf32>
    %569 = arith.mulf %567, %568 : vector<16x48xf32>
    %570 = vector.broadcast %410 : vector<1x48xf32> to vector<16x48xf32>
    %571 = arith.addf %569, %570 : vector<16x48xf32>
    %c3 = arith.constant 3 : index
    %c0_224 = arith.constant 0 : index
    %c0_225 = arith.constant 0 : index
    %572 = vector.load %arg6[%c3, %c0_224, %c0_225] : memref<4x48x192xbf16, #tpu.memory_space<vmem>>, vector<1x48x192xbf16>
    %573 = vector.shape_cast %572 : vector<1x48x192xbf16> to vector<48x192xbf16>
    %c3_226 = arith.constant 3 : index
    %c0_227 = arith.constant 0 : index
    %c0_228 = arith.constant 0 : index
    %574 = vector.load %arg7[%c3_226, %c0_227, %c0_228] : memref<4x1x192xf32, #tpu.memory_space<vmem>>, vector<1x1x192xf32>
    %575 = vector.shape_cast %574 : vector<1x1x192xf32> to vector<1x192xf32>
    %c3_229 = arith.constant 3 : index
    %c0_230 = arith.constant 0 : index
    %c0_231 = arith.constant 0 : index
    %576 = vector.load %arg8[%c3_229, %c0_230, %c0_231] : memref<4x64x48xbf16, #tpu.memory_space<vmem>>, vector<1x64x48xbf16>
    %577 = vector.shape_cast %576 : vector<1x64x48xbf16> to vector<64x48xbf16>
    %c3_232 = arith.constant 3 : index
    %c0_233 = arith.constant 0 : index
    %c0_234 = arith.constant 0 : index
    %578 = vector.load %arg9[%c3_232, %c0_233, %c0_234] : memref<4x1x48xf32, #tpu.memory_space<vmem>>, vector<1x1x48xf32>
    %579 = vector.shape_cast %578 : vector<1x1x48xf32> to vector<1x48xf32>
    %c3_235 = arith.constant 3 : index
    %c0_236 = arith.constant 0 : index
    %c0_237 = arith.constant 0 : index
    %580 = vector.load %arg10[%c3_235, %c0_236, %c0_237] : memref<4x1x48xf32, #tpu.memory_space<vmem>>, vector<1x1x48xf32>
    %581 = vector.shape_cast %580 : vector<1x1x48xf32> to vector<1x48xf32>
    %c3_238 = arith.constant 3 : index
    %c0_239 = arith.constant 0 : index
    %c0_240 = arith.constant 0 : index
    %582 = vector.load %arg11[%c3_238, %c0_239, %c0_240] : memref<4x1x48xf32, #tpu.memory_space<vmem>>, vector<1x1x48xf32>
    %583 = vector.shape_cast %582 : vector<1x1x48xf32> to vector<1x48xf32>
    %c3_241 = arith.constant 3 : index
    %c0_242 = arith.constant 0 : index
    %c0_243 = arith.constant 0 : index
    %584 = vector.load %arg12[%c3_241, %c0_242, %c0_243] : memref<4x48x192xbf16, #tpu.memory_space<vmem>>, vector<1x48x192xbf16>
    %585 = vector.shape_cast %584 : vector<1x48x192xbf16> to vector<48x192xbf16>
    %c3_244 = arith.constant 3 : index
    %c0_245 = arith.constant 0 : index
    %c0_246 = arith.constant 0 : index
    %586 = vector.load %arg13[%c3_244, %c0_245, %c0_246] : memref<4x1x192xf32, #tpu.memory_space<vmem>>, vector<1x1x192xf32>
    %587 = vector.shape_cast %586 : vector<1x1x192xf32> to vector<1x192xf32>
    %c3_247 = arith.constant 3 : index
    %c0_248 = arith.constant 0 : index
    %c0_249 = arith.constant 0 : index
    %588 = vector.load %arg14[%c3_247, %c0_248, %c0_249] : memref<4x192x48xbf16, #tpu.memory_space<vmem>>, vector<1x192x48xbf16>
    %589 = vector.shape_cast %588 : vector<1x192x48xbf16> to vector<192x48xbf16>
    %c3_250 = arith.constant 3 : index
    %c0_251 = arith.constant 0 : index
    %c0_252 = arith.constant 0 : index
    %590 = vector.load %arg15[%c3_250, %c0_251, %c0_252] : memref<4x1x48xf32, #tpu.memory_space<vmem>>, vector<1x1x48xf32>
    %591 = vector.shape_cast %590 : vector<1x1x48xf32> to vector<1x48xf32>
    %c3_253 = arith.constant 3 : index
    %c0_254 = arith.constant 0 : index
    %c0_255 = arith.constant 0 : index
    %592 = vector.load %arg16[%c3_253, %c0_254, %c0_255] : memref<4x1x48xf32, #tpu.memory_space<vmem>>, vector<1x1x48xf32>
    %593 = vector.shape_cast %592 : vector<1x1x48xf32> to vector<1x48xf32>
    %c3_256 = arith.constant 3 : index
    %c0_257 = arith.constant 0 : index
    %c0_258 = arith.constant 0 : index
    %594 = vector.load %arg17[%c3_256, %c0_257, %c0_258] : memref<4x1x48xf32, #tpu.memory_space<vmem>>, vector<1x1x48xf32>
    %595 = vector.shape_cast %594 : vector<1x1x48xf32> to vector<1x48xf32>
    %596 = arith.truncf %571 : vector<16x48xf32> to vector<16x48xbf16>
    %cst_259 = arith.constant dense<0.000000e+00> : vector<16x192xf32>
    %597 = tpu.matmul %596, %573, %cst_259 {dimension_numbers = #tpu.dot_dimension_numbers<[1], [0], [0], [1], [0, 0, 1, 1], [], []>} : vector<16x48xbf16>, vector<48x192xbf16>, vector<16x192xf32> -> vector<16x192xf32>
    %598 = vector.broadcast %575 : vector<1x192xf32> to vector<16x192xf32>
    %599 = arith.addf %597, %598 : vector<16x192xf32>
    %600 = vector.extract_strided_slice %599 {offsets = [0, 0], sizes = [16, 16], strides = [1, 1]} : vector<16x192xf32> to vector<16x16xf32>
    %601 = vector.shape_cast %600 : vector<16x16xf32> to vector<2x8x16xf32>
    %602 = vector.extract_strided_slice %599 {offsets = [0, 64], sizes = [16, 16], strides = [1, 1]} : vector<16x192xf32> to vector<16x16xf32>
    %603 = vector.shape_cast %602 : vector<16x16xf32> to vector<2x8x16xf32>
    %604 = vector.extract_strided_slice %599 {offsets = [0, 128], sizes = [16, 16], strides = [1, 1]} : vector<16x192xf32> to vector<16x16xf32>
    %605 = vector.shape_cast %604 : vector<16x16xf32> to vector<2x8x16xf32>
    %606 = arith.truncf %601 : vector<2x8x16xf32> to vector<2x8x16xbf16>
    %607 = arith.truncf %603 : vector<2x8x16xf32> to vector<2x8x16xbf16>
    "tpu.trace_start"() <{level = 10 : i32, message = "bqd,bkd->bqk"}> : () -> ()
    %cst_260 = arith.constant dense<0.000000e+00> : vector<2x8x8xf32>
    %608 = tpu.matmul %606, %607, %cst_260 {dimension_numbers = #tpu.dot_dimension_numbers<[2], [2], [1], [1], [0, 0, 0, 1, 1, 1], [0], [0]>} : vector<2x8x16xbf16>, vector<2x8x16xbf16>, vector<2x8x8xf32> -> vector<2x8x8xf32>
    "tpu.trace_stop"() : () -> ()
    %cst_261 = arith.constant 0.288675129 : f32
    %609 = vector.broadcast %cst_261 : f32 to vector<2x8x8xf32>
    %610 = arith.mulf %608, %609 : vector<2x8x8xf32>
    %cst_262 = arith.constant dense<0xFF800000> : vector<2x8xf32>
    %611 = vector.multi_reduction <maximumf>, %610, %cst_262 [2] : vector<2x8x8xf32> to vector<2x8xf32>
    %612 = vector.shape_cast %611 : vector<2x8xf32> to vector<2x8x1xf32>
    %613 = vector.broadcast %612 : vector<2x8x1xf32> to vector<2x8x8xf32>
    %614 = arith.subf %610, %613 : vector<2x8x8xf32>
    %615 = math.exp %614 : vector<2x8x8xf32>
    %cst_263 = arith.constant dense<0.000000e+00> : vector<2x8xf32>
    %616 = vector.multi_reduction <add>, %615, %cst_263 [2] : vector<2x8x8xf32> to vector<2x8xf32>
    %617 = vector.shape_cast %616 : vector<2x8xf32> to vector<2x8x1xf32>
    %618 = vector.broadcast %617 : vector<2x8x1xf32> to vector<2x8x8xf32>
    %619 = arith.divf %615, %618 : vector<2x8x8xf32>
    %620 = arith.truncf %619 : vector<2x8x8xf32> to vector<2x8x8xbf16>
    %621 = arith.truncf %605 : vector<2x8x16xf32> to vector<2x8x16xbf16>
    "tpu.trace_start"() <{level = 10 : i32, message = "bqk,bkd->bqd"}> : () -> ()
    %cst_264 = arith.constant dense<0.000000e+00> : vector<2x8x16xf32>
    %622 = tpu.matmul %620, %621, %cst_264 {dimension_numbers = #tpu.dot_dimension_numbers<[2], [1], [1], [2], [0, 0, 0, 1, 1, 2], [0], [0]>} : vector<2x8x8xbf16>, vector<2x8x16xbf16>, vector<2x8x16xf32> -> vector<2x8x16xf32>
    "tpu.trace_stop"() : () -> ()
    %623 = vector.shape_cast %622 : vector<2x8x16xf32> to vector<16x16xf32>
    %624 = vector.extract_strided_slice %599 {offsets = [0, 16], sizes = [16, 16], strides = [1, 1]} : vector<16x192xf32> to vector<16x16xf32>
    %625 = vector.shape_cast %624 : vector<16x16xf32> to vector<2x8x16xf32>
    %626 = vector.extract_strided_slice %599 {offsets = [0, 80], sizes = [16, 16], strides = [1, 1]} : vector<16x192xf32> to vector<16x16xf32>
    %627 = vector.shape_cast %626 : vector<16x16xf32> to vector<2x8x16xf32>
    %628 = vector.extract_strided_slice %599 {offsets = [0, 144], sizes = [16, 16], strides = [1, 1]} : vector<16x192xf32> to vector<16x16xf32>
    %629 = vector.shape_cast %628 : vector<16x16xf32> to vector<2x8x16xf32>
    %630 = arith.truncf %625 : vector<2x8x16xf32> to vector<2x8x16xbf16>
    %631 = arith.truncf %627 : vector<2x8x16xf32> to vector<2x8x16xbf16>
    "tpu.trace_start"() <{level = 10 : i32, message = "bqd,bkd->bqk"}> : () -> ()
    %cst_265 = arith.constant dense<0.000000e+00> : vector<2x8x8xf32>
    %632 = tpu.matmul %630, %631, %cst_265 {dimension_numbers = #tpu.dot_dimension_numbers<[2], [2], [1], [1], [0, 0, 0, 1, 1, 1], [0], [0]>} : vector<2x8x16xbf16>, vector<2x8x16xbf16>, vector<2x8x8xf32> -> vector<2x8x8xf32>
    "tpu.trace_stop"() : () -> ()
    %cst_266 = arith.constant 0.288675129 : f32
    %633 = vector.broadcast %cst_266 : f32 to vector<2x8x8xf32>
    %634 = arith.mulf %632, %633 : vector<2x8x8xf32>
    %cst_267 = arith.constant dense<0xFF800000> : vector<2x8xf32>
    %635 = vector.multi_reduction <maximumf>, %634, %cst_267 [2] : vector<2x8x8xf32> to vector<2x8xf32>
    %636 = vector.shape_cast %635 : vector<2x8xf32> to vector<2x8x1xf32>
    %637 = vector.broadcast %636 : vector<2x8x1xf32> to vector<2x8x8xf32>
    %638 = arith.subf %634, %637 : vector<2x8x8xf32>
    %639 = math.exp %638 : vector<2x8x8xf32>
    %cst_268 = arith.constant dense<0.000000e+00> : vector<2x8xf32>
    %640 = vector.multi_reduction <add>, %639, %cst_268 [2] : vector<2x8x8xf32> to vector<2x8xf32>
    %641 = vector.shape_cast %640 : vector<2x8xf32> to vector<2x8x1xf32>
    %642 = vector.broadcast %641 : vector<2x8x1xf32> to vector<2x8x8xf32>
    %643 = arith.divf %639, %642 : vector<2x8x8xf32>
    %644 = arith.truncf %643 : vector<2x8x8xf32> to vector<2x8x8xbf16>
    %645 = arith.truncf %629 : vector<2x8x16xf32> to vector<2x8x16xbf16>
    "tpu.trace_start"() <{level = 10 : i32, message = "bqk,bkd->bqd"}> : () -> ()
    %cst_269 = arith.constant dense<0.000000e+00> : vector<2x8x16xf32>
    %646 = tpu.matmul %644, %645, %cst_269 {dimension_numbers = #tpu.dot_dimension_numbers<[2], [1], [1], [2], [0, 0, 0, 1, 1, 2], [0], [0]>} : vector<2x8x8xbf16>, vector<2x8x16xbf16>, vector<2x8x16xf32> -> vector<2x8x16xf32>
    "tpu.trace_stop"() : () -> ()
    %647 = vector.shape_cast %646 : vector<2x8x16xf32> to vector<16x16xf32>
    %648 = vector.extract_strided_slice %599 {offsets = [0, 32], sizes = [16, 16], strides = [1, 1]} : vector<16x192xf32> to vector<16x16xf32>
    %649 = vector.shape_cast %648 : vector<16x16xf32> to vector<2x8x16xf32>
    %650 = vector.extract_strided_slice %599 {offsets = [0, 96], sizes = [16, 16], strides = [1, 1]} : vector<16x192xf32> to vector<16x16xf32>
    %651 = vector.shape_cast %650 : vector<16x16xf32> to vector<2x8x16xf32>
    %652 = vector.extract_strided_slice %599 {offsets = [0, 160], sizes = [16, 16], strides = [1, 1]} : vector<16x192xf32> to vector<16x16xf32>
    %653 = vector.shape_cast %652 : vector<16x16xf32> to vector<2x8x16xf32>
    %654 = arith.truncf %649 : vector<2x8x16xf32> to vector<2x8x16xbf16>
    %655 = arith.truncf %651 : vector<2x8x16xf32> to vector<2x8x16xbf16>
    "tpu.trace_start"() <{level = 10 : i32, message = "bqd,bkd->bqk"}> : () -> ()
    %cst_270 = arith.constant dense<0.000000e+00> : vector<2x8x8xf32>
    %656 = tpu.matmul %654, %655, %cst_270 {dimension_numbers = #tpu.dot_dimension_numbers<[2], [2], [1], [1], [0, 0, 0, 1, 1, 1], [0], [0]>} : vector<2x8x16xbf16>, vector<2x8x16xbf16>, vector<2x8x8xf32> -> vector<2x8x8xf32>
    "tpu.trace_stop"() : () -> ()
    %cst_271 = arith.constant 0.288675129 : f32
    %657 = vector.broadcast %cst_271 : f32 to vector<2x8x8xf32>
    %658 = arith.mulf %656, %657 : vector<2x8x8xf32>
    %cst_272 = arith.constant dense<0xFF800000> : vector<2x8xf32>
    %659 = vector.multi_reduction <maximumf>, %658, %cst_272 [2] : vector<2x8x8xf32> to vector<2x8xf32>
    %660 = vector.shape_cast %659 : vector<2x8xf32> to vector<2x8x1xf32>
    %661 = vector.broadcast %660 : vector<2x8x1xf32> to vector<2x8x8xf32>
    %662 = arith.subf %658, %661 : vector<2x8x8xf32>
    %663 = math.exp %662 : vector<2x8x8xf32>
    %cst_273 = arith.constant dense<0.000000e+00> : vector<2x8xf32>
    %664 = vector.multi_reduction <add>, %663, %cst_273 [2] : vector<2x8x8xf32> to vector<2x8xf32>
    %665 = vector.shape_cast %664 : vector<2x8xf32> to vector<2x8x1xf32>
    %666 = vector.broadcast %665 : vector<2x8x1xf32> to vector<2x8x8xf32>
    %667 = arith.divf %663, %666 : vector<2x8x8xf32>
    %668 = arith.truncf %667 : vector<2x8x8xf32> to vector<2x8x8xbf16>
    %669 = arith.truncf %653 : vector<2x8x16xf32> to vector<2x8x16xbf16>
    "tpu.trace_start"() <{level = 10 : i32, message = "bqk,bkd->bqd"}> : () -> ()
    %cst_274 = arith.constant dense<0.000000e+00> : vector<2x8x16xf32>
    %670 = tpu.matmul %668, %669, %cst_274 {dimension_numbers = #tpu.dot_dimension_numbers<[2], [1], [1], [2], [0, 0, 0, 1, 1, 2], [0], [0]>} : vector<2x8x8xbf16>, vector<2x8x16xbf16>, vector<2x8x16xf32> -> vector<2x8x16xf32>
    "tpu.trace_stop"() : () -> ()
    %671 = vector.shape_cast %670 : vector<2x8x16xf32> to vector<16x16xf32>
    %672 = vector.extract_strided_slice %599 {offsets = [0, 48], sizes = [16, 16], strides = [1, 1]} : vector<16x192xf32> to vector<16x16xf32>
    %673 = vector.shape_cast %672 : vector<16x16xf32> to vector<2x8x16xf32>
    %674 = vector.extract_strided_slice %599 {offsets = [0, 112], sizes = [16, 16], strides = [1, 1]} : vector<16x192xf32> to vector<16x16xf32>
    %675 = vector.shape_cast %674 : vector<16x16xf32> to vector<2x8x16xf32>
    %676 = vector.extract_strided_slice %599 {offsets = [0, 176], sizes = [16, 16], strides = [1, 1]} : vector<16x192xf32> to vector<16x16xf32>
    %677 = vector.shape_cast %676 : vector<16x16xf32> to vector<2x8x16xf32>
    %678 = arith.truncf %673 : vector<2x8x16xf32> to vector<2x8x16xbf16>
    %679 = arith.truncf %675 : vector<2x8x16xf32> to vector<2x8x16xbf16>
    "tpu.trace_start"() <{level = 10 : i32, message = "bqd,bkd->bqk"}> : () -> ()
    %cst_275 = arith.constant dense<0.000000e+00> : vector<2x8x8xf32>
    %680 = tpu.matmul %678, %679, %cst_275 {dimension_numbers = #tpu.dot_dimension_numbers<[2], [2], [1], [1], [0, 0, 0, 1, 1, 1], [0], [0]>} : vector<2x8x16xbf16>, vector<2x8x16xbf16>, vector<2x8x8xf32> -> vector<2x8x8xf32>
    "tpu.trace_stop"() : () -> ()
    %cst_276 = arith.constant 0.288675129 : f32
    %681 = vector.broadcast %cst_276 : f32 to vector<2x8x8xf32>
    %682 = arith.mulf %680, %681 : vector<2x8x8xf32>
    %cst_277 = arith.constant dense<0xFF800000> : vector<2x8xf32>
    %683 = vector.multi_reduction <maximumf>, %682, %cst_277 [2] : vector<2x8x8xf32> to vector<2x8xf32>
    %684 = vector.shape_cast %683 : vector<2x8xf32> to vector<2x8x1xf32>
    %685 = vector.broadcast %684 : vector<2x8x1xf32> to vector<2x8x8xf32>
    %686 = arith.subf %682, %685 : vector<2x8x8xf32>
    %687 = math.exp %686 : vector<2x8x8xf32>
    %cst_278 = arith.constant dense<0.000000e+00> : vector<2x8xf32>
    %688 = vector.multi_reduction <add>, %687, %cst_278 [2] : vector<2x8x8xf32> to vector<2x8xf32>
    %689 = vector.shape_cast %688 : vector<2x8xf32> to vector<2x8x1xf32>
    %690 = vector.broadcast %689 : vector<2x8x1xf32> to vector<2x8x8xf32>
    %691 = arith.divf %687, %690 : vector<2x8x8xf32>
    %692 = arith.truncf %691 : vector<2x8x8xf32> to vector<2x8x8xbf16>
    %693 = arith.truncf %677 : vector<2x8x16xf32> to vector<2x8x16xbf16>
    "tpu.trace_start"() <{level = 10 : i32, message = "bqk,bkd->bqd"}> : () -> ()
    %cst_279 = arith.constant dense<0.000000e+00> : vector<2x8x16xf32>
    %694 = tpu.matmul %692, %693, %cst_279 {dimension_numbers = #tpu.dot_dimension_numbers<[2], [1], [1], [2], [0, 0, 0, 1, 1, 2], [0], [0]>} : vector<2x8x8xbf16>, vector<2x8x16xbf16>, vector<2x8x16xf32> -> vector<2x8x16xf32>
    "tpu.trace_stop"() : () -> ()
    %695 = vector.shape_cast %694 : vector<2x8x16xf32> to vector<16x16xf32>
    %696 = tpu.concatenate %623, %647, %671, %695 in 1 : vector<16x16xf32>, vector<16x16xf32>, vector<16x16xf32>, vector<16x16xf32> -> vector<16x64xf32>
    %697 = arith.truncf %696 : vector<16x64xf32> to vector<16x64xbf16>
    %cst_280 = arith.constant dense<0.000000e+00> : vector<16x48xf32>
    %698 = tpu.matmul %697, %577, %cst_280 {dimension_numbers = #tpu.dot_dimension_numbers<[1], [0], [0], [1], [0, 0, 1, 1], [], []>} : vector<16x64xbf16>, vector<64x48xbf16>, vector<16x48xf32> -> vector<16x48xf32>
    %699 = vector.broadcast %579 : vector<1x48xf32> to vector<16x48xf32>
    %700 = arith.addf %698, %699 : vector<16x48xf32>
    %701 = arith.addf %571, %700 : vector<16x48xf32>
    %cst_281 = arith.constant dense<0.000000e+00> : vector<16xf32>
    %702 = vector.multi_reduction <add>, %701, %cst_281 [1] : vector<16x48xf32> to vector<16xf32>
    %703 = vector.shape_cast %702 : vector<16xf32> to vector<16x1xf32>
    %cst_282 = arith.constant 4.800000e+01 : f32
    %704 = vector.broadcast %cst_282 : f32 to vector<16x1xf32>
    %705 = arith.divf %703, %704 : vector<16x1xf32>
    %706 = vector.broadcast %705 : vector<16x1xf32> to vector<16x48xf32>
    %707 = arith.subf %701, %706 : vector<16x48xf32>
    %708 = arith.mulf %707, %707 : vector<16x48xf32>
    %cst_283 = arith.constant dense<0.000000e+00> : vector<16xf32>
    %709 = vector.multi_reduction <add>, %708, %cst_283 [1] : vector<16x48xf32> to vector<16xf32>
    %710 = vector.shape_cast %709 : vector<16xf32> to vector<16x1xf32>
    %cst_284 = arith.constant 4.800000e+01 : f32
    %711 = vector.broadcast %cst_284 : f32 to vector<16x1xf32>
    %712 = arith.divf %710, %711 : vector<16x1xf32>
    %713 = vector.broadcast %705 : vector<16x1xf32> to vector<16x48xf32>
    %714 = arith.subf %701, %713 : vector<16x48xf32>
    %cst_285 = arith.constant 9.99999974E-6 : f32
    %715 = vector.broadcast %cst_285 : f32 to vector<16x1xf32>
    %716 = arith.addf %712, %715 : vector<16x1xf32>
    %717 = math.rsqrt %716 : vector<16x1xf32>
    %718 = vector.broadcast %717 : vector<16x1xf32> to vector<16x48xf32>
    %719 = arith.mulf %714, %718 : vector<16x48xf32>
    %720 = vector.broadcast %581 : vector<1x48xf32> to vector<16x48xf32>
    %721 = arith.mulf %719, %720 : vector<16x48xf32>
    %722 = vector.broadcast %583 : vector<1x48xf32> to vector<16x48xf32>
    %723 = arith.addf %721, %722 : vector<16x48xf32>
    %724 = arith.truncf %723 : vector<16x48xf32> to vector<16x48xbf16>
    %cst_286 = arith.constant dense<0.000000e+00> : vector<16x192xf32>
    %725 = tpu.matmul %724, %585, %cst_286 {dimension_numbers = #tpu.dot_dimension_numbers<[1], [0], [0], [1], [0, 0, 1, 1], [], []>} : vector<16x48xbf16>, vector<48x192xbf16>, vector<16x192xf32> -> vector<16x192xf32>
    %726 = vector.broadcast %587 : vector<1x192xf32> to vector<16x192xf32>
    %727 = arith.addf %725, %726 : vector<16x192xf32>
    %cst_287 = arith.constant 0.000000e+00 : f32
    %728 = vector.broadcast %cst_287 : f32 to vector<16x192xf32>
    %729 = arith.maximumf %727, %728 : vector<16x192xf32>
    %730 = arith.truncf %729 : vector<16x192xf32> to vector<16x192xbf16>
    %cst_288 = arith.constant dense<0.000000e+00> : vector<16x48xf32>
    %731 = tpu.matmul %730, %589, %cst_288 {dimension_numbers = #tpu.dot_dimension_numbers<[1], [0], [0], [1], [0, 0, 1, 1], [], []>} : vector<16x192xbf16>, vector<192x48xbf16>, vector<16x48xf32> -> vector<16x48xf32>
    %732 = vector.broadcast %591 : vector<1x48xf32> to vector<16x48xf32>
    %733 = arith.addf %731, %732 : vector<16x48xf32>
    %734 = arith.addf %723, %733 : vector<16x48xf32>
    %cst_289 = arith.constant dense<0.000000e+00> : vector<16xf32>
    %735 = vector.multi_reduction <add>, %734, %cst_289 [1] : vector<16x48xf32> to vector<16xf32>
    %736 = vector.shape_cast %735 : vector<16xf32> to vector<16x1xf32>
    %cst_290 = arith.constant 4.800000e+01 : f32
    %737 = vector.broadcast %cst_290 : f32 to vector<16x1xf32>
    %738 = arith.divf %736, %737 : vector<16x1xf32>
    %739 = vector.broadcast %738 : vector<16x1xf32> to vector<16x48xf32>
    %740 = arith.subf %734, %739 : vector<16x48xf32>
    %741 = arith.mulf %740, %740 : vector<16x48xf32>
    %cst_291 = arith.constant dense<0.000000e+00> : vector<16xf32>
    %742 = vector.multi_reduction <add>, %741, %cst_291 [1] : vector<16x48xf32> to vector<16xf32>
    %743 = vector.shape_cast %742 : vector<16xf32> to vector<16x1xf32>
    %cst_292 = arith.constant 4.800000e+01 : f32
    %744 = vector.broadcast %cst_292 : f32 to vector<16x1xf32>
    %745 = arith.divf %743, %744 : vector<16x1xf32>
    %746 = vector.broadcast %738 : vector<16x1xf32> to vector<16x48xf32>
    %747 = arith.subf %734, %746 : vector<16x48xf32>
    %cst_293 = arith.constant 9.99999974E-6 : f32
    %748 = vector.broadcast %cst_293 : f32 to vector<16x1xf32>
    %749 = arith.addf %745, %748 : vector<16x1xf32>
    %750 = math.rsqrt %749 : vector<16x1xf32>
    %751 = vector.broadcast %750 : vector<16x1xf32> to vector<16x48xf32>
    %752 = arith.mulf %747, %751 : vector<16x48xf32>
    %753 = vector.broadcast %593 : vector<1x48xf32> to vector<16x48xf32>
    %754 = arith.mulf %752, %753 : vector<16x48xf32>
    %755 = vector.broadcast %595 : vector<1x48xf32> to vector<16x48xf32>
    %756 = arith.addf %754, %755 : vector<16x48xf32>
    %c0_294 = arith.constant 0 : index
    %c0_295 = arith.constant 0 : index
    %757 = vector.load %arg18[%c0_294, %c0_295] : memref<48x128xbf16, #tpu.memory_space<vmem>>, vector<48x128xbf16>
    %c0_296 = arith.constant 0 : index
    %c0_297 = arith.constant 0 : index
    %758 = vector.load %arg19[%c0_296, %c0_297] : memref<1x128xf32, #tpu.memory_space<vmem>>, vector<1x128xf32>
    %759 = arith.truncf %756 : vector<16x48xf32> to vector<16x48xbf16>
    %cst_298 = arith.constant dense<0.000000e+00> : vector<16x128xf32>
    %760 = tpu.matmul %759, %757, %cst_298 {dimension_numbers = #tpu.dot_dimension_numbers<[1], [0], [0], [1], [0, 0, 1, 1], [], []>} : vector<16x48xbf16>, vector<48x128xbf16>, vector<16x128xf32> -> vector<16x128xf32>
    %761 = vector.broadcast %758 : vector<1x128xf32> to vector<16x128xf32>
    %762 = arith.addf %760, %761 : vector<16x128xf32>
    %c0_299 = arith.constant 0 : index
    %c0_300 = arith.constant 0 : index
    %763 = vector.load %arg20[%c0_299, %c0_300] : memref<16x128xf32, #tpu.memory_space<vmem>>, vector<16x128xf32>
    tpu.vector_store %arg20[%c0_299, %c0_300], %762 {strides = array<i32>} : memref<16x128xf32, #tpu.memory_space<vmem>>, vector<16x128xf32>,
    return
  }
}

</mosaic_0001>

<llo_original>
// kernel: custom-call.1
$region0: #{custom-call.1}
  %s0 = inlined_call_operand.vmem [shape: f32[2,8,8], index: 0, kind: input, shape index: {}]
  %s1 = inlined_call_operand.vmem [shape: f32[2,8,8], index: 1, kind: input, shape index: {}]
  %s2 = inlined_call_operand.hbm [shape: c64[2,8,8], index: 2, kind: output, shape index: {}]
  %s3 = scalar_lea.hbm %s2, 16
  $region1: #{custom-call.1} parent=0
    #allocation0 [shape = 's32[1]{0}', space=sflag, size = 0x4, scoped, tag = 'scoped memory for custom-call.1']
    %4 = vsyncpa [#allocation0], 0
    %s6 = sshll.u32 %s0, 4
    %s7 = int_to_ptr.vmem [resolvable:$true] %s6
    %s8 = sshll.u32 %s2, 4
    %s9 = int_to_ptr.hbm [resolvable:$true] %s8
    %11 = dma.vmem_to_hbm [thread:$0]  %s7, 256, %s9, [#allocation0]
    %13 = dma.done [#allocation0], 256
    %14 = vsyncpa [#allocation0], 1
  $region2: #{custom-call.1} parent=0
    #allocation1 [shape = 's32[1]{0}', space=sflag, size = 0x4, scoped, tag = 'scoped memory for custom-call.1']
    %15 = vsyncpa [#allocation1], 0
    %s17 = sshll.u32 %s1, 4
    %s18 = int_to_ptr.vmem [resolvable:$true] %s17
    %s19 = sshll.u32 %s3, 4
    %s20 = int_to_ptr.hbm [resolvable:$true] %s19
    %22 = dma.vmem_to_hbm [thread:$0]  %s18, 256, %s20, [#allocation1]
    %24 = dma.done [#allocation1], 256
    %25 = vsyncpa [#allocation1], 1

// kernel: forward.2
$region0: #{forward.2}
  #allocation0 [shape = 'u32[]', space=smem, size = 0x4, offset = 0x4, fixed_abs, tag = 'smem constant byte address 0x4 - core index']
  #allocation1 [shape = 'u32[72,128]{1,0:T(1,128)}', space=vmem, size = 0x9000, scoped, tag = 'internal scratch']
  %s0 = inlined_call_operand.vmem [shape: f32[16,32], index: 0, kind: input, shape index: {}]
  %s1 = inlined_call_operand.vmem [shape: f32[1,16], index: 1, kind: input, shape index: {}]
  %s2 = inlined_call_operand.vmem [shape: f32[2,1,8], index: 2, kind: input, shape index: {}]
  %s3 = inlined_call_operand.vmem [shape: bf16[32,32], index: 3, kind: input, shape index: {}]
  %s4 = inlined_call_operand.vmem [shape: f32[1,32], index: 4, kind: input, shape index: {}]
  %s5 = inlined_call_operand.vmem [shape: bf16[2,48,192], index: 5, kind: input, shape index: {}]
  %s6 = inlined_call_operand.vmem [shape: f32[2,1,192], index: 6, kind: input, shape index: {}]
  %s7 = inlined_call_operand.vmem [shape: bf16[2,64,48], index: 7, kind: input, shape index: {}]
  %s8 = inlined_call_operand.vmem [shape: f32[2,1,48], index: 8, kind: input, shape index: {}]
  %s9 = inlined_call_operand.vmem [shape: f32[2,1,48], index: 9, kind: input, shape index: {}]
  %s10 = inlined_call_operand.vmem [shape: f32[2,1,48], index: 10, kind: input, shape index: {}]
  %s11 = inlined_call_operand.vmem [shape: bf16[2,48,384], index: 11, kind: input, shape index: {}]
  %s12 = inlined_call_operand.vmem [shape: f32[2,1,384], index: 12, kind: input, shape index: {}]
  %s13 = inlined_call_operand.vmem [shape: bf16[2,384,48], index: 13, kind: input, shape index: {}]
  %s14 = inlined_call_operand.vmem [shape: f32[2,1,48], index: 14, kind: input, shape index: {}]
  %s15 = inlined_call_operand.vmem [shape: f32[2,1,48], index: 15, kind: input, shape index: {}]
  %s16 = inlined_call_operand.vmem [shape: f32[2,1,48], index: 16, kind: input, shape index: {}]
  %s17 = inlined_call_operand.vmem [shape: bf16[48,192], index: 17, kind: input, shape index: {}]
  %s18 = inlined_call_operand.vmem [shape: f32[1,192], index: 18, kind: input, shape index: {}]
  %s19 = inlined_call_operand.vmem [shape: bf16[192,128], index: 19, kind: input, shape index: {}]
  %s20 = inlined_call_operand.vmem [shape: f32[1,128], index: 20, kind: input, shape index: {}]
  %s21 = inlined_call_operand.vmem [shape: f32[16,128], index: 21, kind: output, shape index: {}]
  %s22 = sld [smem:[#allocation0]]
  $region94: #{forward.2} parent=0
    _
  %s24 = ssub.s32 1, %s22
  %s25 = scalar_select 0, %s24, %s22
  // Predicated region
  $region2: #{forward.2} parent=0 // pred_check
    _
  $region3: #{forward.2} parent=0 // pred_check_branch
    %27 = sbr.rel (0) target = $region5
  $region4: #{forward.2} parent=0 // pred_region
    _
  $region5: #{forward.2} parent=0 // pred_fallthru
    _
  // Predicated region
  $region6: #{forward.2} parent=0 // pred_check
    _
  $region7: #{forward.2} parent=0 // pred_check_branch
    %29 = sbr.rel (0) target = $region9
  $region8: #{forward.2} parent=0 // pred_region
    _
  $region9: #{forward.2} parent=0 // pred_fallthru
    _
  // Predicated region
  $region10: #{forward.2} parent=0 // pred_check
    _
  $region11: #{forward.2} parent=0 // pred_check_branch
    %31 = sbr.rel (0) target = $region13
  $region12: #{forward.2} parent=0 // pred_region
    _
  $region13: #{forward.2} parent=0 // pred_fallthru
    _
  // Predicated region
  $region14: #{forward.2} parent=0 // pred_check
    _
  $region15: #{forward.2} parent=0 // pred_check_branch
    %33 = sbr.rel (0) target = $region17
  $region16: #{forward.2} parent=0 // pred_region
    _
  $region17: #{forward.2} parent=0 // pred_fallthru
    _
  // Predicated region
  $region18: #{forward.2} parent=0 // pred_check
    _
  $region19: #{forward.2} parent=0 // pred_check_branch
    %35 = sbr.rel (0) target = $region21
  $region20: #{forward.2} parent=0 // pred_region
    _
  $region21: #{forward.2} parent=0 // pred_fallthru
    _
  // Predicated region
  $region22: #{forward.2} parent=0 // pred_check
    _
  $region23: #{forward.2} parent=0 // pred_check_branch
    %37 = sbr.rel (0) target = $region25
  $region24: #{forward.2} parent=0 // pred_region
    _
  $region25: #{forward.2} parent=0 // pred_fallthru
    _
  // Predicated region
  $region26: #{forward.2} parent=0 // pred_check
    _
  $region27: #{forward.2} parent=0 // pred_check_branch
    %39 = sbr.rel (0) target = $region29
  $region28: #{forward.2} parent=0 // pred_region
    _
  $region29: #{forward.2} parent=0 // pred_fallthru
    _
  // Predicated region
  $region30: #{forward.2} parent=0 // pred_check
    _
  $region31: #{forward.2} parent=0 // pred_check_branch
    %41 = sbr.rel (0) target = $region33
  $region32: #{forward.2} parent=0 // pred_region
    _
  $region33: #{forward.2} parent=0 // pred_fallthru
    _
  // Predicated region
  $region34: #{forward.2} parent=0 // pred_check
    _
  $region35: #{forward.2} parent=0 // pred_check_branch
    %43 = sbr.rel (0) target = $region37
  $region36: #{forward.2} parent=0 // pred_region
    _
  $region37: #{forward.2} parent=0 // pred_fallthru
    _
  // Predicated region
  $region38: #{forward.2} parent=0 // pred_check
    _
  $region39: #{forward.2} parent=0 // pred_check_branch
    %45 = sbr.rel (0) target = $region41
  $region40: #{forward.2} parent=0 // pred_region
    _
  $region41: #{forward.2} parent=0 // pred_fallthru
    _
  // Predicated region
  $region42: #{forward.2} parent=0 // pred_check
    _
  $region43: #{forward.2} parent=0 // pred_check_branch
    %47 = sbr.rel (0) target = $region45
  $region44: #{forward.2} parent=0 // pred_region
    _
  $region45: #{forward.2} parent=0 // pred_fallthru
    _
  // Predicated region
  $region46: #{forward.2} parent=0 // pred_check
    _
  $region47: #{forward.2} parent=0 // pred_check_branch
    %49 = sbr.rel (0) target = $region49
  $region48: #{forward.2} parent=0 // pred_region
    _
  $region49: #{forward.2} parent=0 // pred_fallthru
    _
  // Predicated region
  $region50: #{forward.2} parent=0 // pred_check
    _
  $region51: #{forward.2} parent=0 // pred_check_branch
    %51 = sbr.rel (0) target = $region53
  $region52: #{forward.2} parent=0 // pred_region
    _
  $region53: #{forward.2} parent=0 // pred_fallthru
    _
  // Predicated region
  $region54: #{forward.2} parent=0 // pred_check
    _
  $region55: #{forward.2} parent=0 // pred_check_branch
    %53 = sbr.rel (0) target = $region57
  $region56: #{forward.2} parent=0 // pred_region
    _
  $region57: #{forward.2} parent=0 // pred_fallthru
    _
  // Predicated region
  $region58: #{forward.2} parent=0 // pred_check
    _
  $region59: #{forward.2} parent=0 // pred_check_branch
    %55 = sbr.rel (0) target = $region61
  $region60: #{forward.2} parent=0 // pred_region
    _
  $region61: #{forward.2} parent=0 // pred_fallthru
    _
  // Predicated region
  $region62: #{forward.2} parent=0 // pred_check
    _
  $region63: #{forward.2} parent=0 // pred_check_branch
    %57 = sbr.rel (0) target = $region65
  $region64: #{forward.2} parent=0 // pred_region
    _
  $region65: #{forward.2} parent=0 // pred_fallthru
    _
  // Predicated region
  $region66: #{forward.2} parent=0 // pred_check
    _
  $region67: #{forward.2} parent=0 // pred_check_branch
    %59 = sbr.rel (0) target = $region69
  $region68: #{forward.2} parent=0 // pred_region
    _
  $region69: #{forward.2} parent=0 // pred_fallthru
    _
  // Predicated region
  $region70: #{forward.2} parent=0 // pred_check
    _
  $region71: #{forward.2} parent=0 // pred_check_branch
    %61 = sbr.rel (0) target = $region73
  $region72: #{forward.2} parent=0 // pred_region
    _
  $region73: #{forward.2} parent=0 // pred_fallthru
    _
  // Predicated region
  $region74: #{forward.2} parent=0 // pred_check
    _
  $region75: #{forward.2} parent=0 // pred_check_branch
    %63 = sbr.rel (0) target = $region77
  $region76: #{forward.2} parent=0 // pred_region
    _
  $region77: #{forward.2} parent=0 // pred_fallthru
    _
  // Predicated region
  $region78: #{forward.2} parent=0 // pred_check
    _
  $region79: #{forward.2} parent=0 // pred_check_branch
    %65 = sbr.rel (0) target = $region81
  $region80: #{forward.2} parent=0 // pred_region
    _
  $region81: #{forward.2} parent=0 // pred_fallthru
    _
  // Predicated region
  $region82: #{forward.2} parent=0 // pred_check
    _
  $region83: #{forward.2} parent=0 // pred_check_branch
    %67 = sbr.rel (0) target = $region85
  $region84: #{forward.2} parent=0 // pred_region
    _
  $region85: #{forward.2} parent=0 // pred_fallthru
    _
  %v69 = vld [vmem:[%s0] sm:$0xff]
  %v70 = vld [vmem:[%s0 + $0x8] sm:$0xff]
  %v71 = vld [vmem:[%s3] sm:$0xf]
  %v72 = vld [vmem:[%s3 + $0x4] sm:$0xf]
  %v73 = vld [vmem:[%s3 + $0x8] sm:$0xf]
  %v74 = vld [vmem:[%s3 + $0xc] sm:$0xf]
  %v75 = vld [vmem:[%s4] sm:$0x1]
  %v76 = vpack.c.bf16 %v70, %v69
  %v78 = vperm.slane %v75, 0
  %v84 = vunpack.c.l.b16 %v71
  %v85 = vunpack.c.l.b16 %v72
  %v86 = vunpack.c.l.b16 %v73
  %v87 = vunpack.c.l.b16 %v74
  %v88 = vpack.c.b16 %v85, %v84
  %v89 = vpack.c.b16 %v87, %v86
  %vm92 = vcmask 261120
  %v94 = vsel %vm92, %v76, 0
  %96 = vmatpush.bf16.msra.mxu0 0
  %97 = vmatpush.bf16.msra.mxu0 0
  %98 = vmatpush.bf16.msra.mxu0 0
  %99 = vmatpush.bf16.msra.mxu0 0
  %100 = vmatpush.bf16.msra.mxu0 0
  %101 = vmatpush.bf16.msra.mxu0 0
  %102 = vmatpush.bf16.msra.mxu0 %v89
  %103 = vmatpush.bf16.msra.mxu0 %v88
  %104 = vmatmul.bf16.gmra.mxu0 %v94
  %v105 = vpop.f32.mrf.mxu0
  %v106 = vadd.f32 %v78, %v105
  %v107 = vpop.f32.mrf.mxu0
  %v108 = vadd.f32 %v78, %v107
  %109 = vdwg.mxu0
  %v110 = vld [vmem:[%s1] sm:$0x1]
  %v112 = vperm.slane %v110, 0
  %113 = vrot.lane.b32.xlu0 %v112, 32
  %v114 = vpop.permute.xlu0 %113
  %v116 = vsel %vm92, %v106, %v114
  %v117 = vsel %vm92, %v108, %v114
  %v118 = vld [vmem:[%s2] sm:$0x1]
  %v119 = vld [vmem:[%s2 + $0x1] sm:$0x1]
  %v120 = vld [vmem:[%s5] sm:$0xff]
  %v121 = vld [vmem:[%s5 + $0x8] sm:$0xff]
  %v122 = vld [vmem:[%s5 + $0x10] sm:$0xff]
  %v123 = vld [vmem:[%s5 + $0x18] sm:$0xff]
  %v124 = vld [vmem:[%s5 + $0x20] sm:$0xff]
  %v125 = vld [vmem:[%s5 + $0x28] sm:$0xff]
  %v126 = vld [vmem:[%s6] sm:$0x3]
  %v127 = vld [vmem:[%s7] sm:$0xf]
  %v128 = vld [vmem:[%s7 + $0x4] sm:$0xf]
  %v129 = vld [vmem:[%s7 + $0x8] sm:$0xf]
  %v130 = vld [vmem:[%s7 + $0xc] sm:$0xf]
  %v131 = vld [vmem:[%s7 + $0x10] sm:$0xf]
  %v132 = vld [vmem:[%s7 + $0x14] sm:$0xf]
  %v133 = vld [vmem:[%s7 + $0x18] sm:$0xf]
  %v134 = vld [vmem:[%s7 + $0x1c] sm:$0xf]
  %v135 = vld [vmem:[%s8] sm:$0x1]
  %v136 = vld [vmem:[%s9] sm:$0x1]
  %v137 = vld [vmem:[%s10] sm:$0x1]
  %v138 = vld [vmem:[%s11] sm:$0xff]
  %v139 = vld [vmem:[%s11 + $0x8] sm:$0xf]
  %v140 = vld [vmem:[%s11 + $0xc] sm:$0xff]
  %v141 = vld [vmem:[%s11 + $0x14] sm:$0xf]
  %v142 = vld [vmem:[%s11 + $0x18] sm:$0xff]
  %v143 = vld [vmem:[%s11 + $0x20] sm:$0xf]
  %v144 = vld [vmem:[%s11 + $0x24] sm:$0xff]
  %v145 = vld [vmem:[%s11 + $0x2c] sm:$0xf]
  %v146 = vld [vmem:[%s11 + $0x30] sm:$0xff]
  %v147 = vld [vmem:[%s11 + $0x38] sm:$0xf]
  %v148 = vld [vmem:[%s11 + $0x3c] sm:$0xff]
  %v149 = vld [vmem:[%s11 + $0x44] sm:$0xf]
  %v150 = vld [vmem:[%s12] sm:$0x7]
  %v151 = vld [vmem:[%s13] sm:$0xf]
  %v152 = vld [vmem:[%s13 + $0x4] sm:$0xf]
  %v153 = vld [vmem:[%s13 + $0x8] sm:$0xf]
  %v154 = vld [vmem:[%s13 + $0xc] sm:$0xf]
  %v155 = vld [vmem:[%s13 + $0x10] sm:$0xf]
  %v156 = vld [vmem:[%s13 + $0x14] sm:$0xf]
  %v157 = vld [vmem:[%s13 + $0x18] sm:$0xf]
  %v158 = vld [vmem:[%s13 + $0x1c] sm:$0xf]
  %v159 = vld [vmem:[%s13 + $0x20] sm:$0xf]
  %v160 = vld [vmem:[%s13 + $0x24] sm:$0xf]
  %v161 = vld [vmem:[%s13 + $0x28] sm:$0xf]
  %v162 = vld [vmem:[%s13 + $0x2c] sm:$0xf]
  %v163 = vld [vmem:[%s13 + $0x30] sm:$0xf]
  %v164 = vld [vmem:[%s13 + $0x34] sm:$0xf]
  %v165 = vld [vmem:[%s13 + $0x38] sm:$0xf]
  %v166 = vld [vmem:[%s13 + $0x3c] sm:$0xf]
  %v167 = vld [vmem:[%s13 + $0x40] sm:$0xf]
  %v168 = vld [vmem:[%s13 + $0x44] sm:$0xf]
  %v169 = vld [vmem:[%s13 + $0x48] sm:$0xf]
  %v170 = vld [vmem:[%s13 + $0x4c] sm:$0xf]
  %v171 = vld [vmem:[%s13 + $0x50] sm:$0xf]
  %v172 = vld [vmem:[%s13 + $0x54] sm:$0xf]
  %v173 = vld [vmem:[%s13 + $0x58] sm:$0xf]
  %v174 = vld [vmem:[%s13 + $0x5c] sm:$0xf]
  %v175 = vld [vmem:[%s13 + $0x60] sm:$0xf]
  %v176 = vld [vmem:[%s13 + $0x64] sm:$0xf]
  %v177 = vld [vmem:[%s13 + $0x68] sm:$0xf]
  %v178 = vld [vmem:[%s13 + $0x6c] sm:$0xf]
  %v179 = vld [vmem:[%s13 + $0x70] sm:$0xf]
  %v180 = vld [vmem:[%s13 + $0x74] sm:$0xf]
  %v181 = vld [vmem:[%s13 + $0x78] sm:$0xf]
  %v182 = vld [vmem:[%s13 + $0x7c] sm:$0xf]
  %v183 = vld [vmem:[%s13 + $0x80] sm:$0xf]
  %v184 = vld [vmem:[%s13 + $0x84] sm:$0xf]
  %v185 = vld [vmem:[%s13 + $0x88] sm:$0xf]
  %v186 = vld [vmem:[%s13 + $0x8c] sm:$0xf]
  %v187 = vld [vmem:[%s13 + $0x90] sm:$0xf]
  %v188 = vld [vmem:[%s13 + $0x94] sm:$0xf]
  %v189 = vld [vmem:[%s13 + $0x98] sm:$0xf]
  %v190 = vld [vmem:[%s13 + $0x9c] sm:$0xf]
  %v191 = vld [vmem:[%s13 + $0xa0] sm:$0xf]
  %v192 = vld [vmem:[%s13 + $0xa4] sm:$0xf]
  %v193 = vld [vmem:[%s13 + $0xa8] sm:$0xf]
  %v194 = vld [vmem:[%s13 + $0xac] sm:$0xf]
  %v195 = vld [vmem:[%s13 + $0xb0] sm:$0xf]
  %v196 = vld [vmem:[%s13 + $0xb4] sm:$0xf]
  %v197 = vld [vmem:[%s13 + $0xb8] sm:$0xf]
  %v198 = vld [vmem:[%s13 + $0xbc] sm:$0xf]
  %v199 = vld [vmem:[%s14] sm:$0x1]
  %v200 = vld [vmem:[%s15] sm:$0x1]
  %v201 = vld [vmem:[%s16] sm:$0x1]
  %v202 = vpack.c.bf16 %v117, %v116
  %v204 = vperm.slane %v126, 0
  %v205 = vperm.slane %v126, 1
  %v214 = vunpack.c.l.b16 %v120
  %v215 = vunpack.c.h.b16 %v120
  %v216 = vunpack.c.l.b16 %v121
  %v217 = vunpack.c.h.b16 %v121
  %v218 = vunpack.c.l.b16 %v122
  %v219 = vunpack.c.h.b16 %v122
  %v220 = vunpack.c.l.b16 %v123
  %v221 = vunpack.c.h.b16 %v123
  %v222 = vunpack.c.l.b16 %v124
  %v223 = vunpack.c.h.b16 %v124
  %v224 = vunpack.c.l.b16 %v125
  %v225 = vunpack.c.h.b16 %v125
  %v226 = vpack.c.b16 %v216, %v214
  %v227 = vpack.c.b16 %v217, %v215
  %v228 = vpack.c.b16 %v220, %v218
  %v229 = vpack.c.b16 %v221, %v219
  %v230 = vpack.c.b16 %v224, %v222
  %v231 = vpack.c.b16 %v225, %v223
  %vm238 = vcmask 392192
  %v240 = vsel %vm238, %v202, 0
  %242 = vmatpush.bf16.msra.mxu0 0
  %243 = vmatpush.bf16.msra.mxu0 0
  %244 = vmatpush.bf16.msra.mxu0 0
  %245 = vmatpush.bf16.msra.mxu0 0
  %246 = vmatpush.bf16.msra.mxu0 0
  %247 = vmatpush.bf16.msra.mxu0 %v230
  %248 = vmatpush.bf16.msra.mxu0 %v228
  %249 = vmatpush.bf16.msra.mxu0 %v226
  %250 = vmatmul.bf16.gmra.mxu0 %v240
  %v251 = vpop.f32.mrf.mxu0
  %v252 = vadd.f32 %v204, %v251
  %v253 = vpop.f32.mrf.mxu0
  %v254 = vadd.f32 %v204, %v253
  %255 = vdwg.mxu0
  %256 = vmatpush.bf16.msra.mxu0 0
  %257 = vmatpush.bf16.msra.mxu0 0
  %258 = vmatpush.bf16.msra.mxu0 0
  %259 = vmatpush.bf16.msra.mxu0 0
  %260 = vmatpush.bf16.msra.mxu0 0
  %261 = vmatpush.bf16.msra.mxu0 %v231
  %262 = vmatpush.bf16.msra.mxu0 %v229
  %263 = vmatpush.bf16.msra.mxu0 %v227
  %264 = vmatmul.bf16.gmra.mxu0 %v240
  %v265 = vpop.f32.mrf.mxu0
  %v266 = vadd.f32 %v205, %v265
  %v267 = vpop.f32.mrf.mxu0
  %v268 = vadd.f32 %v205, %v267
  %269 = vdwg.mxu0
  %v270 = vpack.c.bf16 %v252, %v252
  %v271 = vpack.c.bf16 %v254, %v254
  %v273 = vunpack.c.l.b16 %v270
  %v274 = vpack.c.b16 %v273, %v273
  %275 = vrot.lane.b32.xlu0 %v274, 64
  %v276 = vpop.permute.xlu0 %275
  %vm277 = vcmask 130048
  %v279 = vsel %vm277, %v270, 0
  %v282 = vsel %vm277, %v276, 0
  %284 = vmatpush.bf16.xpose.msra.mxu0 0
  %285 = vmatpush.bf16.xpose.msra.mxu0 0
  %286 = vmatpush.bf16.xpose.msra.mxu0 0
  %287 = vmatpush.bf16.xpose.msra.mxu0 0
  %288 = vmatpush.bf16.xpose.msra.mxu0 0
  %289 = vmatpush.bf16.xpose.msra.mxu0 0
  %290 = vmatpush.bf16.xpose.msra.mxu0 0
  %291 = vmatpush.bf16.xpose.msra.mxu0 %v282
  %292 = vmatmul.bf16.gmra.mxu0 %v279
  %v293 = vpop.f32.mrf.mxu0
  %v294 = vadd.f32 0.0, %v293
  %v295 = vpop.f32.mrf.mxu0
  %296 = vdwg.mxu0
  %v298 = vunpack.c.l.b16 %v271
  %v299 = vpack.c.b16 %v298, %v298
  %300 = vrot.lane.b32.xlu0 %v299, 64
  %v301 = vpop.permute.xlu0 %300
  %v303 = vsel %vm277, %v271, 0
  %v306 = vsel %vm277, %v301, 0
  %308 = vmatpush.bf16.xpose.msra.mxu0 0
  %309 = vmatpush.bf16.xpose.msra.mxu0 0
  %310 = vmatpush.bf16.xpose.msra.mxu0 0
  %311 = vmatpush.bf16.xpose.msra.mxu0 0
  %312 = vmatpush.bf16.xpose.msra.mxu0 0
  %313 = vmatpush.bf16.xpose.msra.mxu0 0
  %314 = vmatpush.bf16.xpose.msra.mxu0 0
  %315 = vmatpush.bf16.xpose.msra.mxu0 %v306
  %316 = vmatmul.bf16.gmra.mxu0 %v303
  %v317 = vpop.f32.mrf.mxu0
  %v318 = vadd.f32 0.0, %v317
  %v319 = vpop.f32.mrf.mxu0
  %320 = vdwg.mxu0
  %v321 = vmul.f32 %v294, 0.28867513
  %v322 = vmul.f32 %v318, 0.28867513
  %v325 = vperm.slane %v118, 0
  %v326 = vperm.slane %v119, 0
  %v329 = vadd.f32 %v321, %v325
  %v330 = vadd.f32 %v322, %v326
  %vm331 = vcmask 64512
  %v332 = vsel %vm331, %v329, -inf
  %333 = vmax.xlane.f32.xlu0 %v332
  %v334 = vpop.xlane.xlu0 %333
  %v335 = vsel %vm331, %v330, -inf
  %336 = vmax.xlane.f32.xlu0 %v335
  %v337 = vpop.xlane.xlu0 %336
  %v338 = vsub.f32 %v329, %v334
  %v339 = vsub.f32 %v330, %v337
  %v340 = vmul.f32 %v338, 1.442695
  %v341 = vpow.pop %v340
  %v342 = vmul.f32 %v339, 1.442695
  %v343 = vpow.pop %v342
  %v344 = vsel %vm331, %v341, 0.0
  %345 = vadd.xlane.f32.xlu0 %v344
  %v346 = vpop.xlane.xlu0 %345
  %v347 = vsel %vm331, %v343, 0.0
  %348 = vadd.xlane.f32.xlu0 %v347
  %v349 = vpop.xlane.xlu0 %348
  %v350 = vrcp.pop %v346
  %v351 = vmul.f32 %v346, %v350
  %v352 = vsub.f32 1.0, %v351
  %v353 = vmul.f32 %v350, %v352
  %v354 = vadd.f32 %v350, %v353
  %vm355 = vweird.f32 %v346
  %vm356 = vweird.f32 %v350
  %vm357 = vmor %vm355, %vm356
  %v358 = vsel %vm357, %v350, %v354
  %v359 = vand.u32 2147483647, %v346
  %vm360 = vcmp.eq.f32.partialorder %v359, 8.507059e+37
  %v361 = vand.u32 %v346, 2147483648
  %v362 = vor.u32 1.1754944e-38, %v361
  %v363 = vsel %vm360, %v362, %v358
  %v364 = vmul.f32 %v341, %v363
  %v365 = vrcp.pop %v349
  %v366 = vmul.f32 %v349, %v365
  %v367 = vsub.f32 1.0, %v366
  %v368 = vmul.f32 %v365, %v367
  %v369 = vadd.f32 %v365, %v368
  %vm370 = vweird.f32 %v349
  %vm371 = vweird.f32 %v365
  %vm372 = vmor %vm370, %vm371
  %v373 = vsel %vm372, %v365, %v369
  %v374 = vand.u32 2147483647, %v349
  %vm375 = vcmp.eq.f32.partialorder %v374, 8.507059e+37
  %v376 = vand.u32 %v349, 2147483648
  %v377 = vor.u32 1.1754944e-38, %v376
  %v378 = vsel %vm375, %v377, %v373
  %v379 = vmul.f32 %v343, %v378
  %v380 = vpack.c.bf16 %v364, %v364
  %v381 = vpack.c.bf16 %v379, %v379
  %v382 = vpack.c.bf16 %v266, %v266
  %v383 = vpack.c.bf16 %v268, %v268
  %v385 = vsel %vm331, %v380, 0
  %vm387 = vcmask 1043456
  %v389 = vsel %vm387, %v382, 0
  %391 = vmatpush.bf16.msra.mxu0 0
  %392 = vmatpush.bf16.msra.mxu0 0
  %393 = vmatpush.bf16.msra.mxu0 0
  %394 = vmatpush.bf16.msra.mxu0 0
  %395 = vmatpush.bf16.msra.mxu0 0
  %396 = vmatpush.bf16.msra.mxu0 0
  %397 = vmatpush.bf16.msra.mxu0 0
  %398 = vmatpush.bf16.msra.mxu0 %v389
  %399 = vmatmul.bf16.gmra.mxu0 %v385
  %v400 = vpop.f32.mrf.mxu0
  %v401 = vadd.f32 0.0, %v400
  %v402 = vpop.f32.mrf.mxu0
  %403 = vdwg.mxu0
  %v405 = vsel %vm331, %v381, 0
  %v408 = vsel %vm387, %v383, 0
  %410 = vmatpush.bf16.msra.mxu0 0
  %411 = vmatpush.bf16.msra.mxu0 0
  %412 = vmatpush.bf16.msra.mxu0 0
  %413 = vmatpush.bf16.msra.mxu0 0
  %414 = vmatpush.bf16.msra.mxu0 0
  %415 = vmatpush.bf16.msra.mxu0 0
  %416 = vmatpush.bf16.msra.mxu0 0
  %417 = vmatpush.bf16.msra.mxu0 %v408
  %418 = vmatmul.bf16.gmra.mxu0 %v405
  %v419 = vpop.f32.mrf.mxu0
  %v420 = vadd.f32 0.0, %v419
  %v421 = vpop.f32.mrf.mxu0
  %422 = vdwg.mxu0
  %423 = vrot.lane.b32.xlu0 %v274, 112
  %v424 = vpop.permute.xlu0 %423
  %425 = vrot.lane.b32.xlu0 %v274, 48
  %v426 = vpop.permute.xlu0 %425
  %v428 = vsel %vm277, %v424, 0
  %v431 = vsel %vm277, %v426, 0
  %433 = vmatpush.bf16.xpose.msra.mxu0 0
  %434 = vmatpush.bf16.xpose.msra.mxu0 0
  %435 = vmatpush.bf16.xpose.msra.mxu0 0
  %436 = vmatpush.bf16.xpose.msra.mxu0 0
  %437 = vmatpush.bf16.xpose.msra.mxu0 0
  %438 = vmatpush.bf16.xpose.msra.mxu0 0
  %439 = vmatpush.bf16.xpose.msra.mxu0 0
  %440 = vmatpush.bf16.xpose.msra.mxu0 %v431
  %441 = vmatmul.bf16.gmra.mxu0 %v428
  %v442 = vpop.f32.mrf.mxu0
  %v443 = vadd.f32 0.0, %v442
  %v444 = vpop.f32.mrf.mxu0
  %445 = vdwg.mxu0
  %446 = vrot.lane.b32.xlu0 %v299, 112
  %v447 = vpop.permute.xlu0 %446
  %448 = vrot.lane.b32.xlu0 %v299, 48
  %v449 = vpop.permute.xlu0 %448
  %v451 = vsel %vm277, %v447, 0
  %v454 = vsel %vm277, %v449, 0
  %456 = vmatpush.bf16.xpose.msra.mxu0 0
  %457 = vmatpush.bf16.xpose.msra.mxu0 0
  %458 = vmatpush.bf16.xpose.msra.mxu0 0
  %459 = vmatpush.bf16.xpose.msra.mxu0 0
  %460 = vmatpush.bf16.xpose.msra.mxu0 0
  %461 = vmatpush.bf16.xpose.msra.mxu0 0
  %462 = vmatpush.bf16.xpose.msra.mxu0 0
  %463 = vmatpush.bf16.xpose.msra.mxu0 %v454
  %464 = vmatmul.bf16.gmra.mxu0 %v451
  %v465 = vpop.f32.mrf.mxu0
  %v466 = vadd.f32 0.0, %v465
  %v467 = vpop.f32.mrf.mxu0
  %468 = vdwg.mxu0
  %v469 = vmul.f32 %v443, 0.28867513
  %v470 = vmul.f32 %v466, 0.28867513
  %v471 = vadd.f32 %v469, %v325
  %v472 = vadd.f32 %v470, %v326
  %v473 = vsel %vm331, %v471, -inf
  %474 = vmax.xlane.f32.xlu0 %v473
  %v475 = vpop.xlane.xlu0 %474
  %v476 = vsel %vm331, %v472, -inf
  %477 = vmax.xlane.f32.xlu0 %v476
  %v478 = vpop.xlane.xlu0 %477
  %v479 = vsub.f32 %v471, %v475
  %v480 = vsub.f32 %v472, %v478
  %v481 = vmul.f32 %v479, 1.442695
  %v482 = vpow.pop %v481
  %v483 = vmul.f32 %v480, 1.442695
  %v484 = vpow.pop %v483
  %v485 = vsel %vm331, %v482, 0.0
  %486 = vadd.xlane.f32.xlu0 %v485
  %v487 = vpop.xlane.xlu0 %486
  %v488 = vsel %vm331, %v484, 0.0
  %489 = vadd.xlane.f32.xlu0 %v488
  %v490 = vpop.xlane.xlu0 %489
  %v491 = vrcp.pop %v487
  %v492 = vmul.f32 %v487, %v491
  %v493 = vsub.f32 1.0, %v492
  %v494 = vmul.f32 %v491, %v493
  %v495 = vadd.f32 %v491, %v494
  %vm496 = vweird.f32 %v487
  %vm497 = vweird.f32 %v491
  %vm498 = vmor %vm496, %vm497
  %v499 = vsel %vm498, %v491, %v495
  %v500 = vand.u32 2147483647, %v487
  %vm501 = vcmp.eq.f32.partialorder %v500, 8.507059e+37
  %v502 = vand.u32 %v487, 2147483648
  %v503 = vor.u32 1.1754944e-38, %v502
  %v504 = vsel %vm501, %v503, %v499
  %v505 = vmul.f32 %v482, %v504
  %v506 = vrcp.pop %v490
  %v507 = vmul.f32 %v490, %v506
  %v508 = vsub.f32 1.0, %v507
  %v509 = vmul.f32 %v506, %v508
  %v510 = vadd.f32 %v506, %v509
  %vm511 = vweird.f32 %v490
  %vm512 = vweird.f32 %v506
  %vm513 = vmor %vm511, %vm512
  %v514 = vsel %vm513, %v506, %v510
  %v515 = vand.u32 2147483647, %v490
  %vm516 = vcmp.eq.f32.partialorder %v515, 8.507059e+37
  %v517 = vand.u32 %v490, 2147483648
  %v518 = vor.u32 1.1754944e-38, %v517
  %v519 = vsel %vm516, %v518, %v514
  %v520 = vmul.f32 %v484, %v519
  %v521 = vpack.c.bf16 %v505, %v505
  %v522 = vpack.c.bf16 %v520, %v520
  %v524 = vunpack.c.l.b16 %v382
  %v525 = vpack.c.b16 %v524, %v524
  %526 = vrot.lane.b32.xlu0 %v525, 112
  %v527 = vpop.permute.xlu0 %526
  %v529 = vsel %vm331, %v521, 0
  %v532 = vsel %vm387, %v527, 0
  %534 = vmatpush.bf16.msra.mxu0 0
  %535 = vmatpush.bf16.msra.mxu0 0
  %536 = vmatpush.bf16.msra.mxu0 0
  %537 = vmatpush.bf16.msra.mxu0 0
  %538 = vmatpush.bf16.msra.mxu0 0
  %539 = vmatpush.bf16.msra.mxu0 0
  %540 = vmatpush.bf16.msra.mxu0 0
  %541 = vmatpush.bf16.msra.mxu0 %v532
  %542 = vmatmul.bf16.gmra.mxu0 %v529
  %v543 = vpop.f32.mrf.mxu0
  %v544 = vadd.f32 0.0, %v543
  %v545 = vpop.f32.mrf.mxu0
  %546 = vdwg.mxu0
  %v548 = vunpack.c.l.b16 %v383
  %v549 = vpack.c.b16 %v548, %v548
  %550 = vrot.lane.b32.xlu0 %v549, 112
  %v551 = vpop.permute.xlu0 %550
  %v553 = vsel %vm331, %v522, 0
  %v556 = vsel %vm387, %v551, 0
  %558 = vmatpush.bf16.msra.mxu0 0
  %559 = vmatpush.bf16.msra.mxu0 0
  %560 = vmatpush.bf16.msra.mxu0 0
  %561 = vmatpush.bf16.msra.mxu0 0
  %562 = vmatpush.bf16.msra.mxu0 0
  %563 = vmatpush.bf16.msra.mxu0 0
  %564 = vmatpush.bf16.msra.mxu0 0
  %565 = vmatpush.bf16.msra.mxu0 %v556
  %566 = vmatmul.bf16.gmra.mxu0 %v553
  %v567 = vpop.f32.mrf.mxu0
  %v568 = vadd.f32 0.0, %v567
  %v569 = vpop.f32.mrf.mxu0
  %570 = vdwg.mxu0
  %571 = vrot.lane.b32.xlu0 %v274, 96
  %v572 = vpop.permute.xlu0 %571
  %573 = vrot.lane.b32.xlu0 %v274, 32
  %v574 = vpop.permute.xlu0 %573
  %v576 = vsel %vm277, %v572, 0
  %v579 = vsel %vm277, %v574, 0
  %581 = vmatpush.bf16.xpose.msra.mxu0 0
  %582 = vmatpush.bf16.xpose.msra.mxu0 0
  %583 = vmatpush.bf16.xpose.msra.mxu0 0
  %584 = vmatpush.bf16.xpose.msra.mxu0 0
  %585 = vmatpush.bf16.xpose.msra.mxu0 0
  %586 = vmatpush.bf16.xpose.msra.mxu0 0
  %587 = vmatpush.bf16.xpose.msra.mxu0 0
  %588 = vmatpush.bf16.xpose.msra.mxu0 %v579
  %589 = vmatmul.bf16.gmra.mxu0 %v576
  %v590 = vpop.f32.mrf.mxu0
  %v591 = vadd.f32 0.0, %v590
  %v592 = vpop.f32.mrf.mxu0
  %593 = vdwg.mxu0
  %594 = vrot.lane.b32.xlu0 %v299, 96
  %v595 = vpop.permute.xlu0 %594
  %596 = vrot.lane.b32.xlu0 %v299, 32
  %v597 = vpop.permute.xlu0 %596
  %v599 = vsel %vm277, %v595, 0
  %v602 = vsel %vm277, %v597, 0
  %604 = vmatpush.bf16.xpose.msra.mxu0 0
  %605 = vmatpush.bf16.xpose.msra.mxu0 0
  %606 = vmatpush.bf16.xpose.msra.mxu0 0
  %607 = vmatpush.bf16.xpose.msra.mxu0 0
  %608 = vmatpush.bf16.xpose.msra.mxu0 0
  %609 = vmatpush.bf16.xpose.msra.mxu0 0
  %610 = vmatpush.bf16.xpose.msra.mxu0 0
  %611 = vmatpush.bf16.xpose.msra.mxu0 %v602
  %612 = vmatmul.bf16.gmra.mxu0 %v599
  %v613 = vpop.f32.mrf.mxu0
  %v614 = vadd.f32 0.0, %v613
  %v615 = vpop.f32.mrf.mxu0
  %616 = vdwg.mxu0
  %v617 = vmul.f32 %v591, 0.28867513
  %v618 = vmul.f32 %v614, 0.28867513
  %v619 = vadd.f32 %v617, %v325
  %v620 = vadd.f32 %v618, %v326
  %v621 = vsel %vm331, %v619, -inf
  %622 = vmax.xlane.f32.xlu0 %v621
  %v623 = vpop.xlane.xlu0 %622
  %v624 = vsel %vm331, %v620, -inf
  %625 = vmax.xlane.f32.xlu0 %v624
  %v626 = vpop.xlane.xlu0 %625
  %v627 = vsub.f32 %v619, %v623
  %v628 = vsub.f32 %v620, %v626
  %v629 = vmul.f32 %v627, 1.442695
  %v630 = vpow.pop %v629
  %v631 = vmul.f32 %v628, 1.442695
  %v632 = vpow.pop %v631
  %v633 = vsel %vm331, %v630, 0.0
  %634 = vadd.xlane.f32.xlu0 %v633
  %v635 = vpop.xlane.xlu0 %634
  %v636 = vsel %vm331, %v632, 0.0
  %637 = vadd.xlane.f32.xlu0 %v636
  %v638 = vpop.xlane.xlu0 %637
  %v639 = vrcp.pop %v635
  %v640 = vmul.f32 %v635, %v639
  %v641 = vsub.f32 1.0, %v640
  %v642 = vmul.f32 %v639, %v641
  %v643 = vadd.f32 %v639, %v642
  %vm644 = vweird.f32 %v635
  %vm645 = vweird.f32 %v639
  %vm646 = vmor %vm644, %vm645
  %v647 = vsel %vm646, %v639, %v643
  %v648 = vand.u32 2147483647, %v635
  %vm649 = vcmp.eq.f32.partialorder %v648, 8.507059e+37
  %v650 = vand.u32 %v635, 2147483648
  %v651 = vor.u32 1.1754944e-38, %v650
  %v652 = vsel %vm649, %v651, %v647
  %v653 = vmul.f32 %v630, %v652
  %v654 = vrcp.pop %v638
  %v655 = vmul.f32 %v638, %v654
  %v656 = vsub.f32 1.0, %v655
  %v657 = vmul.f32 %v654, %v656
  %v658 = vadd.f32 %v654, %v657
  %vm659 = vweird.f32 %v638
  %vm660 = vweird.f32 %v654
  %vm661 = vmor %vm659, %vm660
  %v662 = vsel %vm661, %v654, %v658
  %v663 = vand.u32 2147483647, %v638
  %vm664 = vcmp.eq.f32.partialorder %v663, 8.507059e+37
  %v665 = vand.u32 %v638, 2147483648
  %v666 = vor.u32 1.1754944e-38, %v665
  %v667 = vsel %vm664, %v666, %v662
  %v668 = vmul.f32 %v632, %v667
  %v669 = vpack.c.bf16 %v653, %v653
  %v670 = vpack.c.bf16 %v668, %v668
  %671 = vrot.lane.b32.xlu0 %v525, 96
  %v672 = vpop.permute.xlu0 %671
  %v674 = vsel %vm331, %v669, 0
  %v677 = vsel %vm387, %v672, 0
  %679 = vmatpush.bf16.msra.mxu0 0
  %680 = vmatpush.bf16.msra.mxu0 0
  %681 = vmatpush.bf16.msra.mxu0 0
  %682 = vmatpush.bf16.msra.mxu0 0
  %683 = vmatpush.bf16.msra.mxu0 0
  %684 = vmatpush.bf16.msra.mxu0 0
  %685 = vmatpush.bf16.msra.mxu0 0
  %686 = vmatpush.bf16.msra.mxu0 %v677
  %687 = vmatmul.bf16.gmra.mxu0 %v674
  %v688 = vpop.f32.mrf.mxu0
  %v689 = vadd.f32 0.0, %v688
  %v690 = vpop.f32.mrf.mxu0
  %691 = vdwg.mxu0
  %692 = vrot.lane.b32.xlu0 %v549, 96
  %v693 = vpop.permute.xlu0 %692
  %v695 = vsel %vm331, %v670, 0
  %v698 = vsel %vm387, %v693, 0
  %700 = vmatpush.bf16.msra.mxu0 0
  %701 = vmatpush.bf16.msra.mxu0 0
  %702 = vmatpush.bf16.msra.mxu0 0
  %703 = vmatpush.bf16.msra.mxu0 0
  %704 = vmatpush.bf16.msra.mxu0 0
  %705 = vmatpush.bf16.msra.mxu0 0
  %706 = vmatpush.bf16.msra.mxu0 0
  %707 = vmatpush.bf16.msra.mxu0 %v698
  %708 = vmatmul.bf16.gmra.mxu0 %v695
  %v709 = vpop.f32.mrf.mxu0
  %v710 = vadd.f32 0.0, %v709
  %v711 = vpop.f32.mrf.mxu0
  %712 = vdwg.mxu0
  %713 = vrot.lane.b32.xlu0 %v274, 80
  %v714 = vpop.permute.xlu0 %713
  %715 = vrot.lane.b32.xlu0 %v274, 16
  %v716 = vpop.permute.xlu0 %715
  %v718 = vsel %vm277, %v714, 0
  %v721 = vsel %vm277, %v716, 0
  %723 = vmatpush.bf16.xpose.msra.mxu0 0
  %724 = vmatpush.bf16.xpose.msra.mxu0 0
  %725 = vmatpush.bf16.xpose.msra.mxu0 0
  %726 = vmatpush.bf16.xpose.msra.mxu0 0
  %727 = vmatpush.bf16.xpose.msra.mxu0 0
  %728 = vmatpush.bf16.xpose.msra.mxu0 0
  %729 = vmatpush.bf16.xpose.msra.mxu0 0
  %730 = vmatpush.bf16.xpose.msra.mxu0 %v721
  %731 = vmatmul.bf16.gmra.mxu0 %v718
  %v732 = vpop.f32.mrf.mxu0
  %v733 = vadd.f32 0.0, %v732
  %v734 = vpop.f32.mrf.mxu0
  %735 = vdwg.mxu0
  %736 = vrot.lane.b32.xlu0 %v299, 80
  %v737 = vpop.permute.xlu0 %736
  %738 = vrot.lane.b32.xlu0 %v299, 16
  %v739 = vpop.permute.xlu0 %738
  %v741 = vsel %vm277, %v737, 0
  %v744 = vsel %vm277, %v739, 0
  %746 = vmatpush.bf16.xpose.msra.mxu0 0
  %747 = vmatpush.bf16.xpose.msra.mxu0 0
  %748 = vmatpush.bf16.xpose.msra.mxu0 0
  %749 = vmatpush.bf16.xpose.msra.mxu0 0
  %750 = vmatpush.bf16.xpose.msra.mxu0 0
  %751 = vmatpush.bf16.xpose.msra.mxu0 0
  %752 = vmatpush.bf16.xpose.msra.mxu0 0
  %753 = vmatpush.bf16.xpose.msra.mxu0 %v744
  %754 = vmatmul.bf16.gmra.mxu0 %v741
  %v755 = vpop.f32.mrf.mxu0
  %v756 = vadd.f32 0.0, %v755
  %v757 = vpop.f32.mrf.mxu0
  %758 = vdwg.mxu0
  %v759 = vmul.f32 %v733, 0.28867513
  %v760 = vmul.f32 %v756, 0.28867513
  %v761 = vadd.f32 %v759, %v325
  %v762 = vadd.f32 %v760, %v326
  %v763 = vsel %vm331, %v761, -inf
  %764 = vmax.xlane.f32.xlu0 %v763
  %v765 = vpop.xlane.xlu0 %764
  %v766 = vsel %vm331, %v762, -inf
  %767 = vmax.xlane.f32.xlu0 %v766
  %v768 = vpop.xlane.xlu0 %767
  %v769 = vsub.f32 %v761, %v765
  %v770 = vsub.f32 %v762, %v768
  %v771 = vmul.f32 %v769, 1.442695
  %v772 = vpow.pop %v771
  %v773 = vmul.f32 %v770, 1.442695
  %v774 = vpow.pop %v773
  %v775 = vsel %vm331, %v772, 0.0
  %776 = vadd.xlane.f32.xlu0 %v775
  %v777 = vpop.xlane.xlu0 %776
  %v778 = vsel %vm331, %v774, 0.0
  %779 = vadd.xlane.f32.xlu0 %v778
  %v780 = vpop.xlane.xlu0 %779
  %v781 = vrcp.pop %v777
  %v782 = vmul.f32 %v777, %v781
  %v783 = vsub.f32 1.0, %v782
  %v784 = vmul.f32 %v781, %v783
  %v785 = vadd.f32 %v781, %v784
  %vm786 = vweird.f32 %v777
  %vm787 = vweird.f32 %v781
  %vm788 = vmor %vm786, %vm787
  %v789 = vsel %vm788, %v781, %v785
  %v790 = vand.u32 2147483647, %v777
  %vm791 = vcmp.eq.f32.partialorder %v790, 8.507059e+37
  %v792 = vand.u32 %v777, 2147483648
  %v793 = vor.u32 1.1754944e-38, %v792
  %v794 = vsel %vm791, %v793, %v789
  %v795 = vmul.f32 %v772, %v794
  %v796 = vrcp.pop %v780
  %v797 = vmul.f32 %v780, %v796
  %v798 = vsub.f32 1.0, %v797
  %v799 = vmul.f32 %v796, %v798
  %v800 = vadd.f32 %v796, %v799
  %vm801 = vweird.f32 %v780
  %vm802 = vweird.f32 %v796
  %vm803 = vmor %vm801, %vm802
  %v804 = vsel %vm803, %v796, %v800
  %v805 = vand.u32 2147483647, %v780
  %vm806 = vcmp.eq.f32.partialorder %v805, 8.507059e+37
  %v807 = vand.u32 %v780, 2147483648
  %v808 = vor.u32 1.1754944e-38, %v807
  %v809 = vsel %vm806, %v808, %v804
  %v810 = vmul.f32 %v774, %v809
  %v811 = vpack.c.bf16 %v795, %v795
  %v812 = vpack.c.bf16 %v810, %v810
  %813 = vrot.lane.b32.xlu0 %v525, 80
  %v814 = vpop.permute.xlu0 %813
  %v816 = vsel %vm331, %v811, 0
  %v819 = vsel %vm387, %v814, 0
  %821 = vmatpush.bf16.msra.mxu0 0
  %822 = vmatpush.bf16.msra.mxu0 0
  %823 = vmatpush.bf16.msra.mxu0 0
  %824 = vmatpush.bf16.msra.mxu0 0
  %825 = vmatpush.bf16.msra.mxu0 0
  %826 = vmatpush.bf16.msra.mxu0 0
  %827 = vmatpush.bf16.msra.mxu0 0
  %828 = vmatpush.bf16.msra.mxu0 %v819
  %829 = vmatmul.bf16.gmra.mxu0 %v816
  %v830 = vpop.f32.mrf.mxu0
  %v831 = vadd.f32 0.0, %v830
  %v832 = vpop.f32.mrf.mxu0
  %833 = vdwg.mxu0
  %834 = vrot.lane.b32.xlu0 %v549, 80
  %v835 = vpop.permute.xlu0 %834
  %v837 = vsel %vm331, %v812, 0
  %v840 = vsel %vm387, %v835, 0
  %842 = vmatpush.bf16.msra.mxu0 0
  %843 = vmatpush.bf16.msra.mxu0 0
  %844 = vmatpush.bf16.msra.mxu0 0
  %845 = vmatpush.bf16.msra.mxu0 0
  %846 = vmatpush.bf16.msra.mxu0 0
  %847 = vmatpush.bf16.msra.mxu0 0
  %848 = vmatpush.bf16.msra.mxu0 0
  %849 = vmatpush.bf16.msra.mxu0 %v840
  %850 = vmatmul.bf16.gmra.mxu0 %v837
  %v851 = vpop.f32.mrf.mxu0
  %v852 = vadd.f32 0.0, %v851
  %v853 = vpop.f32.mrf.mxu0
  %854 = vdwg.mxu0
  %857 = vrot.lane.b32.xlu0 %v544, 16
  %v858 = vpop.permute.xlu0 %857
  %859 = vrot.lane.b32.xlu0 %v568, 16
  %v860 = vpop.permute.xlu0 %859
  %865 = vrot.lane.b32.xlu0 %v689, 32
  %v866 = vpop.permute.xlu0 %865
  %867 = vrot.lane.b32.xlu0 %v710, 32
  %v868 = vpop.permute.xlu0 %867
  %873 = vrot.lane.b32.xlu0 %v831, 48
  %v874 = vpop.permute.xlu0 %873
  %875 = vrot.lane.b32.xlu0 %v852, 48
  %v876 = vpop.permute.xlu0 %875
  %v879 = vsel %vm277, %v401, %v858
  %v880 = vsel %vm277, %v420, %v860
  %v881 = vsel %vm92, %v879, %v866
  %v882 = vsel %vm92, %v880, %v868
  %v883 = vsel %vm238, %v881, %v874
  %v884 = vsel %vm238, %v882, %v876
  %v885 = vpack.c.bf16 %v884, %v883
  %v887 = vperm.slane %v135, 0
  %v897 = vunpack.c.l.b16 %v127
  %v898 = vunpack.c.l.b16 %v128
  %v899 = vunpack.c.l.b16 %v129
  %v900 = vunpack.c.l.b16 %v130
  %v901 = vunpack.c.l.b16 %v131
  %v902 = vunpack.c.l.b16 %v132
  %v903 = vunpack.c.l.b16 %v133
  %v904 = vunpack.c.l.b16 %v134
  %v905 = vpack.c.b16 %v898, %v897
  %v906 = vpack.c.b16 %v900, %v899
  %v907 = vpack.c.b16 %v902, %v901
  %v908 = vpack.c.b16 %v904, %v903
  %vm913 = vcmask 523264
  %v915 = vsel %vm913, %v885, 0
  %917 = vmatpush.bf16.msra.mxu0 0
  %918 = vmatpush.bf16.msra.mxu0 0
  %919 = vmatpush.bf16.msra.mxu0 0
  %920 = vmatpush.bf16.msra.mxu0 0
  %921 = vmatpush.bf16.msra.mxu0 %v908
  %922 = vmatpush.bf16.msra.mxu0 %v907
  %923 = vmatpush.bf16.msra.mxu0 %v906
  %924 = vmatpush.bf16.msra.mxu0 %v905
  %925 = vmatmul.bf16.gmra.mxu0 %v915
  %v926 = vpop.f32.mrf.mxu0
  %v927 = vadd.f32 %v887, %v926
  %v928 = vpop.f32.mrf.mxu0
  %v929 = vadd.f32 %v887, %v928
  %930 = vdwg.mxu0
  %v931 = vadd.f32 %v116, %v927
  %v932 = vadd.f32 %v117, %v929
  %v933 = vsel %vm238, %v931, 0.0
  %934 = vadd.xlane.f32.xlu0 %v933
  %v935 = vpop.xlane.xlu0 %934
  %v936 = vsel %vm238, %v932, 0.0
  %937 = vadd.xlane.f32.xlu0 %v936
  %v938 = vpop.xlane.xlu0 %937
  %v939 = vrcp.pop 48.0
  %v940 = vmul.f32 48.0, %v939
  %v941 = vsub.f32 1.0, %v940
  %v942 = vmul.f32 %v939, %v941
  %v943 = vadd.f32 %v939, %v942
  %vm944 = vweird.f32 %v939
  %v945 = vsel %vm944, %v939, %v943
  %v946 = vmul.f32 %v935, %v945
  %v947 = vmul.f32 %v938, %v945
  %v948 = vsub.f32 %v931, %v946
  %v949 = vsub.f32 %v932, %v947
  %v950 = vmul.f32 %v948, %v948
  %v951 = vmul.f32 %v949, %v949
  %v952 = vsel %vm238, %v950, 0.0
  %953 = vadd.xlane.f32.xlu0 %v952
  %v954 = vpop.xlane.xlu0 %953
  %v955 = vsel %vm238, %v951, 0.0
  %956 = vadd.xlane.f32.xlu0 %v955
  %v957 = vpop.xlane.xlu0 %956
  %v958 = vmul.f32 %v954, %v945
  %v959 = vmul.f32 %v957, %v945
  %v960 = vadd.f32 %v958, 1e-05
  %v961 = vadd.f32 %v959, 1e-05
  %v962 = vrsqrt.pop %v960
  %v963 = vmul.f32 %v962, %v960
  %v964 = vmul.f32 %v963, %v962
  %v965 = vmul.f32 0.5, %v964
  %v966 = vsub.f32 1.5, %v965
  %v967 = vmul.f32 %v962, %v966
  %vm968 = vweird.f32 %v960
  %vm969 = vweird.f32 %v962
  %vm970 = vmor %vm968, %vm969
  %v971 = vsel %vm970, %v962, %v967
  %v972 = vrsqrt.pop %v961
  %v973 = vmul.f32 %v972, %v961
  %v974 = vmul.f32 %v973, %v972
  %v975 = vmul.f32 0.5, %v974
  %v976 = vsub.f32 1.5, %v975
  %v977 = vmul.f32 %v972, %v976
  %vm978 = vweird.f32 %v961
  %vm979 = vweird.f32 %v972
  %vm980 = vmor %vm978, %vm979
  %v981 = vsel %vm980, %v972, %v977
  %v982 = vmul.f32 %v948, %v971
  %v983 = vmul.f32 %v949, %v981
  %v985 = vperm.slane %v136, 0
  %v987 = vmul.f32 %v982, %v985
  %v988 = vmul.f32 %v983, %v985
  %v990 = vperm.slane %v137, 0
  %v992 = vadd.f32 %v987, %v990
  %v993 = vadd.f32 %v988, %v990
  %v994 = vpack.c.bf16 %v993, %v992
  %v996 = vperm.slane %v150, 0
  %v997 = vperm.slane %v150, 1
  %v998 = vperm.slane %v150, 2
  %v1014 = vunpack.c.l.b16 %v138
  %v1015 = vunpack.c.h.b16 %v138
  %v1016 = vunpack.c.l.b16 %v139
  %v1017 = vunpack.c.l.b16 %v140
  %v1018 = vunpack.c.h.b16 %v140
  %v1019 = vunpack.c.l.b16 %v141
  %v1020 = vunpack.c.l.b16 %v142
  %v1021 = vunpack.c.h.b16 %v142
  %v1022 = vunpack.c.l.b16 %v143
  %v1023 = vunpack.c.l.b16 %v144
  %v1024 = vunpack.c.h.b16 %v144
  %v1025 = vunpack.c.l.b16 %v145
  %v1026 = vunpack.c.l.b16 %v146
  %v1027 = vunpack.c.h.b16 %v146
  %v1028 = vunpack.c.l.b16 %v147
  %v1029 = vunpack.c.l.b16 %v148
  %v1030 = vunpack.c.h.b16 %v148
  %v1031 = vunpack.c.l.b16 %v149
  %v1032 = vpack.c.b16 %v1017, %v1014
  %v1033 = vpack.c.b16 %v1018, %v1015
  %v1034 = vpack.c.b16 %v1019, %v1016
  %v1035 = vpack.c.b16 %v1023, %v1020
  %v1036 = vpack.c.b16 %v1024, %v1021
  %v1037 = vpack.c.b16 %v1025, %v1022
  %v1038 = vpack.c.b16 %v1029, %v1026
  %v1039 = vpack.c.b16 %v1030, %v1027
  %v1040 = vpack.c.b16 %v1031, %v1028
  %v1051 = vsel %vm238, %v994, 0
  %1053 = vmatpush.bf16.msra.mxu0 0
  %1054 = vmatpush.bf16.msra.mxu0 0
  %1055 = vmatpush.bf16.msra.mxu0 0
  %1056 = vmatpush.bf16.msra.mxu0 0
  %1057 = vmatpush.bf16.msra.mxu0 0
  %1058 = vmatpush.bf16.msra.mxu0 %v1038
  %1059 = vmatpush.bf16.msra.mxu0 %v1035
  %1060 = vmatpush.bf16.msra.mxu0 %v1032
  %1061 = vmatmul.bf16.gmra.mxu0 %v1051
  %v1062 = vpop.f32.mrf.mxu0
  %v1063 = vadd.f32 %v996, %v1062
  %v1064 = vpop.f32.mrf.mxu0
  %v1065 = vadd.f32 %v996, %v1064
  %1066 = vdwg.mxu0
  %1067 = vmatpush.bf16.msra.mxu0 0
  %1068 = vmatpush.bf16.msra.mxu0 0
  %1069 = vmatpush.bf16.msra.mxu0 0
  %1070 = vmatpush.bf16.msra.mxu0 0
  %1071 = vmatpush.bf16.msra.mxu0 0
  %1072 = vmatpush.bf16.msra.mxu0 %v1039
  %1073 = vmatpush.bf16.msra.mxu0 %v1036
  %1074 = vmatpush.bf16.msra.mxu0 %v1033
  %1075 = vmatmul.bf16.gmra.mxu0 %v1051
  %v1076 = vpop.f32.mrf.mxu0
  %v1077 = vadd.f32 %v997, %v1076
  %v1078 = vpop.f32.mrf.mxu0
  %v1079 = vadd.f32 %v997, %v1078
  %1080 = vdwg.mxu0
  %1081 = vmatpush.bf16.msra.mxu0 0
  %1082 = vmatpush.bf16.msra.mxu0 0
  %1083 = vmatpush.bf16.msra.mxu0 0
  %1084 = vmatpush.bf16.msra.mxu0 0
  %1085 = vmatpush.bf16.msra.mxu0 0
  %1086 = vmatpush.bf16.msra.mxu0 %v1040
  %1087 = vmatpush.bf16.msra.mxu0 %v1037
  %1088 = vmatpush.bf16.msra.mxu0 %v1034
  %1089 = vmatmul.bf16.gmra.mxu0 %v1051
  %v1090 = vpop.f32.mrf.mxu0
  %v1091 = vadd.f32 %v998, %v1090
  %v1092 = vpop.f32.mrf.mxu0
  %v1093 = vadd.f32 %v998, %v1092
  %1094 = vdwg.mxu0
  %v1095 = vmax.f32 %v1063, 0.0
  %v1096 = vmax.f32 %v1077, 0.0
  %v1097 = vmax.f32 %v1091, 0.0
  %v1098 = vmax.f32 %v1065, 0.0
  %v1099 = vmax.f32 %v1079, 0.0
  %v1100 = vmax.f32 %v1093, 0.0
  %v1101 = vpack.c.bf16 %v1098, %v1095
  %v1102 = vpack.c.bf16 %v1099, %v1096
  %v1103 = vpack.c.bf16 %v1100, %v1097
  %v1105 = vperm.slane %v199, 0
  %v1155 = vunpack.c.l.b16 %v151
  %v1156 = vunpack.c.l.b16 %v152
  %v1157 = vunpack.c.l.b16 %v153
  %v1158 = vunpack.c.l.b16 %v154
  %v1159 = vunpack.c.l.b16 %v155
  %v1160 = vunpack.c.l.b16 %v156
  %v1161 = vunpack.c.l.b16 %v157
  %v1162 = vunpack.c.l.b16 %v158
  %v1163 = vunpack.c.l.b16 %v159
  %v1164 = vunpack.c.l.b16 %v160
  %v1165 = vunpack.c.l.b16 %v161
  %v1166 = vunpack.c.l.b16 %v162
  %v1167 = vunpack.c.l.b16 %v163
  %v1168 = vunpack.c.l.b16 %v164
  %v1169 = vunpack.c.l.b16 %v165
  %v1170 = vunpack.c.l.b16 %v166
  %v1171 = vunpack.c.l.b16 %v167
  %v1172 = vunpack.c.l.b16 %v168
  %v1173 = vunpack.c.l.b16 %v169
  %v1174 = vunpack.c.l.b16 %v170
  %v1175 = vunpack.c.l.b16 %v171
  %v1176 = vunpack.c.l.b16 %v172
  %v1177 = vunpack.c.l.b16 %v173
  %v1178 = vunpack.c.l.b16 %v174
  %v1179 = vunpack.c.l.b16 %v175
  %v1180 = vunpack.c.l.b16 %v176
  %v1181 = vunpack.c.l.b16 %v177
  %v1182 = vunpack.c.l.b16 %v178
  %v1183 = vunpack.c.l.b16 %v179
  %v1184 = vunpack.c.l.b16 %v180
  %v1185 = vunpack.c.l.b16 %v181
  %v1186 = vunpack.c.l.b16 %v182
  %v1187 = vunpack.c.l.b16 %v183
  %v1188 = vunpack.c.l.b16 %v184
  %v1189 = vunpack.c.l.b16 %v185
  %v1190 = vunpack.c.l.b16 %v186
  %v1191 = vunpack.c.l.b16 %v187
  %v1192 = vunpack.c.l.b16 %v188
  %v1193 = vunpack.c.l.b16 %v189
  %v1194 = vunpack.c.l.b16 %v190
  %v1195 = vunpack.c.l.b16 %v191
  %v1196 = vunpack.c.l.b16 %v192
  %v1197 = vunpack.c.l.b16 %v193
  %v1198 = vunpack.c.l.b16 %v194
  %v1199 = vunpack.c.l.b16 %v195
  %v1200 = vunpack.c.l.b16 %v196
  %v1201 = vunpack.c.l.b16 %v197
  %v1202 = vunpack.c.l.b16 %v198
  %v1203 = vpack.c.b16 %v1156, %v1155
  %v1204 = vpack.c.b16 %v1158, %v1157
  %v1205 = vpack.c.b16 %v1160, %v1159
  %v1206 = vpack.c.b16 %v1162, %v1161
  %v1207 = vpack.c.b16 %v1164, %v1163
  %v1208 = vpack.c.b16 %v1166, %v1165
  %v1209 = vpack.c.b16 %v1168, %v1167
  %v1210 = vpack.c.b16 %v1170, %v1169
  %v1211 = vpack.c.b16 %v1172, %v1171
  %v1212 = vpack.c.b16 %v1174, %v1173
  %v1213 = vpack.c.b16 %v1176, %v1175
  %v1214 = vpack.c.b16 %v1178, %v1177
  %v1215 = vpack.c.b16 %v1180, %v1179
  %v1216 = vpack.c.b16 %v1182, %v1181
  %v1217 = vpack.c.b16 %v1184, %v1183
  %v1218 = vpack.c.b16 %v1186, %v1185
  %v1219 = vpack.c.b16 %v1188, %v1187
  %v1220 = vpack.c.b16 %v1190, %v1189
  %v1221 = vpack.c.b16 %v1192, %v1191
  %v1222 = vpack.c.b16 %v1194, %v1193
  %v1223 = vpack.c.b16 %v1196, %v1195
  %v1224 = vpack.c.b16 %v1198, %v1197
  %v1225 = vpack.c.b16 %v1200, %v1199
  %v1226 = vpack.c.b16 %v1202, %v1201
  %1251 = vmatpush.bf16.msra.mxu0 %v1210
  %1252 = vmatpush.bf16.msra.mxu0 %v1209
  %1253 = vmatpush.bf16.msra.mxu0 %v1208
  %1254 = vmatpush.bf16.msra.mxu0 %v1207
  %1255 = vmatpush.bf16.msra.mxu0 %v1206
  %1256 = vmatpush.bf16.msra.mxu0 %v1205
  %1257 = vmatpush.bf16.msra.mxu0 %v1204
  %1258 = vmatpush.bf16.msra.mxu0 %v1203
  %1259 = vmatmul.bf16.gmra.mxu0 %v1101
  %v1260 = vpop.f32.mrf.mxu0
  %v1261 = vadd.f32 %v1105, %v1260
  %v1262 = vpop.f32.mrf.mxu0
  %v1263 = vadd.f32 %v1105, %v1262
  %1264 = vdwg.mxu0
  %1265 = vmatpush.bf16.msra.mxu0 %v1218
  %1266 = vmatpush.bf16.msra.mxu0 %v1217
  %1267 = vmatpush.bf16.msra.mxu0 %v1216
  %1268 = vmatpush.bf16.msra.mxu0 %v1215
  %1269 = vmatpush.bf16.msra.mxu0 %v1214
  %1270 = vmatpush.bf16.msra.mxu0 %v1213
  %1271 = vmatpush.bf16.msra.mxu0 %v1212
  %1272 = vmatpush.bf16.msra.mxu0 %v1211
  %1273 = vmatmul.bf16.gmra.mxu0 %v1102
  %v1274 = vpop.f32.mrf.mxu0
  %v1275 = vadd.f32 %v1261, %v1274
  %v1276 = vpop.f32.mrf.mxu0
  %v1277 = vadd.f32 %v1263, %v1276
  %1278 = vdwg.mxu0
  %1279 = vmatpush.bf16.msra.mxu0 %v1226
  %1280 = vmatpush.bf16.msra.mxu0 %v1225
  %1281 = vmatpush.bf16.msra.mxu0 %v1224
  %1282 = vmatpush.bf16.msra.mxu0 %v1223
  %1283 = vmatpush.bf16.msra.mxu0 %v1222
  %1284 = vmatpush.bf16.msra.mxu0 %v1221
  %1285 = vmatpush.bf16.msra.mxu0 %v1220
  %1286 = vmatpush.bf16.msra.mxu0 %v1219
  %1287 = vmatmul.bf16.gmra.mxu0 %v1103
  %v1288 = vpop.f32.mrf.mxu0
  %v1289 = vadd.f32 %v1275, %v1288
  %v1290 = vpop.f32.mrf.mxu0
  %v1291 = vadd.f32 %v1277, %v1290
  %1292 = vdwg.mxu0
  %v1293 = vadd.f32 %v992, %v1289
  %v1294 = vadd.f32 %v993, %v1291
  %v1295 = vsel %vm238, %v1293, 0.0
  %1296 = vadd.xlane.f32.xlu0 %v1295
  %v1297 = vpop.xlane.xlu0 %1296
  %v1298 = vsel %vm238, %v1294, 0.0
  %1299 = vadd.xlane.f32.xlu0 %v1298
  %v1300 = vpop.xlane.xlu0 %1299
  %v1301 = vmul.f32 %v1297, %v945
  %v1302 = vmul.f32 %v1300, %v945
  %v1303 = vsub.f32 %v1293, %v1301
  %v1304 = vsub.f32 %v1294, %v1302
  %v1305 = vmul.f32 %v1303, %v1303
  %v1306 = vmul.f32 %v1304, %v1304
  %v1307 = vsel %vm238, %v1305, 0.0
  %1308 = vadd.xlane.f32.xlu0 %v1307
  %v1309 = vpop.xlane.xlu0 %1308
  %v1310 = vsel %vm238, %v1306, 0.0
  %1311 = vadd.xlane.f32.xlu0 %v1310
  %v1312 = vpop.xlane.xlu0 %1311
  %v1313 = vmul.f32 %v1309, %v945
  %v1314 = vmul.f32 %v1312, %v945
  %v1315 = vadd.f32 %v1313, 1e-05
  %v1316 = vadd.f32 %v1314, 1e-05
  %v1317 = vrsqrt.pop %v1315
  %v1318 = vmul.f32 %v1317, %v1315
  %v1319 = vmul.f32 %v1318, %v1317
  %v1320 = vmul.f32 0.5, %v1319
  %v1321 = vsub.f32 1.5, %v1320
  %v1322 = vmul.f32 %v1317, %v1321
  %vm1323 = vweird.f32 %v1315
  %vm1324 = vweird.f32 %v1317
  %vm1325 = vmor %vm1323, %vm1324
  %v1326 = vsel %vm1325, %v1317, %v1322
  %v1327 = vrsqrt.pop %v1316
  %v1328 = vmul.f32 %v1327, %v1316
  %v1329 = vmul.f32 %v1328, %v1327
  %v1330 = vmul.f32 0.5, %v1329
  %v1331 = vsub.f32 1.5, %v1330
  %v1332 = vmul.f32 %v1327, %v1331
  %vm1333 = vweird.f32 %v1316
  %vm1334 = vweird.f32 %v1327
  %vm1335 = vmor %vm1333, %vm1334
  %v1336 = vsel %vm1335, %v1327, %v1332
  %v1337 = vmul.f32 %v1303, %v1326
  %v1338 = vmul.f32 %v1304, %v1336
  %v1340 = vperm.slane %v200, 0
  %v1342 = vmul.f32 %v1337, %v1340
  %v1343 = vmul.f32 %v1338, %v1340
  %v1345 = vperm.slane %v201, 0
  %v1347 = vadd.f32 %v1342, %v1345
  %v1348 = vadd.f32 %v1343, %v1345
  %s1349 = scalar_lea.vmem %s5, 48
  %v1350 = vld [vmem:[%s1349] sm:$0xff]
  %v1351 = vld [vmem:[%s1349 + $0x8] sm:$0xff]
  %v1352 = vld [vmem:[%s1349 + $0x10] sm:$0xff]
  %v1353 = vld [vmem:[%s1349 + $0x18] sm:$0xff]
  %v1354 = vld [vmem:[%s1349 + $0x20] sm:$0xff]
  %v1355 = vld [vmem:[%s1349 + $0x28] sm:$0xff]
  %s1356 = scalar_lea.vmem %s6, 2
  %v1357 = vld [vmem:[%s1356] sm:$0x3]
  %s1358 = scalar_lea.vmem %s7, 32
  %v1359 = vld [vmem:[%s1358] sm:$0xf]
  %v1360 = vld [vmem:[%s1358 + $0x4] sm:$0xf]
  %v1361 = vld [vmem:[%s1358 + $0x8] sm:$0xf]
  %v1362 = vld [vmem:[%s1358 + $0xc] sm:$0xf]
  %v1363 = vld [vmem:[%s1358 + $0x10] sm:$0xf]
  %v1364 = vld [vmem:[%s1358 + $0x14] sm:$0xf]
  %v1365 = vld [vmem:[%s1358 + $0x18] sm:$0xf]
  %v1366 = vld [vmem:[%s1358 + $0x1c] sm:$0xf]
  %s1367 = scalar_lea.vmem %s8, 1
  %v1368 = vld [vmem:[%s1367] sm:$0x1]
  %s1369 = scalar_lea.vmem %s9, 1
  %v1370 = vld [vmem:[%s1369] sm:$0x1]
  %s1371 = scalar_lea.vmem %s10, 1
  %v1372 = vld [vmem:[%s1371] sm:$0x1]
  %s1373 = scalar_lea.vmem %s11, 72
  %v1374 = vld [vmem:[%s1373] sm:$0xff]
  %v1375 = vld [vmem:[%s1373 + $0x8] sm:$0xf]
  %v1376 = vld [vmem:[%s1373 + $0xc] sm:$0xff]
  %v1377 = vld [vmem:[%s1373 + $0x14] sm:$0xf]
  %v1378 = vld [vmem:[%s1373 + $0x18] sm:$0xff]
  %v1379 = vld [vmem:[%s1373 + $0x20] sm:$0xf]
  %v1380 = vld [vmem:[%s1373 + $0x24] sm:$0xff]
  %v1381 = vld [vmem:[%s1373 + $0x2c] sm:$0xf]
  %v1382 = vld [vmem:[%s1373 + $0x30] sm:$0xff]
  %v1383 = vld [vmem:[%s1373 + $0x38] sm:$0xf]
  %v1384 = vld [vmem:[%s1373 + $0x3c] sm:$0xff]
  %v1385 = vld [vmem:[%s1373 + $0x44] sm:$0xf]
  %s1386 = scalar_lea.vmem %s12, 3
  %v1387 = vld [vmem:[%s1386] sm:$0x7]
  %s1388 = scalar_lea.vmem %s13, 192
  %v1389 = vld [vmem:[%s1388] sm:$0xf]
  %v1390 = vld [vmem:[%s1388 + $0x4] sm:$0xf]
  %v1391 = vld [vmem:[%s1388 + $0x8] sm:$0xf]
  %v1392 = vld [vmem:[%s1388 + $0xc] sm:$0xf]
  %v1393 = vld [vmem:[%s1388 + $0x10] sm:$0xf]
  %v1394 = vld [vmem:[%s1388 + $0x14] sm:$0xf]
  %v1395 = vld [vmem:[%s1388 + $0x18] sm:$0xf]
  %v1396 = vld [vmem:[%s1388 + $0x1c] sm:$0xf]
  %v1397 = vld [vmem:[%s1388 + $0x20] sm:$0xf]
  %v1398 = vld [vmem:[%s1388 + $0x24] sm:$0xf]
  %v1399 = vld [vmem:[%s1388 + $0x28] sm:$0xf]
  %v1400 = vld [vmem:[%s1388 + $0x2c] sm:$0xf]
  %v1401 = vld [vmem:[%s1388 + $0x30] sm:$0xf]
  %v1402 = vld [vmem:[%s1388 + $0x34] sm:$0xf]
  %v1403 = vld [vmem:[%s1388 + $0x38] sm:$0xf]
  %v1404 = vld [vmem:[%s1388 + $0x3c] sm:$0xf]
  %v1405 = vld [vmem:[%s1388 + $0x40] sm:$0xf]
  %v1406 = vld [vmem:[%s1388 + $0x44] sm:$0xf]
  %v1407 = vld [vmem:[%s1388 + $0x48] sm:$0xf]
  %v1408 = vld [vmem:[%s1388 + $0x4c] sm:$0xf]
  %v1409 = vld [vmem:[%s1388 + $0x50] sm:$0xf]
  %v1410 = vld [vmem:[%s1388 + $0x54] sm:$0xf]
  %v1411 = vld [vmem:[%s1388 + $0x58] sm:$0xf]
  %v1412 = vld [vmem:[%s1388 + $0x5c] sm:$0xf]
  %v1413 = vld [vmem:[%s1388 + $0x60] sm:$0xf]
  %v1414 = vld [vmem:[%s1388 + $0x64] sm:$0xf]
  %v1415 = vld [vmem:[%s1388 + $0x68] sm:$0xf]
  %v1416 = vld [vmem:[%s1388 + $0x6c] sm:$0xf]
  %v1417 = vld [vmem:[%s1388 + $0x70] sm:$0xf]
  %v1418 = vld [vmem:[%s1388 + $0x74] sm:$0xf]
  %v1419 = vld [vmem:[%s1388 + $0x78] sm:$0xf]
  %v1420 = vld [vmem:[%s1388 + $0x7c] sm:$0xf]
  %v1421 = vld [vmem:[%s1388 + $0x80] sm:$0xf]
  %v1422 = vld [vmem:[%s1388 + $0x84] sm:$0xf]
  %v1423 = vld [vmem:[%s1388 + $0x88] sm:$0xf]
  %v1424 = vld [vmem:[%s1388 + $0x8c] sm:$0xf]
  %v1425 = vld [vmem:[%s1388 + $0x90] sm:$0xf]
  %v1426 = vld [vmem:[%s1388 + $0x94] sm:$0xf]
  %v1427 = vld [vmem:[%s1388 + $0x98] sm:$0xf]
  %v1428 = vld [vmem:[%s1388 + $0x9c] sm:$0xf]
  %v1429 = vld [vmem:[%s1388 + $0xa0] sm:$0xf]
  %v1430 = vld [vmem:[%s1388 + $0xa4] sm:$0xf]
  %v1431 = vld [vmem:[%s1388 + $0xa8] sm:$0xf]
  %v1432 = vld [vmem:[%s1388 + $0xac] sm:$0xf]
  %v1433 = vld [vmem:[%s1388 + $0xb0] sm:$0xf]
  %v1434 = vld [vmem:[%s1388 + $0xb4] sm:$0xf]
  %v1435 = vld [vmem:[%s1388 + $0xb8] sm:$0xf]
  %v1436 = vld [vmem:[%s1388 + $0xbc] sm:$0xf]
  %s1437 = scalar_lea.vmem %s14, 1
  %v1438 = vld [vmem:[%s1437] sm:$0x1]
  %s1439 = scalar_lea.vmem %s15, 1
  %v1440 = vld [vmem:[%s1439] sm:$0x1]
  %s1441 = scalar_lea.vmem %s16, 1
  %v1442 = vld [vmem:[%s1441] sm:$0x1]
  %v1443 = vpack.c.bf16 %v1348, %v1347
  %v1445 = vperm.slane %v1357, 0
  %v1446 = vperm.slane %v1357, 1
  %v1455 = vunpack.c.l.b16 %v1350
  %v1456 = vunpack.c.h.b16 %v1350
  %v1457 = vunpack.c.l.b16 %v1351
  %v1458 = vunpack.c.h.b16 %v1351
  %v1459 = vunpack.c.l.b16 %v1352
  %v1460 = vunpack.c.h.b16 %v1352
  %v1461 = vunpack.c.l.b16 %v1353
  %v1462 = vunpack.c.h.b16 %v1353
  %v1463 = vunpack.c.l.b16 %v1354
  %v1464 = vunpack.c.h.b16 %v1354
  %v1465 = vunpack.c.l.b16 %v1355
  %v1466 = vunpack.c.h.b16 %v1355
  %v1467 = vpack.c.b16 %v1457, %v1455
  %v1468 = vpack.c.b16 %v1458, %v1456
  %v1469 = vpack.c.b16 %v1461, %v1459
  %v1470 = vpack.c.b16 %v1462, %v1460
  %v1471 = vpack.c.b16 %v1465, %v1463
  %v1472 = vpack.c.b16 %v1466, %v1464
  %v1480 = vsel %vm238, %v1443, 0
  %1482 = vmatpush.bf16.msra.mxu0 0
  %1483 = vmatpush.bf16.msra.mxu0 0
  %1484 = vmatpush.bf16.msra.mxu0 0
  %1485 = vmatpush.bf16.msra.mxu0 0
  %1486 = vmatpush.bf16.msra.mxu0 0
  %1487 = vmatpush.bf16.msra.mxu0 %v1471
  %1488 = vmatpush.bf16.msra.mxu0 %v1469
  %1489 = vmatpush.bf16.msra.mxu0 %v1467
  %1490 = vmatmul.bf16.gmra.mxu0 %v1480
  %v1491 = vpop.f32.mrf.mxu0
  %v1492 = vadd.f32 %v1445, %v1491
  %v1493 = vpop.f32.mrf.mxu0
  %v1494 = vadd.f32 %v1445, %v1493
  %1495 = vdwg.mxu0
  %1496 = vmatpush.bf16.msra.mxu0 0
  %1497 = vmatpush.bf16.msra.mxu0 0
  %1498 = vmatpush.bf16.msra.mxu0 0
  %1499 = vmatpush.bf16.msra.mxu0 0
  %1500 = vmatpush.bf16.msra.mxu0 0
  %1501 = vmatpush.bf16.msra.mxu0 %v1472
  %1502 = vmatpush.bf16.msra.mxu0 %v1470
  %1503 = vmatpush.bf16.msra.mxu0 %v1468
  %1504 = vmatmul.bf16.gmra.mxu0 %v1480
  %v1505 = vpop.f32.mrf.mxu0
  %v1506 = vadd.f32 %v1446, %v1505
  %v1507 = vpop.f32.mrf.mxu0
  %v1508 = vadd.f32 %v1446, %v1507
  %1509 = vdwg.mxu0
  %v1510 = vpack.c.bf16 %v1492, %v1492
  %v1511 = vpack.c.bf16 %v1494, %v1494
  %v1513 = vunpack.c.l.b16 %v1510
  %v1514 = vpack.c.b16 %v1513, %v1513
  %1515 = vrot.lane.b32.xlu0 %v1514, 64
  %v1516 = vpop.permute.xlu0 %1515
  %v1518 = vsel %vm277, %v1510, 0
  %v1521 = vsel %vm277, %v1516, 0
  %1523 = vmatpush.bf16.xpose.msra.mxu0 0
  %1524 = vmatpush.bf16.xpose.msra.mxu0 0
  %1525 = vmatpush.bf16.xpose.msra.mxu0 0
  %1526 = vmatpush.bf16.xpose.msra.mxu0 0
  %1527 = vmatpush.bf16.xpose.msra.mxu0 0
  %1528 = vmatpush.bf16.xpose.msra.mxu0 0
  %1529 = vmatpush.bf16.xpose.msra.mxu0 0
  %1530 = vmatpush.bf16.xpose.msra.mxu0 %v1521
  %1531 = vmatmul.bf16.gmra.mxu0 %v1518
  %v1532 = vpop.f32.mrf.mxu0
  %v1533 = vadd.f32 0.0, %v1532
  %v1534 = vpop.f32.mrf.mxu0
  %1535 = vdwg.mxu0
  %v1537 = vunpack.c.l.b16 %v1511
  %v1538 = vpack.c.b16 %v1537, %v1537
  %1539 = vrot.lane.b32.xlu0 %v1538, 64
  %v1540 = vpop.permute.xlu0 %1539
  %v1542 = vsel %vm277, %v1511, 0
  %v1545 = vsel %vm277, %v1540, 0
  %1547 = vmatpush.bf16.xpose.msra.mxu0 0
  %1548 = vmatpush.bf16.xpose.msra.mxu0 0
  %1549 = vmatpush.bf16.xpose.msra.mxu0 0
  %1550 = vmatpush.bf16.xpose.msra.mxu0 0
  %1551 = vmatpush.bf16.xpose.msra.mxu0 0
  %1552 = vmatpush.bf16.xpose.msra.mxu0 0
  %1553 = vmatpush.bf16.xpose.msra.mxu0 0
  %1554 = vmatpush.bf16.xpose.msra.mxu0 %v1545
  %1555 = vmatmul.bf16.gmra.mxu0 %v1542
  %v1556 = vpop.f32.mrf.mxu0
  %v1557 = vadd.f32 0.0, %v1556
  %v1558 = vpop.f32.mrf.mxu0
  %1559 = vdwg.mxu0
  %v1560 = vmul.f32 %v1533, 0.28867513
  %v1561 = vmul.f32 %v1557, 0.28867513
  %v1562 = vadd.f32 %v1560, %v325
  %v1563 = vadd.f32 %v1561, %v326
  %v1564 = vsel %vm331, %v1562, -inf
  %1565 = vmax.xlane.f32.xlu0 %v1564
  %v1566 = vpop.xlane.xlu0 %1565
  %v1567 = vsel %vm331, %v1563, -inf
  %1568 = vmax.xlane.f32.xlu0 %v1567
  %v1569 = vpop.xlane.xlu0 %1568
  %v1570 = vsub.f32 %v1562, %v1566
  %v1571 = vsub.f32 %v1563, %v1569
  %v1572 = vmul.f32 %v1570, 1.442695
  %v1573 = vpow.pop %v1572
  %v1574 = vmul.f32 %v1571, 1.442695
  %v1575 = vpow.pop %v1574
  %v1576 = vsel %vm331, %v1573, 0.0
  %1577 = vadd.xlane.f32.xlu0 %v1576
  %v1578 = vpop.xlane.xlu0 %1577
  %v1579 = vsel %vm331, %v1575, 0.0
  %1580 = vadd.xlane.f32.xlu0 %v1579
  %v1581 = vpop.xlane.xlu0 %1580
  %v1582 = vrcp.pop %v1578
  %v1583 = vmul.f32 %v1578, %v1582
  %v1584 = vsub.f32 1.0, %v1583
  %v1585 = vmul.f32 %v1582, %v1584
  %v1586 = vadd.f32 %v1582, %v1585
  %vm1587 = vweird.f32 %v1578
  %vm1588 = vweird.f32 %v1582
  %vm1589 = vmor %vm1587, %vm1588
  %v1590 = vsel %vm1589, %v1582, %v1586
  %v1591 = vand.u32 2147483647, %v1578
  %vm1592 = vcmp.eq.f32.partialorder %v1591, 8.507059e+37
  %v1593 = vand.u32 %v1578, 2147483648
  %v1594 = vor.u32 1.1754944e-38, %v1593
  %v1595 = vsel %vm1592, %v1594, %v1590
  %v1596 = vmul.f32 %v1573, %v1595
  %v1597 = vrcp.pop %v1581
  %v1598 = vmul.f32 %v1581, %v1597
  %v1599 = vsub.f32 1.0, %v1598
  %v1600 = vmul.f32 %v1597, %v1599
  %v1601 = vadd.f32 %v1597, %v1600
  %vm1602 = vweird.f32 %v1581
  %vm1603 = vweird.f32 %v1597
  %vm1604 = vmor %vm1602, %vm1603
  %v1605 = vsel %vm1604, %v1597, %v1601
  %v1606 = vand.u32 2147483647, %v1581
  %vm1607 = vcmp.eq.f32.partialorder %v1606, 8.507059e+37
  %v1608 = vand.u32 %v1581, 2147483648
  %v1609 = vor.u32 1.1754944e-38, %v1608
  %v1610 = vsel %vm1607, %v1609, %v1605
  %v1611 = vmul.f32 %v1575, %v1610
  %v1612 = vpack.c.bf16 %v1596, %v1596
  %v1613 = vpack.c.bf16 %v1611, %v1611
  %v1614 = vpack.c.bf16 %v1506, %v1506
  %v1615 = vpack.c.bf16 %v1508, %v1508
  %v1617 = vsel %vm331, %v1612, 0
  %v1620 = vsel %vm387, %v1614, 0
  %1622 = vmatpush.bf16.msra.mxu0 0
  %1623 = vmatpush.bf16.msra.mxu0 0
  %1624 = vmatpush.bf16.msra.mxu0 0
  %1625 = vmatpush.bf16.msra.mxu0 0
  %1626 = vmatpush.bf16.msra.mxu0 0
  %1627 = vmatpush.bf16.msra.mxu0 0
  %1628 = vmatpush.bf16.msra.mxu0 0
  %1629 = vmatpush.bf16.msra.mxu0 %v1620
  %1630 = vmatmul.bf16.gmra.mxu0 %v1617
  %v1631 = vpop.f32.mrf.mxu0
  %v1632 = vadd.f32 0.0, %v1631
  %v1633 = vpop.f32.mrf.mxu0
  %1634 = vdwg.mxu0
  %v1636 = vsel %vm331, %v1613, 0
  %v1639 = vsel %vm387, %v1615, 0
  %1641 = vmatpush.bf16.msra.mxu0 0
  %1642 = vmatpush.bf16.msra.mxu0 0
  %1643 = vmatpush.bf16.msra.mxu0 0
  %1644 = vmatpush.bf16.msra.mxu0 0
  %1645 = vmatpush.bf16.msra.mxu0 0
  %1646 = vmatpush.bf16.msra.mxu0 0
  %1647 = vmatpush.bf16.msra.mxu0 0
  %1648 = vmatpush.bf16.msra.mxu0 %v1639
  %1649 = vmatmul.bf16.gmra.mxu0 %v1636
  %v1650 = vpop.f32.mrf.mxu0
  %v1651 = vadd.f32 0.0, %v1650
  %v1652 = vpop.f32.mrf.mxu0
  %1653 = vdwg.mxu0
  %1654 = vrot.lane.b32.xlu0 %v1514, 112
  %v1655 = vpop.permute.xlu0 %1654
  %1656 = vrot.lane.b32.xlu0 %v1514, 48
  %v1657 = vpop.permute.xlu0 %1656
  %v1659 = vsel %vm277, %v1655, 0
  %v1662 = vsel %vm277, %v1657, 0
  %1664 = vmatpush.bf16.xpose.msra.mxu0 0
  %1665 = vmatpush.bf16.xpose.msra.mxu0 0
  %1666 = vmatpush.bf16.xpose.msra.mxu0 0
  %1667 = vmatpush.bf16.xpose.msra.mxu0 0
  %1668 = vmatpush.bf16.xpose.msra.mxu0 0
  %1669 = vmatpush.bf16.xpose.msra.mxu0 0
  %1670 = vmatpush.bf16.xpose.msra.mxu0 0
  %1671 = vmatpush.bf16.xpose.msra.mxu0 %v1662
  %1672 = vmatmul.bf16.gmra.mxu0 %v1659
  %v1673 = vpop.f32.mrf.mxu0
  %v1674 = vadd.f32 0.0, %v1673
  %v1675 = vpop.f32.mrf.mxu0
  %1676 = vdwg.mxu0
  %1677 = vrot.lane.b32.xlu0 %v1538, 112
  %v1678 = vpop.permute.xlu0 %1677
  %1679 = vrot.lane.b32.xlu0 %v1538, 48
  %v1680 = vpop.permute.xlu0 %1679
  %v1682 = vsel %vm277, %v1678, 0
  %v1685 = vsel %vm277, %v1680, 0
  %1687 = vmatpush.bf16.xpose.msra.mxu0 0
  %1688 = vmatpush.bf16.xpose.msra.mxu0 0
  %1689 = vmatpush.bf16.xpose.msra.mxu0 0
  %1690 = vmatpush.bf16.xpose.msra.mxu0 0
  %1691 = vmatpush.bf16.xpose.msra.mxu0 0
  %1692 = vmatpush.bf16.xpose.msra.mxu0 0
  %1693 = vmatpush.bf16.xpose.msra.mxu0 0
  %1694 = vmatpush.bf16.xpose.msra.mxu0 %v1685
  %1695 = vmatmul.bf16.gmra.mxu0 %v1682
  %v1696 = vpop.f32.mrf.mxu0
  %v1697 = vadd.f32 0.0, %v1696
  %v1698 = vpop.f32.mrf.mxu0
  %1699 = vdwg.mxu0
  %v1700 = vmul.f32 %v1674, 0.28867513
  %v1701 = vmul.f32 %v1697, 0.28867513
  %v1702 = vadd.f32 %v1700, %v325
  %v1703 = vadd.f32 %v1701, %v326
  %v1704 = vsel %vm331, %v1702, -inf
  %1705 = vmax.xlane.f32.xlu0 %v1704
  %v1706 = vpop.xlane.xlu0 %1705
  %v1707 = vsel %vm331, %v1703, -inf
  %1708 = vmax.xlane.f32.xlu0 %v1707
  %v1709 = vpop.xlane.xlu0 %1708
  %v1710 = vsub.f32 %v1702, %v1706
  %v1711 = vsub.f32 %v1703, %v1709
  %v1712 = vmul.f32 %v1710, 1.442695
  %v1713 = vpow.pop %v1712
  %v1714 = vmul.f32 %v1711, 1.442695
  %v1715 = vpow.pop %v1714
  %v1716 = vsel %vm331, %v1713, 0.0
  %1717 = vadd.xlane.f32.xlu0 %v1716
  %v1718 = vpop.xlane.xlu0 %1717
  %v1719 = vsel %vm331, %v1715, 0.0
  %1720 = vadd.xlane.f32.xlu0 %v1719
  %v1721 = vpop.xlane.xlu0 %1720
  %v1722 = vrcp.pop %v1718
  %v1723 = vmul.f32 %v1718, %v1722
  %v1724 = vsub.f32 1.0, %v1723
  %v1725 = vmul.f32 %v1722, %v1724
  %v1726 = vadd.f32 %v1722, %v1725
  %vm1727 = vweird.f32 %v1718
  %vm1728 = vweird.f32 %v1722
  %vm1729 = vmor %vm1727, %vm1728
  %v1730 = vsel %vm1729, %v1722, %v1726
  %v1731 = vand.u32 2147483647, %v1718
  %vm1732 = vcmp.eq.f32.partialorder %v1731, 8.507059e+37
  %v1733 = vand.u32 %v1718, 2147483648
  %v1734 = vor.u32 1.1754944e-38, %v1733
  %v1735 = vsel %vm1732, %v1734, %v1730
  %v1736 = vmul.f32 %v1713, %v1735
  %v1737 = vrcp.pop %v1721
  %v1738 = vmul.f32 %v1721, %v1737
  %v1739 = vsub.f32 1.0, %v1738
  %v1740 = vmul.f32 %v1737, %v1739
  %v1741 = vadd.f32 %v1737, %v1740
  %vm1742 = vweird.f32 %v1721
  %vm1743 = vweird.f32 %v1737
  %vm1744 = vmor %vm1742, %vm1743
  %v1745 = vsel %vm1744, %v1737, %v1741
  %v1746 = vand.u32 2147483647, %v1721
  %vm1747 = vcmp.eq.f32.partialorder %v1746, 8.507059e+37
  %v1748 = vand.u32 %v1721, 2147483648
  %v1749 = vor.u32 1.1754944e-38, %v1748
  %v1750 = vsel %vm1747, %v1749, %v1745
  %v1751 = vmul.f32 %v1715, %v1750
  %v1752 = vpack.c.bf16 %v1736, %v1736
  %v1753 = vpack.c.bf16 %v1751, %v1751
  %v1755 = vunpack.c.l.b16 %v1614
  %v1756 = vpack.c.b16 %v1755, %v1755
  %1757 = vrot.lane.b32.xlu0 %v1756, 112
  %v1758 = vpop.permute.xlu0 %1757
  %v1760 = vsel %vm331, %v1752, 0
  %v1763 = vsel %vm387, %v1758, 0
  %1765 = vmatpush.bf16.msra.mxu0 0
  %1766 = vmatpush.bf16.msra.mxu0 0
  %1767 = vmatpush.bf16.msra.mxu0 0
  %1768 = vmatpush.bf16.msra.mxu0 0
  %1769 = vmatpush.bf16.msra.mxu0 0
  %1770 = vmatpush.bf16.msra.mxu0 0
  %1771 = vmatpush.bf16.msra.mxu0 0
  %1772 = vmatpush.bf16.msra.mxu0 %v1763
  %1773 = vmatmul.bf16.gmra.mxu0 %v1760
  %v1774 = vpop.f32.mrf.mxu0
  %v1775 = vadd.f32 0.0, %v1774
  %v1776 = vpop.f32.mrf.mxu0
  %1777 = vdwg.mxu0
  %v1779 = vunpack.c.l.b16 %v1615
  %v1780 = vpack.c.b16 %v1779, %v1779
  %1781 = vrot.lane.b32.xlu0 %v1780, 112
  %v1782 = vpop.permute.xlu0 %1781
  %v1784 = vsel %vm331, %v1753, 0
  %v1787 = vsel %vm387, %v1782, 0
  %1789 = vmatpush.bf16.msra.mxu0 0
  %1790 = vmatpush.bf16.msra.mxu0 0
  %1791 = vmatpush.bf16.msra.mxu0 0
  %1792 = vmatpush.bf16.msra.mxu0 0
  %1793 = vmatpush.bf16.msra.mxu0 0
  %1794 = vmatpush.bf16.msra.mxu0 0
  %1795 = vmatpush.bf16.msra.mxu0 0
  %1796 = vmatpush.bf16.msra.mxu0 %v1787
  %1797 = vmatmul.bf16.gmra.mxu0 %v1784
  %v1798 = vpop.f32.mrf.mxu0
  %v1799 = vadd.f32 0.0, %v1798
  %v1800 = vpop.f32.mrf.mxu0
  %1801 = vdwg.mxu0
  %1802 = vrot.lane.b32.xlu0 %v1514, 96
  %v1803 = vpop.permute.xlu0 %1802
  %1804 = vrot.lane.b32.xlu0 %v1514, 32
  %v1805 = vpop.permute.xlu0 %1804
  %v1807 = vsel %vm277, %v1803, 0
  %v1810 = vsel %vm277, %v1805, 0
  %1812 = vmatpush.bf16.xpose.msra.mxu0 0
  %1813 = vmatpush.bf16.xpose.msra.mxu0 0
  %1814 = vmatpush.bf16.xpose.msra.mxu0 0
  %1815 = vmatpush.bf16.xpose.msra.mxu0 0
  %1816 = vmatpush.bf16.xpose.msra.mxu0 0
  %1817 = vmatpush.bf16.xpose.msra.mxu0 0
  %1818 = vmatpush.bf16.xpose.msra.mxu0 0
  %1819 = vmatpush.bf16.xpose.msra.mxu0 %v1810
  %1820 = vmatmul.bf16.gmra.mxu0 %v1807
  %v1821 = vpop.f32.mrf.mxu0
  %v1822 = vadd.f32 0.0, %v1821
  %v1823 = vpop.f32.mrf.mxu0
  %1824 = vdwg.mxu0
  %1825 = vrot.lane.b32.xlu0 %v1538, 96
  %v1826 = vpop.permute.xlu0 %1825
  %1827 = vrot.lane.b32.xlu0 %v1538, 32
  %v1828 = vpop.permute.xlu0 %1827
  %v1830 = vsel %vm277, %v1826, 0
  %v1833 = vsel %vm277, %v1828, 0
  %1835 = vmatpush.bf16.xpose.msra.mxu0 0
  %1836 = vmatpush.bf16.xpose.msra.mxu0 0
  %1837 = vmatpush.bf16.xpose.msra.mxu0 0
  %1838 = vmatpush.bf16.xpose.msra.mxu0 0
  %1839 = vmatpush.bf16.xpose.msra.mxu0 0
  %1840 = vmatpush.bf16.xpose.msra.mxu0 0
  %1841 = vmatpush.bf16.xpose.msra.mxu0 0
  %1842 = vmatpush.bf16.xpose.msra.mxu0 %v1833
  %1843 = vmatmul.bf16.gmra.mxu0 %v1830
  %v1844 = vpop.f32.mrf.mxu0
  %v1845 = vadd.f32 0.0, %v1844
  %v1846 = vpop.f32.mrf.mxu0
  %1847 = vdwg.mxu0
  %v1848 = vmul.f32 %v1822, 0.28867513
  %v1849 = vmul.f32 %v1845, 0.28867513
  %v1850 = vadd.f32 %v1848, %v325
  %v1851 = vadd.f32 %v1849, %v326
  %v1852 = vsel %vm331, %v1850, -inf
  %1853 = vmax.xlane.f32.xlu0 %v1852
  %v1854 = vpop.xlane.xlu0 %1853
  %v1855 = vsel %vm331, %v1851, -inf
  %1856 = vmax.xlane.f32.xlu0 %v1855
  %v1857 = vpop.xlane.xlu0 %1856
  %v1858 = vsub.f32 %v1850, %v1854
  %v1859 = vsub.f32 %v1851, %v1857
  %v1860 = vmul.f32 %v1858, 1.442695
  %v1861 = vpow.pop %v1860
  %v1862 = vmul.f32 %v1859, 1.442695
  %v1863 = vpow.pop %v1862
  %v1864 = vsel %vm331, %v1861, 0.0
  %1865 = vadd.xlane.f32.xlu0 %v1864
  %v1866 = vpop.xlane.xlu0 %1865
  %v1867 = vsel %vm331, %v1863, 0.0
  %1868 = vadd.xlane.f32.xlu0 %v1867
  %v1869 = vpop.xlane.xlu0 %1868
  %v1870 = vrcp.pop %v1866
  %v1871 = vmul.f32 %v1866, %v1870
  %v1872 = vsub.f32 1.0, %v1871
  %v1873 = vmul.f32 %v1870, %v1872
  %v1874 = vadd.f32 %v1870, %v1873
  %vm1875 = vweird.f32 %v1866
  %vm1876 = vweird.f32 %v1870
  %vm1877 = vmor %vm1875, %vm1876
  %v1878 = vsel %vm1877, %v1870, %v1874
  %v1879 = vand.u32 2147483647, %v1866
  %vm1880 = vcmp.eq.f32.partialorder %v1879, 8.507059e+37
  %v1881 = vand.u32 %v1866, 2147483648
  %v1882 = vor.u32 1.1754944e-38, %v1881
  %v1883 = vsel %vm1880, %v1882, %v1878
  %v1884 = vmul.f32 %v1861, %v1883
  %v1885 = vrcp.pop %v1869
  %v1886 = vmul.f32 %v1869, %v1885
  %v1887 = vsub.f32 1.0, %v1886
  %v1888 = vmul.f32 %v1885, %v1887
  %v1889 = vadd.f32 %v1885, %v1888
  %vm1890 = vweird.f32 %v1869
  %vm1891 = vweird.f32 %v1885
  %vm1892 = vmor %vm1890, %vm1891
  %v1893 = vsel %vm1892, %v1885, %v1889
  %v1894 = vand.u32 2147483647, %v1869
  %vm1895 = vcmp.eq.f32.partialorder %v1894, 8.507059e+37
  %v1896 = vand.u32 %v1869, 2147483648
  %v1897 = vor.u32 1.1754944e-38, %v1896
  %v1898 = vsel %vm1895, %v1897, %v1893
  %v1899 = vmul.f32 %v1863, %v1898
  %v1900 = vpack.c.bf16 %v1884, %v1884
  %v1901 = vpack.c.bf16 %v1899, %v1899
  %1902 = vrot.lane.b32.xlu0 %v1756, 96
  %v1903 = vpop.permute.xlu0 %1902
  %v1905 = vsel %vm331, %v1900, 0
  %v1908 = vsel %vm387, %v1903, 0
  %1910 = vmatpush.bf16.msra.mxu0 0
  %1911 = vmatpush.bf16.msra.mxu0 0
  %1912 = vmatpush.bf16.msra.mxu0 0
  %1913 = vmatpush.bf16.msra.mxu0 0
  %1914 = vmatpush.bf16.msra.mxu0 0
  %1915 = vmatpush.bf16.msra.mxu0 0
  %1916 = vmatpush.bf16.msra.mxu0 0
  %1917 = vmatpush.bf16.msra.mxu0 %v1908
  %1918 = vmatmul.bf16.gmra.mxu0 %v1905
  %v1919 = vpop.f32.mrf.mxu0
  %v1920 = vadd.f32 0.0, %v1919
  %v1921 = vpop.f32.mrf.mxu0
  %1922 = vdwg.mxu0
  %1923 = vrot.lane.b32.xlu0 %v1780, 96
  %v1924 = vpop.permute.xlu0 %1923
  %v1926 = vsel %vm331, %v1901, 0
  %v1929 = vsel %vm387, %v1924, 0
  %1931 = vmatpush.bf16.msra.mxu0 0
  %1932 = vmatpush.bf16.msra.mxu0 0
  %1933 = vmatpush.bf16.msra.mxu0 0
  %1934 = vmatpush.bf16.msra.mxu0 0
  %1935 = vmatpush.bf16.msra.mxu0 0
  %1936 = vmatpush.bf16.msra.mxu0 0
  %1937 = vmatpush.bf16.msra.mxu0 0
  %1938 = vmatpush.bf16.msra.mxu0 %v1929
  %1939 = vmatmul.bf16.gmra.mxu0 %v1926
  %v1940 = vpop.f32.mrf.mxu0
  %v1941 = vadd.f32 0.0, %v1940
  %v1942 = vpop.f32.mrf.mxu0
  %1943 = vdwg.mxu0
  %1944 = vrot.lane.b32.xlu0 %v1514, 80
  %v1945 = vpop.permute.xlu0 %1944
  %1946 = vrot.lane.b32.xlu0 %v1514, 16
  %v1947 = vpop.permute.xlu0 %1946
  %v1949 = vsel %vm277, %v1945, 0
  %v1952 = vsel %vm277, %v1947, 0
  %1954 = vmatpush.bf16.xpose.msra.mxu0 0
  %1955 = vmatpush.bf16.xpose.msra.mxu0 0
  %1956 = vmatpush.bf16.xpose.msra.mxu0 0
  %1957 = vmatpush.bf16.xpose.msra.mxu0 0
  %1958 = vmatpush.bf16.xpose.msra.mxu0 0
  %1959 = vmatpush.bf16.xpose.msra.mxu0 0
  %1960 = vmatpush.bf16.xpose.msra.mxu0 0
  %1961 = vmatpush.bf16.xpose.msra.mxu0 %v1952
  %1962 = vmatmul.bf16.gmra.mxu0 %v1949
  %v1963 = vpop.f32.mrf.mxu0
  %v1964 = vadd.f32 0.0, %v1963
  %v1965 = vpop.f32.mrf.mxu0
  %1966 = vdwg.mxu0
  %1967 = vrot.lane.b32.xlu0 %v1538, 80
  %v1968 = vpop.permute.xlu0 %1967
  %1969 = vrot.lane.b32.xlu0 %v1538, 16
  %v1970 = vpop.permute.xlu0 %1969
  %v1972 = vsel %vm277, %v1968, 0
  %v1975 = vsel %vm277, %v1970, 0
  %1977 = vmatpush.bf16.xpose.msra.mxu0 0
  %1978 = vmatpush.bf16.xpose.msra.mxu0 0
  %1979 = vmatpush.bf16.xpose.msra.mxu0 0
  %1980 = vmatpush.bf16.xpose.msra.mxu0 0
  %1981 = vmatpush.bf16.xpose.msra.mxu0 0
  %1982 = vmatpush.bf16.xpose.msra.mxu0 0
  %1983 = vmatpush.bf16.xpose.msra.mxu0 0
  %1984 = vmatpush.bf16.xpose.msra.mxu0 %v1975
  %1985 = vmatmul.bf16.gmra.mxu0 %v1972
  %v1986 = vpop.f32.mrf.mxu0
  %v1987 = vadd.f32 0.0, %v1986
  %v1988 = vpop.f32.mrf.mxu0
  %1989 = vdwg.mxu0
  %v1990 = vmul.f32 %v1964, 0.28867513
  %v1991 = vmul.f32 %v1987, 0.28867513
  %v1992 = vadd.f32 %v1990, %v325
  %v1993 = vadd.f32 %v1991, %v326
  %v1994 = vsel %vm331, %v1992, -inf
  %1995 = vmax.xlane.f32.xlu0 %v1994
  %v1996 = vpop.xlane.xlu0 %1995
  %v1997 = vsel %vm331, %v1993, -inf
  %1998 = vmax.xlane.f32.xlu0 %v1997
  %v1999 = vpop.xlane.xlu0 %1998
  %v2000 = vsub.f32 %v1992, %v1996
  %v2001 = vsub.f32 %v1993, %v1999
  %v2002 = vmul.f32 %v2000, 1.442695
  %v2003 = vpow.pop %v2002
  %v2004 = vmul.f32 %v2001, 1.442695
  %v2005 = vpow.pop %v2004
  %v2006 = vsel %vm331, %v2003, 0.0
  %2007 = vadd.xlane.f32.xlu0 %v2006
  %v2008 = vpop.xlane.xlu0 %2007
  %v2009 = vsel %vm331, %v2005, 0.0
  %2010 = vadd.xlane.f32.xlu0 %v2009
  %v2011 = vpop.xlane.xlu0 %2010
  %v2012 = vrcp.pop %v2008
  %v2013 = vmul.f32 %v2008, %v2012
  %v2014 = vsub.f32 1.0, %v2013
  %v2015 = vmul.f32 %v2012, %v2014
  %v2016 = vadd.f32 %v2012, %v2015
  %vm2017 = vweird.f32 %v2008
  %vm2018 = vweird.f32 %v2012
  %vm2019 = vmor %vm2017, %vm2018
  %v2020 = vsel %vm2019, %v2012, %v2016
  %v2021 = vand.u32 2147483647, %v2008
  %vm2022 = vcmp.eq.f32.partialorder %v2021, 8.507059e+37
  %v2023 = vand.u32 %v2008, 2147483648
  %v2024 = vor.u32 1.1754944e-38, %v2023
  %v2025 = vsel %vm2022, %v2024, %v2020
  %v2026 = vmul.f32 %v2003, %v2025
  %v2027 = vrcp.pop %v2011
  %v2028 = vmul.f32 %v2011, %v2027
  %v2029 = vsub.f32 1.0, %v2028
  %v2030 = vmul.f32 %v2027, %v2029
  %v2031 = vadd.f32 %v2027, %v2030
  %vm2032 = vweird.f32 %v2011
  %vm2033 = vweird.f32 %v2027
  %vm2034 = vmor %vm2032, %vm2033
  %v2035 = vsel %vm2034, %v2027, %v2031
  %v2036 = vand.u32 2147483647, %v2011
  %vm2037 = vcmp.eq.f32.partialorder %v2036, 8.507059e+37
  %v2038 = vand.u32 %v2011, 2147483648
  %v2039 = vor.u32 1.1754944e-38, %v2038
  %v2040 = vsel %vm2037, %v2039, %v2035
  %v2041 = vmul.f32 %v2005, %v2040
  %v2042 = vpack.c.bf16 %v2026, %v2026
  %v2043 = vpack.c.bf16 %v2041, %v2041
  %2044 = vrot.lane.b32.xlu0 %v1756, 80
  %v2045 = vpop.permute.xlu0 %2044
  %v2047 = vsel %vm331, %v2042, 0
  %v2050 = vsel %vm387, %v2045, 0
  %2052 = vmatpush.bf16.msra.mxu0 0
  %2053 = vmatpush.bf16.msra.mxu0 0
  %2054 = vmatpush.bf16.msra.mxu0 0
  %2055 = vmatpush.bf16.msra.mxu0 0
  %2056 = vmatpush.bf16.msra.mxu0 0
  %2057 = vmatpush.bf16.msra.mxu0 0
  %2058 = vmatpush.bf16.msra.mxu0 0
  %2059 = vmatpush.bf16.msra.mxu0 %v2050
  %2060 = vmatmul.bf16.gmra.mxu0 %v2047
  %v2061 = vpop.f32.mrf.mxu0
  %v2062 = vadd.f32 0.0, %v2061
  %v2063 = vpop.f32.mrf.mxu0
  %2064 = vdwg.mxu0
  %2065 = vrot.lane.b32.xlu0 %v1780, 80
  %v2066 = vpop.permute.xlu0 %2065
  %v2068 = vsel %vm331, %v2043, 0
  %v2071 = vsel %vm387, %v2066, 0
  %2073 = vmatpush.bf16.msra.mxu0 0
  %2074 = vmatpush.bf16.msra.mxu0 0
  %2075 = vmatpush.bf16.msra.mxu0 0
  %2076 = vmatpush.bf16.msra.mxu0 0
  %2077 = vmatpush.bf16.msra.mxu0 0
  %2078 = vmatpush.bf16.msra.mxu0 0
  %2079 = vmatpush.bf16.msra.mxu0 0
  %2080 = vmatpush.bf16.msra.mxu0 %v2071
  %2081 = vmatmul.bf16.gmra.mxu0 %v2068
  %v2082 = vpop.f32.mrf.mxu0
  %v2083 = vadd.f32 0.0, %v2082
  %v2084 = vpop.f32.mrf.mxu0
  %2085 = vdwg.mxu0
  %2088 = vrot.lane.b32.xlu0 %v1775, 16
  %v2089 = vpop.permute.xlu0 %2088
  %2090 = vrot.lane.b32.xlu0 %v1799, 16
  %v2091 = vpop.permute.xlu0 %2090
  %2096 = vrot.lane.b32.xlu0 %v1920, 32
  %v2097 = vpop.permute.xlu0 %2096
  %2098 = vrot.lane.b32.xlu0 %v1941, 32
  %v2099 = vpop.permute.xlu0 %2098
  %2104 = vrot.lane.b32.xlu0 %v2062, 48
  %v2105 = vpop.permute.xlu0 %2104
  %2106 = vrot.lane.b32.xlu0 %v2083, 48
  %v2107 = vpop.permute.xlu0 %2106
  %v2110 = vsel %vm277, %v1632, %v2089
  %v2111 = vsel %vm277, %v1651, %v2091
  %v2112 = vsel %vm92, %v2110, %v2097
  %v2113 = vsel %vm92, %v2111, %v2099
  %v2114 = vsel %vm238, %v2112, %v2105
  %v2115 = vsel %vm238, %v2113, %v2107
  %v2116 = vpack.c.bf16 %v2115, %v2114
  %v2118 = vperm.slane %v1368, 0
  %v2128 = vunpack.c.l.b16 %v1359
  %v2129 = vunpack.c.l.b16 %v1360
  %v2130 = vunpack.c.l.b16 %v1361
  %v2131 = vunpack.c.l.b16 %v1362
  %v2132 = vunpack.c.l.b16 %v1363
  %v2133 = vunpack.c.l.b16 %v1364
  %v2134 = vunpack.c.l.b16 %v1365
  %v2135 = vunpack.c.l.b16 %v1366
  %v2136 = vpack.c.b16 %v2129, %v2128
  %v2137 = vpack.c.b16 %v2131, %v2130
  %v2138 = vpack.c.b16 %v2133, %v2132
  %v2139 = vpack.c.b16 %v2135, %v2134
  %v2145 = vsel %vm913, %v2116, 0
  %2147 = vmatpush.bf16.msra.mxu0 0
  %2148 = vmatpush.bf16.msra.mxu0 0
  %2149 = vmatpush.bf16.msra.mxu0 0
  %2150 = vmatpush.bf16.msra.mxu0 0
  %2151 = vmatpush.bf16.msra.mxu0 %v2139
  %2152 = vmatpush.bf16.msra.mxu0 %v2138
  %2153 = vmatpush.bf16.msra.mxu0 %v2137
  %2154 = vmatpush.bf16.msra.mxu0 %v2136
  %2155 = vmatmul.bf16.gmra.mxu0 %v2145
  %v2156 = vpop.f32.mrf.mxu0
  %v2157 = vadd.f32 %v2118, %v2156
  %v2158 = vpop.f32.mrf.mxu0
  %v2159 = vadd.f32 %v2118, %v2158
  %2160 = vdwg.mxu0
  %v2161 = vadd.f32 %v1347, %v2157
  %v2162 = vadd.f32 %v1348, %v2159
  %v2163 = vsel %vm238, %v2161, 0.0
  %2164 = vadd.xlane.f32.xlu0 %v2163
  %v2165 = vpop.xlane.xlu0 %2164
  %v2166 = vsel %vm238, %v2162, 0.0
  %2167 = vadd.xlane.f32.xlu0 %v2166
  %v2168 = vpop.xlane.xlu0 %2167
  %v2169 = vmul.f32 %v2165, %v945
  %v2170 = vmul.f32 %v2168, %v945
  %v2171 = vsub.f32 %v2161, %v2169
  %v2172 = vsub.f32 %v2162, %v2170
  %v2173 = vmul.f32 %v2171, %v2171
  %v2174 = vmul.f32 %v2172, %v2172
  %v2175 = vsel %vm238, %v2173, 0.0
  %2176 = vadd.xlane.f32.xlu0 %v2175
  %v2177 = vpop.xlane.xlu0 %2176
  %v2178 = vsel %vm238, %v2174, 0.0
  %2179 = vadd.xlane.f32.xlu0 %v2178
  %v2180 = vpop.xlane.xlu0 %2179
  %v2181 = vmul.f32 %v2177, %v945
  %v2182 = vmul.f32 %v2180, %v945
  %v2183 = vadd.f32 %v2181, 1e-05
  %v2184 = vadd.f32 %v2182, 1e-05
  %v2185 = vrsqrt.pop %v2183
  %v2186 = vmul.f32 %v2185, %v2183
  %v2187 = vmul.f32 %v2186, %v2185
  %v2188 = vmul.f32 0.5, %v2187
  %v2189 = vsub.f32 1.5, %v2188
  %v2190 = vmul.f32 %v2185, %v2189
  %vm2191 = vweird.f32 %v2183
  %vm2192 = vweird.f32 %v2185
  %vm2193 = vmor %vm2191, %vm2192
  %v2194 = vsel %vm2193, %v2185, %v2190
  %v2195 = vrsqrt.pop %v2184
  %v2196 = vmul.f32 %v2195, %v2184
  %v2197 = vmul.f32 %v2196, %v2195
  %v2198 = vmul.f32 0.5, %v2197
  %v2199 = vsub.f32 1.5, %v2198
  %v2200 = vmul.f32 %v2195, %v2199
  %vm2201 = vweird.f32 %v2184
  %vm2202 = vweird.f32 %v2195
  %vm2203 = vmor %vm2201, %vm2202
  %v2204 = vsel %vm2203, %v2195, %v2200
  %v2205 = vmul.f32 %v2171, %v2194
  %v2206 = vmul.f32 %v2172, %v2204
  %v2208 = vperm.slane %v1370, 0
  %v2210 = vmul.f32 %v2205, %v2208
  %v2211 = vmul.f32 %v2206, %v2208
  %v2213 = vperm.slane %v1372, 0
  %v2215 = vadd.f32 %v2210, %v2213
  %v2216 = vadd.f32 %v2211, %v2213
  %v2217 = vpack.c.bf16 %v2216, %v2215
  %v2219 = vperm.slane %v1387, 0
  %v2220 = vperm.slane %v1387, 1
  %v2221 = vperm.slane %v1387, 2
  %v2237 = vunpack.c.l.b16 %v1374
  %v2238 = vunpack.c.h.b16 %v1374
  %v2239 = vunpack.c.l.b16 %v1375
  %v2240 = vunpack.c.l.b16 %v1376
  %v2241 = vunpack.c.h.b16 %v1376
  %v2242 = vunpack.c.l.b16 %v1377
  %v2243 = vunpack.c.l.b16 %v1378
  %v2244 = vunpack.c.h.b16 %v1378
  %v2245 = vunpack.c.l.b16 %v1379
  %v2246 = vunpack.c.l.b16 %v1380
  %v2247 = vunpack.c.h.b16 %v1380
  %v2248 = vunpack.c.l.b16 %v1381
  %v2249 = vunpack.c.l.b16 %v1382
  %v2250 = vunpack.c.h.b16 %v1382
  %v2251 = vunpack.c.l.b16 %v1383
  %v2252 = vunpack.c.l.b16 %v1384
  %v2253 = vunpack.c.h.b16 %v1384
  %v2254 = vunpack.c.l.b16 %v1385
  %v2255 = vpack.c.b16 %v2240, %v2237
  %v2256 = vpack.c.b16 %v2241, %v2238
  %v2257 = vpack.c.b16 %v2242, %v2239
  %v2258 = vpack.c.b16 %v2246, %v2243
  %v2259 = vpack.c.b16 %v2247, %v2244
  %v2260 = vpack.c.b16 %v2248, %v2245
  %v2261 = vpack.c.b16 %v2252, %v2249
  %v2262 = vpack.c.b16 %v2253, %v2250
  %v2263 = vpack.c.b16 %v2254, %v2251
  %v2274 = vsel %vm238, %v2217, 0
  %2276 = vmatpush.bf16.msra.mxu0 0
  %2277 = vmatpush.bf16.msra.mxu0 0
  %2278 = vmatpush.bf16.msra.mxu0 0
  %2279 = vmatpush.bf16.msra.mxu0 0
  %2280 = vmatpush.bf16.msra.mxu0 0
  %2281 = vmatpush.bf16.msra.mxu0 %v2261
  %2282 = vmatpush.bf16.msra.mxu0 %v2258
  %2283 = vmatpush.bf16.msra.mxu0 %v2255
  %2284 = vmatmul.bf16.gmra.mxu0 %v2274
  %v2285 = vpop.f32.mrf.mxu0
  %v2286 = vadd.f32 %v2219, %v2285
  %v2287 = vpop.f32.mrf.mxu0
  %v2288 = vadd.f32 %v2219, %v2287
  %2289 = vdwg.mxu0
  %2290 = vmatpush.bf16.msra.mxu0 0
  %2291 = vmatpush.bf16.msra.mxu0 0
  %2292 = vmatpush.bf16.msra.mxu0 0
  %2293 = vmatpush.bf16.msra.mxu0 0
  %2294 = vmatpush.bf16.msra.mxu0 0
  %2295 = vmatpush.bf16.msra.mxu0 %v2262
  %2296 = vmatpush.bf16.msra.mxu0 %v2259
  %2297 = vmatpush.bf16.msra.mxu0 %v2256
  %2298 = vmatmul.bf16.gmra.mxu0 %v2274
  %v2299 = vpop.f32.mrf.mxu0
  %v2300 = vadd.f32 %v2220, %v2299
  %v2301 = vpop.f32.mrf.mxu0
  %v2302 = vadd.f32 %v2220, %v2301
  %2303 = vdwg.mxu0
  %2304 = vmatpush.bf16.msra.mxu0 0
  %2305 = vmatpush.bf16.msra.mxu0 0
  %2306 = vmatpush.bf16.msra.mxu0 0
  %2307 = vmatpush.bf16.msra.mxu0 0
  %2308 = vmatpush.bf16.msra.mxu0 0
  %2309 = vmatpush.bf16.msra.mxu0 %v2263
  %2310 = vmatpush.bf16.msra.mxu0 %v2260
  %2311 = vmatpush.bf16.msra.mxu0 %v2257
  %2312 = vmatmul.bf16.gmra.mxu0 %v2274
  %v2313 = vpop.f32.mrf.mxu0
  %v2314 = vadd.f32 %v2221, %v2313
  %v2315 = vpop.f32.mrf.mxu0
  %v2316 = vadd.f32 %v2221, %v2315
  %2317 = vdwg.mxu0
  %v2318 = vmax.f32 %v2286, 0.0
  %v2319 = vmax.f32 %v2300, 0.0
  %v2320 = vmax.f32 %v2314, 0.0
  %v2321 = vmax.f32 %v2288, 0.0
  %v2322 = vmax.f32 %v2302, 0.0
  %v2323 = vmax.f32 %v2316, 0.0
  %v2324 = vpack.c.bf16 %v2321, %v2318
  %v2325 = vpack.c.bf16 %v2322, %v2319
  %v2326 = vpack.c.bf16 %v2323, %v2320
  %v2328 = vperm.slane %v1438, 0
  %v2378 = vunpack.c.l.b16 %v1389
  %v2379 = vunpack.c.l.b16 %v1390
  %v2380 = vunpack.c.l.b16 %v1391
  %v2381 = vunpack.c.l.b16 %v1392
  %v2382 = vunpack.c.l.b16 %v1393
  %v2383 = vunpack.c.l.b16 %v1394
  %v2384 = vunpack.c.l.b16 %v1395
  %v2385 = vunpack.c.l.b16 %v1396
  %v2386 = vunpack.c.l.b16 %v1397
  %v2387 = vunpack.c.l.b16 %v1398
  %v2388 = vunpack.c.l.b16 %v1399
  %v2389 = vunpack.c.l.b16 %v1400
  %v2390 = vunpack.c.l.b16 %v1401
  %v2391 = vunpack.c.l.b16 %v1402
  %v2392 = vunpack.c.l.b16 %v1403
  %v2393 = vunpack.c.l.b16 %v1404
  %v2394 = vunpack.c.l.b16 %v1405
  %v2395 = vunpack.c.l.b16 %v1406
  %v2396 = vunpack.c.l.b16 %v1407
  %v2397 = vunpack.c.l.b16 %v1408
  %v2398 = vunpack.c.l.b16 %v1409
  %v2399 = vunpack.c.l.b16 %v1410
  %v2400 = vunpack.c.l.b16 %v1411
  %v2401 = vunpack.c.l.b16 %v1412
  %v2402 = vunpack.c.l.b16 %v1413
  %v2403 = vunpack.c.l.b16 %v1414
  %v2404 = vunpack.c.l.b16 %v1415
  %v2405 = vunpack.c.l.b16 %v1416
  %v2406 = vunpack.c.l.b16 %v1417
  %v2407 = vunpack.c.l.b16 %v1418
  %v2408 = vunpack.c.l.b16 %v1419
  %v2409 = vunpack.c.l.b16 %v1420
  %v2410 = vunpack.c.l.b16 %v1421
  %v2411 = vunpack.c.l.b16 %v1422
  %v2412 = vunpack.c.l.b16 %v1423
  %v2413 = vunpack.c.l.b16 %v1424
  %v2414 = vunpack.c.l.b16 %v1425
  %v2415 = vunpack.c.l.b16 %v1426
  %v2416 = vunpack.c.l.b16 %v1427
  %v2417 = vunpack.c.l.b16 %v1428
  %v2418 = vunpack.c.l.b16 %v1429
  %v2419 = vunpack.c.l.b16 %v1430
  %v2420 = vunpack.c.l.b16 %v1431
  %v2421 = vunpack.c.l.b16 %v1432
  %v2422 = vunpack.c.l.b16 %v1433
  %v2423 = vunpack.c.l.b16 %v1434
  %v2424 = vunpack.c.l.b16 %v1435
  %v2425 = vunpack.c.l.b16 %v1436
  %v2426 = vpack.c.b16 %v2379, %v2378
  %v2427 = vpack.c.b16 %v2381, %v2380
  %v2428 = vpack.c.b16 %v2383, %v2382
  %v2429 = vpack.c.b16 %v2385, %v2384
  %v2430 = vpack.c.b16 %v2387, %v2386
  %v2431 = vpack.c.b16 %v2389, %v2388
  %v2432 = vpack.c.b16 %v2391, %v2390
  %v2433 = vpack.c.b16 %v2393, %v2392
  %v2434 = vpack.c.b16 %v2395, %v2394
  %v2435 = vpack.c.b16 %v2397, %v2396
  %v2436 = vpack.c.b16 %v2399, %v2398
  %v2437 = vpack.c.b16 %v2401, %v2400
  %v2438 = vpack.c.b16 %v2403, %v2402
  %v2439 = vpack.c.b16 %v2405, %v2404
  %v2440 = vpack.c.b16 %v2407, %v2406
  %v2441 = vpack.c.b16 %v2409, %v2408
  %v2442 = vpack.c.b16 %v2411, %v2410
  %v2443 = vpack.c.b16 %v2413, %v2412
  %v2444 = vpack.c.b16 %v2415, %v2414
  %v2445 = vpack.c.b16 %v2417, %v2416
  %v2446 = vpack.c.b16 %v2419, %v2418
  %v2447 = vpack.c.b16 %v2421, %v2420
  %v2448 = vpack.c.b16 %v2423, %v2422
  %v2449 = vpack.c.b16 %v2425, %v2424
  %2474 = vmatpush.bf16.msra.mxu0 %v2433
  %2475 = vmatpush.bf16.msra.mxu0 %v2432
  %2476 = vmatpush.bf16.msra.mxu0 %v2431
  %2477 = vmatpush.bf16.msra.mxu0 %v2430
  %2478 = vmatpush.bf16.msra.mxu0 %v2429
  %2479 = vmatpush.bf16.msra.mxu0 %v2428
  %2480 = vmatpush.bf16.msra.mxu0 %v2427
  %2481 = vmatpush.bf16.msra.mxu0 %v2426
  %2482 = vmatmul.bf16.gmra.mxu0 %v2324
  %v2483 = vpop.f32.mrf.mxu0
  %v2484 = vadd.f32 %v2328, %v2483
  %v2485 = vpop.f32.mrf.mxu0
  %v2486 = vadd.f32 %v2328, %v2485
  %2487 = vdwg.mxu0
  %2488 = vmatpush.bf16.msra.mxu0 %v2441
  %2489 = vmatpush.bf16.msra.mxu0 %v2440
  %2490 = vmatpush.bf16.msra.mxu0 %v2439
  %2491 = vmatpush.bf16.msra.mxu0 %v2438
  %2492 = vmatpush.bf16.msra.mxu0 %v2437
  %2493 = vmatpush.bf16.msra.mxu0 %v2436
  %2494 = vmatpush.bf16.msra.mxu0 %v2435
  %2495 = vmatpush.bf16.msra.mxu0 %v2434
  %2496 = vmatmul.bf16.gmra.mxu0 %v2325
  %v2497 = vpop.f32.mrf.mxu0
  %v2498 = vadd.f32 %v2484, %v2497
  %v2499 = vpop.f32.mrf.mxu0
  %v2500 = vadd.f32 %v2486, %v2499
  %2501 = vdwg.mxu0
  %2502 = vmatpush.bf16.msra.mxu0 %v2449
  %2503 = vmatpush.bf16.msra.mxu0 %v2448
  %2504 = vmatpush.bf16.msra.mxu0 %v2447
  %2505 = vmatpush.bf16.msra.mxu0 %v2446
  %2506 = vmatpush.bf16.msra.mxu0 %v2445
  %2507 = vmatpush.bf16.msra.mxu0 %v2444
  %2508 = vmatpush.bf16.msra.mxu0 %v2443
  %2509 = vmatpush.bf16.msra.mxu0 %v2442
  %2510 = vmatmul.bf16.gmra.mxu0 %v2326
  %v2511 = vpop.f32.mrf.mxu0
  %v2512 = vadd.f32 %v2498, %v2511
  %v2513 = vpop.f32.mrf.mxu0
  %v2514 = vadd.f32 %v2500, %v2513
  %2515 = vdwg.mxu0
  %v2516 = vadd.f32 %v2215, %v2512
  %v2517 = vadd.f32 %v2216, %v2514
  %v2518 = vsel %vm238, %v2516, 0.0
  %2519 = vadd.xlane.f32.xlu0 %v2518
  %v2520 = vpop.xlane.xlu0 %2519
  %v2521 = vsel %vm238, %v2517, 0.0
  %2522 = vadd.xlane.f32.xlu0 %v2521
  %v2523 = vpop.xlane.xlu0 %2522
  %v2524 = vmul.f32 %v2520, %v945
  %v2525 = vmul.f32 %v2523, %v945
  %v2526 = vsub.f32 %v2516, %v2524
  %v2527 = vsub.f32 %v2517, %v2525
  %v2528 = vmul.f32 %v2526, %v2526
  %v2529 = vmul.f32 %v2527, %v2527
  %v2530 = vsel %vm238, %v2528, 0.0
  %2531 = vadd.xlane.f32.xlu0 %v2530
  %v2532 = vpop.xlane.xlu0 %2531
  %v2533 = vsel %vm238, %v2529, 0.0
  %2534 = vadd.xlane.f32.xlu0 %v2533
  %v2535 = vpop.xlane.xlu0 %2534
  %v2536 = vmul.f32 %v2532, %v945
  %v2537 = vmul.f32 %v2535, %v945
  %v2538 = vadd.f32 %v2536, 1e-05
  %v2539 = vadd.f32 %v2537, 1e-05
  %v2540 = vrsqrt.pop %v2538
  %v2541 = vmul.f32 %v2540, %v2538
  %v2542 = vmul.f32 %v2541, %v2540
  %v2543 = vmul.f32 0.5, %v2542
  %v2544 = vsub.f32 1.5, %v2543
  %v2545 = vmul.f32 %v2540, %v2544
  %vm2546 = vweird.f32 %v2538
  %vm2547 = vweird.f32 %v2540
  %vm2548 = vmor %vm2546, %vm2547
  %v2549 = vsel %vm2548, %v2540, %v2545
  %v2550 = vrsqrt.pop %v2539
  %v2551 = vmul.f32 %v2550, %v2539
  %v2552 = vmul.f32 %v2551, %v2550
  %v2553 = vmul.f32 0.5, %v2552
  %v2554 = vsub.f32 1.5, %v2553
  %v2555 = vmul.f32 %v2550, %v2554
  %vm2556 = vweird.f32 %v2539
  %vm2557 = vweird.f32 %v2550
  %vm2558 = vmor %vm2556, %vm2557
  %v2559 = vsel %vm2558, %v2550, %v2555
  %v2560 = vmul.f32 %v2526, %v2549
  %v2561 = vmul.f32 %v2527, %v2559
  %v2563 = vperm.slane %v1440, 0
  %v2565 = vmul.f32 %v2560, %v2563
  %v2566 = vmul.f32 %v2561, %v2563
  %v2568 = vperm.slane %v1442, 0
  %v2570 = vadd.f32 %v2565, %v2568
  %v2571 = vadd.f32 %v2566, %v2568
  %v2572 = vld [vmem:[%s17] sm:$0xff]
  %v2573 = vld [vmem:[%s17 + $0x8] sm:$0xff]
  %v2574 = vld [vmem:[%s17 + $0x10] sm:$0xff]
  %v2575 = vld [vmem:[%s17 + $0x18] sm:$0xff]
  %v2576 = vld [vmem:[%s17 + $0x20] sm:$0xff]
  %v2577 = vld [vmem:[%s17 + $0x28] sm:$0xff]
  %v2578 = vld [vmem:[%s18] sm:$0x3]
  %v2579 = vpack.c.bf16 %v2571, %v2570
  %v2581 = vperm.slane %v2578, 0
  %v2582 = vperm.slane %v2578, 1
  %v2591 = vunpack.c.l.b16 %v2572
  %v2592 = vunpack.c.h.b16 %v2572
  %v2593 = vunpack.c.l.b16 %v2573
  %v2594 = vunpack.c.h.b16 %v2573
  %v2595 = vunpack.c.l.b16 %v2574
  %v2596 = vunpack.c.h.b16 %v2574
  %v2597 = vunpack.c.l.b16 %v2575
  %v2598 = vunpack.c.h.b16 %v2575
  %v2599 = vunpack.c.l.b16 %v2576
  %v2600 = vunpack.c.h.b16 %v2576
  %v2601 = vunpack.c.l.b16 %v2577
  %v2602 = vunpack.c.h.b16 %v2577
  %v2603 = vpack.c.b16 %v2593, %v2591
  %v2604 = vpack.c.b16 %v2594, %v2592
  %v2605 = vpack.c.b16 %v2597, %v2595
  %v2606 = vpack.c.b16 %v2598, %v2596
  %v2607 = vpack.c.b16 %v2601, %v2599
  %v2608 = vpack.c.b16 %v2602, %v2600
  %v2616 = vsel %vm238, %v2579, 0
  %2618 = vmatpush.bf16.msra.mxu0 0
  %2619 = vmatpush.bf16.msra.mxu0 0
  %2620 = vmatpush.bf16.msra.mxu0 0
  %2621 = vmatpush.bf16.msra.mxu0 0
  %2622 = vmatpush.bf16.msra.mxu0 0
  %2623 = vmatpush.bf16.msra.mxu0 %v2607
  %2624 = vmatpush.bf16.msra.mxu0 %v2605
  %2625 = vmatpush.bf16.msra.mxu0 %v2603
  %2626 = vmatmul.bf16.gmra.mxu0 %v2616
  %v2627 = vpop.f32.mrf.mxu0
  %v2628 = vadd.f32 %v2581, %v2627
  %v2629 = vpop.f32.mrf.mxu0
  %v2630 = vadd.f32 %v2581, %v2629
  %2631 = vdwg.mxu0
  %2632 = vmatpush.bf16.msra.mxu0 0
  %2633 = vmatpush.bf16.msra.mxu0 0
  %2634 = vmatpush.bf16.msra.mxu0 0
  %2635 = vmatpush.bf16.msra.mxu0 0
  %2636 = vmatpush.bf16.msra.mxu0 0
  %2637 = vmatpush.bf16.msra.mxu0 %v2608
  %2638 = vmatpush.bf16.msra.mxu0 %v2606
  %2639 = vmatpush.bf16.msra.mxu0 %v2604
  %2640 = vmatmul.bf16.gmra.mxu0 %v2616
  %v2641 = vpop.f32.mrf.mxu0
  %v2642 = vadd.f32 %v2582, %v2641
  %v2643 = vpop.f32.mrf.mxu0
  %v2644 = vadd.f32 %v2582, %v2643
  %2645 = vdwg.mxu0
  %v2646 = vmax.f32 %v2628, 0.0
  %v2647 = vmax.f32 %v2642, 0.0
  %v2648 = vmax.f32 %v2630, 0.0
  %v2649 = vmax.f32 %v2644, 0.0
  %v2650 = vld [vmem:[%s19] sm:$0xf]
  %v2651 = vld [vmem:[%s19 + $0x4] sm:$0xf]
  %v2652 = vld [vmem:[%s19 + $0x8] sm:$0xf]
  %v2653 = vld [vmem:[%s19 + $0xc] sm:$0xf]
  %v2654 = vld [vmem:[%s19 + $0x10] sm:$0xf]
  %v2655 = vld [vmem:[%s19 + $0x14] sm:$0xf]
  %v2656 = vld [vmem:[%s19 + $0x18] sm:$0xf]
  %v2657 = vld [vmem:[%s19 + $0x1c] sm:$0xf]
  %v2658 = vld [vmem:[%s19 + $0x20] sm:$0xf]
  %v2659 = vld [vmem:[%s19 + $0x24] sm:$0xf]
  %v2660 = vld [vmem:[%s19 + $0x28] sm:$0xf]
  %v2661 = vld [vmem:[%s19 + $0x2c] sm:$0xf]
  %v2662 = vld [vmem:[%s19 + $0x30] sm:$0xf]
  %v2663 = vld [vmem:[%s19 + $0x34] sm:$0xf]
  %v2664 = vld [vmem:[%s19 + $0x38] sm:$0xf]
  %v2665 = vld [vmem:[%s19 + $0x3c] sm:$0xf]
  %v2666 = vld [vmem:[%s19 + $0x40] sm:$0xf]
  %v2667 = vld [vmem:[%s19 + $0x44] sm:$0xf]
  %v2668 = vld [vmem:[%s19 + $0x48] sm:$0xf]
  %v2669 = vld [vmem:[%s19 + $0x4c] sm:$0xf]
  %v2670 = vld [vmem:[%s19 + $0x50] sm:$0xf]
  %v2671 = vld [vmem:[%s19 + $0x54] sm:$0xf]
  %v2672 = vld [vmem:[%s19 + $0x58] sm:$0xf]
  %v2673 = vld [vmem:[%s19 + $0x5c] sm:$0xf]
  %v2674 = vld [vmem:[%s20] sm:$0x1]
  %v2675 = vpack.c.bf16 %v2648, %v2646
  %v2676 = vpack.c.bf16 %v2649, %v2647
  %v2678 = vperm.slane %v2674, 0
  %v2704 = vunpack.c.l.b16 %v2650
  %v2705 = vunpack.c.l.b16 %v2651
  %v2706 = vunpack.c.l.b16 %v2652
  %v2707 = vunpack.c.l.b16 %v2653
  %v2708 = vunpack.c.l.b16 %v2654
  %v2709 = vunpack.c.l.b16 %v2655
  %v2710 = vunpack.c.l.b16 %v2656
  %v2711 = vunpack.c.l.b16 %v2657
  %v2712 = vunpack.c.l.b16 %v2658
  %v2713 = vunpack.c.l.b16 %v2659
  %v2714 = vunpack.c.l.b16 %v2660
  %v2715 = vunpack.c.l.b16 %v2661
  %v2716 = vunpack.c.l.b16 %v2662
  %v2717 = vunpack.c.l.b16 %v2663
  %v2718 = vunpack.c.l.b16 %v2664
  %v2719 = vunpack.c.l.b16 %v2665
  %v2720 = vunpack.c.l.b16 %v2666
  %v2721 = vunpack.c.l.b16 %v2667
  %v2722 = vunpack.c.l.b16 %v2668
  %v2723 = vunpack.c.l.b16 %v2669
  %v2724 = vunpack.c.l.b16 %v2670
  %v2725 = vunpack.c.l.b16 %v2671
  %v2726 = vunpack.c.l.b16 %v2672
  %v2727 = vunpack.c.l.b16 %v2673
  %v2728 = vpack.c.b16 %v2705, %v2704
  %v2729 = vpack.c.b16 %v2707, %v2706
  %v2730 = vpack.c.b16 %v2709, %v2708
  %v2731 = vpack.c.b16 %v2711, %v2710
  %v2732 = vpack.c.b16 %v2713, %v2712
  %v2733 = vpack.c.b16 %v2715, %v2714
  %v2734 = vpack.c.b16 %v2717, %v2716
  %v2735 = vpack.c.b16 %v2719, %v2718
  %v2736 = vpack.c.b16 %v2721, %v2720
  %v2737 = vpack.c.b16 %v2723, %v2722
  %v2738 = vpack.c.b16 %v2725, %v2724
  %v2739 = vpack.c.b16 %v2727, %v2726
  %v2753 = vsel %vm913, %v2676, 0
  %2755 = vmatpush.bf16.msra.mxu0 %v2735
  %2756 = vmatpush.bf16.msra.mxu0 %v2734
  %2757 = vmatpush.bf16.msra.mxu0 %v2733
  %2758 = vmatpush.bf16.msra.mxu0 %v2732
  %2759 = vmatpush.bf16.msra.mxu0 %v2731
  %2760 = vmatpush.bf16.msra.mxu0 %v2730
  %2761 = vmatpush.bf16.msra.mxu0 %v2729
  %2762 = vmatpush.bf16.msra.mxu0 %v2728
  %2763 = vmatmul.bf16.gmra.mxu0 %v2675
  %v2764 = vpop.f32.mrf.mxu0
  %v2765 = vadd.f32 %v2678, %v2764
  %v2766 = vpop.f32.mrf.mxu0
  %v2767 = vadd.f32 %v2678, %v2766
  %2768 = vdwg.mxu0
  %2769 = vmatpush.bf16.msra.mxu0 0
  %2770 = vmatpush.bf16.msra.mxu0 0
  %2771 = vmatpush.bf16.msra.mxu0 0
  %2772 = vmatpush.bf16.msra.mxu0 0
  %2773 = vmatpush.bf16.msra.mxu0 %v2739
  %2774 = vmatpush.bf16.msra.mxu0 %v2738
  %2775 = vmatpush.bf16.msra.mxu0 %v2737
  %2776 = vmatpush.bf16.msra.mxu0 %v2736
  %2777 = vmatmul.bf16.gmra.mxu0 %v2753
  %v2778 = vpop.f32.mrf.mxu0
  %v2779 = vadd.f32 %v2765, %v2778
  %v2780 = vpop.f32.mrf.mxu0
  %v2781 = vadd.f32 %v2767, %v2780
  %2782 = vdwg.mxu0
  %2783 = vst [vmem:[%s21] sm:$0xff] %v2779
  %2784 = vst [vmem:[%s21 + $0x8] sm:$0xff] %v2781
  // Predicated region
  $region86: #{forward.2} parent=0 // pred_check
    _
  $region87: #{forward.2} parent=0 // pred_check_branch
    %2786 = sbr.rel (0) target = $region89
  $region88: #{forward.2} parent=0 // pred_region
    _
  $region89: #{forward.2} parent=0 // pred_fallthru
    _
  // Predicated region
  $region90: #{forward.2} parent=0 // pred_check
    _
  $region91: #{forward.2} parent=0 // pred_check_branch
    %2788 = sbr.rel (0) target = $region93
  $region92: #{forward.2} parent=0 // pred_region
    _
  $region93: #{forward.2} parent=0 // pred_fallthru
    _

// kernel: forward.3
$region0: #{forward.3}
  #allocation0 [shape = 'u32[]', space=smem, size = 0x4, offset = 0x4, fixed_abs, tag = 'smem constant byte address 0x4 - core index']
  #allocation1 [shape = 'u32[72,128]{1,0:T(1,128)}', space=vmem, size = 0x9000, scoped, tag = 'internal scratch']
  %s0 = inlined_call_operand.vmem [shape: f32[16,16], index: 0, kind: input, shape index: {}]
  %s1 = inlined_call_operand.vmem [shape: f32[16,48], index: 1, kind: input, shape index: {}]
  %s2 = inlined_call_operand.vmem [shape: bf16[16,192], index: 2, kind: input, shape index: {}]
  %s3 = inlined_call_operand.vmem [shape: f32[1,192], index: 3, kind: input, shape index: {}]
  %s4 = inlined_call_operand.vmem [shape: bf16[192,48], index: 4, kind: input, shape index: {}]
  %s5 = inlined_call_operand.vmem [shape: f32[1,48], index: 5, kind: input, shape index: {}]
  %s6 = inlined_call_operand.vmem [shape: bf16[4,48,192], index: 6, kind: input, shape index: {}]
  %s7 = inlined_call_operand.vmem [shape: f32[4,1,192], index: 7, kind: input, shape index: {}]
  %s8 = inlined_call_operand.vmem [shape: bf16[4,64,48], index: 8, kind: input, shape index: {}]
  %s9 = inlined_call_operand.vmem [shape: f32[4,1,48], index: 9, kind: input, shape index: {}]
  %s10 = inlined_call_operand.vmem [shape: f32[4,1,48], index: 10, kind: input, shape index: {}]
  %s11 = inlined_call_operand.vmem [shape: f32[4,1,48], index: 11, kind: input, shape index: {}]
  %s12 = inlined_call_operand.vmem [shape: bf16[4,48,192], index: 12, kind: input, shape index: {}]
  %s13 = inlined_call_operand.vmem [shape: f32[4,1,192], index: 13, kind: input, shape index: {}]
  %s14 = inlined_call_operand.vmem [shape: bf16[4,192,48], index: 14, kind: input, shape index: {}]
  %s15 = inlined_call_operand.vmem [shape: f32[4,1,48], index: 15, kind: input, shape index: {}]
  %s16 = inlined_call_operand.vmem [shape: f32[4,1,48], index: 16, kind: input, shape index: {}]
  %s17 = inlined_call_operand.vmem [shape: f32[4,1,48], index: 17, kind: input, shape index: {}]
  %s18 = inlined_call_operand.vmem [shape: bf16[48,128], index: 18, kind: input, shape index: {}]
  %s19 = inlined_call_operand.vmem [shape: f32[1,128], index: 19, kind: input, shape index: {}]
  %s20 = inlined_call_operand.vmem [shape: f32[16,128], index: 20, kind: output, shape index: {}]
  %s21 = sld [smem:[#allocation0]]
  $region90: #{forward.3} parent=0
    _
  %s23 = ssub.s32 1, %s21
  %s24 = scalar_select 0, %s23, %s21
  // Predicated region
  $region2: #{forward.3} parent=0 // pred_check
    _
  $region3: #{forward.3} parent=0 // pred_check_branch
    %26 = sbr.rel (0) target = $region5
  $region4: #{forward.3} parent=0 // pred_region
    _
  $region5: #{forward.3} parent=0 // pred_fallthru
    _
  // Predicated region
  $region6: #{forward.3} parent=0 // pred_check
    _
  $region7: #{forward.3} parent=0 // pred_check_branch
    %28 = sbr.rel (0) target = $region9
  $region8: #{forward.3} parent=0 // pred_region
    _
  $region9: #{forward.3} parent=0 // pred_fallthru
    _
  // Predicated region
  $region10: #{forward.3} parent=0 // pred_check
    _
  $region11: #{forward.3} parent=0 // pred_check_branch
    %30 = sbr.rel (0) target = $region13
  $region12: #{forward.3} parent=0 // pred_region
    _
  $region13: #{forward.3} parent=0 // pred_fallthru
    _
  // Predicated region
  $region14: #{forward.3} parent=0 // pred_check
    _
  $region15: #{forward.3} parent=0 // pred_check_branch
    %32 = sbr.rel (0) target = $region17
  $region16: #{forward.3} parent=0 // pred_region
    _
  $region17: #{forward.3} parent=0 // pred_fallthru
    _
  // Predicated region
  $region18: #{forward.3} parent=0 // pred_check
    _
  $region19: #{forward.3} parent=0 // pred_check_branch
    %34 = sbr.rel (0) target = $region21
  $region20: #{forward.3} parent=0 // pred_region
    _
  $region21: #{forward.3} parent=0 // pred_fallthru
    _
  // Predicated region
  $region22: #{forward.3} parent=0 // pred_check
    _
  $region23: #{forward.3} parent=0 // pred_check_branch
    %36 = sbr.rel (0) target = $region25
  $region24: #{forward.3} parent=0 // pred_region
    _
  $region25: #{forward.3} parent=0 // pred_fallthru
    _
  // Predicated region
  $region26: #{forward.3} parent=0 // pred_check
    _
  $region27: #{forward.3} parent=0 // pred_check_branch
    %38 = sbr.rel (0) target = $region29
  $region28: #{forward.3} parent=0 // pred_region
    _
  $region29: #{forward.3} parent=0 // pred_fallthru
    _
  // Predicated region
  $region30: #{forward.3} parent=0 // pred_check
    _
  $region31: #{forward.3} parent=0 // pred_check_branch
    %40 = sbr.rel (0) target = $region33
  $region32: #{forward.3} parent=0 // pred_region
    _
  $region33: #{forward.3} parent=0 // pred_fallthru
    _
  // Predicated region
  $region34: #{forward.3} parent=0 // pred_check
    _
  $region35: #{forward.3} parent=0 // pred_check_branch
    %42 = sbr.rel (0) target = $region37
  $region36: #{forward.3} parent=0 // pred_region
    _
  $region37: #{forward.3} parent=0 // pred_fallthru
    _
  // Predicated region
  $region38: #{forward.3} parent=0 // pred_check
    _
  $region39: #{forward.3} parent=0 // pred_check_branch
    %44 = sbr.rel (0) target = $region41
  $region40: #{forward.3} parent=0 // pred_region
    _
  $region41: #{forward.3} parent=0 // pred_fallthru
    _
  // Predicated region
  $region42: #{forward.3} parent=0 // pred_check
    _
  $region43: #{forward.3} parent=0 // pred_check_branch
    %46 = sbr.rel (0) target = $region45
  $region44: #{forward.3} parent=0 // pred_region
    _
  $region45: #{forward.3} parent=0 // pred_fallthru
    _
  // Predicated region
  $region46: #{forward.3} parent=0 // pred_check
    _
  $region47: #{forward.3} parent=0 // pred_check_branch
    %48 = sbr.rel (0) target = $region49
  $region48: #{forward.3} parent=0 // pred_region
    _
  $region49: #{forward.3} parent=0 // pred_fallthru
    _
  // Predicated region
  $region50: #{forward.3} parent=0 // pred_check
    _
  $region51: #{forward.3} parent=0 // pred_check_branch
    %50 = sbr.rel (0) target = $region53
  $region52: #{forward.3} parent=0 // pred_region
    _
  $region53: #{forward.3} parent=0 // pred_fallthru
    _
  // Predicated region
  $region54: #{forward.3} parent=0 // pred_check
    _
  $region55: #{forward.3} parent=0 // pred_check_branch
    %52 = sbr.rel (0) target = $region57
  $region56: #{forward.3} parent=0 // pred_region
    _
  $region57: #{forward.3} parent=0 // pred_fallthru
    _
  // Predicated region
  $region58: #{forward.3} parent=0 // pred_check
    _
  $region59: #{forward.3} parent=0 // pred_check_branch
    %54 = sbr.rel (0) target = $region61
  $region60: #{forward.3} parent=0 // pred_region
    _
  $region61: #{forward.3} parent=0 // pred_fallthru
    _
  // Predicated region
  $region62: #{forward.3} parent=0 // pred_check
    _
  $region63: #{forward.3} parent=0 // pred_check_branch
    %56 = sbr.rel (0) target = $region65
  $region64: #{forward.3} parent=0 // pred_region
    _
  $region65: #{forward.3} parent=0 // pred_fallthru
    _
  // Predicated region
  $region66: #{forward.3} parent=0 // pred_check
    _
  $region67: #{forward.3} parent=0 // pred_check_branch
    %58 = sbr.rel (0) target = $region69
  $region68: #{forward.3} parent=0 // pred_region
    _
  $region69: #{forward.3} parent=0 // pred_fallthru
    _
  // Predicated region
  $region70: #{forward.3} parent=0 // pred_check
    _
  $region71: #{forward.3} parent=0 // pred_check_branch
    %60 = sbr.rel (0) target = $region73
  $region72: #{forward.3} parent=0 // pred_region
    _
  $region73: #{forward.3} parent=0 // pred_fallthru
    _
  // Predicated region
  $region74: #{forward.3} parent=0 // pred_check
    _
  $region75: #{forward.3} parent=0 // pred_check_branch
    %62 = sbr.rel (0) target = $region77
  $region76: #{forward.3} parent=0 // pred_region
    _
  $region77: #{forward.3} parent=0 // pred_fallthru
    _
  // Predicated region
  $region78: #{forward.3} parent=0 // pred_check
    _
  $region79: #{forward.3} parent=0 // pred_check_branch
    %64 = sbr.rel (0) target = $region81
  $region80: #{forward.3} parent=0 // pred_region
    _
  $region81: #{forward.3} parent=0 // pred_fallthru
    _
  %v66 = vld [vmem:[%s0] sm:$0xff]
  %v67 = vld [vmem:[%s0 + $0x8] sm:$0xff]
  %v68 = vld [vmem:[%s2] sm:$0xff]
  %v69 = vld [vmem:[%s2 + $0x8] sm:$0xff]
  %v70 = vld [vmem:[%s3] sm:$0x3]
  %v71 = vpack.c.bf16 %v67, %v66
  %v73 = vperm.slane %v70, 0
  %v74 = vperm.slane %v70, 1
  %v79 = vunpack.c.l.b16 %v68
  %v80 = vunpack.c.h.b16 %v68
  %v81 = vunpack.c.l.b16 %v69
  %v82 = vunpack.c.h.b16 %v69
  %v83 = vpack.c.b16 %v81, %v79
  %v84 = vpack.c.b16 %v82, %v80
  %vm87 = vcmask 130048
  %v89 = vsel %vm87, %v71, 0
  %91 = vmatpush.bf16.msra.mxu0 0
  %92 = vmatpush.bf16.msra.mxu0 0
  %93 = vmatpush.bf16.msra.mxu0 0
  %94 = vmatpush.bf16.msra.mxu0 0
  %95 = vmatpush.bf16.msra.mxu0 0
  %96 = vmatpush.bf16.msra.mxu0 0
  %97 = vmatpush.bf16.msra.mxu0 0
  %98 = vmatpush.bf16.msra.mxu0 %v83
  %99 = vmatmul.bf16.gmra.mxu0 %v89
  %v100 = vpop.f32.mrf.mxu0
  %v101 = vadd.f32 %v73, %v100
  %v102 = vpop.f32.mrf.mxu0
  %v103 = vadd.f32 %v73, %v102
  %104 = vdwg.mxu0
  %105 = vmatpush.bf16.msra.mxu0 0
  %106 = vmatpush.bf16.msra.mxu0 0
  %107 = vmatpush.bf16.msra.mxu0 0
  %108 = vmatpush.bf16.msra.mxu0 0
  %109 = vmatpush.bf16.msra.mxu0 0
  %110 = vmatpush.bf16.msra.mxu0 0
  %111 = vmatpush.bf16.msra.mxu0 0
  %112 = vmatpush.bf16.msra.mxu0 %v84
  %113 = vmatmul.bf16.gmra.mxu0 %v89
  %v114 = vpop.f32.mrf.mxu0
  %v115 = vadd.f32 %v74, %v114
  %v116 = vpop.f32.mrf.mxu0
  %v117 = vadd.f32 %v74, %v116
  %118 = vdwg.mxu0
  %v119 = vmax.f32 %v101, 0.0
  %v120 = vmax.f32 %v115, 0.0
  %v121 = vmax.f32 %v103, 0.0
  %v122 = vmax.f32 %v117, 0.0
  %v123 = vld [vmem:[%s4] sm:$0xf]
  %v124 = vld [vmem:[%s4 + $0x4] sm:$0xf]
  %v125 = vld [vmem:[%s4 + $0x8] sm:$0xf]
  %v126 = vld [vmem:[%s4 + $0xc] sm:$0xf]
  %v127 = vld [vmem:[%s4 + $0x10] sm:$0xf]
  %v128 = vld [vmem:[%s4 + $0x14] sm:$0xf]
  %v129 = vld [vmem:[%s4 + $0x18] sm:$0xf]
  %v130 = vld [vmem:[%s4 + $0x1c] sm:$0xf]
  %v131 = vld [vmem:[%s4 + $0x20] sm:$0xf]
  %v132 = vld [vmem:[%s4 + $0x24] sm:$0xf]
  %v133 = vld [vmem:[%s4 + $0x28] sm:$0xf]
  %v134 = vld [vmem:[%s4 + $0x2c] sm:$0xf]
  %v135 = vld [vmem:[%s4 + $0x30] sm:$0xf]
  %v136 = vld [vmem:[%s4 + $0x34] sm:$0xf]
  %v137 = vld [vmem:[%s4 + $0x38] sm:$0xf]
  %v138 = vld [vmem:[%s4 + $0x3c] sm:$0xf]
  %v139 = vld [vmem:[%s4 + $0x40] sm:$0xf]
  %v140 = vld [vmem:[%s4 + $0x44] sm:$0xf]
  %v141 = vld [vmem:[%s4 + $0x48] sm:$0xf]
  %v142 = vld [vmem:[%s4 + $0x4c] sm:$0xf]
  %v143 = vld [vmem:[%s4 + $0x50] sm:$0xf]
  %v144 = vld [vmem:[%s4 + $0x54] sm:$0xf]
  %v145 = vld [vmem:[%s4 + $0x58] sm:$0xf]
  %v146 = vld [vmem:[%s4 + $0x5c] sm:$0xf]
  %v147 = vld [vmem:[%s5] sm:$0x1]
  %v148 = vpack.c.bf16 %v121, %v119
  %v149 = vpack.c.bf16 %v122, %v120
  %v151 = vperm.slane %v147, 0
  %v177 = vunpack.c.l.b16 %v123
  %v178 = vunpack.c.l.b16 %v124
  %v179 = vunpack.c.l.b16 %v125
  %v180 = vunpack.c.l.b16 %v126
  %v181 = vunpack.c.l.b16 %v127
  %v182 = vunpack.c.l.b16 %v128
  %v183 = vunpack.c.l.b16 %v129
  %v184 = vunpack.c.l.b16 %v130
  %v185 = vunpack.c.l.b16 %v131
  %v186 = vunpack.c.l.b16 %v132
  %v187 = vunpack.c.l.b16 %v133
  %v188 = vunpack.c.l.b16 %v134
  %v189 = vunpack.c.l.b16 %v135
  %v190 = vunpack.c.l.b16 %v136
  %v191 = vunpack.c.l.b16 %v137
  %v192 = vunpack.c.l.b16 %v138
  %v193 = vunpack.c.l.b16 %v139
  %v194 = vunpack.c.l.b16 %v140
  %v195 = vunpack.c.l.b16 %v141
  %v196 = vunpack.c.l.b16 %v142
  %v197 = vunpack.c.l.b16 %v143
  %v198 = vunpack.c.l.b16 %v144
  %v199 = vunpack.c.l.b16 %v145
  %v200 = vunpack.c.l.b16 %v146
  %v201 = vpack.c.b16 %v178, %v177
  %v202 = vpack.c.b16 %v180, %v179
  %v203 = vpack.c.b16 %v182, %v181
  %v204 = vpack.c.b16 %v184, %v183
  %v205 = vpack.c.b16 %v186, %v185
  %v206 = vpack.c.b16 %v188, %v187
  %v207 = vpack.c.b16 %v190, %v189
  %v208 = vpack.c.b16 %v192, %v191
  %v209 = vpack.c.b16 %v194, %v193
  %v210 = vpack.c.b16 %v196, %v195
  %v211 = vpack.c.b16 %v198, %v197
  %v212 = vpack.c.b16 %v200, %v199
  %vm225 = vcmask 523264
  %v227 = vsel %vm225, %v149, 0
  %229 = vmatpush.bf16.msra.mxu0 %v208
  %230 = vmatpush.bf16.msra.mxu0 %v207
  %231 = vmatpush.bf16.msra.mxu0 %v206
  %232 = vmatpush.bf16.msra.mxu0 %v205
  %233 = vmatpush.bf16.msra.mxu0 %v204
  %234 = vmatpush.bf16.msra.mxu0 %v203
  %235 = vmatpush.bf16.msra.mxu0 %v202
  %236 = vmatpush.bf16.msra.mxu0 %v201
  %237 = vmatmul.bf16.gmra.mxu0 %v148
  %v238 = vpop.f32.mrf.mxu0
  %v239 = vadd.f32 %v151, %v238
  %v240 = vpop.f32.mrf.mxu0
  %v241 = vadd.f32 %v151, %v240
  %242 = vdwg.mxu0
  %243 = vmatpush.bf16.msra.mxu0 0
  %244 = vmatpush.bf16.msra.mxu0 0
  %245 = vmatpush.bf16.msra.mxu0 0
  %246 = vmatpush.bf16.msra.mxu0 0
  %247 = vmatpush.bf16.msra.mxu0 %v212
  %248 = vmatpush.bf16.msra.mxu0 %v211
  %249 = vmatpush.bf16.msra.mxu0 %v210
  %250 = vmatpush.bf16.msra.mxu0 %v209
  %251 = vmatmul.bf16.gmra.mxu0 %v227
  %v252 = vpop.f32.mrf.mxu0
  %v253 = vadd.f32 %v239, %v252
  %v254 = vpop.f32.mrf.mxu0
  %v255 = vadd.f32 %v241, %v254
  %256 = vdwg.mxu0
  %v257 = vld [vmem:[%s1] sm:$0xff]
  %v258 = vld [vmem:[%s1 + $0x8] sm:$0xff]
  %v259 = vadd.f32 %v253, %v257
  %v260 = vadd.f32 %v255, %v258
  %v261 = vld [vmem:[%s6] sm:$0xff]
  %v262 = vld [vmem:[%s6 + $0x8] sm:$0xff]
  %v263 = vld [vmem:[%s6 + $0x10] sm:$0xff]
  %v264 = vld [vmem:[%s6 + $0x18] sm:$0xff]
  %v265 = vld [vmem:[%s6 + $0x20] sm:$0xff]
  %v266 = vld [vmem:[%s6 + $0x28] sm:$0xff]
  %v267 = vld [vmem:[%s7] sm:$0x3]
  %v268 = vld [vmem:[%s8] sm:$0xf]
  %v269 = vld [vmem:[%s8 + $0x4] sm:$0xf]
  %v270 = vld [vmem:[%s8 + $0x8] sm:$0xf]
  %v271 = vld [vmem:[%s8 + $0xc] sm:$0xf]
  %v272 = vld [vmem:[%s8 + $0x10] sm:$0xf]
  %v273 = vld [vmem:[%s8 + $0x14] sm:$0xf]
  %v274 = vld [vmem:[%s8 + $0x18] sm:$0xf]
  %v275 = vld [vmem:[%s8 + $0x1c] sm:$0xf]
  %v276 = vld [vmem:[%s9] sm:$0x1]
  %v277 = vld [vmem:[%s10] sm:$0x1]
  %v278 = vld [vmem:[%s11] sm:$0x1]
  %v279 = vld [vmem:[%s12] sm:$0xff]
  %v280 = vld [vmem:[%s12 + $0x8] sm:$0xff]
  %v281 = vld [vmem:[%s12 + $0x10] sm:$0xff]
  %v282 = vld [vmem:[%s12 + $0x18] sm:$0xff]
  %v283 = vld [vmem:[%s12 + $0x20] sm:$0xff]
  %v284 = vld [vmem:[%s12 + $0x28] sm:$0xff]
  %v285 = vld [vmem:[%s13] sm:$0x3]
  %v286 = vld [vmem:[%s14] sm:$0xf]
  %v287 = vld [vmem:[%s14 + $0x4] sm:$0xf]
  %v288 = vld [vmem:[%s14 + $0x8] sm:$0xf]
  %v289 = vld [vmem:[%s14 + $0xc] sm:$0xf]
  %v290 = vld [vmem:[%s14 + $0x10] sm:$0xf]
  %v291 = vld [vmem:[%s14 + $0x14] sm:$0xf]
  %v292 = vld [vmem:[%s14 + $0x18] sm:$0xf]
  %v293 = vld [vmem:[%s14 + $0x1c] sm:$0xf]
  %v294 = vld [vmem:[%s14 + $0x20] sm:$0xf]
  %v295 = vld [vmem:[%s14 + $0x24] sm:$0xf]
  %v296 = vld [vmem:[%s14 + $0x28] sm:$0xf]
  %v297 = vld [vmem:[%s14 + $0x2c] sm:$0xf]
  %v298 = vld [vmem:[%s14 + $0x30] sm:$0xf]
  %v299 = vld [vmem:[%s14 + $0x34] sm:$0xf]
  %v300 = vld [vmem:[%s14 + $0x38] sm:$0xf]
  %v301 = vld [vmem:[%s14 + $0x3c] sm:$0xf]
  %v302 = vld [vmem:[%s14 + $0x40] sm:$0xf]
  %v303 = vld [vmem:[%s14 + $0x44] sm:$0xf]
  %v304 = vld [vmem:[%s14 + $0x48] sm:$0xf]
  %v305 = vld [vmem:[%s14 + $0x4c] sm:$0xf]
  %v306 = vld [vmem:[%s14 + $0x50] sm:$0xf]
  %v307 = vld [vmem:[%s14 + $0x54] sm:$0xf]
  %v308 = vld [vmem:[%s14 + $0x58] sm:$0xf]
  %v309 = vld [vmem:[%s14 + $0x5c] sm:$0xf]
  %v310 = vld [vmem:[%s15] sm:$0x1]
  %v311 = vld [vmem:[%s16] sm:$0x1]
  %v312 = vld [vmem:[%s17] sm:$0x1]
  %v313 = vpack.c.bf16 %v260, %v259
  %v315 = vperm.slane %v267, 0
  %v316 = vperm.slane %v267, 1
  %v325 = vunpack.c.l.b16 %v261
  %v326 = vunpack.c.h.b16 %v261
  %v327 = vunpack.c.l.b16 %v262
  %v328 = vunpack.c.h.b16 %v262
  %v329 = vunpack.c.l.b16 %v263
  %v330 = vunpack.c.h.b16 %v263
  %v331 = vunpack.c.l.b16 %v264
  %v332 = vunpack.c.h.b16 %v264
  %v333 = vunpack.c.l.b16 %v265
  %v334 = vunpack.c.h.b16 %v265
  %v335 = vunpack.c.l.b16 %v266
  %v336 = vunpack.c.h.b16 %v266
  %v337 = vpack.c.b16 %v327, %v325
  %v338 = vpack.c.b16 %v328, %v326
  %v339 = vpack.c.b16 %v331, %v329
  %v340 = vpack.c.b16 %v332, %v330
  %v341 = vpack.c.b16 %v335, %v333
  %v342 = vpack.c.b16 %v336, %v334
  %vm349 = vcmask 392192
  %v351 = vsel %vm349, %v313, 0
  %353 = vmatpush.bf16.msra.mxu0 0
  %354 = vmatpush.bf16.msra.mxu0 0
  %355 = vmatpush.bf16.msra.mxu0 0
  %356 = vmatpush.bf16.msra.mxu0 0
  %357 = vmatpush.bf16.msra.mxu0 0
  %358 = vmatpush.bf16.msra.mxu0 %v341
  %359 = vmatpush.bf16.msra.mxu0 %v339
  %360 = vmatpush.bf16.msra.mxu0 %v337
  %361 = vmatmul.bf16.gmra.mxu0 %v351
  %v362 = vpop.f32.mrf.mxu0
  %v363 = vadd.f32 %v315, %v362
  %v364 = vpop.f32.mrf.mxu0
  %v365 = vadd.f32 %v315, %v364
  %366 = vdwg.mxu0
  %367 = vmatpush.bf16.msra.mxu0 0
  %368 = vmatpush.bf16.msra.mxu0 0
  %369 = vmatpush.bf16.msra.mxu0 0
  %370 = vmatpush.bf16.msra.mxu0 0
  %371 = vmatpush.bf16.msra.mxu0 0
  %372 = vmatpush.bf16.msra.mxu0 %v342
  %373 = vmatpush.bf16.msra.mxu0 %v340
  %374 = vmatpush.bf16.msra.mxu0 %v338
  %375 = vmatmul.bf16.gmra.mxu0 %v351
  %v376 = vpop.f32.mrf.mxu0
  %v377 = vadd.f32 %v316, %v376
  %v378 = vpop.f32.mrf.mxu0
  %v379 = vadd.f32 %v316, %v378
  %380 = vdwg.mxu0
  %v381 = vpack.c.bf16 %v363, %v363
  %v382 = vpack.c.bf16 %v365, %v365
  %v384 = vunpack.c.l.b16 %v381
  %v385 = vpack.c.b16 %v384, %v384
  %386 = vrot.lane.b32.xlu0 %v385, 64
  %v387 = vpop.permute.xlu0 %386
  %v389 = vsel %vm87, %v381, 0
  %v392 = vsel %vm87, %v387, 0
  %394 = vmatpush.bf16.xpose.msra.mxu0 0
  %395 = vmatpush.bf16.xpose.msra.mxu0 0
  %396 = vmatpush.bf16.xpose.msra.mxu0 0
  %397 = vmatpush.bf16.xpose.msra.mxu0 0
  %398 = vmatpush.bf16.xpose.msra.mxu0 0
  %399 = vmatpush.bf16.xpose.msra.mxu0 0
  %400 = vmatpush.bf16.xpose.msra.mxu0 0
  %401 = vmatpush.bf16.xpose.msra.mxu0 %v392
  %402 = vmatmul.bf16.gmra.mxu0 %v389
  %v403 = vpop.f32.mrf.mxu0
  %v404 = vadd.f32 0.0, %v403
  %v405 = vpop.f32.mrf.mxu0
  %406 = vdwg.mxu0
  %v408 = vunpack.c.l.b16 %v382
  %v409 = vpack.c.b16 %v408, %v408
  %410 = vrot.lane.b32.xlu0 %v409, 64
  %v411 = vpop.permute.xlu0 %410
  %v413 = vsel %vm87, %v382, 0
  %v416 = vsel %vm87, %v411, 0
  %418 = vmatpush.bf16.xpose.msra.mxu0 0
  %419 = vmatpush.bf16.xpose.msra.mxu0 0
  %420 = vmatpush.bf16.xpose.msra.mxu0 0
  %421 = vmatpush.bf16.xpose.msra.mxu0 0
  %422 = vmatpush.bf16.xpose.msra.mxu0 0
  %423 = vmatpush.bf16.xpose.msra.mxu0 0
  %424 = vmatpush.bf16.xpose.msra.mxu0 0
  %425 = vmatpush.bf16.xpose.msra.mxu0 %v416
  %426 = vmatmul.bf16.gmra.mxu0 %v413
  %v427 = vpop.f32.mrf.mxu0
  %v428 = vadd.f32 0.0, %v427
  %v429 = vpop.f32.mrf.mxu0
  %430 = vdwg.mxu0
  %v431 = vmul.f32 %v404, 0.28867513
  %v432 = vmul.f32 %v428, 0.28867513
  %vm433 = vcmask 64512
  %v434 = vsel %vm433, %v431, -inf
  %435 = vmax.xlane.f32.xlu0 %v434
  %v436 = vpop.xlane.xlu0 %435
  %v437 = vsel %vm433, %v432, -inf
  %438 = vmax.xlane.f32.xlu0 %v437
  %v439 = vpop.xlane.xlu0 %438
  %v440 = vsub.f32 %v431, %v436
  %v441 = vsub.f32 %v432, %v439
  %v442 = vmul.f32 %v440, 1.442695
  %v443 = vpow.pop %v442
  %v444 = vmul.f32 %v441, 1.442695
  %v445 = vpow.pop %v444
  %v446 = vsel %vm433, %v443, 0.0
  %447 = vadd.xlane.f32.xlu0 %v446
  %v448 = vpop.xlane.xlu0 %447
  %v449 = vsel %vm433, %v445, 0.0
  %450 = vadd.xlane.f32.xlu0 %v449
  %v451 = vpop.xlane.xlu0 %450
  %v452 = vrcp.pop %v448
  %v453 = vmul.f32 %v448, %v452
  %v454 = vsub.f32 1.0, %v453
  %v455 = vmul.f32 %v452, %v454
  %v456 = vadd.f32 %v452, %v455
  %vm457 = vweird.f32 %v448
  %vm458 = vweird.f32 %v452
  %vm459 = vmor %vm457, %vm458
  %v460 = vsel %vm459, %v452, %v456
  %v461 = vand.u32 2147483647, %v448
  %vm462 = vcmp.eq.f32.partialorder %v461, 8.507059e+37
  %v463 = vand.u32 %v448, 2147483648
  %v464 = vor.u32 1.1754944e-38, %v463
  %v465 = vsel %vm462, %v464, %v460
  %v466 = vmul.f32 %v443, %v465
  %v467 = vrcp.pop %v451
  %v468 = vmul.f32 %v451, %v467
  %v469 = vsub.f32 1.0, %v468
  %v470 = vmul.f32 %v467, %v469
  %v471 = vadd.f32 %v467, %v470
  %vm472 = vweird.f32 %v451
  %vm473 = vweird.f32 %v467
  %vm474 = vmor %vm472, %vm473
  %v475 = vsel %vm474, %v467, %v471
  %v476 = vand.u32 2147483647, %v451
  %vm477 = vcmp.eq.f32.partialorder %v476, 8.507059e+37
  %v478 = vand.u32 %v451, 2147483648
  %v479 = vor.u32 1.1754944e-38, %v478
  %v480 = vsel %vm477, %v479, %v475
  %v481 = vmul.f32 %v445, %v480
  %v482 = vpack.c.bf16 %v466, %v466
  %v483 = vpack.c.bf16 %v481, %v481
  %v484 = vpack.c.bf16 %v377, %v377
  %v485 = vpack.c.bf16 %v379, %v379
  %v487 = vsel %vm433, %v482, 0
  %vm489 = vcmask 1043456
  %v491 = vsel %vm489, %v484, 0
  %493 = vmatpush.bf16.msra.mxu0 0
  %494 = vmatpush.bf16.msra.mxu0 0
  %495 = vmatpush.bf16.msra.mxu0 0
  %496 = vmatpush.bf16.msra.mxu0 0
  %497 = vmatpush.bf16.msra.mxu0 0
  %498 = vmatpush.bf16.msra.mxu0 0
  %499 = vmatpush.bf16.msra.mxu0 0
  %500 = vmatpush.bf16.msra.mxu0 %v491
  %501 = vmatmul.bf16.gmra.mxu0 %v487
  %v502 = vpop.f32.mrf.mxu0
  %v503 = vadd.f32 0.0, %v502
  %v504 = vpop.f32.mrf.mxu0
  %505 = vdwg.mxu0
  %v507 = vsel %vm433, %v483, 0
  %v510 = vsel %vm489, %v485, 0
  %512 = vmatpush.bf16.msra.mxu0 0
  %513 = vmatpush.bf16.msra.mxu0 0
  %514 = vmatpush.bf16.msra.mxu0 0
  %515 = vmatpush.bf16.msra.mxu0 0
  %516 = vmatpush.bf16.msra.mxu0 0
  %517 = vmatpush.bf16.msra.mxu0 0
  %518 = vmatpush.bf16.msra.mxu0 0
  %519 = vmatpush.bf16.msra.mxu0 %v510
  %520 = vmatmul.bf16.gmra.mxu0 %v507
  %v521 = vpop.f32.mrf.mxu0
  %v522 = vadd.f32 0.0, %v521
  %v523 = vpop.f32.mrf.mxu0
  %524 = vdwg.mxu0
  %525 = vrot.lane.b32.xlu0 %v385, 112
  %v526 = vpop.permute.xlu0 %525
  %527 = vrot.lane.b32.xlu0 %v385, 48
  %v528 = vpop.permute.xlu0 %527
  %v530 = vsel %vm87, %v526, 0
  %v533 = vsel %vm87, %v528, 0
  %535 = vmatpush.bf16.xpose.msra.mxu0 0
  %536 = vmatpush.bf16.xpose.msra.mxu0 0
  %537 = vmatpush.bf16.xpose.msra.mxu0 0
  %538 = vmatpush.bf16.xpose.msra.mxu0 0
  %539 = vmatpush.bf16.xpose.msra.mxu0 0
  %540 = vmatpush.bf16.xpose.msra.mxu0 0
  %541 = vmatpush.bf16.xpose.msra.mxu0 0
  %542 = vmatpush.bf16.xpose.msra.mxu0 %v533
  %543 = vmatmul.bf16.gmra.mxu0 %v530
  %v544 = vpop.f32.mrf.mxu0
  %v545 = vadd.f32 0.0, %v544
  %v546 = vpop.f32.mrf.mxu0
  %547 = vdwg.mxu0
  %548 = vrot.lane.b32.xlu0 %v409, 112
  %v549 = vpop.permute.xlu0 %548
  %550 = vrot.lane.b32.xlu0 %v409, 48
  %v551 = vpop.permute.xlu0 %550
  %v553 = vsel %vm87, %v549, 0
  %v556 = vsel %vm87, %v551, 0
  %558 = vmatpush.bf16.xpose.msra.mxu0 0
  %559 = vmatpush.bf16.xpose.msra.mxu0 0
  %560 = vmatpush.bf16.xpose.msra.mxu0 0
  %561 = vmatpush.bf16.xpose.msra.mxu0 0
  %562 = vmatpush.bf16.xpose.msra.mxu0 0
  %563 = vmatpush.bf16.xpose.msra.mxu0 0
  %564 = vmatpush.bf16.xpose.msra.mxu0 0
  %565 = vmatpush.bf16.xpose.msra.mxu0 %v556
  %566 = vmatmul.bf16.gmra.mxu0 %v553
  %v567 = vpop.f32.mrf.mxu0
  %v568 = vadd.f32 0.0, %v567
  %v569 = vpop.f32.mrf.mxu0
  %570 = vdwg.mxu0
  %v571 = vmul.f32 %v545, 0.28867513
  %v572 = vmul.f32 %v568, 0.28867513
  %v573 = vsel %vm433, %v571, -inf
  %574 = vmax.xlane.f32.xlu0 %v573
  %v575 = vpop.xlane.xlu0 %574
  %v576 = vsel %vm433, %v572, -inf
  %577 = vmax.xlane.f32.xlu0 %v576
  %v578 = vpop.xlane.xlu0 %577
  %v579 = vsub.f32 %v571, %v575
  %v580 = vsub.f32 %v572, %v578
  %v581 = vmul.f32 %v579, 1.442695
  %v582 = vpow.pop %v581
  %v583 = vmul.f32 %v580, 1.442695
  %v584 = vpow.pop %v583
  %v585 = vsel %vm433, %v582, 0.0
  %586 = vadd.xlane.f32.xlu0 %v585
  %v587 = vpop.xlane.xlu0 %586
  %v588 = vsel %vm433, %v584, 0.0
  %589 = vadd.xlane.f32.xlu0 %v588
  %v590 = vpop.xlane.xlu0 %589
  %v591 = vrcp.pop %v587
  %v592 = vmul.f32 %v587, %v591
  %v593 = vsub.f32 1.0, %v592
  %v594 = vmul.f32 %v591, %v593
  %v595 = vadd.f32 %v591, %v594
  %vm596 = vweird.f32 %v587
  %vm597 = vweird.f32 %v591
  %vm598 = vmor %vm596, %vm597
  %v599 = vsel %vm598, %v591, %v595
  %v600 = vand.u32 2147483647, %v587
  %vm601 = vcmp.eq.f32.partialorder %v600, 8.507059e+37
  %v602 = vand.u32 %v587, 2147483648
  %v603 = vor.u32 1.1754944e-38, %v602
  %v604 = vsel %vm601, %v603, %v599
  %v605 = vmul.f32 %v582, %v604
  %v606 = vrcp.pop %v590
  %v607 = vmul.f32 %v590, %v606
  %v608 = vsub.f32 1.0, %v607
  %v609 = vmul.f32 %v606, %v608
  %v610 = vadd.f32 %v606, %v609
  %vm611 = vweird.f32 %v590
  %vm612 = vweird.f32 %v606
  %vm613 = vmor %vm611, %vm612
  %v614 = vsel %vm613, %v606, %v610
  %v615 = vand.u32 2147483647, %v590
  %vm616 = vcmp.eq.f32.partialorder %v615, 8.507059e+37
  %v617 = vand.u32 %v590, 2147483648
  %v618 = vor.u32 1.1754944e-38, %v617
  %v619 = vsel %vm616, %v618, %v614
  %v620 = vmul.f32 %v584, %v619
  %v621 = vpack.c.bf16 %v605, %v605
  %v622 = vpack.c.bf16 %v620, %v620
  %v624 = vunpack.c.l.b16 %v484
  %v625 = vpack.c.b16 %v624, %v624
  %626 = vrot.lane.b32.xlu0 %v625, 112
  %v627 = vpop.permute.xlu0 %626
  %v629 = vsel %vm433, %v621, 0
  %v632 = vsel %vm489, %v627, 0
  %634 = vmatpush.bf16.msra.mxu0 0
  %635 = vmatpush.bf16.msra.mxu0 0
  %636 = vmatpush.bf16.msra.mxu0 0
  %637 = vmatpush.bf16.msra.mxu0 0
  %638 = vmatpush.bf16.msra.mxu0 0
  %639 = vmatpush.bf16.msra.mxu0 0
  %640 = vmatpush.bf16.msra.mxu0 0
  %641 = vmatpush.bf16.msra.mxu0 %v632
  %642 = vmatmul.bf16.gmra.mxu0 %v629
  %v643 = vpop.f32.mrf.mxu0
  %v644 = vadd.f32 0.0, %v643
  %v645 = vpop.f32.mrf.mxu0
  %646 = vdwg.mxu0
  %v648 = vunpack.c.l.b16 %v485
  %v649 = vpack.c.b16 %v648, %v648
  %650 = vrot.lane.b32.xlu0 %v649, 112
  %v651 = vpop.permute.xlu0 %650
  %v653 = vsel %vm433, %v622, 0
  %v656 = vsel %vm489, %v651, 0
  %658 = vmatpush.bf16.msra.mxu0 0
  %659 = vmatpush.bf16.msra.mxu0 0
  %660 = vmatpush.bf16.msra.mxu0 0
  %661 = vmatpush.bf16.msra.mxu0 0
  %662 = vmatpush.bf16.msra.mxu0 0
  %663 = vmatpush.bf16.msra.mxu0 0
  %664 = vmatpush.bf16.msra.mxu0 0
  %665 = vmatpush.bf16.msra.mxu0 %v656
  %666 = vmatmul.bf16.gmra.mxu0 %v653
  %v667 = vpop.f32.mrf.mxu0
  %v668 = vadd.f32 0.0, %v667
  %v669 = vpop.f32.mrf.mxu0
  %670 = vdwg.mxu0
  %671 = vrot.lane.b32.xlu0 %v385, 96
  %v672 = vpop.permute.xlu0 %671
  %673 = vrot.lane.b32.xlu0 %v385, 32
  %v674 = vpop.permute.xlu0 %673
  %v676 = vsel %vm87, %v672, 0
  %v679 = vsel %vm87, %v674, 0
  %681 = vmatpush.bf16.xpose.msra.mxu0 0
  %682 = vmatpush.bf16.xpose.msra.mxu0 0
  %683 = vmatpush.bf16.xpose.msra.mxu0 0
  %684 = vmatpush.bf16.xpose.msra.mxu0 0
  %685 = vmatpush.bf16.xpose.msra.mxu0 0
  %686 = vmatpush.bf16.xpose.msra.mxu0 0
  %687 = vmatpush.bf16.xpose.msra.mxu0 0
  %688 = vmatpush.bf16.xpose.msra.mxu0 %v679
  %689 = vmatmul.bf16.gmra.mxu0 %v676
  %v690 = vpop.f32.mrf.mxu0
  %v691 = vadd.f32 0.0, %v690
  %v692 = vpop.f32.mrf.mxu0
  %693 = vdwg.mxu0
  %694 = vrot.lane.b32.xlu0 %v409, 96
  %v695 = vpop.permute.xlu0 %694
  %696 = vrot.lane.b32.xlu0 %v409, 32
  %v697 = vpop.permute.xlu0 %696
  %v699 = vsel %vm87, %v695, 0
  %v702 = vsel %vm87, %v697, 0
  %704 = vmatpush.bf16.xpose.msra.mxu0 0
  %705 = vmatpush.bf16.xpose.msra.mxu0 0
  %706 = vmatpush.bf16.xpose.msra.mxu0 0
  %707 = vmatpush.bf16.xpose.msra.mxu0 0
  %708 = vmatpush.bf16.xpose.msra.mxu0 0
  %709 = vmatpush.bf16.xpose.msra.mxu0 0
  %710 = vmatpush.bf16.xpose.msra.mxu0 0
  %711 = vmatpush.bf16.xpose.msra.mxu0 %v702
  %712 = vmatmul.bf16.gmra.mxu0 %v699
  %v713 = vpop.f32.mrf.mxu0
  %v714 = vadd.f32 0.0, %v713
  %v715 = vpop.f32.mrf.mxu0
  %716 = vdwg.mxu0
  %v717 = vmul.f32 %v691, 0.28867513
  %v718 = vmul.f32 %v714, 0.28867513
  %v719 = vsel %vm433, %v717, -inf
  %720 = vmax.xlane.f32.xlu0 %v719
  %v721 = vpop.xlane.xlu0 %720
  %v722 = vsel %vm433, %v718, -inf
  %723 = vmax.xlane.f32.xlu0 %v722
  %v724 = vpop.xlane.xlu0 %723
  %v725 = vsub.f32 %v717, %v721
  %v726 = vsub.f32 %v718, %v724
  %v727 = vmul.f32 %v725, 1.442695
  %v728 = vpow.pop %v727
  %v729 = vmul.f32 %v726, 1.442695
  %v730 = vpow.pop %v729
  %v731 = vsel %vm433, %v728, 0.0
  %732 = vadd.xlane.f32.xlu0 %v731
  %v733 = vpop.xlane.xlu0 %732
  %v734 = vsel %vm433, %v730, 0.0
  %735 = vadd.xlane.f32.xlu0 %v734
  %v736 = vpop.xlane.xlu0 %735
  %v737 = vrcp.pop %v733
  %v738 = vmul.f32 %v733, %v737
  %v739 = vsub.f32 1.0, %v738
  %v740 = vmul.f32 %v737, %v739
  %v741 = vadd.f32 %v737, %v740
  %vm742 = vweird.f32 %v733
  %vm743 = vweird.f32 %v737
  %vm744 = vmor %vm742, %vm743
  %v745 = vsel %vm744, %v737, %v741
  %v746 = vand.u32 2147483647, %v733
  %vm747 = vcmp.eq.f32.partialorder %v746, 8.507059e+37
  %v748 = vand.u32 %v733, 2147483648
  %v749 = vor.u32 1.1754944e-38, %v748
  %v750 = vsel %vm747, %v749, %v745
  %v751 = vmul.f32 %v728, %v750
  %v752 = vrcp.pop %v736
  %v753 = vmul.f32 %v736, %v752
  %v754 = vsub.f32 1.0, %v753
  %v755 = vmul.f32 %v752, %v754
  %v756 = vadd.f32 %v752, %v755
  %vm757 = vweird.f32 %v736
  %vm758 = vweird.f32 %v752
  %vm759 = vmor %vm757, %vm758
  %v760 = vsel %vm759, %v752, %v756
  %v761 = vand.u32 2147483647, %v736
  %vm762 = vcmp.eq.f32.partialorder %v761, 8.507059e+37
  %v763 = vand.u32 %v736, 2147483648
  %v764 = vor.u32 1.1754944e-38, %v763
  %v765 = vsel %vm762, %v764, %v760
  %v766 = vmul.f32 %v730, %v765
  %v767 = vpack.c.bf16 %v751, %v751
  %v768 = vpack.c.bf16 %v766, %v766
  %769 = vrot.lane.b32.xlu0 %v625, 96
  %v770 = vpop.permute.xlu0 %769
  %v772 = vsel %vm433, %v767, 0
  %v775 = vsel %vm489, %v770, 0
  %777 = vmatpush.bf16.msra.mxu0 0
  %778 = vmatpush.bf16.msra.mxu0 0
  %779 = vmatpush.bf16.msra.mxu0 0
  %780 = vmatpush.bf16.msra.mxu0 0
  %781 = vmatpush.bf16.msra.mxu0 0
  %782 = vmatpush.bf16.msra.mxu0 0
  %783 = vmatpush.bf16.msra.mxu0 0
  %784 = vmatpush.bf16.msra.mxu0 %v775
  %785 = vmatmul.bf16.gmra.mxu0 %v772
  %v786 = vpop.f32.mrf.mxu0
  %v787 = vadd.f32 0.0, %v786
  %v788 = vpop.f32.mrf.mxu0
  %789 = vdwg.mxu0
  %790 = vrot.lane.b32.xlu0 %v649, 96
  %v791 = vpop.permute.xlu0 %790
  %v793 = vsel %vm433, %v768, 0
  %v796 = vsel %vm489, %v791, 0
  %798 = vmatpush.bf16.msra.mxu0 0
  %799 = vmatpush.bf16.msra.mxu0 0
  %800 = vmatpush.bf16.msra.mxu0 0
  %801 = vmatpush.bf16.msra.mxu0 0
  %802 = vmatpush.bf16.msra.mxu0 0
  %803 = vmatpush.bf16.msra.mxu0 0
  %804 = vmatpush.bf16.msra.mxu0 0
  %805 = vmatpush.bf16.msra.mxu0 %v796
  %806 = vmatmul.bf16.gmra.mxu0 %v793
  %v807 = vpop.f32.mrf.mxu0
  %v808 = vadd.f32 0.0, %v807
  %v809 = vpop.f32.mrf.mxu0
  %810 = vdwg.mxu0
  %811 = vrot.lane.b32.xlu0 %v385, 80
  %v812 = vpop.permute.xlu0 %811
  %813 = vrot.lane.b32.xlu0 %v385, 16
  %v814 = vpop.permute.xlu0 %813
  %v816 = vsel %vm87, %v812, 0
  %v819 = vsel %vm87, %v814, 0
  %821 = vmatpush.bf16.xpose.msra.mxu0 0
  %822 = vmatpush.bf16.xpose.msra.mxu0 0
  %823 = vmatpush.bf16.xpose.msra.mxu0 0
  %824 = vmatpush.bf16.xpose.msra.mxu0 0
  %825 = vmatpush.bf16.xpose.msra.mxu0 0
  %826 = vmatpush.bf16.xpose.msra.mxu0 0
  %827 = vmatpush.bf16.xpose.msra.mxu0 0
  %828 = vmatpush.bf16.xpose.msra.mxu0 %v819
  %829 = vmatmul.bf16.gmra.mxu0 %v816
  %v830 = vpop.f32.mrf.mxu0
  %v831 = vadd.f32 0.0, %v830
  %v832 = vpop.f32.mrf.mxu0
  %833 = vdwg.mxu0
  %834 = vrot.lane.b32.xlu0 %v409, 80
  %v835 = vpop.permute.xlu0 %834
  %836 = vrot.lane.b32.xlu0 %v409, 16
  %v837 = vpop.permute.xlu0 %836
  %v839 = vsel %vm87, %v835, 0
  %v842 = vsel %vm87, %v837, 0
  %844 = vmatpush.bf16.xpose.msra.mxu0 0
  %845 = vmatpush.bf16.xpose.msra.mxu0 0
  %846 = vmatpush.bf16.xpose.msra.mxu0 0
  %847 = vmatpush.bf16.xpose.msra.mxu0 0
  %848 = vmatpush.bf16.xpose.msra.mxu0 0
  %849 = vmatpush.bf16.xpose.msra.mxu0 0
  %850 = vmatpush.bf16.xpose.msra.mxu0 0
  %851 = vmatpush.bf16.xpose.msra.mxu0 %v842
  %852 = vmatmul.bf16.gmra.mxu0 %v839
  %v853 = vpop.f32.mrf.mxu0
  %v854 = vadd.f32 0.0, %v853
  %v855 = vpop.f32.mrf.mxu0
  %856 = vdwg.mxu0
  %v857 = vmul.f32 %v831, 0.28867513
  %v858 = vmul.f32 %v854, 0.28867513
  %v859 = vsel %vm433, %v857, -inf
  %860 = vmax.xlane.f32.xlu0 %v859
  %v861 = vpop.xlane.xlu0 %860
  %v862 = vsel %vm433, %v858, -inf
  %863 = vmax.xlane.f32.xlu0 %v862
  %v864 = vpop.xlane.xlu0 %863
  %v865 = vsub.f32 %v857, %v861
  %v866 = vsub.f32 %v858, %v864
  %v867 = vmul.f32 %v865, 1.442695
  %v868 = vpow.pop %v867
  %v869 = vmul.f32 %v866, 1.442695
  %v870 = vpow.pop %v869
  %v871 = vsel %vm433, %v868, 0.0
  %872 = vadd.xlane.f32.xlu0 %v871
  %v873 = vpop.xlane.xlu0 %872
  %v874 = vsel %vm433, %v870, 0.0
  %875 = vadd.xlane.f32.xlu0 %v874
  %v876 = vpop.xlane.xlu0 %875
  %v877 = vrcp.pop %v873
  %v878 = vmul.f32 %v873, %v877
  %v879 = vsub.f32 1.0, %v878
  %v880 = vmul.f32 %v877, %v879
  %v881 = vadd.f32 %v877, %v880
  %vm882 = vweird.f32 %v873
  %vm883 = vweird.f32 %v877
  %vm884 = vmor %vm882, %vm883
  %v885 = vsel %vm884, %v877, %v881
  %v886 = vand.u32 2147483647, %v873
  %vm887 = vcmp.eq.f32.partialorder %v886, 8.507059e+37
  %v888 = vand.u32 %v873, 2147483648
  %v889 = vor.u32 1.1754944e-38, %v888
  %v890 = vsel %vm887, %v889, %v885
  %v891 = vmul.f32 %v868, %v890
  %v892 = vrcp.pop %v876
  %v893 = vmul.f32 %v876, %v892
  %v894 = vsub.f32 1.0, %v893
  %v895 = vmul.f32 %v892, %v894
  %v896 = vadd.f32 %v892, %v895
  %vm897 = vweird.f32 %v876
  %vm898 = vweird.f32 %v892
  %vm899 = vmor %vm897, %vm898
  %v900 = vsel %vm899, %v892, %v896
  %v901 = vand.u32 2147483647, %v876
  %vm902 = vcmp.eq.f32.partialorder %v901, 8.507059e+37
  %v903 = vand.u32 %v876, 2147483648
  %v904 = vor.u32 1.1754944e-38, %v903
  %v905 = vsel %vm902, %v904, %v900
  %v906 = vmul.f32 %v870, %v905
  %v907 = vpack.c.bf16 %v891, %v891
  %v908 = vpack.c.bf16 %v906, %v906
  %909 = vrot.lane.b32.xlu0 %v625, 80
  %v910 = vpop.permute.xlu0 %909
  %v912 = vsel %vm433, %v907, 0
  %v915 = vsel %vm489, %v910, 0
  %917 = vmatpush.bf16.msra.mxu0 0
  %918 = vmatpush.bf16.msra.mxu0 0
  %919 = vmatpush.bf16.msra.mxu0 0
  %920 = vmatpush.bf16.msra.mxu0 0
  %921 = vmatpush.bf16.msra.mxu0 0
  %922 = vmatpush.bf16.msra.mxu0 0
  %923 = vmatpush.bf16.msra.mxu0 0
  %924 = vmatpush.bf16.msra.mxu0 %v915
  %925 = vmatmul.bf16.gmra.mxu0 %v912
  %v926 = vpop.f32.mrf.mxu0
  %v927 = vadd.f32 0.0, %v926
  %v928 = vpop.f32.mrf.mxu0
  %929 = vdwg.mxu0
  %930 = vrot.lane.b32.xlu0 %v649, 80
  %v931 = vpop.permute.xlu0 %930
  %v933 = vsel %vm433, %v908, 0
  %v936 = vsel %vm489, %v931, 0
  %938 = vmatpush.bf16.msra.mxu0 0
  %939 = vmatpush.bf16.msra.mxu0 0
  %940 = vmatpush.bf16.msra.mxu0 0
  %941 = vmatpush.bf16.msra.mxu0 0
  %942 = vmatpush.bf16.msra.mxu0 0
  %943 = vmatpush.bf16.msra.mxu0 0
  %944 = vmatpush.bf16.msra.mxu0 0
  %945 = vmatpush.bf16.msra.mxu0 %v936
  %946 = vmatmul.bf16.gmra.mxu0 %v933
  %v947 = vpop.f32.mrf.mxu0
  %v948 = vadd.f32 0.0, %v947
  %v949 = vpop.f32.mrf.mxu0
  %950 = vdwg.mxu0
  %953 = vrot.lane.b32.xlu0 %v644, 16
  %v954 = vpop.permute.xlu0 %953
  %955 = vrot.lane.b32.xlu0 %v668, 16
  %v956 = vpop.permute.xlu0 %955
  %961 = vrot.lane.b32.xlu0 %v787, 32
  %v962 = vpop.permute.xlu0 %961
  %963 = vrot.lane.b32.xlu0 %v808, 32
  %v964 = vpop.permute.xlu0 %963
  %969 = vrot.lane.b32.xlu0 %v927, 48
  %v970 = vpop.permute.xlu0 %969
  %971 = vrot.lane.b32.xlu0 %v948, 48
  %v972 = vpop.permute.xlu0 %971
  %v975 = vsel %vm87, %v503, %v954
  %v976 = vsel %vm87, %v522, %v956
  %vm977 = vcmask 261120
  %v978 = vsel %vm977, %v975, %v962
  %v979 = vsel %vm977, %v976, %v964
  %v980 = vsel %vm349, %v978, %v970
  %v981 = vsel %vm349, %v979, %v972
  %v982 = vpack.c.bf16 %v981, %v980
  %v984 = vperm.slane %v276, 0
  %v994 = vunpack.c.l.b16 %v268
  %v995 = vunpack.c.l.b16 %v269
  %v996 = vunpack.c.l.b16 %v270
  %v997 = vunpack.c.l.b16 %v271
  %v998 = vunpack.c.l.b16 %v272
  %v999 = vunpack.c.l.b16 %v273
  %v1000 = vunpack.c.l.b16 %v274
  %v1001 = vunpack.c.l.b16 %v275
  %v1002 = vpack.c.b16 %v995, %v994
  %v1003 = vpack.c.b16 %v997, %v996
  %v1004 = vpack.c.b16 %v999, %v998
  %v1005 = vpack.c.b16 %v1001, %v1000
  %v1011 = vsel %vm225, %v982, 0
  %1013 = vmatpush.bf16.msra.mxu0 0
  %1014 = vmatpush.bf16.msra.mxu0 0
  %1015 = vmatpush.bf16.msra.mxu0 0
  %1016 = vmatpush.bf16.msra.mxu0 0
  %1017 = vmatpush.bf16.msra.mxu0 %v1005
  %1018 = vmatpush.bf16.msra.mxu0 %v1004
  %1019 = vmatpush.bf16.msra.mxu0 %v1003
  %1020 = vmatpush.bf16.msra.mxu0 %v1002
  %1021 = vmatmul.bf16.gmra.mxu0 %v1011
  %v1022 = vpop.f32.mrf.mxu0
  %v1023 = vadd.f32 %v984, %v1022
  %v1024 = vpop.f32.mrf.mxu0
  %v1025 = vadd.f32 %v984, %v1024
  %1026 = vdwg.mxu0
  %v1027 = vadd.f32 %v259, %v1023
  %v1028 = vadd.f32 %v260, %v1025
  %v1029 = vsel %vm349, %v1027, 0.0
  %1030 = vadd.xlane.f32.xlu0 %v1029
  %v1031 = vpop.xlane.xlu0 %1030
  %v1032 = vsel %vm349, %v1028, 0.0
  %1033 = vadd.xlane.f32.xlu0 %v1032
  %v1034 = vpop.xlane.xlu0 %1033
  %v1035 = vrcp.pop 48.0
  %v1036 = vmul.f32 48.0, %v1035
  %v1037 = vsub.f32 1.0, %v1036
  %v1038 = vmul.f32 %v1035, %v1037
  %v1039 = vadd.f32 %v1035, %v1038
  %vm1040 = vweird.f32 %v1035
  %v1041 = vsel %vm1040, %v1035, %v1039
  %v1042 = vmul.f32 %v1031, %v1041
  %v1043 = vmul.f32 %v1034, %v1041
  %v1044 = vsub.f32 %v1027, %v1042
  %v1045 = vsub.f32 %v1028, %v1043
  %v1046 = vmul.f32 %v1044, %v1044
  %v1047 = vmul.f32 %v1045, %v1045
  %v1048 = vsel %vm349, %v1046, 0.0
  %1049 = vadd.xlane.f32.xlu0 %v1048
  %v1050 = vpop.xlane.xlu0 %1049
  %v1051 = vsel %vm349, %v1047, 0.0
  %1052 = vadd.xlane.f32.xlu0 %v1051
  %v1053 = vpop.xlane.xlu0 %1052
  %v1054 = vmul.f32 %v1050, %v1041
  %v1055 = vmul.f32 %v1053, %v1041
  %v1056 = vadd.f32 %v1054, 1e-05
  %v1057 = vadd.f32 %v1055, 1e-05
  %v1058 = vrsqrt.pop %v1056
  %v1059 = vmul.f32 %v1058, %v1056
  %v1060 = vmul.f32 %v1059, %v1058
  %v1061 = vmul.f32 0.5, %v1060
  %v1062 = vsub.f32 1.5, %v1061
  %v1063 = vmul.f32 %v1058, %v1062
  %vm1064 = vweird.f32 %v1056
  %vm1065 = vweird.f32 %v1058
  %vm1066 = vmor %vm1064, %vm1065
  %v1067 = vsel %vm1066, %v1058, %v1063
  %v1068 = vrsqrt.pop %v1057
  %v1069 = vmul.f32 %v1068, %v1057
  %v1070 = vmul.f32 %v1069, %v1068
  %v1071 = vmul.f32 0.5, %v1070
  %v1072 = vsub.f32 1.5, %v1071
  %v1073 = vmul.f32 %v1068, %v1072
  %vm1074 = vweird.f32 %v1057
  %vm1075 = vweird.f32 %v1068
  %vm1076 = vmor %vm1074, %vm1075
  %v1077 = vsel %vm1076, %v1068, %v1073
  %v1078 = vmul.f32 %v1044, %v1067
  %v1079 = vmul.f32 %v1045, %v1077
  %v1081 = vperm.slane %v277, 0
  %v1083 = vmul.f32 %v1078, %v1081
  %v1084 = vmul.f32 %v1079, %v1081
  %v1086 = vperm.slane %v278, 0
  %v1088 = vadd.f32 %v1083, %v1086
  %v1089 = vadd.f32 %v1084, %v1086
  %v1090 = vpack.c.bf16 %v1089, %v1088
  %v1092 = vperm.slane %v285, 0
  %v1093 = vperm.slane %v285, 1
  %v1102 = vunpack.c.l.b16 %v279
  %v1103 = vunpack.c.h.b16 %v279
  %v1104 = vunpack.c.l.b16 %v280
  %v1105 = vunpack.c.h.b16 %v280
  %v1106 = vunpack.c.l.b16 %v281
  %v1107 = vunpack.c.h.b16 %v281
  %v1108 = vunpack.c.l.b16 %v282
  %v1109 = vunpack.c.h.b16 %v282
  %v1110 = vunpack.c.l.b16 %v283
  %v1111 = vunpack.c.h.b16 %v283
  %v1112 = vunpack.c.l.b16 %v284
  %v1113 = vunpack.c.h.b16 %v284
  %v1114 = vpack.c.b16 %v1104, %v1102
  %v1115 = vpack.c.b16 %v1105, %v1103
  %v1116 = vpack.c.b16 %v1108, %v1106
  %v1117 = vpack.c.b16 %v1109, %v1107
  %v1118 = vpack.c.b16 %v1112, %v1110
  %v1119 = vpack.c.b16 %v1113, %v1111
  %v1127 = vsel %vm349, %v1090, 0
  %1129 = vmatpush.bf16.msra.mxu0 0
  %1130 = vmatpush.bf16.msra.mxu0 0
  %1131 = vmatpush.bf16.msra.mxu0 0
  %1132 = vmatpush.bf16.msra.mxu0 0
  %1133 = vmatpush.bf16.msra.mxu0 0
  %1134 = vmatpush.bf16.msra.mxu0 %v1118
  %1135 = vmatpush.bf16.msra.mxu0 %v1116
  %1136 = vmatpush.bf16.msra.mxu0 %v1114
  %1137 = vmatmul.bf16.gmra.mxu0 %v1127
  %v1138 = vpop.f32.mrf.mxu0
  %v1139 = vadd.f32 %v1092, %v1138
  %v1140 = vpop.f32.mrf.mxu0
  %v1141 = vadd.f32 %v1092, %v1140
  %1142 = vdwg.mxu0
  %1143 = vmatpush.bf16.msra.mxu0 0
  %1144 = vmatpush.bf16.msra.mxu0 0
  %1145 = vmatpush.bf16.msra.mxu0 0
  %1146 = vmatpush.bf16.msra.mxu0 0
  %1147 = vmatpush.bf16.msra.mxu0 0
  %1148 = vmatpush.bf16.msra.mxu0 %v1119
  %1149 = vmatpush.bf16.msra.mxu0 %v1117
  %1150 = vmatpush.bf16.msra.mxu0 %v1115
  %1151 = vmatmul.bf16.gmra.mxu0 %v1127
  %v1152 = vpop.f32.mrf.mxu0
  %v1153 = vadd.f32 %v1093, %v1152
  %v1154 = vpop.f32.mrf.mxu0
  %v1155 = vadd.f32 %v1093, %v1154
  %1156 = vdwg.mxu0
  %v1157 = vmax.f32 %v1139, 0.0
  %v1158 = vmax.f32 %v1153, 0.0
  %v1159 = vmax.f32 %v1141, 0.0
  %v1160 = vmax.f32 %v1155, 0.0
  %v1161 = vpack.c.bf16 %v1159, %v1157
  %v1162 = vpack.c.bf16 %v1160, %v1158
  %v1164 = vperm.slane %v310, 0
  %v1190 = vunpack.c.l.b16 %v286
  %v1191 = vunpack.c.l.b16 %v287
  %v1192 = vunpack.c.l.b16 %v288
  %v1193 = vunpack.c.l.b16 %v289
  %v1194 = vunpack.c.l.b16 %v290
  %v1195 = vunpack.c.l.b16 %v291
  %v1196 = vunpack.c.l.b16 %v292
  %v1197 = vunpack.c.l.b16 %v293
  %v1198 = vunpack.c.l.b16 %v294
  %v1199 = vunpack.c.l.b16 %v295
  %v1200 = vunpack.c.l.b16 %v296
  %v1201 = vunpack.c.l.b16 %v297
  %v1202 = vunpack.c.l.b16 %v298
  %v1203 = vunpack.c.l.b16 %v299
  %v1204 = vunpack.c.l.b16 %v300
  %v1205 = vunpack.c.l.b16 %v301
  %v1206 = vunpack.c.l.b16 %v302
  %v1207 = vunpack.c.l.b16 %v303
  %v1208 = vunpack.c.l.b16 %v304
  %v1209 = vunpack.c.l.b16 %v305
  %v1210 = vunpack.c.l.b16 %v306
  %v1211 = vunpack.c.l.b16 %v307
  %v1212 = vunpack.c.l.b16 %v308
  %v1213 = vunpack.c.l.b16 %v309
  %v1214 = vpack.c.b16 %v1191, %v1190
  %v1215 = vpack.c.b16 %v1193, %v1192
  %v1216 = vpack.c.b16 %v1195, %v1194
  %v1217 = vpack.c.b16 %v1197, %v1196
  %v1218 = vpack.c.b16 %v1199, %v1198
  %v1219 = vpack.c.b16 %v1201, %v1200
  %v1220 = vpack.c.b16 %v1203, %v1202
  %v1221 = vpack.c.b16 %v1205, %v1204
  %v1222 = vpack.c.b16 %v1207, %v1206
  %v1223 = vpack.c.b16 %v1209, %v1208
  %v1224 = vpack.c.b16 %v1211, %v1210
  %v1225 = vpack.c.b16 %v1213, %v1212
  %v1239 = vsel %vm225, %v1162, 0
  %1241 = vmatpush.bf16.msra.mxu0 %v1221
  %1242 = vmatpush.bf16.msra.mxu0 %v1220
  %1243 = vmatpush.bf16.msra.mxu0 %v1219
  %1244 = vmatpush.bf16.msra.mxu0 %v1218
  %1245 = vmatpush.bf16.msra.mxu0 %v1217
  %1246 = vmatpush.bf16.msra.mxu0 %v1216
  %1247 = vmatpush.bf16.msra.mxu0 %v1215
  %1248 = vmatpush.bf16.msra.mxu0 %v1214
  %1249 = vmatmul.bf16.gmra.mxu0 %v1161
  %v1250 = vpop.f32.mrf.mxu0
  %v1251 = vadd.f32 %v1164, %v1250
  %v1252 = vpop.f32.mrf.mxu0
  %v1253 = vadd.f32 %v1164, %v1252
  %1254 = vdwg.mxu0
  %1255 = vmatpush.bf16.msra.mxu0 0
  %1256 = vmatpush.bf16.msra.mxu0 0
  %1257 = vmatpush.bf16.msra.mxu0 0
  %1258 = vmatpush.bf16.msra.mxu0 0
  %1259 = vmatpush.bf16.msra.mxu0 %v1225
  %1260 = vmatpush.bf16.msra.mxu0 %v1224
  %1261 = vmatpush.bf16.msra.mxu0 %v1223
  %1262 = vmatpush.bf16.msra.mxu0 %v1222
  %1263 = vmatmul.bf16.gmra.mxu0 %v1239
  %v1264 = vpop.f32.mrf.mxu0
  %v1265 = vadd.f32 %v1251, %v1264
  %v1266 = vpop.f32.mrf.mxu0
  %v1267 = vadd.f32 %v1253, %v1266
  %1268 = vdwg.mxu0
  %v1269 = vadd.f32 %v1088, %v1265
  %v1270 = vadd.f32 %v1089, %v1267
  %v1271 = vsel %vm349, %v1269, 0.0
  %1272 = vadd.xlane.f32.xlu0 %v1271
  %v1273 = vpop.xlane.xlu0 %1272
  %v1274 = vsel %vm349, %v1270, 0.0
  %1275 = vadd.xlane.f32.xlu0 %v1274
  %v1276 = vpop.xlane.xlu0 %1275
  %v1277 = vmul.f32 %v1273, %v1041
  %v1278 = vmul.f32 %v1276, %v1041
  %v1279 = vsub.f32 %v1269, %v1277
  %v1280 = vsub.f32 %v1270, %v1278
  %v1281 = vmul.f32 %v1279, %v1279
  %v1282 = vmul.f32 %v1280, %v1280
  %v1283 = vsel %vm349, %v1281, 0.0
  %1284 = vadd.xlane.f32.xlu0 %v1283
  %v1285 = vpop.xlane.xlu0 %1284
  %v1286 = vsel %vm349, %v1282, 0.0
  %1287 = vadd.xlane.f32.xlu0 %v1286
  %v1288 = vpop.xlane.xlu0 %1287
  %v1289 = vmul.f32 %v1285, %v1041
  %v1290 = vmul.f32 %v1288, %v1041
  %v1291 = vadd.f32 %v1289, 1e-05
  %v1292 = vadd.f32 %v1290, 1e-05
  %v1293 = vrsqrt.pop %v1291
  %v1294 = vmul.f32 %v1293, %v1291
  %v1295 = vmul.f32 %v1294, %v1293
  %v1296 = vmul.f32 0.5, %v1295
  %v1297 = vsub.f32 1.5, %v1296
  %v1298 = vmul.f32 %v1293, %v1297
  %vm1299 = vweird.f32 %v1291
  %vm1300 = vweird.f32 %v1293
  %vm1301 = vmor %vm1299, %vm1300
  %v1302 = vsel %vm1301, %v1293, %v1298
  %v1303 = vrsqrt.pop %v1292
  %v1304 = vmul.f32 %v1303, %v1292
  %v1305 = vmul.f32 %v1304, %v1303
  %v1306 = vmul.f32 0.5, %v1305
  %v1307 = vsub.f32 1.5, %v1306
  %v1308 = vmul.f32 %v1303, %v1307
  %vm1309 = vweird.f32 %v1292
  %vm1310 = vweird.f32 %v1303
  %vm1311 = vmor %vm1309, %vm1310
  %v1312 = vsel %vm1311, %v1303, %v1308
  %v1313 = vmul.f32 %v1279, %v1302
  %v1314 = vmul.f32 %v1280, %v1312
  %v1316 = vperm.slane %v311, 0
  %v1318 = vmul.f32 %v1313, %v1316
  %v1319 = vmul.f32 %v1314, %v1316
  %v1321 = vperm.slane %v312, 0
  %v1323 = vadd.f32 %v1318, %v1321
  %v1324 = vadd.f32 %v1319, %v1321
  %s1325 = scalar_lea.vmem %s6, 48
  %v1326 = vld [vmem:[%s1325] sm:$0xff]
  %v1327 = vld [vmem:[%s1325 + $0x8] sm:$0xff]
  %v1328 = vld [vmem:[%s1325 + $0x10] sm:$0xff]
  %v1329 = vld [vmem:[%s1325 + $0x18] sm:$0xff]
  %v1330 = vld [vmem:[%s1325 + $0x20] sm:$0xff]
  %v1331 = vld [vmem:[%s1325 + $0x28] sm:$0xff]
  %s1332 = scalar_lea.vmem %s7, 2
  %v1333 = vld [vmem:[%s1332] sm:$0x3]
  %s1334 = scalar_lea.vmem %s8, 32
  %v1335 = vld [vmem:[%s1334] sm:$0xf]
  %v1336 = vld [vmem:[%s1334 + $0x4] sm:$0xf]
  %v1337 = vld [vmem:[%s1334 + $0x8] sm:$0xf]
  %v1338 = vld [vmem:[%s1334 + $0xc] sm:$0xf]
  %v1339 = vld [vmem:[%s1334 + $0x10] sm:$0xf]
  %v1340 = vld [vmem:[%s1334 + $0x14] sm:$0xf]
  %v1341 = vld [vmem:[%s1334 + $0x18] sm:$0xf]
  %v1342 = vld [vmem:[%s1334 + $0x1c] sm:$0xf]
  %s1343 = scalar_lea.vmem %s9, 1
  %v1344 = vld [vmem:[%s1343] sm:$0x1]
  %s1345 = scalar_lea.vmem %s10, 1
  %v1346 = vld [vmem:[%s1345] sm:$0x1]
  %s1347 = scalar_lea.vmem %s11, 1
  %v1348 = vld [vmem:[%s1347] sm:$0x1]
  %s1349 = scalar_lea.vmem %s12, 48
  %v1350 = vld [vmem:[%s1349] sm:$0xff]
  %v1351 = vld [vmem:[%s1349 + $0x8] sm:$0xff]
  %v1352 = vld [vmem:[%s1349 + $0x10] sm:$0xff]
  %v1353 = vld [vmem:[%s1349 + $0x18] sm:$0xff]
  %v1354 = vld [vmem:[%s1349 + $0x20] sm:$0xff]
  %v1355 = vld [vmem:[%s1349 + $0x28] sm:$0xff]
  %s1356 = scalar_lea.vmem %s13, 2
  %v1357 = vld [vmem:[%s1356] sm:$0x3]
  %s1358 = scalar_lea.vmem %s14, 96
  %v1359 = vld [vmem:[%s1358] sm:$0xf]
  %v1360 = vld [vmem:[%s1358 + $0x4] sm:$0xf]
  %v1361 = vld [vmem:[%s1358 + $0x8] sm:$0xf]
  %v1362 = vld [vmem:[%s1358 + $0xc] sm:$0xf]
  %v1363 = vld [vmem:[%s1358 + $0x10] sm:$0xf]
  %v1364 = vld [vmem:[%s1358 + $0x14] sm:$0xf]
  %v1365 = vld [vmem:[%s1358 + $0x18] sm:$0xf]
  %v1366 = vld [vmem:[%s1358 + $0x1c] sm:$0xf]
  %v1367 = vld [vmem:[%s1358 + $0x20] sm:$0xf]
  %v1368 = vld [vmem:[%s1358 + $0x24] sm:$0xf]
  %v1369 = vld [vmem:[%s1358 + $0x28] sm:$0xf]
  %v1370 = vld [vmem:[%s1358 + $0x2c] sm:$0xf]
  %v1371 = vld [vmem:[%s1358 + $0x30] sm:$0xf]
  %v1372 = vld [vmem:[%s1358 + $0x34] sm:$0xf]
  %v1373 = vld [vmem:[%s1358 + $0x38] sm:$0xf]
  %v1374 = vld [vmem:[%s1358 + $0x3c] sm:$0xf]
  %v1375 = vld [vmem:[%s1358 + $0x40] sm:$0xf]
  %v1376 = vld [vmem:[%s1358 + $0x44] sm:$0xf]
  %v1377 = vld [vmem:[%s1358 + $0x48] sm:$0xf]
  %v1378 = vld [vmem:[%s1358 + $0x4c] sm:$0xf]
  %v1379 = vld [vmem:[%s1358 + $0x50] sm:$0xf]
  %v1380 = vld [vmem:[%s1358 + $0x54] sm:$0xf]
  %v1381 = vld [vmem:[%s1358 + $0x58] sm:$0xf]
  %v1382 = vld [vmem:[%s1358 + $0x5c] sm:$0xf]
  %s1383 = scalar_lea.vmem %s15, 1
  %v1384 = vld [vmem:[%s1383] sm:$0x1]
  %s1385 = scalar_lea.vmem %s16, 1
  %v1386 = vld [vmem:[%s1385] sm:$0x1]
  %s1387 = scalar_lea.vmem %s17, 1
  %v1388 = vld [vmem:[%s1387] sm:$0x1]
  %v1389 = vpack.c.bf16 %v1324, %v1323
  %v1391 = vperm.slane %v1333, 0
  %v1392 = vperm.slane %v1333, 1
  %v1401 = vunpack.c.l.b16 %v1326
  %v1402 = vunpack.c.h.b16 %v1326
  %v1403 = vunpack.c.l.b16 %v1327
  %v1404 = vunpack.c.h.b16 %v1327
  %v1405 = vunpack.c.l.b16 %v1328
  %v1406 = vunpack.c.h.b16 %v1328
  %v1407 = vunpack.c.l.b16 %v1329
  %v1408 = vunpack.c.h.b16 %v1329
  %v1409 = vunpack.c.l.b16 %v1330
  %v1410 = vunpack.c.h.b16 %v1330
  %v1411 = vunpack.c.l.b16 %v1331
  %v1412 = vunpack.c.h.b16 %v1331
  %v1413 = vpack.c.b16 %v1403, %v1401
  %v1414 = vpack.c.b16 %v1404, %v1402
  %v1415 = vpack.c.b16 %v1407, %v1405
  %v1416 = vpack.c.b16 %v1408, %v1406
  %v1417 = vpack.c.b16 %v1411, %v1409
  %v1418 = vpack.c.b16 %v1412, %v1410
  %v1426 = vsel %vm349, %v1389, 0
  %1428 = vmatpush.bf16.msra.mxu0 0
  %1429 = vmatpush.bf16.msra.mxu0 0
  %1430 = vmatpush.bf16.msra.mxu0 0
  %1431 = vmatpush.bf16.msra.mxu0 0
  %1432 = vmatpush.bf16.msra.mxu0 0
  %1433 = vmatpush.bf16.msra.mxu0 %v1417
  %1434 = vmatpush.bf16.msra.mxu0 %v1415
  %1435 = vmatpush.bf16.msra.mxu0 %v1413
  %1436 = vmatmul.bf16.gmra.mxu0 %v1426
  %v1437 = vpop.f32.mrf.mxu0
  %v1438 = vadd.f32 %v1391, %v1437
  %v1439 = vpop.f32.mrf.mxu0
  %v1440 = vadd.f32 %v1391, %v1439
  %1441 = vdwg.mxu0
  %1442 = vmatpush.bf16.msra.mxu0 0
  %1443 = vmatpush.bf16.msra.mxu0 0
  %1444 = vmatpush.bf16.msra.mxu0 0
  %1445 = vmatpush.bf16.msra.mxu0 0
  %1446 = vmatpush.bf16.msra.mxu0 0
  %1447 = vmatpush.bf16.msra.mxu0 %v1418
  %1448 = vmatpush.bf16.msra.mxu0 %v1416
  %1449 = vmatpush.bf16.msra.mxu0 %v1414
  %1450 = vmatmul.bf16.gmra.mxu0 %v1426
  %v1451 = vpop.f32.mrf.mxu0
  %v1452 = vadd.f32 %v1392, %v1451
  %v1453 = vpop.f32.mrf.mxu0
  %v1454 = vadd.f32 %v1392, %v1453
  %1455 = vdwg.mxu0
  %v1456 = vpack.c.bf16 %v1438, %v1438
  %v1457 = vpack.c.bf16 %v1440, %v1440
  %v1459 = vunpack.c.l.b16 %v1456
  %v1460 = vpack.c.b16 %v1459, %v1459
  %1461 = vrot.lane.b32.xlu0 %v1460, 64
  %v1462 = vpop.permute.xlu0 %1461
  %v1464 = vsel %vm87, %v1456, 0
  %v1467 = vsel %vm87, %v1462, 0
  %1469 = vmatpush.bf16.xpose.msra.mxu0 0
  %1470 = vmatpush.bf16.xpose.msra.mxu0 0
  %1471 = vmatpush.bf16.xpose.msra.mxu0 0
  %1472 = vmatpush.bf16.xpose.msra.mxu0 0
  %1473 = vmatpush.bf16.xpose.msra.mxu0 0
  %1474 = vmatpush.bf16.xpose.msra.mxu0 0
  %1475 = vmatpush.bf16.xpose.msra.mxu0 0
  %1476 = vmatpush.bf16.xpose.msra.mxu0 %v1467
  %1477 = vmatmul.bf16.gmra.mxu0 %v1464
  %v1478 = vpop.f32.mrf.mxu0
  %v1479 = vadd.f32 0.0, %v1478
  %v1480 = vpop.f32.mrf.mxu0
  %1481 = vdwg.mxu0
  %v1483 = vunpack.c.l.b16 %v1457
  %v1484 = vpack.c.b16 %v1483, %v1483
  %1485 = vrot.lane.b32.xlu0 %v1484, 64
  %v1486 = vpop.permute.xlu0 %1485
  %v1488 = vsel %vm87, %v1457, 0
  %v1491 = vsel %vm87, %v1486, 0
  %1493 = vmatpush.bf16.xpose.msra.mxu0 0
  %1494 = vmatpush.bf16.xpose.msra.mxu0 0
  %1495 = vmatpush.bf16.xpose.msra.mxu0 0
  %1496 = vmatpush.bf16.xpose.msra.mxu0 0
  %1497 = vmatpush.bf16.xpose.msra.mxu0 0
  %1498 = vmatpush.bf16.xpose.msra.mxu0 0
  %1499 = vmatpush.bf16.xpose.msra.mxu0 0
  %1500 = vmatpush.bf16.xpose.msra.mxu0 %v1491
  %1501 = vmatmul.bf16.gmra.mxu0 %v1488
  %v1502 = vpop.f32.mrf.mxu0
  %v1503 = vadd.f32 0.0, %v1502
  %v1504 = vpop.f32.mrf.mxu0
  %1505 = vdwg.mxu0
  %v1506 = vmul.f32 %v1479, 0.28867513
  %v1507 = vmul.f32 %v1503, 0.28867513
  %v1508 = vsel %vm433, %v1506, -inf
  %1509 = vmax.xlane.f32.xlu0 %v1508
  %v1510 = vpop.xlane.xlu0 %1509
  %v1511 = vsel %vm433, %v1507, -inf
  %1512 = vmax.xlane.f32.xlu0 %v1511
  %v1513 = vpop.xlane.xlu0 %1512
  %v1514 = vsub.f32 %v1506, %v1510
  %v1515 = vsub.f32 %v1507, %v1513
  %v1516 = vmul.f32 %v1514, 1.442695
  %v1517 = vpow.pop %v1516
  %v1518 = vmul.f32 %v1515, 1.442695
  %v1519 = vpow.pop %v1518
  %v1520 = vsel %vm433, %v1517, 0.0
  %1521 = vadd.xlane.f32.xlu0 %v1520
  %v1522 = vpop.xlane.xlu0 %1521
  %v1523 = vsel %vm433, %v1519, 0.0
  %1524 = vadd.xlane.f32.xlu0 %v1523
  %v1525 = vpop.xlane.xlu0 %1524
  %v1526 = vrcp.pop %v1522
  %v1527 = vmul.f32 %v1522, %v1526
  %v1528 = vsub.f32 1.0, %v1527
  %v1529 = vmul.f32 %v1526, %v1528
  %v1530 = vadd.f32 %v1526, %v1529
  %vm1531 = vweird.f32 %v1522
  %vm1532 = vweird.f32 %v1526
  %vm1533 = vmor %vm1531, %vm1532
  %v1534 = vsel %vm1533, %v1526, %v1530
  %v1535 = vand.u32 2147483647, %v1522
  %vm1536 = vcmp.eq.f32.partialorder %v1535, 8.507059e+37
  %v1537 = vand.u32 %v1522, 2147483648
  %v1538 = vor.u32 1.1754944e-38, %v1537
  %v1539 = vsel %vm1536, %v1538, %v1534
  %v1540 = vmul.f32 %v1517, %v1539
  %v1541 = vrcp.pop %v1525
  %v1542 = vmul.f32 %v1525, %v1541
  %v1543 = vsub.f32 1.0, %v1542
  %v1544 = vmul.f32 %v1541, %v1543
  %v1545 = vadd.f32 %v1541, %v1544
  %vm1546 = vweird.f32 %v1525
  %vm1547 = vweird.f32 %v1541
  %vm1548 = vmor %vm1546, %vm1547
  %v1549 = vsel %vm1548, %v1541, %v1545
  %v1550 = vand.u32 2147483647, %v1525
  %vm1551 = vcmp.eq.f32.partialorder %v1550, 8.507059e+37
  %v1552 = vand.u32 %v1525, 2147483648
  %v1553 = vor.u32 1.1754944e-38, %v1552
  %v1554 = vsel %vm1551, %v1553, %v1549
  %v1555 = vmul.f32 %v1519, %v1554
  %v1556 = vpack.c.bf16 %v1540, %v1540
  %v1557 = vpack.c.bf16 %v1555, %v1555
  %v1558 = vpack.c.bf16 %v1452, %v1452
  %v1559 = vpack.c.bf16 %v1454, %v1454
  %v1561 = vsel %vm433, %v1556, 0
  %v1564 = vsel %vm489, %v1558, 0
  %1566 = vmatpush.bf16.msra.mxu0 0
  %1567 = vmatpush.bf16.msra.mxu0 0
  %1568 = vmatpush.bf16.msra.mxu0 0
  %1569 = vmatpush.bf16.msra.mxu0 0
  %1570 = vmatpush.bf16.msra.mxu0 0
  %1571 = vmatpush.bf16.msra.mxu0 0
  %1572 = vmatpush.bf16.msra.mxu0 0
  %1573 = vmatpush.bf16.msra.mxu0 %v1564
  %1574 = vmatmul.bf16.gmra.mxu0 %v1561
  %v1575 = vpop.f32.mrf.mxu0
  %v1576 = vadd.f32 0.0, %v1575
  %v1577 = vpop.f32.mrf.mxu0
  %1578 = vdwg.mxu0
  %v1580 = vsel %vm433, %v1557, 0
  %v1583 = vsel %vm489, %v1559, 0
  %1585 = vmatpush.bf16.msra.mxu0 0
  %1586 = vmatpush.bf16.msra.mxu0 0
  %1587 = vmatpush.bf16.msra.mxu0 0
  %1588 = vmatpush.bf16.msra.mxu0 0
  %1589 = vmatpush.bf16.msra.mxu0 0
  %1590 = vmatpush.bf16.msra.mxu0 0
  %1591 = vmatpush.bf16.msra.mxu0 0
  %1592 = vmatpush.bf16.msra.mxu0 %v1583
  %1593 = vmatmul.bf16.gmra.mxu0 %v1580
  %v1594 = vpop.f32.mrf.mxu0
  %v1595 = vadd.f32 0.0, %v1594
  %v1596 = vpop.f32.mrf.mxu0
  %1597 = vdwg.mxu0
  %1598 = vrot.lane.b32.xlu0 %v1460, 112
  %v1599 = vpop.permute.xlu0 %1598
  %1600 = vrot.lane.b32.xlu0 %v1460, 48
  %v1601 = vpop.permute.xlu0 %1600
  %v1603 = vsel %vm87, %v1599, 0
  %v1606 = vsel %vm87, %v1601, 0
  %1608 = vmatpush.bf16.xpose.msra.mxu0 0
  %1609 = vmatpush.bf16.xpose.msra.mxu0 0
  %1610 = vmatpush.bf16.xpose.msra.mxu0 0
  %1611 = vmatpush.bf16.xpose.msra.mxu0 0
  %1612 = vmatpush.bf16.xpose.msra.mxu0 0
  %1613 = vmatpush.bf16.xpose.msra.mxu0 0
  %1614 = vmatpush.bf16.xpose.msra.mxu0 0
  %1615 = vmatpush.bf16.xpose.msra.mxu0 %v1606
  %1616 = vmatmul.bf16.gmra.mxu0 %v1603
  %v1617 = vpop.f32.mrf.mxu0
  %v1618 = vadd.f32 0.0, %v1617
  %v1619 = vpop.f32.mrf.mxu0
  %1620 = vdwg.mxu0
  %1621 = vrot.lane.b32.xlu0 %v1484, 112
  %v1622 = vpop.permute.xlu0 %1621
  %1623 = vrot.lane.b32.xlu0 %v1484, 48
  %v1624 = vpop.permute.xlu0 %1623
  %v1626 = vsel %vm87, %v1622, 0
  %v1629 = vsel %vm87, %v1624, 0
  %1631 = vmatpush.bf16.xpose.msra.mxu0 0
  %1632 = vmatpush.bf16.xpose.msra.mxu0 0
  %1633 = vmatpush.bf16.xpose.msra.mxu0 0
  %1634 = vmatpush.bf16.xpose.msra.mxu0 0
  %1635 = vmatpush.bf16.xpose.msra.mxu0 0
  %1636 = vmatpush.bf16.xpose.msra.mxu0 0
  %1637 = vmatpush.bf16.xpose.msra.mxu0 0
  %1638 = vmatpush.bf16.xpose.msra.mxu0 %v1629
  %1639 = vmatmul.bf16.gmra.mxu0 %v1626
  %v1640 = vpop.f32.mrf.mxu0
  %v1641 = vadd.f32 0.0, %v1640
  %v1642 = vpop.f32.mrf.mxu0
  %1643 = vdwg.mxu0
  %v1644 = vmul.f32 %v1618, 0.28867513
  %v1645 = vmul.f32 %v1641, 0.28867513
  %v1646 = vsel %vm433, %v1644, -inf
  %1647 = vmax.xlane.f32.xlu0 %v1646
  %v1648 = vpop.xlane.xlu0 %1647
  %v1649 = vsel %vm433, %v1645, -inf
  %1650 = vmax.xlane.f32.xlu0 %v1649
  %v1651 = vpop.xlane.xlu0 %1650
  %v1652 = vsub.f32 %v1644, %v1648
  %v1653 = vsub.f32 %v1645, %v1651
  %v1654 = vmul.f32 %v1652, 1.442695
  %v1655 = vpow.pop %v1654
  %v1656 = vmul.f32 %v1653, 1.442695
  %v1657 = vpow.pop %v1656
  %v1658 = vsel %vm433, %v1655, 0.0
  %1659 = vadd.xlane.f32.xlu0 %v1658
  %v1660 = vpop.xlane.xlu0 %1659
  %v1661 = vsel %vm433, %v1657, 0.0
  %1662 = vadd.xlane.f32.xlu0 %v1661
  %v1663 = vpop.xlane.xlu0 %1662
  %v1664 = vrcp.pop %v1660
  %v1665 = vmul.f32 %v1660, %v1664
  %v1666 = vsub.f32 1.0, %v1665
  %v1667 = vmul.f32 %v1664, %v1666
  %v1668 = vadd.f32 %v1664, %v1667
  %vm1669 = vweird.f32 %v1660
  %vm1670 = vweird.f32 %v1664
  %vm1671 = vmor %vm1669, %vm1670
  %v1672 = vsel %vm1671, %v1664, %v1668
  %v1673 = vand.u32 2147483647, %v1660
  %vm1674 = vcmp.eq.f32.partialorder %v1673, 8.507059e+37
  %v1675 = vand.u32 %v1660, 2147483648
  %v1676 = vor.u32 1.1754944e-38, %v1675
  %v1677 = vsel %vm1674, %v1676, %v1672
  %v1678 = vmul.f32 %v1655, %v1677
  %v1679 = vrcp.pop %v1663
  %v1680 = vmul.f32 %v1663, %v1679
  %v1681 = vsub.f32 1.0, %v1680
  %v1682 = vmul.f32 %v1679, %v1681
  %v1683 = vadd.f32 %v1679, %v1682
  %vm1684 = vweird.f32 %v1663
  %vm1685 = vweird.f32 %v1679
  %vm1686 = vmor %vm1684, %vm1685
  %v1687 = vsel %vm1686, %v1679, %v1683
  %v1688 = vand.u32 2147483647, %v1663
  %vm1689 = vcmp.eq.f32.partialorder %v1688, 8.507059e+37
  %v1690 = vand.u32 %v1663, 2147483648
  %v1691 = vor.u32 1.1754944e-38, %v1690
  %v1692 = vsel %vm1689, %v1691, %v1687
  %v1693 = vmul.f32 %v1657, %v1692
  %v1694 = vpack.c.bf16 %v1678, %v1678
  %v1695 = vpack.c.bf16 %v1693, %v1693
  %v1697 = vunpack.c.l.b16 %v1558
  %v1698 = vpack.c.b16 %v1697, %v1697
  %1699 = vrot.lane.b32.xlu0 %v1698, 112
  %v1700 = vpop.permute.xlu0 %1699
  %v1702 = vsel %vm433, %v1694, 0
  %v1705 = vsel %vm489, %v1700, 0
  %1707 = vmatpush.bf16.msra.mxu0 0
  %1708 = vmatpush.bf16.msra.mxu0 0
  %1709 = vmatpush.bf16.msra.mxu0 0
  %1710 = vmatpush.bf16.msra.mxu0 0
  %1711 = vmatpush.bf16.msra.mxu0 0
  %1712 = vmatpush.bf16.msra.mxu0 0
  %1713 = vmatpush.bf16.msra.mxu0 0
  %1714 = vmatpush.bf16.msra.mxu0 %v1705
  %1715 = vmatmul.bf16.gmra.mxu0 %v1702
  %v1716 = vpop.f32.mrf.mxu0
  %v1717 = vadd.f32 0.0, %v1716
  %v1718 = vpop.f32.mrf.mxu0
  %1719 = vdwg.mxu0
  %v1721 = vunpack.c.l.b16 %v1559
  %v1722 = vpack.c.b16 %v1721, %v1721
  %1723 = vrot.lane.b32.xlu0 %v1722, 112
  %v1724 = vpop.permute.xlu0 %1723
  %v1726 = vsel %vm433, %v1695, 0
  %v1729 = vsel %vm489, %v1724, 0
  %1731 = vmatpush.bf16.msra.mxu0 0
  %1732 = vmatpush.bf16.msra.mxu0 0
  %1733 = vmatpush.bf16.msra.mxu0 0
  %1734 = vmatpush.bf16.msra.mxu0 0
  %1735 = vmatpush.bf16.msra.mxu0 0
  %1736 = vmatpush.bf16.msra.mxu0 0
  %1737 = vmatpush.bf16.msra.mxu0 0
  %1738 = vmatpush.bf16.msra.mxu0 %v1729
  %1739 = vmatmul.bf16.gmra.mxu0 %v1726
  %v1740 = vpop.f32.mrf.mxu0
  %v1741 = vadd.f32 0.0, %v1740
  %v1742 = vpop.f32.mrf.mxu0
  %1743 = vdwg.mxu0
  %1744 = vrot.lane.b32.xlu0 %v1460, 96
  %v1745 = vpop.permute.xlu0 %1744
  %1746 = vrot.lane.b32.xlu0 %v1460, 32
  %v1747 = vpop.permute.xlu0 %1746
  %v1749 = vsel %vm87, %v1745, 0
  %v1752 = vsel %vm87, %v1747, 0
  %1754 = vmatpush.bf16.xpose.msra.mxu0 0
  %1755 = vmatpush.bf16.xpose.msra.mxu0 0
  %1756 = vmatpush.bf16.xpose.msra.mxu0 0
  %1757 = vmatpush.bf16.xpose.msra.mxu0 0
  %1758 = vmatpush.bf16.xpose.msra.mxu0 0
  %1759 = vmatpush.bf16.xpose.msra.mxu0 0
  %1760 = vmatpush.bf16.xpose.msra.mxu0 0
  %1761 = vmatpush.bf16.xpose.msra.mxu0 %v1752
  %1762 = vmatmul.bf16.gmra.mxu0 %v1749
  %v1763 = vpop.f32.mrf.mxu0
  %v1764 = vadd.f32 0.0, %v1763
  %v1765 = vpop.f32.mrf.mxu0
  %1766 = vdwg.mxu0
  %1767 = vrot.lane.b32.xlu0 %v1484, 96
  %v1768 = vpop.permute.xlu0 %1767
  %1769 = vrot.lane.b32.xlu0 %v1484, 32
  %v1770 = vpop.permute.xlu0 %1769
  %v1772 = vsel %vm87, %v1768, 0
  %v1775 = vsel %vm87, %v1770, 0
  %1777 = vmatpush.bf16.xpose.msra.mxu0 0
  %1778 = vmatpush.bf16.xpose.msra.mxu0 0
  %1779 = vmatpush.bf16.xpose.msra.mxu0 0
  %1780 = vmatpush.bf16.xpose.msra.mxu0 0
  %1781 = vmatpush.bf16.xpose.msra.mxu0 0
  %1782 = vmatpush.bf16.xpose.msra.mxu0 0
  %1783 = vmatpush.bf16.xpose.msra.mxu0 0
  %1784 = vmatpush.bf16.xpose.msra.mxu0 %v1775
  %1785 = vmatmul.bf16.gmra.mxu0 %v1772
  %v1786 = vpop.f32.mrf.mxu0
  %v1787 = vadd.f32 0.0, %v1786
  %v1788 = vpop.f32.mrf.mxu0
  %1789 = vdwg.mxu0
  %v1790 = vmul.f32 %v1764, 0.28867513
  %v1791 = vmul.f32 %v1787, 0.28867513
  %v1792 = vsel %vm433, %v1790, -inf
  %1793 = vmax.xlane.f32.xlu0 %v1792
  %v1794 = vpop.xlane.xlu0 %1793
  %v1795 = vsel %vm433, %v1791, -inf
  %1796 = vmax.xlane.f32.xlu0 %v1795
  %v1797 = vpop.xlane.xlu0 %1796
  %v1798 = vsub.f32 %v1790, %v1794
  %v1799 = vsub.f32 %v1791, %v1797
  %v1800 = vmul.f32 %v1798, 1.442695
  %v1801 = vpow.pop %v1800
  %v1802 = vmul.f32 %v1799, 1.442695
  %v1803 = vpow.pop %v1802
  %v1804 = vsel %vm433, %v1801, 0.0
  %1805 = vadd.xlane.f32.xlu0 %v1804
  %v1806 = vpop.xlane.xlu0 %1805
  %v1807 = vsel %vm433, %v1803, 0.0
  %1808 = vadd.xlane.f32.xlu0 %v1807
  %v1809 = vpop.xlane.xlu0 %1808
  %v1810 = vrcp.pop %v1806
  %v1811 = vmul.f32 %v1806, %v1810
  %v1812 = vsub.f32 1.0, %v1811
  %v1813 = vmul.f32 %v1810, %v1812
  %v1814 = vadd.f32 %v1810, %v1813
  %vm1815 = vweird.f32 %v1806
  %vm1816 = vweird.f32 %v1810
  %vm1817 = vmor %vm1815, %vm1816
  %v1818 = vsel %vm1817, %v1810, %v1814
  %v1819 = vand.u32 2147483647, %v1806
  %vm1820 = vcmp.eq.f32.partialorder %v1819, 8.507059e+37
  %v1821 = vand.u32 %v1806, 2147483648
  %v1822 = vor.u32 1.1754944e-38, %v1821
  %v1823 = vsel %vm1820, %v1822, %v1818
  %v1824 = vmul.f32 %v1801, %v1823
  %v1825 = vrcp.pop %v1809
  %v1826 = vmul.f32 %v1809, %v1825
  %v1827 = vsub.f32 1.0, %v1826
  %v1828 = vmul.f32 %v1825, %v1827
  %v1829 = vadd.f32 %v1825, %v1828
  %vm1830 = vweird.f32 %v1809
  %vm1831 = vweird.f32 %v1825
  %vm1832 = vmor %vm1830, %vm1831
  %v1833 = vsel %vm1832, %v1825, %v1829
  %v1834 = vand.u32 2147483647, %v1809
  %vm1835 = vcmp.eq.f32.partialorder %v1834, 8.507059e+37
  %v1836 = vand.u32 %v1809, 2147483648
  %v1837 = vor.u32 1.1754944e-38, %v1836
  %v1838 = vsel %vm1835, %v1837, %v1833
  %v1839 = vmul.f32 %v1803, %v1838
  %v1840 = vpack.c.bf16 %v1824, %v1824
  %v1841 = vpack.c.bf16 %v1839, %v1839
  %1842 = vrot.lane.b32.xlu0 %v1698, 96
  %v1843 = vpop.permute.xlu0 %1842
  %v1845 = vsel %vm433, %v1840, 0
  %v1848 = vsel %vm489, %v1843, 0
  %1850 = vmatpush.bf16.msra.mxu0 0
  %1851 = vmatpush.bf16.msra.mxu0 0
  %1852 = vmatpush.bf16.msra.mxu0 0
  %1853 = vmatpush.bf16.msra.mxu0 0
  %1854 = vmatpush.bf16.msra.mxu0 0
  %1855 = vmatpush.bf16.msra.mxu0 0
  %1856 = vmatpush.bf16.msra.mxu0 0
  %1857 = vmatpush.bf16.msra.mxu0 %v1848
  %1858 = vmatmul.bf16.gmra.mxu0 %v1845
  %v1859 = vpop.f32.mrf.mxu0
  %v1860 = vadd.f32 0.0, %v1859
  %v1861 = vpop.f32.mrf.mxu0
  %1862 = vdwg.mxu0
  %1863 = vrot.lane.b32.xlu0 %v1722, 96
  %v1864 = vpop.permute.xlu0 %1863
  %v1866 = vsel %vm433, %v1841, 0
  %v1869 = vsel %vm489, %v1864, 0
  %1871 = vmatpush.bf16.msra.mxu0 0
  %1872 = vmatpush.bf16.msra.mxu0 0
  %1873 = vmatpush.bf16.msra.mxu0 0
  %1874 = vmatpush.bf16.msra.mxu0 0
  %1875 = vmatpush.bf16.msra.mxu0 0
  %1876 = vmatpush.bf16.msra.mxu0 0
  %1877 = vmatpush.bf16.msra.mxu0 0
  %1878 = vmatpush.bf16.msra.mxu0 %v1869
  %1879 = vmatmul.bf16.gmra.mxu0 %v1866
  %v1880 = vpop.f32.mrf.mxu0
  %v1881 = vadd.f32 0.0, %v1880
  %v1882 = vpop.f32.mrf.mxu0
  %1883 = vdwg.mxu0
  %1884 = vrot.lane.b32.xlu0 %v1460, 80
  %v1885 = vpop.permute.xlu0 %1884
  %1886 = vrot.lane.b32.xlu0 %v1460, 16
  %v1887 = vpop.permute.xlu0 %1886
  %v1889 = vsel %vm87, %v1885, 0
  %v1892 = vsel %vm87, %v1887, 0
  %1894 = vmatpush.bf16.xpose.msra.mxu0 0
  %1895 = vmatpush.bf16.xpose.msra.mxu0 0
  %1896 = vmatpush.bf16.xpose.msra.mxu0 0
  %1897 = vmatpush.bf16.xpose.msra.mxu0 0
  %1898 = vmatpush.bf16.xpose.msra.mxu0 0
  %1899 = vmatpush.bf16.xpose.msra.mxu0 0
  %1900 = vmatpush.bf16.xpose.msra.mxu0 0
  %1901 = vmatpush.bf16.xpose.msra.mxu0 %v1892
  %1902 = vmatmul.bf16.gmra.mxu0 %v1889
  %v1903 = vpop.f32.mrf.mxu0
  %v1904 = vadd.f32 0.0, %v1903
  %v1905 = vpop.f32.mrf.mxu0
  %1906 = vdwg.mxu0
  %1907 = vrot.lane.b32.xlu0 %v1484, 80
  %v1908 = vpop.permute.xlu0 %1907
  %1909 = vrot.lane.b32.xlu0 %v1484, 16
  %v1910 = vpop.permute.xlu0 %1909
  %v1912 = vsel %vm87, %v1908, 0
  %v1915 = vsel %vm87, %v1910, 0
  %1917 = vmatpush.bf16.xpose.msra.mxu0 0
  %1918 = vmatpush.bf16.xpose.msra.mxu0 0
  %1919 = vmatpush.bf16.xpose.msra.mxu0 0
  %1920 = vmatpush.bf16.xpose.msra.mxu0 0
  %1921 = vmatpush.bf16.xpose.msra.mxu0 0
  %1922 = vmatpush.bf16.xpose.msra.mxu0 0
  %1923 = vmatpush.bf16.xpose.msra.mxu0 0
  %1924 = vmatpush.bf16.xpose.msra.mxu0 %v1915
  %1925 = vmatmul.bf16.gmra.mxu0 %v1912
  %v1926 = vpop.f32.mrf.mxu0
  %v1927 = vadd.f32 0.0, %v1926
  %v1928 = vpop.f32.mrf.mxu0
  %1929 = vdwg.mxu0
  %v1930 = vmul.f32 %v1904, 0.28867513
  %v1931 = vmul.f32 %v1927, 0.28867513
  %v1932 = vsel %vm433, %v1930, -inf
  %1933 = vmax.xlane.f32.xlu0 %v1932
  %v1934 = vpop.xlane.xlu0 %1933
  %v1935 = vsel %vm433, %v1931, -inf
  %1936 = vmax.xlane.f32.xlu0 %v1935
  %v1937 = vpop.xlane.xlu0 %1936
  %v1938 = vsub.f32 %v1930, %v1934
  %v1939 = vsub.f32 %v1931, %v1937
  %v1940 = vmul.f32 %v1938, 1.442695
  %v1941 = vpow.pop %v1940
  %v1942 = vmul.f32 %v1939, 1.442695
  %v1943 = vpow.pop %v1942
  %v1944 = vsel %vm433, %v1941, 0.0
  %1945 = vadd.xlane.f32.xlu0 %v1944
  %v1946 = vpop.xlane.xlu0 %1945
  %v1947 = vsel %vm433, %v1943, 0.0
  %1948 = vadd.xlane.f32.xlu0 %v1947
  %v1949 = vpop.xlane.xlu0 %1948
  %v1950 = vrcp.pop %v1946
  %v1951 = vmul.f32 %v1946, %v1950
  %v1952 = vsub.f32 1.0, %v1951
  %v1953 = vmul.f32 %v1950, %v1952
  %v1954 = vadd.f32 %v1950, %v1953
  %vm1955 = vweird.f32 %v1946
  %vm1956 = vweird.f32 %v1950
  %vm1957 = vmor %vm1955, %vm1956
  %v1958 = vsel %vm1957, %v1950, %v1954
  %v1959 = vand.u32 2147483647, %v1946
  %vm1960 = vcmp.eq.f32.partialorder %v1959, 8.507059e+37
  %v1961 = vand.u32 %v1946, 2147483648
  %v1962 = vor.u32 1.1754944e-38, %v1961
  %v1963 = vsel %vm1960, %v1962, %v1958
  %v1964 = vmul.f32 %v1941, %v1963
  %v1965 = vrcp.pop %v1949
  %v1966 = vmul.f32 %v1949, %v1965
  %v1967 = vsub.f32 1.0, %v1966
  %v1968 = vmul.f32 %v1965, %v1967
  %v1969 = vadd.f32 %v1965, %v1968
  %vm1970 = vweird.f32 %v1949
  %vm1971 = vweird.f32 %v1965
  %vm1972 = vmor %vm1970, %vm1971
  %v1973 = vsel %vm1972, %v1965, %v1969
  %v1974 = vand.u32 2147483647, %v1949
  %vm1975 = vcmp.eq.f32.partialorder %v1974, 8.507059e+37
  %v1976 = vand.u32 %v1949, 2147483648
  %v1977 = vor.u32 1.1754944e-38, %v1976
  %v1978 = vsel %vm1975, %v1977, %v1973
  %v1979 = vmul.f32 %v1943, %v1978
  %v1980 = vpack.c.bf16 %v1964, %v1964
  %v1981 = vpack.c.bf16 %v1979, %v1979
  %1982 = vrot.lane.b32.xlu0 %v1698, 80
  %v1983 = vpop.permute.xlu0 %1982
  %v1985 = vsel %vm433, %v1980, 0
  %v1988 = vsel %vm489, %v1983, 0
  %1990 = vmatpush.bf16.msra.mxu0 0
  %1991 = vmatpush.bf16.msra.mxu0 0
  %1992 = vmatpush.bf16.msra.mxu0 0
  %1993 = vmatpush.bf16.msra.mxu0 0
  %1994 = vmatpush.bf16.msra.mxu0 0
  %1995 = vmatpush.bf16.msra.mxu0 0
  %1996 = vmatpush.bf16.msra.mxu0 0
  %1997 = vmatpush.bf16.msra.mxu0 %v1988
  %1998 = vmatmul.bf16.gmra.mxu0 %v1985
  %v1999 = vpop.f32.mrf.mxu0
  %v2000 = vadd.f32 0.0, %v1999
  %v2001 = vpop.f32.mrf.mxu0
  %2002 = vdwg.mxu0
  %2003 = vrot.lane.b32.xlu0 %v1722, 80
  %v2004 = vpop.permute.xlu0 %2003
  %v2006 = vsel %vm433, %v1981, 0
  %v2009 = vsel %vm489, %v2004, 0
  %2011 = vmatpush.bf16.msra.mxu0 0
  %2012 = vmatpush.bf16.msra.mxu0 0
  %2013 = vmatpush.bf16.msra.mxu0 0
  %2014 = vmatpush.bf16.msra.mxu0 0
  %2015 = vmatpush.bf16.msra.mxu0 0
  %2016 = vmatpush.bf16.msra.mxu0 0
  %2017 = vmatpush.bf16.msra.mxu0 0
  %2018 = vmatpush.bf16.msra.mxu0 %v2009
  %2019 = vmatmul.bf16.gmra.mxu0 %v2006
  %v2020 = vpop.f32.mrf.mxu0
  %v2021 = vadd.f32 0.0, %v2020
  %v2022 = vpop.f32.mrf.mxu0
  %2023 = vdwg.mxu0
  %2026 = vrot.lane.b32.xlu0 %v1717, 16
  %v2027 = vpop.permute.xlu0 %2026
  %2028 = vrot.lane.b32.xlu0 %v1741, 16
  %v2029 = vpop.permute.xlu0 %2028
  %2034 = vrot.lane.b32.xlu0 %v1860, 32
  %v2035 = vpop.permute.xlu0 %2034
  %2036 = vrot.lane.b32.xlu0 %v1881, 32
  %v2037 = vpop.permute.xlu0 %2036
  %2042 = vrot.lane.b32.xlu0 %v2000, 48
  %v2043 = vpop.permute.xlu0 %2042
  %2044 = vrot.lane.b32.xlu0 %v2021, 48
  %v2045 = vpop.permute.xlu0 %2044
  %v2048 = vsel %vm87, %v1576, %v2027
  %v2049 = vsel %vm87, %v1595, %v2029
  %v2050 = vsel %vm977, %v2048, %v2035
  %v2051 = vsel %vm977, %v2049, %v2037
  %v2052 = vsel %vm349, %v2050, %v2043
  %v2053 = vsel %vm349, %v2051, %v2045
  %v2054 = vpack.c.bf16 %v2053, %v2052
  %v2056 = vperm.slane %v1344, 0
  %v2066 = vunpack.c.l.b16 %v1335
  %v2067 = vunpack.c.l.b16 %v1336
  %v2068 = vunpack.c.l.b16 %v1337
  %v2069 = vunpack.c.l.b16 %v1338
  %v2070 = vunpack.c.l.b16 %v1339
  %v2071 = vunpack.c.l.b16 %v1340
  %v2072 = vunpack.c.l.b16 %v1341
  %v2073 = vunpack.c.l.b16 %v1342
  %v2074 = vpack.c.b16 %v2067, %v2066
  %v2075 = vpack.c.b16 %v2069, %v2068
  %v2076 = vpack.c.b16 %v2071, %v2070
  %v2077 = vpack.c.b16 %v2073, %v2072
  %v2083 = vsel %vm225, %v2054, 0
  %2085 = vmatpush.bf16.msra.mxu0 0
  %2086 = vmatpush.bf16.msra.mxu0 0
  %2087 = vmatpush.bf16.msra.mxu0 0
  %2088 = vmatpush.bf16.msra.mxu0 0
  %2089 = vmatpush.bf16.msra.mxu0 %v2077
  %2090 = vmatpush.bf16.msra.mxu0 %v2076
  %2091 = vmatpush.bf16.msra.mxu0 %v2075
  %2092 = vmatpush.bf16.msra.mxu0 %v2074
  %2093 = vmatmul.bf16.gmra.mxu0 %v2083
  %v2094 = vpop.f32.mrf.mxu0
  %v2095 = vadd.f32 %v2056, %v2094
  %v2096 = vpop.f32.mrf.mxu0
  %v2097 = vadd.f32 %v2056, %v2096
  %2098 = vdwg.mxu0
  %v2099 = vadd.f32 %v1323, %v2095
  %v2100 = vadd.f32 %v1324, %v2097
  %v2101 = vsel %vm349, %v2099, 0.0
  %2102 = vadd.xlane.f32.xlu0 %v2101
  %v2103 = vpop.xlane.xlu0 %2102
  %v2104 = vsel %vm349, %v2100, 0.0
  %2105 = vadd.xlane.f32.xlu0 %v2104
  %v2106 = vpop.xlane.xlu0 %2105
  %v2107 = vmul.f32 %v2103, %v1041
  %v2108 = vmul.f32 %v2106, %v1041
  %v2109 = vsub.f32 %v2099, %v2107
  %v2110 = vsub.f32 %v2100, %v2108
  %v2111 = vmul.f32 %v2109, %v2109
  %v2112 = vmul.f32 %v2110, %v2110
  %v2113 = vsel %vm349, %v2111, 0.0
  %2114 = vadd.xlane.f32.xlu0 %v2113
  %v2115 = vpop.xlane.xlu0 %2114
  %v2116 = vsel %vm349, %v2112, 0.0
  %2117 = vadd.xlane.f32.xlu0 %v2116
  %v2118 = vpop.xlane.xlu0 %2117
  %v2119 = vmul.f32 %v2115, %v1041
  %v2120 = vmul.f32 %v2118, %v1041
  %v2121 = vadd.f32 %v2119, 1e-05
  %v2122 = vadd.f32 %v2120, 1e-05
  %v2123 = vrsqrt.pop %v2121
  %v2124 = vmul.f32 %v2123, %v2121
  %v2125 = vmul.f32 %v2124, %v2123
  %v2126 = vmul.f32 0.5, %v2125
  %v2127 = vsub.f32 1.5, %v2126
  %v2128 = vmul.f32 %v2123, %v2127
  %vm2129 = vweird.f32 %v2121
  %vm2130 = vweird.f32 %v2123
  %vm2131 = vmor %vm2129, %vm2130
  %v2132 = vsel %vm2131, %v2123, %v2128
  %v2133 = vrsqrt.pop %v2122
  %v2134 = vmul.f32 %v2133, %v2122
  %v2135 = vmul.f32 %v2134, %v2133
  %v2136 = vmul.f32 0.5, %v2135
  %v2137 = vsub.f32 1.5, %v2136
  %v2138 = vmul.f32 %v2133, %v2137
  %vm2139 = vweird.f32 %v2122
  %vm2140 = vweird.f32 %v2133
  %vm2141 = vmor %vm2139, %vm2140
  %v2142 = vsel %vm2141, %v2133, %v2138
  %v2143 = vmul.f32 %v2109, %v2132
  %v2144 = vmul.f32 %v2110, %v2142
  %v2146 = vperm.slane %v1346, 0
  %v2148 = vmul.f32 %v2143, %v2146
  %v2149 = vmul.f32 %v2144, %v2146
  %v2151 = vperm.slane %v1348, 0
  %v2153 = vadd.f32 %v2148, %v2151
  %v2154 = vadd.f32 %v2149, %v2151
  %v2155 = vpack.c.bf16 %v2154, %v2153
  %v2157 = vperm.slane %v1357, 0
  %v2158 = vperm.slane %v1357, 1
  %v2167 = vunpack.c.l.b16 %v1350
  %v2168 = vunpack.c.h.b16 %v1350
  %v2169 = vunpack.c.l.b16 %v1351
  %v2170 = vunpack.c.h.b16 %v1351
  %v2171 = vunpack.c.l.b16 %v1352
  %v2172 = vunpack.c.h.b16 %v1352
  %v2173 = vunpack.c.l.b16 %v1353
  %v2174 = vunpack.c.h.b16 %v1353
  %v2175 = vunpack.c.l.b16 %v1354
  %v2176 = vunpack.c.h.b16 %v1354
  %v2177 = vunpack.c.l.b16 %v1355
  %v2178 = vunpack.c.h.b16 %v1355
  %v2179 = vpack.c.b16 %v2169, %v2167
  %v2180 = vpack.c.b16 %v2170, %v2168
  %v2181 = vpack.c.b16 %v2173, %v2171
  %v2182 = vpack.c.b16 %v2174, %v2172
  %v2183 = vpack.c.b16 %v2177, %v2175
  %v2184 = vpack.c.b16 %v2178, %v2176
  %v2192 = vsel %vm349, %v2155, 0
  %2194 = vmatpush.bf16.msra.mxu0 0
  %2195 = vmatpush.bf16.msra.mxu0 0
  %2196 = vmatpush.bf16.msra.mxu0 0
  %2197 = vmatpush.bf16.msra.mxu0 0
  %2198 = vmatpush.bf16.msra.mxu0 0
  %2199 = vmatpush.bf16.msra.mxu0 %v2183
  %2200 = vmatpush.bf16.msra.mxu0 %v2181
  %2201 = vmatpush.bf16.msra.mxu0 %v2179
  %2202 = vmatmul.bf16.gmra.mxu0 %v2192
  %v2203 = vpop.f32.mrf.mxu0
  %v2204 = vadd.f32 %v2157, %v2203
  %v2205 = vpop.f32.mrf.mxu0
  %v2206 = vadd.f32 %v2157, %v2205
  %2207 = vdwg.mxu0
  %2208 = vmatpush.bf16.msra.mxu0 0
  %2209 = vmatpush.bf16.msra.mxu0 0
  %2210 = vmatpush.bf16.msra.mxu0 0
  %2211 = vmatpush.bf16.msra.mxu0 0
  %2212 = vmatpush.bf16.msra.mxu0 0
  %2213 = vmatpush.bf16.msra.mxu0 %v2184
  %2214 = vmatpush.bf16.msra.mxu0 %v2182
  %2215 = vmatpush.bf16.msra.mxu0 %v2180
  %2216 = vmatmul.bf16.gmra.mxu0 %v2192
  %v2217 = vpop.f32.mrf.mxu0
  %v2218 = vadd.f32 %v2158, %v2217
  %v2219 = vpop.f32.mrf.mxu0
  %v2220 = vadd.f32 %v2158, %v2219
  %2221 = vdwg.mxu0
  %v2222 = vmax.f32 %v2204, 0.0
  %v2223 = vmax.f32 %v2218, 0.0
  %v2224 = vmax.f32 %v2206, 0.0
  %v2225 = vmax.f32 %v2220, 0.0
  %v2226 = vpack.c.bf16 %v2224, %v2222
  %v2227 = vpack.c.bf16 %v2225, %v2223
  %v2229 = vperm.slane %v1384, 0
  %v2255 = vunpack.c.l.b16 %v1359
  %v2256 = vunpack.c.l.b16 %v1360
  %v2257 = vunpack.c.l.b16 %v1361
  %v2258 = vunpack.c.l.b16 %v1362
  %v2259 = vunpack.c.l.b16 %v1363
  %v2260 = vunpack.c.l.b16 %v1364
  %v2261 = vunpack.c.l.b16 %v1365
  %v2262 = vunpack.c.l.b16 %v1366
  %v2263 = vunpack.c.l.b16 %v1367
  %v2264 = vunpack.c.l.b16 %v1368
  %v2265 = vunpack.c.l.b16 %v1369
  %v2266 = vunpack.c.l.b16 %v1370
  %v2267 = vunpack.c.l.b16 %v1371
  %v2268 = vunpack.c.l.b16 %v1372
  %v2269 = vunpack.c.l.b16 %v1373
  %v2270 = vunpack.c.l.b16 %v1374
  %v2271 = vunpack.c.l.b16 %v1375
  %v2272 = vunpack.c.l.b16 %v1376
  %v2273 = vunpack.c.l.b16 %v1377
  %v2274 = vunpack.c.l.b16 %v1378
  %v2275 = vunpack.c.l.b16 %v1379
  %v2276 = vunpack.c.l.b16 %v1380
  %v2277 = vunpack.c.l.b16 %v1381
  %v2278 = vunpack.c.l.b16 %v1382
  %v2279 = vpack.c.b16 %v2256, %v2255
  %v2280 = vpack.c.b16 %v2258, %v2257
  %v2281 = vpack.c.b16 %v2260, %v2259
  %v2282 = vpack.c.b16 %v2262, %v2261
  %v2283 = vpack.c.b16 %v2264, %v2263
  %v2284 = vpack.c.b16 %v2266, %v2265
  %v2285 = vpack.c.b16 %v2268, %v2267
  %v2286 = vpack.c.b16 %v2270, %v2269
  %v2287 = vpack.c.b16 %v2272, %v2271
  %v2288 = vpack.c.b16 %v2274, %v2273
  %v2289 = vpack.c.b16 %v2276, %v2275
  %v2290 = vpack.c.b16 %v2278, %v2277
  %v2304 = vsel %vm225, %v2227, 0
  %2306 = vmatpush.bf16.msra.mxu0 %v2286
  %2307 = vmatpush.bf16.msra.mxu0 %v2285
  %2308 = vmatpush.bf16.msra.mxu0 %v2284
  %2309 = vmatpush.bf16.msra.mxu0 %v2283
  %2310 = vmatpush.bf16.msra.mxu0 %v2282
  %2311 = vmatpush.bf16.msra.mxu0 %v2281
  %2312 = vmatpush.bf16.msra.mxu0 %v2280
  %2313 = vmatpush.bf16.msra.mxu0 %v2279
  %2314 = vmatmul.bf16.gmra.mxu0 %v2226
  %v2315 = vpop.f32.mrf.mxu0
  %v2316 = vadd.f32 %v2229, %v2315
  %v2317 = vpop.f32.mrf.mxu0
  %v2318 = vadd.f32 %v2229, %v2317
  %2319 = vdwg.mxu0
  %2320 = vmatpush.bf16.msra.mxu0 0
  %2321 = vmatpush.bf16.msra.mxu0 0
  %2322 = vmatpush.bf16.msra.mxu0 0
  %2323 = vmatpush.bf16.msra.mxu0 0
  %2324 = vmatpush.bf16.msra.mxu0 %v2290
  %2325 = vmatpush.bf16.msra.mxu0 %v2289
  %2326 = vmatpush.bf16.msra.mxu0 %v2288
  %2327 = vmatpush.bf16.msra.mxu0 %v2287
  %2328 = vmatmul.bf16.gmra.mxu0 %v2304
  %v2329 = vpop.f32.mrf.mxu0
  %v2330 = vadd.f32 %v2316, %v2329
  %v2331 = vpop.f32.mrf.mxu0
  %v2332 = vadd.f32 %v2318, %v2331
  %2333 = vdwg.mxu0
  %v2334 = vadd.f32 %v2153, %v2330
  %v2335 = vadd.f32 %v2154, %v2332
  %v2336 = vsel %vm349, %v2334, 0.0
  %2337 = vadd.xlane.f32.xlu0 %v2336
  %v2338 = vpop.xlane.xlu0 %2337
  %v2339 = vsel %vm349, %v2335, 0.0
  %2340 = vadd.xlane.f32.xlu0 %v2339
  %v2341 = vpop.xlane.xlu0 %2340
  %v2342 = vmul.f32 %v2338, %v1041
  %v2343 = vmul.f32 %v2341, %v1041
  %v2344 = vsub.f32 %v2334, %v2342
  %v2345 = vsub.f32 %v2335, %v2343
  %v2346 = vmul.f32 %v2344, %v2344
  %v2347 = vmul.f32 %v2345, %v2345
  %v2348 = vsel %vm349, %v2346, 0.0
  %2349 = vadd.xlane.f32.xlu0 %v2348
  %v2350 = vpop.xlane.xlu0 %2349
  %v2351 = vsel %vm349, %v2347, 0.0
  %2352 = vadd.xlane.f32.xlu0 %v2351
  %v2353 = vpop.xlane.xlu0 %2352
  %v2354 = vmul.f32 %v2350, %v1041
  %v2355 = vmul.f32 %v2353, %v1041
  %v2356 = vadd.f32 %v2354, 1e-05
  %v2357 = vadd.f32 %v2355, 1e-05
  %v2358 = vrsqrt.pop %v2356
  %v2359 = vmul.f32 %v2358, %v2356
  %v2360 = vmul.f32 %v2359, %v2358
  %v2361 = vmul.f32 0.5, %v2360
  %v2362 = vsub.f32 1.5, %v2361
  %v2363 = vmul.f32 %v2358, %v2362
  %vm2364 = vweird.f32 %v2356
  %vm2365 = vweird.f32 %v2358
  %vm2366 = vmor %vm2364, %vm2365
  %v2367 = vsel %vm2366, %v2358, %v2363
  %v2368 = vrsqrt.pop %v2357
  %v2369 = vmul.f32 %v2368, %v2357
  %v2370 = vmul.f32 %v2369, %v2368
  %v2371 = vmul.f32 0.5, %v2370
  %v2372 = vsub.f32 1.5, %v2371
  %v2373 = vmul.f32 %v2368, %v2372
  %vm2374 = vweird.f32 %v2357
  %vm2375 = vweird.f32 %v2368
  %vm2376 = vmor %vm2374, %vm2375
  %v2377 = vsel %vm2376, %v2368, %v2373
  %v2378 = vmul.f32 %v2344, %v2367
  %v2379 = vmul.f32 %v2345, %v2377
  %v2381 = vperm.slane %v1386, 0
  %v2383 = vmul.f32 %v2378, %v2381
  %v2384 = vmul.f32 %v2379, %v2381
  %v2386 = vperm.slane %v1388, 0
  %v2388 = vadd.f32 %v2383, %v2386
  %v2389 = vadd.f32 %v2384, %v2386
  %s2390 = scalar_lea.vmem %s6, 96
  %v2391 = vld [vmem:[%s2390] sm:$0xff]
  %v2392 = vld [vmem:[%s2390 + $0x8] sm:$0xff]
  %v2393 = vld [vmem:[%s2390 + $0x10] sm:$0xff]
  %v2394 = vld [vmem:[%s2390 + $0x18] sm:$0xff]
  %v2395 = vld [vmem:[%s2390 + $0x20] sm:$0xff]
  %v2396 = vld [vmem:[%s2390 + $0x28] sm:$0xff]
  %s2397 = scalar_lea.vmem %s7, 4
  %v2398 = vld [vmem:[%s2397] sm:$0x3]
  %s2399 = scalar_lea.vmem %s8, 64
  %v2400 = vld [vmem:[%s2399] sm:$0xf]
  %v2401 = vld [vmem:[%s2399 + $0x4] sm:$0xf]
  %v2402 = vld [vmem:[%s2399 + $0x8] sm:$0xf]
  %v2403 = vld [vmem:[%s2399 + $0xc] sm:$0xf]
  %v2404 = vld [vmem:[%s2399 + $0x10] sm:$0xf]
  %v2405 = vld [vmem:[%s2399 + $0x14] sm:$0xf]
  %v2406 = vld [vmem:[%s2399 + $0x18] sm:$0xf]
  %v2407 = vld [vmem:[%s2399 + $0x1c] sm:$0xf]
  %s2408 = scalar_lea.vmem %s9, 2
  %v2409 = vld [vmem:[%s2408] sm:$0x1]
  %s2410 = scalar_lea.vmem %s10, 2
  %v2411 = vld [vmem:[%s2410] sm:$0x1]
  %s2412 = scalar_lea.vmem %s11, 2
  %v2413 = vld [vmem:[%s2412] sm:$0x1]
  %s2414 = scalar_lea.vmem %s12, 96
  %v2415 = vld [vmem:[%s2414] sm:$0xff]
  %v2416 = vld [vmem:[%s2414 + $0x8] sm:$0xff]
  %v2417 = vld [vmem:[%s2414 + $0x10] sm:$0xff]
  %v2418 = vld [vmem:[%s2414 + $0x18] sm:$0xff]
  %v2419 = vld [vmem:[%s2414 + $0x20] sm:$0xff]
  %v2420 = vld [vmem:[%s2414 + $0x28] sm:$0xff]
  %s2421 = scalar_lea.vmem %s13, 4
  %v2422 = vld [vmem:[%s2421] sm:$0x3]
  %s2423 = scalar_lea.vmem %s14, 192
  %v2424 = vld [vmem:[%s2423] sm:$0xf]
  %v2425 = vld [vmem:[%s2423 + $0x4] sm:$0xf]
  %v2426 = vld [vmem:[%s2423 + $0x8] sm:$0xf]
  %v2427 = vld [vmem:[%s2423 + $0xc] sm:$0xf]
  %v2428 = vld [vmem:[%s2423 + $0x10] sm:$0xf]
  %v2429 = vld [vmem:[%s2423 + $0x14] sm:$0xf]
  %v2430 = vld [vmem:[%s2423 + $0x18] sm:$0xf]
  %v2431 = vld [vmem:[%s2423 + $0x1c] sm:$0xf]
  %v2432 = vld [vmem:[%s2423 + $0x20] sm:$0xf]
  %v2433 = vld [vmem:[%s2423 + $0x24] sm:$0xf]
  %v2434 = vld [vmem:[%s2423 + $0x28] sm:$0xf]
  %v2435 = vld [vmem:[%s2423 + $0x2c] sm:$0xf]
  %v2436 = vld [vmem:[%s2423 + $0x30] sm:$0xf]
  %v2437 = vld [vmem:[%s2423 + $0x34] sm:$0xf]
  %v2438 = vld [vmem:[%s2423 + $0x38] sm:$0xf]
  %v2439 = vld [vmem:[%s2423 + $0x3c] sm:$0xf]
  %v2440 = vld [vmem:[%s2423 + $0x40] sm:$0xf]
  %v2441 = vld [vmem:[%s2423 + $0x44] sm:$0xf]
  %v2442 = vld [vmem:[%s2423 + $0x48] sm:$0xf]
  %v2443 = vld [vmem:[%s2423 + $0x4c] sm:$0xf]
  %v2444 = vld [vmem:[%s2423 + $0x50] sm:$0xf]
  %v2445 = vld [vmem:[%s2423 + $0x54] sm:$0xf]
  %v2446 = vld [vmem:[%s2423 + $0x58] sm:$0xf]
  %v2447 = vld [vmem:[%s2423 + $0x5c] sm:$0xf]
  %s2448 = scalar_lea.vmem %s15, 2
  %v2449 = vld [vmem:[%s2448] sm:$0x1]
  %s2450 = scalar_lea.vmem %s16, 2
  %v2451 = vld [vmem:[%s2450] sm:$0x1]
  %s2452 = scalar_lea.vmem %s17, 2
  %v2453 = vld [vmem:[%s2452] sm:$0x1]
  %v2454 = vpack.c.bf16 %v2389, %v2388
  %v2456 = vperm.slane %v2398, 0
  %v2457 = vperm.slane %v2398, 1
  %v2466 = vunpack.c.l.b16 %v2391
  %v2467 = vunpack.c.h.b16 %v2391
  %v2468 = vunpack.c.l.b16 %v2392
  %v2469 = vunpack.c.h.b16 %v2392
  %v2470 = vunpack.c.l.b16 %v2393
  %v2471 = vunpack.c.h.b16 %v2393
  %v2472 = vunpack.c.l.b16 %v2394
  %v2473 = vunpack.c.h.b16 %v2394
  %v2474 = vunpack.c.l.b16 %v2395
  %v2475 = vunpack.c.h.b16 %v2395
  %v2476 = vunpack.c.l.b16 %v2396
  %v2477 = vunpack.c.h.b16 %v2396
  %v2478 = vpack.c.b16 %v2468, %v2466
  %v2479 = vpack.c.b16 %v2469, %v2467
  %v2480 = vpack.c.b16 %v2472, %v2470
  %v2481 = vpack.c.b16 %v2473, %v2471
  %v2482 = vpack.c.b16 %v2476, %v2474
  %v2483 = vpack.c.b16 %v2477, %v2475
  %v2491 = vsel %vm349, %v2454, 0
  %2493 = vmatpush.bf16.msra.mxu0 0
  %2494 = vmatpush.bf16.msra.mxu0 0
  %2495 = vmatpush.bf16.msra.mxu0 0
  %2496 = vmatpush.bf16.msra.mxu0 0
  %2497 = vmatpush.bf16.msra.mxu0 0
  %2498 = vmatpush.bf16.msra.mxu0 %v2482
  %2499 = vmatpush.bf16.msra.mxu0 %v2480
  %2500 = vmatpush.bf16.msra.mxu0 %v2478
  %2501 = vmatmul.bf16.gmra.mxu0 %v2491
  %v2502 = vpop.f32.mrf.mxu0
  %v2503 = vadd.f32 %v2456, %v2502
  %v2504 = vpop.f32.mrf.mxu0
  %v2505 = vadd.f32 %v2456, %v2504
  %2506 = vdwg.mxu0
  %2507 = vmatpush.bf16.msra.mxu0 0
  %2508 = vmatpush.bf16.msra.mxu0 0
  %2509 = vmatpush.bf16.msra.mxu0 0
  %2510 = vmatpush.bf16.msra.mxu0 0
  %2511 = vmatpush.bf16.msra.mxu0 0
  %2512 = vmatpush.bf16.msra.mxu0 %v2483
  %2513 = vmatpush.bf16.msra.mxu0 %v2481
  %2514 = vmatpush.bf16.msra.mxu0 %v2479
  %2515 = vmatmul.bf16.gmra.mxu0 %v2491
  %v2516 = vpop.f32.mrf.mxu0
  %v2517 = vadd.f32 %v2457, %v2516
  %v2518 = vpop.f32.mrf.mxu0
  %v2519 = vadd.f32 %v2457, %v2518
  %2520 = vdwg.mxu0
  %v2521 = vpack.c.bf16 %v2503, %v2503
  %v2522 = vpack.c.bf16 %v2505, %v2505
  %v2524 = vunpack.c.l.b16 %v2521
  %v2525 = vpack.c.b16 %v2524, %v2524
  %2526 = vrot.lane.b32.xlu0 %v2525, 64
  %v2527 = vpop.permute.xlu0 %2526
  %v2529 = vsel %vm87, %v2521, 0
  %v2532 = vsel %vm87, %v2527, 0
  %2534 = vmatpush.bf16.xpose.msra.mxu0 0
  %2535 = vmatpush.bf16.xpose.msra.mxu0 0
  %2536 = vmatpush.bf16.xpose.msra.mxu0 0
  %2537 = vmatpush.bf16.xpose.msra.mxu0 0
  %2538 = vmatpush.bf16.xpose.msra.mxu0 0
  %2539 = vmatpush.bf16.xpose.msra.mxu0 0
  %2540 = vmatpush.bf16.xpose.msra.mxu0 0
  %2541 = vmatpush.bf16.xpose.msra.mxu0 %v2532
  %2542 = vmatmul.bf16.gmra.mxu0 %v2529
  %v2543 = vpop.f32.mrf.mxu0
  %v2544 = vadd.f32 0.0, %v2543
  %v2545 = vpop.f32.mrf.mxu0
  %2546 = vdwg.mxu0
  %v2548 = vunpack.c.l.b16 %v2522
  %v2549 = vpack.c.b16 %v2548, %v2548
  %2550 = vrot.lane.b32.xlu0 %v2549, 64
  %v2551 = vpop.permute.xlu0 %2550
  %v2553 = vsel %vm87, %v2522, 0
  %v2556 = vsel %vm87, %v2551, 0
  %2558 = vmatpush.bf16.xpose.msra.mxu0 0
  %2559 = vmatpush.bf16.xpose.msra.mxu0 0
  %2560 = vmatpush.bf16.xpose.msra.mxu0 0
  %2561 = vmatpush.bf16.xpose.msra.mxu0 0
  %2562 = vmatpush.bf16.xpose.msra.mxu0 0
  %2563 = vmatpush.bf16.xpose.msra.mxu0 0
  %2564 = vmatpush.bf16.xpose.msra.mxu0 0
  %2565 = vmatpush.bf16.xpose.msra.mxu0 %v2556
  %2566 = vmatmul.bf16.gmra.mxu0 %v2553
  %v2567 = vpop.f32.mrf.mxu0
  %v2568 = vadd.f32 0.0, %v2567
  %v2569 = vpop.f32.mrf.mxu0
  %2570 = vdwg.mxu0
  %v2571 = vmul.f32 %v2544, 0.28867513
  %v2572 = vmul.f32 %v2568, 0.28867513
  %v2573 = vsel %vm433, %v2571, -inf
  %2574 = vmax.xlane.f32.xlu0 %v2573
  %v2575 = vpop.xlane.xlu0 %2574
  %v2576 = vsel %vm433, %v2572, -inf
  %2577 = vmax.xlane.f32.xlu0 %v2576
  %v2578 = vpop.xlane.xlu0 %2577
  %v2579 = vsub.f32 %v2571, %v2575
  %v2580 = vsub.f32 %v2572, %v2578
  %v2581 = vmul.f32 %v2579, 1.442695
  %v2582 = vpow.pop %v2581
  %v2583 = vmul.f32 %v2580, 1.442695
  %v2584 = vpow.pop %v2583
  %v2585 = vsel %vm433, %v2582, 0.0
  %2586 = vadd.xlane.f32.xlu0 %v2585
  %v2587 = vpop.xlane.xlu0 %2586
  %v2588 = vsel %vm433, %v2584, 0.0
  %2589 = vadd.xlane.f32.xlu0 %v2588
  %v2590 = vpop.xlane.xlu0 %2589
  %v2591 = vrcp.pop %v2587
  %v2592 = vmul.f32 %v2587, %v2591
  %v2593 = vsub.f32 1.0, %v2592
  %v2594 = vmul.f32 %v2591, %v2593
  %v2595 = vadd.f32 %v2591, %v2594
  %vm2596 = vweird.f32 %v2587
  %vm2597 = vweird.f32 %v2591
  %vm2598 = vmor %vm2596, %vm2597
  %v2599 = vsel %vm2598, %v2591, %v2595
  %v2600 = vand.u32 2147483647, %v2587
  %vm2601 = vcmp.eq.f32.partialorder %v2600, 8.507059e+37
  %v2602 = vand.u32 %v2587, 2147483648
  %v2603 = vor.u32 1.1754944e-38, %v2602
  %v2604 = vsel %vm2601, %v2603, %v2599
  %v2605 = vmul.f32 %v2582, %v2604
  %v2606 = vrcp.pop %v2590
  %v2607 = vmul.f32 %v2590, %v2606
  %v2608 = vsub.f32 1.0, %v2607
  %v2609 = vmul.f32 %v2606, %v2608
  %v2610 = vadd.f32 %v2606, %v2609
  %vm2611 = vweird.f32 %v2590
  %vm2612 = vweird.f32 %v2606
  %vm2613 = vmor %vm2611, %vm2612
  %v2614 = vsel %vm2613, %v2606, %v2610
  %v2615 = vand.u32 2147483647, %v2590
  %vm2616 = vcmp.eq.f32.partialorder %v2615, 8.507059e+37
  %v2617 = vand.u32 %v2590, 2147483648
  %v2618 = vor.u32 1.1754944e-38, %v2617
  %v2619 = vsel %vm2616, %v2618, %v2614
  %v2620 = vmul.f32 %v2584, %v2619
  %v2621 = vpack.c.bf16 %v2605, %v2605
  %v2622 = vpack.c.bf16 %v2620, %v2620
  %v2623 = vpack.c.bf16 %v2517, %v2517
  %v2624 = vpack.c.bf16 %v2519, %v2519
  %v2626 = vsel %vm433, %v2621, 0
  %v2629 = vsel %vm489, %v2623, 0
  %2631 = vmatpush.bf16.msra.mxu0 0
  %2632 = vmatpush.bf16.msra.mxu0 0
  %2633 = vmatpush.bf16.msra.mxu0 0
  %2634 = vmatpush.bf16.msra.mxu0 0
  %2635 = vmatpush.bf16.msra.mxu0 0
  %2636 = vmatpush.bf16.msra.mxu0 0
  %2637 = vmatpush.bf16.msra.mxu0 0
  %2638 = vmatpush.bf16.msra.mxu0 %v2629
  %2639 = vmatmul.bf16.gmra.mxu0 %v2626
  %v2640 = vpop.f32.mrf.mxu0
  %v2641 = vadd.f32 0.0, %v2640
  %v2642 = vpop.f32.mrf.mxu0
  %2643 = vdwg.mxu0
  %v2645 = vsel %vm433, %v2622, 0
  %v2648 = vsel %vm489, %v2624, 0
  %2650 = vmatpush.bf16.msra.mxu0 0
  %2651 = vmatpush.bf16.msra.mxu0 0
  %2652 = vmatpush.bf16.msra.mxu0 0
  %2653 = vmatpush.bf16.msra.mxu0 0
  %2654 = vmatpush.bf16.msra.mxu0 0
  %2655 = vmatpush.bf16.msra.mxu0 0
  %2656 = vmatpush.bf16.msra.mxu0 0
  %2657 = vmatpush.bf16.msra.mxu0 %v2648
  %2658 = vmatmul.bf16.gmra.mxu0 %v2645
  %v2659 = vpop.f32.mrf.mxu0
  %v2660 = vadd.f32 0.0, %v2659
  %v2661 = vpop.f32.mrf.mxu0
  %2662 = vdwg.mxu0
  %2663 = vrot.lane.b32.xlu0 %v2525, 112
  %v2664 = vpop.permute.xlu0 %2663
  %2665 = vrot.lane.b32.xlu0 %v2525, 48
  %v2666 = vpop.permute.xlu0 %2665
  %v2668 = vsel %vm87, %v2664, 0
  %v2671 = vsel %vm87, %v2666, 0
  %2673 = vmatpush.bf16.xpose.msra.mxu0 0
  %2674 = vmatpush.bf16.xpose.msra.mxu0 0
  %2675 = vmatpush.bf16.xpose.msra.mxu0 0
  %2676 = vmatpush.bf16.xpose.msra.mxu0 0
  %2677 = vmatpush.bf16.xpose.msra.mxu0 0
  %2678 = vmatpush.bf16.xpose.msra.mxu0 0
  %2679 = vmatpush.bf16.xpose.msra.mxu0 0
  %2680 = vmatpush.bf16.xpose.msra.mxu0 %v2671
  %2681 = vmatmul.bf16.gmra.mxu0 %v2668
  %v2682 = vpop.f32.mrf.mxu0
  %v2683 = vadd.f32 0.0, %v2682
  %v2684 = vpop.f32.mrf.mxu0
  %2685 = vdwg.mxu0
  %2686 = vrot.lane.b32.xlu0 %v2549, 112
  %v2687 = vpop.permute.xlu0 %2686
  %2688 = vrot.lane.b32.xlu0 %v2549, 48
  %v2689 = vpop.permute.xlu0 %2688
  %v2691 = vsel %vm87, %v2687, 0
  %v2694 = vsel %vm87, %v2689, 0
  %2696 = vmatpush.bf16.xpose.msra.mxu0 0
  %2697 = vmatpush.bf16.xpose.msra.mxu0 0
  %2698 = vmatpush.bf16.xpose.msra.mxu0 0
  %2699 = vmatpush.bf16.xpose.msra.mxu0 0
  %2700 = vmatpush.bf16.xpose.msra.mxu0 0
  %2701 = vmatpush.bf16.xpose.msra.mxu0 0
  %2702 = vmatpush.bf16.xpose.msra.mxu0 0
  %2703 = vmatpush.bf16.xpose.msra.mxu0 %v2694
  %2704 = vmatmul.bf16.gmra.mxu0 %v2691
  %v2705 = vpop.f32.mrf.mxu0
  %v2706 = vadd.f32 0.0, %v2705
  %v2707 = vpop.f32.mrf.mxu0
  %2708 = vdwg.mxu0
  %v2709 = vmul.f32 %v2683, 0.28867513
  %v2710 = vmul.f32 %v2706, 0.28867513
  %v2711 = vsel %vm433, %v2709, -inf
  %2712 = vmax.xlane.f32.xlu0 %v2711
  %v2713 = vpop.xlane.xlu0 %2712
  %v2714 = vsel %vm433, %v2710, -inf
  %2715 = vmax.xlane.f32.xlu0 %v2714
  %v2716 = vpop.xlane.xlu0 %2715
  %v2717 = vsub.f32 %v2709, %v2713
  %v2718 = vsub.f32 %v2710, %v2716
  %v2719 = vmul.f32 %v2717, 1.442695
  %v2720 = vpow.pop %v2719
  %v2721 = vmul.f32 %v2718, 1.442695
  %v2722 = vpow.pop %v2721
  %v2723 = vsel %vm433, %v2720, 0.0
  %2724 = vadd.xlane.f32.xlu0 %v2723
  %v2725 = vpop.xlane.xlu0 %2724
  %v2726 = vsel %vm433, %v2722, 0.0
  %2727 = vadd.xlane.f32.xlu0 %v2726
  %v2728 = vpop.xlane.xlu0 %2727
  %v2729 = vrcp.pop %v2725
  %v2730 = vmul.f32 %v2725, %v2729
  %v2731 = vsub.f32 1.0, %v2730
  %v2732 = vmul.f32 %v2729, %v2731
  %v2733 = vadd.f32 %v2729, %v2732
  %vm2734 = vweird.f32 %v2725
  %vm2735 = vweird.f32 %v2729
  %vm2736 = vmor %vm2734, %vm2735
  %v2737 = vsel %vm2736, %v2729, %v2733
  %v2738 = vand.u32 2147483647, %v2725
  %vm2739 = vcmp.eq.f32.partialorder %v2738, 8.507059e+37
  %v2740 = vand.u32 %v2725, 2147483648
  %v2741 = vor.u32 1.1754944e-38, %v2740
  %v2742 = vsel %vm2739, %v2741, %v2737
  %v2743 = vmul.f32 %v2720, %v2742
  %v2744 = vrcp.pop %v2728
  %v2745 = vmul.f32 %v2728, %v2744
  %v2746 = vsub.f32 1.0, %v2745
  %v2747 = vmul.f32 %v2744, %v2746
  %v2748 = vadd.f32 %v2744, %v2747
  %vm2749 = vweird.f32 %v2728
  %vm2750 = vweird.f32 %v2744
  %vm2751 = vmor %vm2749, %vm2750
  %v2752 = vsel %vm2751, %v2744, %v2748
  %v2753 = vand.u32 2147483647, %v2728
  %vm2754 = vcmp.eq.f32.partialorder %v2753, 8.507059e+37
  %v2755 = vand.u32 %v2728, 2147483648
  %v2756 = vor.u32 1.1754944e-38, %v2755
  %v2757 = vsel %vm2754, %v2756, %v2752
  %v2758 = vmul.f32 %v2722, %v2757
  %v2759 = vpack.c.bf16 %v2743, %v2743
  %v2760 = vpack.c.bf16 %v2758, %v2758
  %v2762 = vunpack.c.l.b16 %v2623
  %v2763 = vpack.c.b16 %v2762, %v2762
  %2764 = vrot.lane.b32.xlu0 %v2763, 112
  %v2765 = vpop.permute.xlu0 %2764
  %v2767 = vsel %vm433, %v2759, 0
  %v2770 = vsel %vm489, %v2765, 0
  %2772 = vmatpush.bf16.msra.mxu0 0
  %2773 = vmatpush.bf16.msra.mxu0 0
  %2774 = vmatpush.bf16.msra.mxu0 0
  %2775 = vmatpush.bf16.msra.mxu0 0
  %2776 = vmatpush.bf16.msra.mxu0 0
  %2777 = vmatpush.bf16.msra.mxu0 0
  %2778 = vmatpush.bf16.msra.mxu0 0
  %2779 = vmatpush.bf16.msra.mxu0 %v2770
  %2780 = vmatmul.bf16.gmra.mxu0 %v2767
  %v2781 = vpop.f32.mrf.mxu0
  %v2782 = vadd.f32 0.0, %v2781
  %v2783 = vpop.f32.mrf.mxu0
  %2784 = vdwg.mxu0
  %v2786 = vunpack.c.l.b16 %v2624
  %v2787 = vpack.c.b16 %v2786, %v2786
  %2788 = vrot.lane.b32.xlu0 %v2787, 112
  %v2789 = vpop.permute.xlu0 %2788
  %v2791 = vsel %vm433, %v2760, 0
  %v2794 = vsel %vm489, %v2789, 0
  %2796 = vmatpush.bf16.msra.mxu0 0
  %2797 = vmatpush.bf16.msra.mxu0 0
  %2798 = vmatpush.bf16.msra.mxu0 0
  %2799 = vmatpush.bf16.msra.mxu0 0
  %2800 = vmatpush.bf16.msra.mxu0 0
  %2801 = vmatpush.bf16.msra.mxu0 0
  %2802 = vmatpush.bf16.msra.mxu0 0
  %2803 = vmatpush.bf16.msra.mxu0 %v2794
  %2804 = vmatmul.bf16.gmra.mxu0 %v2791
  %v2805 = vpop.f32.mrf.mxu0
  %v2806 = vadd.f32 0.0, %v2805
  %v2807 = vpop.f32.mrf.mxu0
  %2808 = vdwg.mxu0
  %2809 = vrot.lane.b32.xlu0 %v2525, 96
  %v2810 = vpop.permute.xlu0 %2809
  %2811 = vrot.lane.b32.xlu0 %v2525, 32
  %v2812 = vpop.permute.xlu0 %2811
  %v2814 = vsel %vm87, %v2810, 0
  %v2817 = vsel %vm87, %v2812, 0
  %2819 = vmatpush.bf16.xpose.msra.mxu0 0
  %2820 = vmatpush.bf16.xpose.msra.mxu0 0
  %2821 = vmatpush.bf16.xpose.msra.mxu0 0
  %2822 = vmatpush.bf16.xpose.msra.mxu0 0
  %2823 = vmatpush.bf16.xpose.msra.mxu0 0
  %2824 = vmatpush.bf16.xpose.msra.mxu0 0
  %2825 = vmatpush.bf16.xpose.msra.mxu0 0
  %2826 = vmatpush.bf16.xpose.msra.mxu0 %v2817
  %2827 = vmatmul.bf16.gmra.mxu0 %v2814
  %v2828 = vpop.f32.mrf.mxu0
  %v2829 = vadd.f32 0.0, %v2828
  %v2830 = vpop.f32.mrf.mxu0
  %2831 = vdwg.mxu0
  %2832 = vrot.lane.b32.xlu0 %v2549, 96
  %v2833 = vpop.permute.xlu0 %2832
  %2834 = vrot.lane.b32.xlu0 %v2549, 32
  %v2835 = vpop.permute.xlu0 %2834
  %v2837 = vsel %vm87, %v2833, 0
  %v2840 = vsel %vm87, %v2835, 0
  %2842 = vmatpush.bf16.xpose.msra.mxu0 0
  %2843 = vmatpush.bf16.xpose.msra.mxu0 0
  %2844 = vmatpush.bf16.xpose.msra.mxu0 0
  %2845 = vmatpush.bf16.xpose.msra.mxu0 0
  %2846 = vmatpush.bf16.xpose.msra.mxu0 0
  %2847 = vmatpush.bf16.xpose.msra.mxu0 0
  %2848 = vmatpush.bf16.xpose.msra.mxu0 0
  %2849 = vmatpush.bf16.xpose.msra.mxu0 %v2840
  %2850 = vmatmul.bf16.gmra.mxu0 %v2837
  %v2851 = vpop.f32.mrf.mxu0
  %v2852 = vadd.f32 0.0, %v2851
  %v2853 = vpop.f32.mrf.mxu0
  %2854 = vdwg.mxu0
  %v2855 = vmul.f32 %v2829, 0.28867513
  %v2856 = vmul.f32 %v2852, 0.28867513
  %v2857 = vsel %vm433, %v2855, -inf
  %2858 = vmax.xlane.f32.xlu0 %v2857
  %v2859 = vpop.xlane.xlu0 %2858
  %v2860 = vsel %vm433, %v2856, -inf
  %2861 = vmax.xlane.f32.xlu0 %v2860
  %v2862 = vpop.xlane.xlu0 %2861
  %v2863 = vsub.f32 %v2855, %v2859
  %v2864 = vsub.f32 %v2856, %v2862
  %v2865 = vmul.f32 %v2863, 1.442695
  %v2866 = vpow.pop %v2865
  %v2867 = vmul.f32 %v2864, 1.442695
  %v2868 = vpow.pop %v2867
  %v2869 = vsel %vm433, %v2866, 0.0
  %2870 = vadd.xlane.f32.xlu0 %v2869
  %v2871 = vpop.xlane.xlu0 %2870
  %v2872 = vsel %vm433, %v2868, 0.0
  %2873 = vadd.xlane.f32.xlu0 %v2872
  %v2874 = vpop.xlane.xlu0 %2873
  %v2875 = vrcp.pop %v2871
  %v2876 = vmul.f32 %v2871, %v2875
  %v2877 = vsub.f32 1.0, %v2876
  %v2878 = vmul.f32 %v2875, %v2877
  %v2879 = vadd.f32 %v2875, %v2878
  %vm2880 = vweird.f32 %v2871
  %vm2881 = vweird.f32 %v2875
  %vm2882 = vmor %vm2880, %vm2881
  %v2883 = vsel %vm2882, %v2875, %v2879
  %v2884 = vand.u32 2147483647, %v2871
  %vm2885 = vcmp.eq.f32.partialorder %v2884, 8.507059e+37
  %v2886 = vand.u32 %v2871, 2147483648
  %v2887 = vor.u32 1.1754944e-38, %v2886
  %v2888 = vsel %vm2885, %v2887, %v2883
  %v2889 = vmul.f32 %v2866, %v2888
  %v2890 = vrcp.pop %v2874
  %v2891 = vmul.f32 %v2874, %v2890
  %v2892 = vsub.f32 1.0, %v2891
  %v2893 = vmul.f32 %v2890, %v2892
  %v2894 = vadd.f32 %v2890, %v2893
  %vm2895 = vweird.f32 %v2874
  %vm2896 = vweird.f32 %v2890
  %vm2897 = vmor %vm2895, %vm2896
  %v2898 = vsel %vm2897, %v2890, %v2894
  %v2899 = vand.u32 2147483647, %v2874
  %vm2900 = vcmp.eq.f32.partialorder %v2899, 8.507059e+37
  %v2901 = vand.u32 %v2874, 2147483648
  %v2902 = vor.u32 1.1754944e-38, %v2901
  %v2903 = vsel %vm2900, %v2902, %v2898
  %v2904 = vmul.f32 %v2868, %v2903
  %v2905 = vpack.c.bf16 %v2889, %v2889
  %v2906 = vpack.c.bf16 %v2904, %v2904
  %2907 = vrot.lane.b32.xlu0 %v2763, 96
  %v2908 = vpop.permute.xlu0 %2907
  %v2910 = vsel %vm433, %v2905, 0
  %v2913 = vsel %vm489, %v2908, 0
  %2915 = vmatpush.bf16.msra.mxu0 0
  %2916 = vmatpush.bf16.msra.mxu0 0
  %2917 = vmatpush.bf16.msra.mxu0 0
  %2918 = vmatpush.bf16.msra.mxu0 0
  %2919 = vmatpush.bf16.msra.mxu0 0
  %2920 = vmatpush.bf16.msra.mxu0 0
  %2921 = vmatpush.bf16.msra.mxu0 0
  %2922 = vmatpush.bf16.msra.mxu0 %v2913
  %2923 = vmatmul.bf16.gmra.mxu0 %v2910
  %v2924 = vpop.f32.mrf.mxu0
  %v2925 = vadd.f32 0.0, %v2924
  %v2926 = vpop.f32.mrf.mxu0
  %2927 = vdwg.mxu0
  %2928 = vrot.lane.b32.xlu0 %v2787, 96
  %v2929 = vpop.permute.xlu0 %2928
  %v2931 = vsel %vm433, %v2906, 0
  %v2934 = vsel %vm489, %v2929, 0
  %2936 = vmatpush.bf16.msra.mxu0 0
  %2937 = vmatpush.bf16.msra.mxu0 0
  %2938 = vmatpush.bf16.msra.mxu0 0
  %2939 = vmatpush.bf16.msra.mxu0 0
  %2940 = vmatpush.bf16.msra.mxu0 0
  %2941 = vmatpush.bf16.msra.mxu0 0
  %2942 = vmatpush.bf16.msra.mxu0 0
  %2943 = vmatpush.bf16.msra.mxu0 %v2934
  %2944 = vmatmul.bf16.gmra.mxu0 %v2931
  %v2945 = vpop.f32.mrf.mxu0
  %v2946 = vadd.f32 0.0, %v2945
  %v2947 = vpop.f32.mrf.mxu0
  %2948 = vdwg.mxu0
  %2949 = vrot.lane.b32.xlu0 %v2525, 80
  %v2950 = vpop.permute.xlu0 %2949
  %2951 = vrot.lane.b32.xlu0 %v2525, 16
  %v2952 = vpop.permute.xlu0 %2951
  %v2954 = vsel %vm87, %v2950, 0
  %v2957 = vsel %vm87, %v2952, 0
  %2959 = vmatpush.bf16.xpose.msra.mxu0 0
  %2960 = vmatpush.bf16.xpose.msra.mxu0 0
  %2961 = vmatpush.bf16.xpose.msra.mxu0 0
  %2962 = vmatpush.bf16.xpose.msra.mxu0 0
  %2963 = vmatpush.bf16.xpose.msra.mxu0 0
  %2964 = vmatpush.bf16.xpose.msra.mxu0 0
  %2965 = vmatpush.bf16.xpose.msra.mxu0 0
  %2966 = vmatpush.bf16.xpose.msra.mxu0 %v2957
  %2967 = vmatmul.bf16.gmra.mxu0 %v2954
  %v2968 = vpop.f32.mrf.mxu0
  %v2969 = vadd.f32 0.0, %v2968
  %v2970 = vpop.f32.mrf.mxu0
  %2971 = vdwg.mxu0
  %2972 = vrot.lane.b32.xlu0 %v2549, 80
  %v2973 = vpop.permute.xlu0 %2972
  %2974 = vrot.lane.b32.xlu0 %v2549, 16
  %v2975 = vpop.permute.xlu0 %2974
  %v2977 = vsel %vm87, %v2973, 0
  %v2980 = vsel %vm87, %v2975, 0
  %2982 = vmatpush.bf16.xpose.msra.mxu0 0
  %2983 = vmatpush.bf16.xpose.msra.mxu0 0
  %2984 = vmatpush.bf16.xpose.msra.mxu0 0
  %2985 = vmatpush.bf16.xpose.msra.mxu0 0
  %2986 = vmatpush.bf16.xpose.msra.mxu0 0
  %2987 = vmatpush.bf16.xpose.msra.mxu0 0
  %2988 = vmatpush.bf16.xpose.msra.mxu0 0
  %2989 = vmatpush.bf16.xpose.msra.mxu0 %v2980
  %2990 = vmatmul.bf16.gmra.mxu0 %v2977
  %v2991 = vpop.f32.mrf.mxu0
  %v2992 = vadd.f32 0.0, %v2991
  %v2993 = vpop.f32.mrf.mxu0
  %2994 = vdwg.mxu0
  %v2995 = vmul.f32 %v2969, 0.28867513
  %v2996 = vmul.f32 %v2992, 0.28867513
  %v2997 = vsel %vm433, %v2995, -inf
  %2998 = vmax.xlane.f32.xlu0 %v2997
  %v2999 = vpop.xlane.xlu0 %2998
  %v3000 = vsel %vm433, %v2996, -inf
  %3001 = vmax.xlane.f32.xlu0 %v3000
  %v3002 = vpop.xlane.xlu0 %3001
  %v3003 = vsub.f32 %v2995, %v2999
  %v3004 = vsub.f32 %v2996, %v3002
  %v3005 = vmul.f32 %v3003, 1.442695
  %v3006 = vpow.pop %v3005
  %v3007 = vmul.f32 %v3004, 1.442695
  %v3008 = vpow.pop %v3007
  %v3009 = vsel %vm433, %v3006, 0.0
  %3010 = vadd.xlane.f32.xlu0 %v3009
  %v3011 = vpop.xlane.xlu0 %3010
  %v3012 = vsel %vm433, %v3008, 0.0
  %3013 = vadd.xlane.f32.xlu0 %v3012
  %v3014 = vpop.xlane.xlu0 %3013
  %v3015 = vrcp.pop %v3011
  %v3016 = vmul.f32 %v3011, %v3015
  %v3017 = vsub.f32 1.0, %v3016
  %v3018 = vmul.f32 %v3015, %v3017
  %v3019 = vadd.f32 %v3015, %v3018
  %vm3020 = vweird.f32 %v3011
  %vm3021 = vweird.f32 %v3015
  %vm3022 = vmor %vm3020, %vm3021
  %v3023 = vsel %vm3022, %v3015, %v3019
  %v3024 = vand.u32 2147483647, %v3011
  %vm3025 = vcmp.eq.f32.partialorder %v3024, 8.507059e+37
  %v3026 = vand.u32 %v3011, 2147483648
  %v3027 = vor.u32 1.1754944e-38, %v3026
  %v3028 = vsel %vm3025, %v3027, %v3023
  %v3029 = vmul.f32 %v3006, %v3028
  %v3030 = vrcp.pop %v3014
  %v3031 = vmul.f32 %v3014, %v3030
  %v3032 = vsub.f32 1.0, %v3031
  %v3033 = vmul.f32 %v3030, %v3032
  %v3034 = vadd.f32 %v3030, %v3033
  %vm3035 = vweird.f32 %v3014
  %vm3036 = vweird.f32 %v3030
  %vm3037 = vmor %vm3035, %vm3036
  %v3038 = vsel %vm3037, %v3030, %v3034
  %v3039 = vand.u32 2147483647, %v3014
  %vm3040 = vcmp.eq.f32.partialorder %v3039, 8.507059e+37
  %v3041 = vand.u32 %v3014, 2147483648
  %v3042 = vor.u32 1.1754944e-38, %v3041
  %v3043 = vsel %vm3040, %v3042, %v3038
  %v3044 = vmul.f32 %v3008, %v3043
  %v3045 = vpack.c.bf16 %v3029, %v3029
  %v3046 = vpack.c.bf16 %v3044, %v3044
  %3047 = vrot.lane.b32.xlu0 %v2763, 80
  %v3048 = vpop.permute.xlu0 %3047
  %v3050 = vsel %vm433, %v3045, 0
  %v3053 = vsel %vm489, %v3048, 0
  %3055 = vmatpush.bf16.msra.mxu0 0
  %3056 = vmatpush.bf16.msra.mxu0 0
  %3057 = vmatpush.bf16.msra.mxu0 0
  %3058 = vmatpush.bf16.msra.mxu0 0
  %3059 = vmatpush.bf16.msra.mxu0 0
  %3060 = vmatpush.bf16.msra.mxu0 0
  %3061 = vmatpush.bf16.msra.mxu0 0
  %3062 = vmatpush.bf16.msra.mxu0 %v3053
  %3063 = vmatmul.bf16.gmra.mxu0 %v3050
  %v3064 = vpop.f32.mrf.mxu0
  %v3065 = vadd.f32 0.0, %v3064
  %v3066 = vpop.f32.mrf.mxu0
  %3067 = vdwg.mxu0
  %3068 = vrot.lane.b32.xlu0 %v2787, 80
  %v3069 = vpop.permute.xlu0 %3068
  %v3071 = vsel %vm433, %v3046, 0
  %v3074 = vsel %vm489, %v3069, 0
  %3076 = vmatpush.bf16.msra.mxu0 0
  %3077 = vmatpush.bf16.msra.mxu0 0
  %3078 = vmatpush.bf16.msra.mxu0 0
  %3079 = vmatpush.bf16.msra.mxu0 0
  %3080 = vmatpush.bf16.msra.mxu0 0
  %3081 = vmatpush.bf16.msra.mxu0 0
  %3082 = vmatpush.bf16.msra.mxu0 0
  %3083 = vmatpush.bf16.msra.mxu0 %v3074
  %3084 = vmatmul.bf16.gmra.mxu0 %v3071
  %v3085 = vpop.f32.mrf.mxu0
  %v3086 = vadd.f32 0.0, %v3085
  %v3087 = vpop.f32.mrf.mxu0
  %3088 = vdwg.mxu0
  %3091 = vrot.lane.b32.xlu0 %v2782, 16
  %v3092 = vpop.permute.xlu0 %3091
  %3093 = vrot.lane.b32.xlu0 %v2806, 16
  %v3094 = vpop.permute.xlu0 %3093
  %3099 = vrot.lane.b32.xlu0 %v2925, 32
  %v3100 = vpop.permute.xlu0 %3099
  %3101 = vrot.lane.b32.xlu0 %v2946, 32
  %v3102 = vpop.permute.xlu0 %3101
  %3107 = vrot.lane.b32.xlu0 %v3065, 48
  %v3108 = vpop.permute.xlu0 %3107
  %3109 = vrot.lane.b32.xlu0 %v3086, 48
  %v3110 = vpop.permute.xlu0 %3109
  %v3113 = vsel %vm87, %v2641, %v3092
  %v3114 = vsel %vm87, %v2660, %v3094
  %v3115 = vsel %vm977, %v3113, %v3100
  %v3116 = vsel %vm977, %v3114, %v3102
  %v3117 = vsel %vm349, %v3115, %v3108
  %v3118 = vsel %vm349, %v3116, %v3110
  %v3119 = vpack.c.bf16 %v3118, %v3117
  %v3121 = vperm.slane %v2409, 0
  %v3131 = vunpack.c.l.b16 %v2400
  %v3132 = vunpack.c.l.b16 %v2401
  %v3133 = vunpack.c.l.b16 %v2402
  %v3134 = vunpack.c.l.b16 %v2403
  %v3135 = vunpack.c.l.b16 %v2404
  %v3136 = vunpack.c.l.b16 %v2405
  %v3137 = vunpack.c.l.b16 %v2406
  %v3138 = vunpack.c.l.b16 %v2407
  %v3139 = vpack.c.b16 %v3132, %v3131
  %v3140 = vpack.c.b16 %v3134, %v3133
  %v3141 = vpack.c.b16 %v3136, %v3135
  %v3142 = vpack.c.b16 %v3138, %v3137
  %v3148 = vsel %vm225, %v3119, 0
  %3150 = vmatpush.bf16.msra.mxu0 0
  %3151 = vmatpush.bf16.msra.mxu0 0
  %3152 = vmatpush.bf16.msra.mxu0 0
  %3153 = vmatpush.bf16.msra.mxu0 0
  %3154 = vmatpush.bf16.msra.mxu0 %v3142
  %3155 = vmatpush.bf16.msra.mxu0 %v3141
  %3156 = vmatpush.bf16.msra.mxu0 %v3140
  %3157 = vmatpush.bf16.msra.mxu0 %v3139
  %3158 = vmatmul.bf16.gmra.mxu0 %v3148
  %v3159 = vpop.f32.mrf.mxu0
  %v3160 = vadd.f32 %v3121, %v3159
  %v3161 = vpop.f32.mrf.mxu0
  %v3162 = vadd.f32 %v3121, %v3161
  %3163 = vdwg.mxu0
  %v3164 = vadd.f32 %v2388, %v3160
  %v3165 = vadd.f32 %v2389, %v3162
  %v3166 = vsel %vm349, %v3164, 0.0
  %3167 = vadd.xlane.f32.xlu0 %v3166
  %v3168 = vpop.xlane.xlu0 %3167
  %v3169 = vsel %vm349, %v3165, 0.0
  %3170 = vadd.xlane.f32.xlu0 %v3169
  %v3171 = vpop.xlane.xlu0 %3170
  %v3172 = vmul.f32 %v3168, %v1041
  %v3173 = vmul.f32 %v3171, %v1041
  %v3174 = vsub.f32 %v3164, %v3172
  %v3175 = vsub.f32 %v3165, %v3173
  %v3176 = vmul.f32 %v3174, %v3174
  %v3177 = vmul.f32 %v3175, %v3175
  %v3178 = vsel %vm349, %v3176, 0.0
  %3179 = vadd.xlane.f32.xlu0 %v3178
  %v3180 = vpop.xlane.xlu0 %3179
  %v3181 = vsel %vm349, %v3177, 0.0
  %3182 = vadd.xlane.f32.xlu0 %v3181
  %v3183 = vpop.xlane.xlu0 %3182
  %v3184 = vmul.f32 %v3180, %v1041
  %v3185 = vmul.f32 %v3183, %v1041
  %v3186 = vadd.f32 %v3184, 1e-05
  %v3187 = vadd.f32 %v3185, 1e-05
  %v3188 = vrsqrt.pop %v3186
  %v3189 = vmul.f32 %v3188, %v3186
  %v3190 = vmul.f32 %v3189, %v3188
  %v3191 = vmul.f32 0.5, %v3190
  %v3192 = vsub.f32 1.5, %v3191
  %v3193 = vmul.f32 %v3188, %v3192
  %vm3194 = vweird.f32 %v3186
  %vm3195 = vweird.f32 %v3188
  %vm3196 = vmor %vm3194, %vm3195
  %v3197 = vsel %vm3196, %v3188, %v3193
  %v3198 = vrsqrt.pop %v3187
  %v3199 = vmul.f32 %v3198, %v3187
  %v3200 = vmul.f32 %v3199, %v3198
  %v3201 = vmul.f32 0.5, %v3200
  %v3202 = vsub.f32 1.5, %v3201
  %v3203 = vmul.f32 %v3198, %v3202
  %vm3204 = vweird.f32 %v3187
  %vm3205 = vweird.f32 %v3198
  %vm3206 = vmor %vm3204, %vm3205
  %v3207 = vsel %vm3206, %v3198, %v3203
  %v3208 = vmul.f32 %v3174, %v3197
  %v3209 = vmul.f32 %v3175, %v3207
  %v3211 = vperm.slane %v2411, 0
  %v3213 = vmul.f32 %v3208, %v3211
  %v3214 = vmul.f32 %v3209, %v3211
  %v3216 = vperm.slane %v2413, 0
  %v3218 = vadd.f32 %v3213, %v3216
  %v3219 = vadd.f32 %v3214, %v3216
  %v3220 = vpack.c.bf16 %v3219, %v3218
  %v3222 = vperm.slane %v2422, 0
  %v3223 = vperm.slane %v2422, 1
  %v3232 = vunpack.c.l.b16 %v2415
  %v3233 = vunpack.c.h.b16 %v2415
  %v3234 = vunpack.c.l.b16 %v2416
  %v3235 = vunpack.c.h.b16 %v2416
  %v3236 = vunpack.c.l.b16 %v2417
  %v3237 = vunpack.c.h.b16 %v2417
  %v3238 = vunpack.c.l.b16 %v2418
  %v3239 = vunpack.c.h.b16 %v2418
  %v3240 = vunpack.c.l.b16 %v2419
  %v3241 = vunpack.c.h.b16 %v2419
  %v3242 = vunpack.c.l.b16 %v2420
  %v3243 = vunpack.c.h.b16 %v2420
  %v3244 = vpack.c.b16 %v3234, %v3232
  %v3245 = vpack.c.b16 %v3235, %v3233
  %v3246 = vpack.c.b16 %v3238, %v3236
  %v3247 = vpack.c.b16 %v3239, %v3237
  %v3248 = vpack.c.b16 %v3242, %v3240
  %v3249 = vpack.c.b16 %v3243, %v3241
  %v3257 = vsel %vm349, %v3220, 0
  %3259 = vmatpush.bf16.msra.mxu0 0
  %3260 = vmatpush.bf16.msra.mxu0 0
  %3261 = vmatpush.bf16.msra.mxu0 0
  %3262 = vmatpush.bf16.msra.mxu0 0
  %3263 = vmatpush.bf16.msra.mxu0 0
  %3264 = vmatpush.bf16.msra.mxu0 %v3248
  %3265 = vmatpush.bf16.msra.mxu0 %v3246
  %3266 = vmatpush.bf16.msra.mxu0 %v3244
  %3267 = vmatmul.bf16.gmra.mxu0 %v3257
  %v3268 = vpop.f32.mrf.mxu0
  %v3269 = vadd.f32 %v3222, %v3268
  %v3270 = vpop.f32.mrf.mxu0
  %v3271 = vadd.f32 %v3222, %v3270
  %3272 = vdwg.mxu0
  %3273 = vmatpush.bf16.msra.mxu0 0
  %3274 = vmatpush.bf16.msra.mxu0 0
  %3275 = vmatpush.bf16.msra.mxu0 0
  %3276 = vmatpush.bf16.msra.mxu0 0
  %3277 = vmatpush.bf16.msra.mxu0 0
  %3278 = vmatpush.bf16.msra.mxu0 %v3249
  %3279 = vmatpush.bf16.msra.mxu0 %v3247
  %3280 = vmatpush.bf16.msra.mxu0 %v3245
  %3281 = vmatmul.bf16.gmra.mxu0 %v3257
  %v3282 = vpop.f32.mrf.mxu0
  %v3283 = vadd.f32 %v3223, %v3282
  %v3284 = vpop.f32.mrf.mxu0
  %v3285 = vadd.f32 %v3223, %v3284
  %3286 = vdwg.mxu0
  %v3287 = vmax.f32 %v3269, 0.0
  %v3288 = vmax.f32 %v3283, 0.0
  %v3289 = vmax.f32 %v3271, 0.0
  %v3290 = vmax.f32 %v3285, 0.0
  %v3291 = vpack.c.bf16 %v3289, %v3287
  %v3292 = vpack.c.bf16 %v3290, %v3288
  %v3294 = vperm.slane %v2449, 0
  %v3320 = vunpack.c.l.b16 %v2424
  %v3321 = vunpack.c.l.b16 %v2425
  %v3322 = vunpack.c.l.b16 %v2426
  %v3323 = vunpack.c.l.b16 %v2427
  %v3324 = vunpack.c.l.b16 %v2428
  %v3325 = vunpack.c.l.b16 %v2429
  %v3326 = vunpack.c.l.b16 %v2430
  %v3327 = vunpack.c.l.b16 %v2431
  %v3328 = vunpack.c.l.b16 %v2432
  %v3329 = vunpack.c.l.b16 %v2433
  %v3330 = vunpack.c.l.b16 %v2434
  %v3331 = vunpack.c.l.b16 %v2435
  %v3332 = vunpack.c.l.b16 %v2436
  %v3333 = vunpack.c.l.b16 %v2437
  %v3334 = vunpack.c.l.b16 %v2438
  %v3335 = vunpack.c.l.b16 %v2439
  %v3336 = vunpack.c.l.b16 %v2440
  %v3337 = vunpack.c.l.b16 %v2441
  %v3338 = vunpack.c.l.b16 %v2442
  %v3339 = vunpack.c.l.b16 %v2443
  %v3340 = vunpack.c.l.b16 %v2444
  %v3341 = vunpack.c.l.b16 %v2445
  %v3342 = vunpack.c.l.b16 %v2446
  %v3343 = vunpack.c.l.b16 %v2447
  %v3344 = vpack.c.b16 %v3321, %v3320
  %v3345 = vpack.c.b16 %v3323, %v3322
  %v3346 = vpack.c.b16 %v3325, %v3324
  %v3347 = vpack.c.b16 %v3327, %v3326
  %v3348 = vpack.c.b16 %v3329, %v3328
  %v3349 = vpack.c.b16 %v3331, %v3330
  %v3350 = vpack.c.b16 %v3333, %v3332
  %v3351 = vpack.c.b16 %v3335, %v3334
  %v3352 = vpack.c.b16 %v3337, %v3336
  %v3353 = vpack.c.b16 %v3339, %v3338
  %v3354 = vpack.c.b16 %v3341, %v3340
  %v3355 = vpack.c.b16 %v3343, %v3342
  %v3369 = vsel %vm225, %v3292, 0
  %3371 = vmatpush.bf16.msra.mxu0 %v3351
  %3372 = vmatpush.bf16.msra.mxu0 %v3350
  %3373 = vmatpush.bf16.msra.mxu0 %v3349
  %3374 = vmatpush.bf16.msra.mxu0 %v3348
  %3375 = vmatpush.bf16.msra.mxu0 %v3347
  %3376 = vmatpush.bf16.msra.mxu0 %v3346
  %3377 = vmatpush.bf16.msra.mxu0 %v3345
  %3378 = vmatpush.bf16.msra.mxu0 %v3344
  %3379 = vmatmul.bf16.gmra.mxu0 %v3291
  %v3380 = vpop.f32.mrf.mxu0
  %v3381 = vadd.f32 %v3294, %v3380
  %v3382 = vpop.f32.mrf.mxu0
  %v3383 = vadd.f32 %v3294, %v3382
  %3384 = vdwg.mxu0
  %3385 = vmatpush.bf16.msra.mxu0 0
  %3386 = vmatpush.bf16.msra.mxu0 0
  %3387 = vmatpush.bf16.msra.mxu0 0
  %3388 = vmatpush.bf16.msra.mxu0 0
  %3389 = vmatpush.bf16.msra.mxu0 %v3355
  %3390 = vmatpush.bf16.msra.mxu0 %v3354
  %3391 = vmatpush.bf16.msra.mxu0 %v3353
  %3392 = vmatpush.bf16.msra.mxu0 %v3352
  %3393 = vmatmul.bf16.gmra.mxu0 %v3369
  %v3394 = vpop.f32.mrf.mxu0
  %v3395 = vadd.f32 %v3381, %v3394
  %v3396 = vpop.f32.mrf.mxu0
  %v3397 = vadd.f32 %v3383, %v3396
  %3398 = vdwg.mxu0
  %v3399 = vadd.f32 %v3218, %v3395
  %v3400 = vadd.f32 %v3219, %v3397
  %v3401 = vsel %vm349, %v3399, 0.0
  %3402 = vadd.xlane.f32.xlu0 %v3401
  %v3403 = vpop.xlane.xlu0 %3402
  %v3404 = vsel %vm349, %v3400, 0.0
  %3405 = vadd.xlane.f32.xlu0 %v3404
  %v3406 = vpop.xlane.xlu0 %3405
  %v3407 = vmul.f32 %v3403, %v1041
  %v3408 = vmul.f32 %v3406, %v1041
  %v3409 = vsub.f32 %v3399, %v3407
  %v3410 = vsub.f32 %v3400, %v3408
  %v3411 = vmul.f32 %v3409, %v3409
  %v3412 = vmul.f32 %v3410, %v3410
  %v3413 = vsel %vm349, %v3411, 0.0
  %3414 = vadd.xlane.f32.xlu0 %v3413
  %v3415 = vpop.xlane.xlu0 %3414
  %v3416 = vsel %vm349, %v3412, 0.0
  %3417 = vadd.xlane.f32.xlu0 %v3416
  %v3418 = vpop.xlane.xlu0 %3417
  %v3419 = vmul.f32 %v3415, %v1041
  %v3420 = vmul.f32 %v3418, %v1041
  %v3421 = vadd.f32 %v3419, 1e-05
  %v3422 = vadd.f32 %v3420, 1e-05
  %v3423 = vrsqrt.pop %v3421
  %v3424 = vmul.f32 %v3423, %v3421
  %v3425 = vmul.f32 %v3424, %v3423
  %v3426 = vmul.f32 0.5, %v3425
  %v3427 = vsub.f32 1.5, %v3426
  %v3428 = vmul.f32 %v3423, %v3427
  %vm3429 = vweird.f32 %v3421
  %vm3430 = vweird.f32 %v3423
  %vm3431 = vmor %vm3429, %vm3430
  %v3432 = vsel %vm3431, %v3423, %v3428
  %v3433 = vrsqrt.pop %v3422
  %v3434 = vmul.f32 %v3433, %v3422
  %v3435 = vmul.f32 %v3434, %v3433
  %v3436 = vmul.f32 0.5, %v3435
  %v3437 = vsub.f32 1.5, %v3436
  %v3438 = vmul.f32 %v3433, %v3437
  %vm3439 = vweird.f32 %v3422
  %vm3440 = vweird.f32 %v3433
  %vm3441 = vmor %vm3439, %vm3440
  %v3442 = vsel %vm3441, %v3433, %v3438
  %v3443 = vmul.f32 %v3409, %v3432
  %v3444 = vmul.f32 %v3410, %v3442
  %v3446 = vperm.slane %v2451, 0
  %v3448 = vmul.f32 %v3443, %v3446
  %v3449 = vmul.f32 %v3444, %v3446
  %v3451 = vperm.slane %v2453, 0
  %v3453 = vadd.f32 %v3448, %v3451
  %v3454 = vadd.f32 %v3449, %v3451
  %s3455 = scalar_lea.vmem %s6, 144
  %v3456 = vld [vmem:[%s3455] sm:$0xff]
  %v3457 = vld [vmem:[%s3455 + $0x8] sm:$0xff]
  %v3458 = vld [vmem:[%s3455 + $0x10] sm:$0xff]
  %v3459 = vld [vmem:[%s3455 + $0x18] sm:$0xff]
  %v3460 = vld [vmem:[%s3455 + $0x20] sm:$0xff]
  %v3461 = vld [vmem:[%s3455 + $0x28] sm:$0xff]
  %s3462 = scalar_lea.vmem %s7, 6
  %v3463 = vld [vmem:[%s3462] sm:$0x3]
  %s3464 = scalar_lea.vmem %s8, 96
  %v3465 = vld [vmem:[%s3464] sm:$0xf]
  %v3466 = vld [vmem:[%s3464 + $0x4] sm:$0xf]
  %v3467 = vld [vmem:[%s3464 + $0x8] sm:$0xf]
  %v3468 = vld [vmem:[%s3464 + $0xc] sm:$0xf]
  %v3469 = vld [vmem:[%s3464 + $0x10] sm:$0xf]
  %v3470 = vld [vmem:[%s3464 + $0x14] sm:$0xf]
  %v3471 = vld [vmem:[%s3464 + $0x18] sm:$0xf]
  %v3472 = vld [vmem:[%s3464 + $0x1c] sm:$0xf]
  %s3473 = scalar_lea.vmem %s9, 3
  %v3474 = vld [vmem:[%s3473] sm:$0x1]
  %s3475 = scalar_lea.vmem %s10, 3
  %v3476 = vld [vmem:[%s3475] sm:$0x1]
  %s3477 = scalar_lea.vmem %s11, 3
  %v3478 = vld [vmem:[%s3477] sm:$0x1]
  %s3479 = scalar_lea.vmem %s12, 144
  %v3480 = vld [vmem:[%s3479] sm:$0xff]
  %v3481 = vld [vmem:[%s3479 + $0x8] sm:$0xff]
  %v3482 = vld [vmem:[%s3479 + $0x10] sm:$0xff]
  %v3483 = vld [vmem:[%s3479 + $0x18] sm:$0xff]
  %v3484 = vld [vmem:[%s3479 + $0x20] sm:$0xff]
  %v3485 = vld [vmem:[%s3479 + $0x28] sm:$0xff]
  %s3486 = scalar_lea.vmem %s13, 6
  %v3487 = vld [vmem:[%s3486] sm:$0x3]
  %s3488 = scalar_lea.vmem %s14, 288
  %v3489 = vld [vmem:[%s3488] sm:$0xf]
  %v3490 = vld [vmem:[%s3488 + $0x4] sm:$0xf]
  %v3491 = vld [vmem:[%s3488 + $0x8] sm:$0xf]
  %v3492 = vld [vmem:[%s3488 + $0xc] sm:$0xf]
  %v3493 = vld [vmem:[%s3488 + $0x10] sm:$0xf]
  %v3494 = vld [vmem:[%s3488 + $0x14] sm:$0xf]
  %v3495 = vld [vmem:[%s3488 + $0x18] sm:$0xf]
  %v3496 = vld [vmem:[%s3488 + $0x1c] sm:$0xf]
  %v3497 = vld [vmem:[%s3488 + $0x20] sm:$0xf]
  %v3498 = vld [vmem:[%s3488 + $0x24] sm:$0xf]
  %v3499 = vld [vmem:[%s3488 + $0x28] sm:$0xf]
  %v3500 = vld [vmem:[%s3488 + $0x2c] sm:$0xf]
  %v3501 = vld [vmem:[%s3488 + $0x30] sm:$0xf]
  %v3502 = vld [vmem:[%s3488 + $0x34] sm:$0xf]
  %v3503 = vld [vmem:[%s3488 + $0x38] sm:$0xf]
  %v3504 = vld [vmem:[%s3488 + $0x3c] sm:$0xf]
  %v3505 = vld [vmem:[%s3488 + $0x40] sm:$0xf]
  %v3506 = vld [vmem:[%s3488 + $0x44] sm:$0xf]
  %v3507 = vld [vmem:[%s3488 + $0x48] sm:$0xf]
  %v3508 = vld [vmem:[%s3488 + $0x4c] sm:$0xf]
  %v3509 = vld [vmem:[%s3488 + $0x50] sm:$0xf]
  %v3510 = vld [vmem:[%s3488 + $0x54] sm:$0xf]
  %v3511 = vld [vmem:[%s3488 + $0x58] sm:$0xf]
  %v3512 = vld [vmem:[%s3488 + $0x5c] sm:$0xf]
  %s3513 = scalar_lea.vmem %s15, 3
  %v3514 = vld [vmem:[%s3513] sm:$0x1]
  %s3515 = scalar_lea.vmem %s16, 3
  %v3516 = vld [vmem:[%s3515] sm:$0x1]
  %s3517 = scalar_lea.vmem %s17, 3
  %v3518 = vld [vmem:[%s3517] sm:$0x1]
  %v3519 = vpack.c.bf16 %v3454, %v3453
  %v3521 = vperm.slane %v3463, 0
  %v3522 = vperm.slane %v3463, 1
  %v3531 = vunpack.c.l.b16 %v3456
  %v3532 = vunpack.c.h.b16 %v3456
  %v3533 = vunpack.c.l.b16 %v3457
  %v3534 = vunpack.c.h.b16 %v3457
  %v3535 = vunpack.c.l.b16 %v3458
  %v3536 = vunpack.c.h.b16 %v3458
  %v3537 = vunpack.c.l.b16 %v3459
  %v3538 = vunpack.c.h.b16 %v3459
  %v3539 = vunpack.c.l.b16 %v3460
  %v3540 = vunpack.c.h.b16 %v3460
  %v3541 = vunpack.c.l.b16 %v3461
  %v3542 = vunpack.c.h.b16 %v3461
  %v3543 = vpack.c.b16 %v3533, %v3531
  %v3544 = vpack.c.b16 %v3534, %v3532
  %v3545 = vpack.c.b16 %v3537, %v3535
  %v3546 = vpack.c.b16 %v3538, %v3536
  %v3547 = vpack.c.b16 %v3541, %v3539
  %v3548 = vpack.c.b16 %v3542, %v3540
  %v3556 = vsel %vm349, %v3519, 0
  %3558 = vmatpush.bf16.msra.mxu0 0
  %3559 = vmatpush.bf16.msra.mxu0 0
  %3560 = vmatpush.bf16.msra.mxu0 0
  %3561 = vmatpush.bf16.msra.mxu0 0
  %3562 = vmatpush.bf16.msra.mxu0 0
  %3563 = vmatpush.bf16.msra.mxu0 %v3547
  %3564 = vmatpush.bf16.msra.mxu0 %v3545
  %3565 = vmatpush.bf16.msra.mxu0 %v3543
  %3566 = vmatmul.bf16.gmra.mxu0 %v3556
  %v3567 = vpop.f32.mrf.mxu0
  %v3568 = vadd.f32 %v3521, %v3567
  %v3569 = vpop.f32.mrf.mxu0
  %v3570 = vadd.f32 %v3521, %v3569
  %3571 = vdwg.mxu0
  %3572 = vmatpush.bf16.msra.mxu0 0
  %3573 = vmatpush.bf16.msra.mxu0 0
  %3574 = vmatpush.bf16.msra.mxu0 0
  %3575 = vmatpush.bf16.msra.mxu0 0
  %3576 = vmatpush.bf16.msra.mxu0 0
  %3577 = vmatpush.bf16.msra.mxu0 %v3548
  %3578 = vmatpush.bf16.msra.mxu0 %v3546
  %3579 = vmatpush.bf16.msra.mxu0 %v3544
  %3580 = vmatmul.bf16.gmra.mxu0 %v3556
  %v3581 = vpop.f32.mrf.mxu0
  %v3582 = vadd.f32 %v3522, %v3581
  %v3583 = vpop.f32.mrf.mxu0
  %v3584 = vadd.f32 %v3522, %v3583
  %3585 = vdwg.mxu0
  %v3586 = vpack.c.bf16 %v3568, %v3568
  %v3587 = vpack.c.bf16 %v3570, %v3570
  %v3589 = vunpack.c.l.b16 %v3586
  %v3590 = vpack.c.b16 %v3589, %v3589
  %3591 = vrot.lane.b32.xlu0 %v3590, 64
  %v3592 = vpop.permute.xlu0 %3591
  %v3594 = vsel %vm87, %v3586, 0
  %v3597 = vsel %vm87, %v3592, 0
  %3599 = vmatpush.bf16.xpose.msra.mxu0 0
  %3600 = vmatpush.bf16.xpose.msra.mxu0 0
  %3601 = vmatpush.bf16.xpose.msra.mxu0 0
  %3602 = vmatpush.bf16.xpose.msra.mxu0 0
  %3603 = vmatpush.bf16.xpose.msra.mxu0 0
  %3604 = vmatpush.bf16.xpose.msra.mxu0 0
  %3605 = vmatpush.bf16.xpose.msra.mxu0 0
  %3606 = vmatpush.bf16.xpose.msra.mxu0 %v3597
  %3607 = vmatmul.bf16.gmra.mxu0 %v3594
  %v3608 = vpop.f32.mrf.mxu0
  %v3609 = vadd.f32 0.0, %v3608
  %v3610 = vpop.f32.mrf.mxu0
  %3611 = vdwg.mxu0
  %v3613 = vunpack.c.l.b16 %v3587
  %v3614 = vpack.c.b16 %v3613, %v3613
  %3615 = vrot.lane.b32.xlu0 %v3614, 64
  %v3616 = vpop.permute.xlu0 %3615
  %v3618 = vsel %vm87, %v3587, 0
  %v3621 = vsel %vm87, %v3616, 0
  %3623 = vmatpush.bf16.xpose.msra.mxu0 0
  %3624 = vmatpush.bf16.xpose.msra.mxu0 0
  %3625 = vmatpush.bf16.xpose.msra.mxu0 0
  %3626 = vmatpush.bf16.xpose.msra.mxu0 0
  %3627 = vmatpush.bf16.xpose.msra.mxu0 0
  %3628 = vmatpush.bf16.xpose.msra.mxu0 0
  %3629 = vmatpush.bf16.xpose.msra.mxu0 0
  %3630 = vmatpush.bf16.xpose.msra.mxu0 %v3621
  %3631 = vmatmul.bf16.gmra.mxu0 %v3618
  %v3632 = vpop.f32.mrf.mxu0
  %v3633 = vadd.f32 0.0, %v3632
  %v3634 = vpop.f32.mrf.mxu0
  %3635 = vdwg.mxu0
  %v3636 = vmul.f32 %v3609, 0.28867513
  %v3637 = vmul.f32 %v3633, 0.28867513
  %v3638 = vsel %vm433, %v3636, -inf
  %3639 = vmax.xlane.f32.xlu0 %v3638
  %v3640 = vpop.xlane.xlu0 %3639
  %v3641 = vsel %vm433, %v3637, -inf
  %3642 = vmax.xlane.f32.xlu0 %v3641
  %v3643 = vpop.xlane.xlu0 %3642
  %v3644 = vsub.f32 %v3636, %v3640
  %v3645 = vsub.f32 %v3637, %v3643
  %v3646 = vmul.f32 %v3644, 1.442695
  %v3647 = vpow.pop %v3646
  %v3648 = vmul.f32 %v3645, 1.442695
  %v3649 = vpow.pop %v3648
  %v3650 = vsel %vm433, %v3647, 0.0
  %3651 = vadd.xlane.f32.xlu0 %v3650
  %v3652 = vpop.xlane.xlu0 %3651
  %v3653 = vsel %vm433, %v3649, 0.0
  %3654 = vadd.xlane.f32.xlu0 %v3653
  %v3655 = vpop.xlane.xlu0 %3654
  %v3656 = vrcp.pop %v3652
  %v3657 = vmul.f32 %v3652, %v3656
  %v3658 = vsub.f32 1.0, %v3657
  %v3659 = vmul.f32 %v3656, %v3658
  %v3660 = vadd.f32 %v3656, %v3659
  %vm3661 = vweird.f32 %v3652
  %vm3662 = vweird.f32 %v3656
  %vm3663 = vmor %vm3661, %vm3662
  %v3664 = vsel %vm3663, %v3656, %v3660
  %v3665 = vand.u32 2147483647, %v3652
  %vm3666 = vcmp.eq.f32.partialorder %v3665, 8.507059e+37
  %v3667 = vand.u32 %v3652, 2147483648
  %v3668 = vor.u32 1.1754944e-38, %v3667
  %v3669 = vsel %vm3666, %v3668, %v3664
  %v3670 = vmul.f32 %v3647, %v3669
  %v3671 = vrcp.pop %v3655
  %v3672 = vmul.f32 %v3655, %v3671
  %v3673 = vsub.f32 1.0, %v3672
  %v3674 = vmul.f32 %v3671, %v3673
  %v3675 = vadd.f32 %v3671, %v3674
  %vm3676 = vweird.f32 %v3655
  %vm3677 = vweird.f32 %v3671
  %vm3678 = vmor %vm3676, %vm3677
  %v3679 = vsel %vm3678, %v3671, %v3675
  %v3680 = vand.u32 2147483647, %v3655
  %vm3681 = vcmp.eq.f32.partialorder %v3680, 8.507059e+37
  %v3682 = vand.u32 %v3655, 2147483648
  %v3683 = vor.u32 1.1754944e-38, %v3682
  %v3684 = vsel %vm3681, %v3683, %v3679
  %v3685 = vmul.f32 %v3649, %v3684
  %v3686 = vpack.c.bf16 %v3670, %v3670
  %v3687 = vpack.c.bf16 %v3685, %v3685
  %v3688 = vpack.c.bf16 %v3582, %v3582
  %v3689 = vpack.c.bf16 %v3584, %v3584
  %v3691 = vsel %vm433, %v3686, 0
  %v3694 = vsel %vm489, %v3688, 0
  %3696 = vmatpush.bf16.msra.mxu0 0
  %3697 = vmatpush.bf16.msra.mxu0 0
  %3698 = vmatpush.bf16.msra.mxu0 0
  %3699 = vmatpush.bf16.msra.mxu0 0
  %3700 = vmatpush.bf16.msra.mxu0 0
  %3701 = vmatpush.bf16.msra.mxu0 0
  %3702 = vmatpush.bf16.msra.mxu0 0
  %3703 = vmatpush.bf16.msra.mxu0 %v3694
  %3704 = vmatmul.bf16.gmra.mxu0 %v3691
  %v3705 = vpop.f32.mrf.mxu0
  %v3706 = vadd.f32 0.0, %v3705
  %v3707 = vpop.f32.mrf.mxu0
  %3708 = vdwg.mxu0
  %v3710 = vsel %vm433, %v3687, 0
  %v3713 = vsel %vm489, %v3689, 0
  %3715 = vmatpush.bf16.msra.mxu0 0
  %3716 = vmatpush.bf16.msra.mxu0 0
  %3717 = vmatpush.bf16.msra.mxu0 0
  %3718 = vmatpush.bf16.msra.mxu0 0
  %3719 = vmatpush.bf16.msra.mxu0 0
  %3720 = vmatpush.bf16.msra.mxu0 0
  %3721 = vmatpush.bf16.msra.mxu0 0
  %3722 = vmatpush.bf16.msra.mxu0 %v3713
  %3723 = vmatmul.bf16.gmra.mxu0 %v3710
  %v3724 = vpop.f32.mrf.mxu0
  %v3725 = vadd.f32 0.0, %v3724
  %v3726 = vpop.f32.mrf.mxu0
  %3727 = vdwg.mxu0
  %3728 = vrot.lane.b32.xlu0 %v3590, 112
  %v3729 = vpop.permute.xlu0 %3728
  %3730 = vrot.lane.b32.xlu0 %v3590, 48
  %v3731 = vpop.permute.xlu0 %3730
  %v3733 = vsel %vm87, %v3729, 0
  %v3736 = vsel %vm87, %v3731, 0
  %3738 = vmatpush.bf16.xpose.msra.mxu0 0
  %3739 = vmatpush.bf16.xpose.msra.mxu0 0
  %3740 = vmatpush.bf16.xpose.msra.mxu0 0
  %3741 = vmatpush.bf16.xpose.msra.mxu0 0
  %3742 = vmatpush.bf16.xpose.msra.mxu0 0
  %3743 = vmatpush.bf16.xpose.msra.mxu0 0
  %3744 = vmatpush.bf16.xpose.msra.mxu0 0
  %3745 = vmatpush.bf16.xpose.msra.mxu0 %v3736
  %3746 = vmatmul.bf16.gmra.mxu0 %v3733
  %v3747 = vpop.f32.mrf.mxu0
  %v3748 = vadd.f32 0.0, %v3747
  %v3749 = vpop.f32.mrf.mxu0
  %3750 = vdwg.mxu0
  %3751 = vrot.lane.b32.xlu0 %v3614, 112
  %v3752 = vpop.permute.xlu0 %3751
  %3753 = vrot.lane.b32.xlu0 %v3614, 48
  %v3754 = vpop.permute.xlu0 %3753
  %v3756 = vsel %vm87, %v3752, 0
  %v3759 = vsel %vm87, %v3754, 0
  %3761 = vmatpush.bf16.xpose.msra.mxu0 0
  %3762 = vmatpush.bf16.xpose.msra.mxu0 0
  %3763 = vmatpush.bf16.xpose.msra.mxu0 0
  %3764 = vmatpush.bf16.xpose.msra.mxu0 0
  %3765 = vmatpush.bf16.xpose.msra.mxu0 0
  %3766 = vmatpush.bf16.xpose.msra.mxu0 0
  %3767 = vmatpush.bf16.xpose.msra.mxu0 0
  %3768 = vmatpush.bf16.xpose.msra.mxu0 %v3759
  %3769 = vmatmul.bf16.gmra.mxu0 %v3756
  %v3770 = vpop.f32.mrf.mxu0
  %v3771 = vadd.f32 0.0, %v3770
  %v3772 = vpop.f32.mrf.mxu0
  %3773 = vdwg.mxu0
  %v3774 = vmul.f32 %v3748, 0.28867513
  %v3775 = vmul.f32 %v3771, 0.28867513
  %v3776 = vsel %vm433, %v3774, -inf
  %3777 = vmax.xlane.f32.xlu0 %v3776
  %v3778 = vpop.xlane.xlu0 %3777
  %v3779 = vsel %vm433, %v3775, -inf
  %3780 = vmax.xlane.f32.xlu0 %v3779
  %v3781 = vpop.xlane.xlu0 %3780
  %v3782 = vsub.f32 %v3774, %v3778
  %v3783 = vsub.f32 %v3775, %v3781
  %v3784 = vmul.f32 %v3782, 1.442695
  %v3785 = vpow.pop %v3784
  %v3786 = vmul.f32 %v3783, 1.442695
  %v3787 = vpow.pop %v3786
  %v3788 = vsel %vm433, %v3785, 0.0
  %3789 = vadd.xlane.f32.xlu0 %v3788
  %v3790 = vpop.xlane.xlu0 %3789
  %v3791 = vsel %vm433, %v3787, 0.0
  %3792 = vadd.xlane.f32.xlu0 %v3791
  %v3793 = vpop.xlane.xlu0 %3792
  %v3794 = vrcp.pop %v3790
  %v3795 = vmul.f32 %v3790, %v3794
  %v3796 = vsub.f32 1.0, %v3795
  %v3797 = vmul.f32 %v3794, %v3796
  %v3798 = vadd.f32 %v3794, %v3797
  %vm3799 = vweird.f32 %v3790
  %vm3800 = vweird.f32 %v3794
  %vm3801 = vmor %vm3799, %vm3800
  %v3802 = vsel %vm3801, %v3794, %v3798
  %v3803 = vand.u32 2147483647, %v3790
  %vm3804 = vcmp.eq.f32.partialorder %v3803, 8.507059e+37
  %v3805 = vand.u32 %v3790, 2147483648
  %v3806 = vor.u32 1.1754944e-38, %v3805
  %v3807 = vsel %vm3804, %v3806, %v3802
  %v3808 = vmul.f32 %v3785, %v3807
  %v3809 = vrcp.pop %v3793
  %v3810 = vmul.f32 %v3793, %v3809
  %v3811 = vsub.f32 1.0, %v3810
  %v3812 = vmul.f32 %v3809, %v3811
  %v3813 = vadd.f32 %v3809, %v3812
  %vm3814 = vweird.f32 %v3793
  %vm3815 = vweird.f32 %v3809
  %vm3816 = vmor %vm3814, %vm3815
  %v3817 = vsel %vm3816, %v3809, %v3813
  %v3818 = vand.u32 2147483647, %v3793
  %vm3819 = vcmp.eq.f32.partialorder %v3818, 8.507059e+37
  %v3820 = vand.u32 %v3793, 2147483648
  %v3821 = vor.u32 1.1754944e-38, %v3820
  %v3822 = vsel %vm3819, %v3821, %v3817
  %v3823 = vmul.f32 %v3787, %v3822
  %v3824 = vpack.c.bf16 %v3808, %v3808
  %v3825 = vpack.c.bf16 %v3823, %v3823
  %v3827 = vunpack.c.l.b16 %v3688
  %v3828 = vpack.c.b16 %v3827, %v3827
  %3829 = vrot.lane.b32.xlu0 %v3828, 112
  %v3830 = vpop.permute.xlu0 %3829
  %v3832 = vsel %vm433, %v3824, 0
  %v3835 = vsel %vm489, %v3830, 0
  %3837 = vmatpush.bf16.msra.mxu0 0
  %3838 = vmatpush.bf16.msra.mxu0 0
  %3839 = vmatpush.bf16.msra.mxu0 0
  %3840 = vmatpush.bf16.msra.mxu0 0
  %3841 = vmatpush.bf16.msra.mxu0 0
  %3842 = vmatpush.bf16.msra.mxu0 0
  %3843 = vmatpush.bf16.msra.mxu0 0
  %3844 = vmatpush.bf16.msra.mxu0 %v3835
  %3845 = vmatmul.bf16.gmra.mxu0 %v3832
  %v3846 = vpop.f32.mrf.mxu0
  %v3847 = vadd.f32 0.0, %v3846
  %v3848 = vpop.f32.mrf.mxu0
  %3849 = vdwg.mxu0
  %v3851 = vunpack.c.l.b16 %v3689
  %v3852 = vpack.c.b16 %v3851, %v3851
  %3853 = vrot.lane.b32.xlu0 %v3852, 112
  %v3854 = vpop.permute.xlu0 %3853
  %v3856 = vsel %vm433, %v3825, 0
  %v3859 = vsel %vm489, %v3854, 0
  %3861 = vmatpush.bf16.msra.mxu0 0
  %3862 = vmatpush.bf16.msra.mxu0 0
  %3863 = vmatpush.bf16.msra.mxu0 0
  %3864 = vmatpush.bf16.msra.mxu0 0
  %3865 = vmatpush.bf16.msra.mxu0 0
  %3866 = vmatpush.bf16.msra.mxu0 0
  %3867 = vmatpush.bf16.msra.mxu0 0
  %3868 = vmatpush.bf16.msra.mxu0 %v3859
  %3869 = vmatmul.bf16.gmra.mxu0 %v3856
  %v3870 = vpop.f32.mrf.mxu0
  %v3871 = vadd.f32 0.0, %v3870
  %v3872 = vpop.f32.mrf.mxu0
  %3873 = vdwg.mxu0
  %3874 = vrot.lane.b32.xlu0 %v3590, 96
  %v3875 = vpop.permute.xlu0 %3874
  %3876 = vrot.lane.b32.xlu0 %v3590, 32
  %v3877 = vpop.permute.xlu0 %3876
  %v3879 = vsel %vm87, %v3875, 0
  %v3882 = vsel %vm87, %v3877, 0
  %3884 = vmatpush.bf16.xpose.msra.mxu0 0
  %3885 = vmatpush.bf16.xpose.msra.mxu0 0
  %3886 = vmatpush.bf16.xpose.msra.mxu0 0
  %3887 = vmatpush.bf16.xpose.msra.mxu0 0
  %3888 = vmatpush.bf16.xpose.msra.mxu0 0
  %3889 = vmatpush.bf16.xpose.msra.mxu0 0
  %3890 = vmatpush.bf16.xpose.msra.mxu0 0
  %3891 = vmatpush.bf16.xpose.msra.mxu0 %v3882
  %3892 = vmatmul.bf16.gmra.mxu0 %v3879
  %v3893 = vpop.f32.mrf.mxu0
  %v3894 = vadd.f32 0.0, %v3893
  %v3895 = vpop.f32.mrf.mxu0
  %3896 = vdwg.mxu0
  %3897 = vrot.lane.b32.xlu0 %v3614, 96
  %v3898 = vpop.permute.xlu0 %3897
  %3899 = vrot.lane.b32.xlu0 %v3614, 32
  %v3900 = vpop.permute.xlu0 %3899
  %v3902 = vsel %vm87, %v3898, 0
  %v3905 = vsel %vm87, %v3900, 0
  %3907 = vmatpush.bf16.xpose.msra.mxu0 0
  %3908 = vmatpush.bf16.xpose.msra.mxu0 0
  %3909 = vmatpush.bf16.xpose.msra.mxu0 0
  %3910 = vmatpush.bf16.xpose.msra.mxu0 0
  %3911 = vmatpush.bf16.xpose.msra.mxu0 0
  %3912 = vmatpush.bf16.xpose.msra.mxu0 0
  %3913 = vmatpush.bf16.xpose.msra.mxu0 0
  %3914 = vmatpush.bf16.xpose.msra.mxu0 %v3905
  %3915 = vmatmul.bf16.gmra.mxu0 %v3902
  %v3916 = vpop.f32.mrf.mxu0
  %v3917 = vadd.f32 0.0, %v3916
  %v3918 = vpop.f32.mrf.mxu0
  %3919 = vdwg.mxu0
  %v3920 = vmul.f32 %v3894, 0.28867513
  %v3921 = vmul.f32 %v3917, 0.28867513
  %v3922 = vsel %vm433, %v3920, -inf
  %3923 = vmax.xlane.f32.xlu0 %v3922
  %v3924 = vpop.xlane.xlu0 %3923
  %v3925 = vsel %vm433, %v3921, -inf
  %3926 = vmax.xlane.f32.xlu0 %v3925
  %v3927 = vpop.xlane.xlu0 %3926
  %v3928 = vsub.f32 %v3920, %v3924
  %v3929 = vsub.f32 %v3921, %v3927
  %v3930 = vmul.f32 %v3928, 1.442695
  %v3931 = vpow.pop %v3930
  %v3932 = vmul.f32 %v3929, 1.442695
  %v3933 = vpow.pop %v3932
  %v3934 = vsel %vm433, %v3931, 0.0
  %3935 = vadd.xlane.f32.xlu0 %v3934
  %v3936 = vpop.xlane.xlu0 %3935
  %v3937 = vsel %vm433, %v3933, 0.0
  %3938 = vadd.xlane.f32.xlu0 %v3937
  %v3939 = vpop.xlane.xlu0 %3938
  %v3940 = vrcp.pop %v3936
  %v3941 = vmul.f32 %v3936, %v3940
  %v3942 = vsub.f32 1.0, %v3941
  %v3943 = vmul.f32 %v3940, %v3942
  %v3944 = vadd.f32 %v3940, %v3943
  %vm3945 = vweird.f32 %v3936
  %vm3946 = vweird.f32 %v3940
  %vm3947 = vmor %vm3945, %vm3946
  %v3948 = vsel %vm3947, %v3940, %v3944
  %v3949 = vand.u32 2147483647, %v3936
  %vm3950 = vcmp.eq.f32.partialorder %v3949, 8.507059e+37
  %v3951 = vand.u32 %v3936, 2147483648
  %v3952 = vor.u32 1.1754944e-38, %v3951
  %v3953 = vsel %vm3950, %v3952, %v3948
  %v3954 = vmul.f32 %v3931, %v3953
  %v3955 = vrcp.pop %v3939
  %v3956 = vmul.f32 %v3939, %v3955
  %v3957 = vsub.f32 1.0, %v3956
  %v3958 = vmul.f32 %v3955, %v3957
  %v3959 = vadd.f32 %v3955, %v3958
  %vm3960 = vweird.f32 %v3939
  %vm3961 = vweird.f32 %v3955
  %vm3962 = vmor %vm3960, %vm3961
  %v3963 = vsel %vm3962, %v3955, %v3959
  %v3964 = vand.u32 2147483647, %v3939
  %vm3965 = vcmp.eq.f32.partialorder %v3964, 8.507059e+37
  %v3966 = vand.u32 %v3939, 2147483648
  %v3967 = vor.u32 1.1754944e-38, %v3966
  %v3968 = vsel %vm3965, %v3967, %v3963
  %v3969 = vmul.f32 %v3933, %v3968
  %v3970 = vpack.c.bf16 %v3954, %v3954
  %v3971 = vpack.c.bf16 %v3969, %v3969
  %3972 = vrot.lane.b32.xlu0 %v3828, 96
  %v3973 = vpop.permute.xlu0 %3972
  %v3975 = vsel %vm433, %v3970, 0
  %v3978 = vsel %vm489, %v3973, 0
  %3980 = vmatpush.bf16.msra.mxu0 0
  %3981 = vmatpush.bf16.msra.mxu0 0
  %3982 = vmatpush.bf16.msra.mxu0 0
  %3983 = vmatpush.bf16.msra.mxu0 0
  %3984 = vmatpush.bf16.msra.mxu0 0
  %3985 = vmatpush.bf16.msra.mxu0 0
  %3986 = vmatpush.bf16.msra.mxu0 0
  %3987 = vmatpush.bf16.msra.mxu0 %v3978
  %3988 = vmatmul.bf16.gmra.mxu0 %v3975
  %v3989 = vpop.f32.mrf.mxu0
  %v3990 = vadd.f32 0.0, %v3989
  %v3991 = vpop.f32.mrf.mxu0
  %3992 = vdwg.mxu0
  %3993 = vrot.lane.b32.xlu0 %v3852, 96
  %v3994 = vpop.permute.xlu0 %3993
  %v3996 = vsel %vm433, %v3971, 0
  %v3999 = vsel %vm489, %v3994, 0
  %4001 = vmatpush.bf16.msra.mxu0 0
  %4002 = vmatpush.bf16.msra.mxu0 0
  %4003 = vmatpush.bf16.msra.mxu0 0
  %4004 = vmatpush.bf16.msra.mxu0 0
  %4005 = vmatpush.bf16.msra.mxu0 0
  %4006 = vmatpush.bf16.msra.mxu0 0
  %4007 = vmatpush.bf16.msra.mxu0 0
  %4008 = vmatpush.bf16.msra.mxu0 %v3999
  %4009 = vmatmul.bf16.gmra.mxu0 %v3996
  %v4010 = vpop.f32.mrf.mxu0
  %v4011 = vadd.f32 0.0, %v4010
  %v4012 = vpop.f32.mrf.mxu0
  %4013 = vdwg.mxu0
  %4014 = vrot.lane.b32.xlu0 %v3590, 80
  %v4015 = vpop.permute.xlu0 %4014
  %4016 = vrot.lane.b32.xlu0 %v3590, 16
  %v4017 = vpop.permute.xlu0 %4016
  %v4019 = vsel %vm87, %v4015, 0
  %v4022 = vsel %vm87, %v4017, 0
  %4024 = vmatpush.bf16.xpose.msra.mxu0 0
  %4025 = vmatpush.bf16.xpose.msra.mxu0 0
  %4026 = vmatpush.bf16.xpose.msra.mxu0 0
  %4027 = vmatpush.bf16.xpose.msra.mxu0 0
  %4028 = vmatpush.bf16.xpose.msra.mxu0 0
  %4029 = vmatpush.bf16.xpose.msra.mxu0 0
  %4030 = vmatpush.bf16.xpose.msra.mxu0 0
  %4031 = vmatpush.bf16.xpose.msra.mxu0 %v4022
  %4032 = vmatmul.bf16.gmra.mxu0 %v4019
  %v4033 = vpop.f32.mrf.mxu0
  %v4034 = vadd.f32 0.0, %v4033
  %v4035 = vpop.f32.mrf.mxu0
  %4036 = vdwg.mxu0
  %4037 = vrot.lane.b32.xlu0 %v3614, 80
  %v4038 = vpop.permute.xlu0 %4037
  %4039 = vrot.lane.b32.xlu0 %v3614, 16
  %v4040 = vpop.permute.xlu0 %4039
  %v4042 = vsel %vm87, %v4038, 0
  %v4045 = vsel %vm87, %v4040, 0
  %4047 = vmatpush.bf16.xpose.msra.mxu0 0
  %4048 = vmatpush.bf16.xpose.msra.mxu0 0
  %4049 = vmatpush.bf16.xpose.msra.mxu0 0
  %4050 = vmatpush.bf16.xpose.msra.mxu0 0
  %4051 = vmatpush.bf16.xpose.msra.mxu0 0
  %4052 = vmatpush.bf16.xpose.msra.mxu0 0
  %4053 = vmatpush.bf16.xpose.msra.mxu0 0
  %4054 = vmatpush.bf16.xpose.msra.mxu0 %v4045
  %4055 = vmatmul.bf16.gmra.mxu0 %v4042
  %v4056 = vpop.f32.mrf.mxu0
  %v4057 = vadd.f32 0.0, %v4056
  %v4058 = vpop.f32.mrf.mxu0
  %4059 = vdwg.mxu0
  %v4060 = vmul.f32 %v4034, 0.28867513
  %v4061 = vmul.f32 %v4057, 0.28867513
  %v4062 = vsel %vm433, %v4060, -inf
  %4063 = vmax.xlane.f32.xlu0 %v4062
  %v4064 = vpop.xlane.xlu0 %4063
  %v4065 = vsel %vm433, %v4061, -inf
  %4066 = vmax.xlane.f32.xlu0 %v4065
  %v4067 = vpop.xlane.xlu0 %4066
  %v4068 = vsub.f32 %v4060, %v4064
  %v4069 = vsub.f32 %v4061, %v4067
  %v4070 = vmul.f32 %v4068, 1.442695
  %v4071 = vpow.pop %v4070
  %v4072 = vmul.f32 %v4069, 1.442695
  %v4073 = vpow.pop %v4072
  %v4074 = vsel %vm433, %v4071, 0.0
  %4075 = vadd.xlane.f32.xlu0 %v4074
  %v4076 = vpop.xlane.xlu0 %4075
  %v4077 = vsel %vm433, %v4073, 0.0
  %4078 = vadd.xlane.f32.xlu0 %v4077
  %v4079 = vpop.xlane.xlu0 %4078
  %v4080 = vrcp.pop %v4076
  %v4081 = vmul.f32 %v4076, %v4080
  %v4082 = vsub.f32 1.0, %v4081
  %v4083 = vmul.f32 %v4080, %v4082
  %v4084 = vadd.f32 %v4080, %v4083
  %vm4085 = vweird.f32 %v4076
  %vm4086 = vweird.f32 %v4080
  %vm4087 = vmor %vm4085, %vm4086
  %v4088 = vsel %vm4087, %v4080, %v4084
  %v4089 = vand.u32 2147483647, %v4076
  %vm4090 = vcmp.eq.f32.partialorder %v4089, 8.507059e+37
  %v4091 = vand.u32 %v4076, 2147483648
  %v4092 = vor.u32 1.1754944e-38, %v4091
  %v4093 = vsel %vm4090, %v4092, %v4088
  %v4094 = vmul.f32 %v4071, %v4093
  %v4095 = vrcp.pop %v4079
  %v4096 = vmul.f32 %v4079, %v4095
  %v4097 = vsub.f32 1.0, %v4096
  %v4098 = vmul.f32 %v4095, %v4097
  %v4099 = vadd.f32 %v4095, %v4098
  %vm4100 = vweird.f32 %v4079
  %vm4101 = vweird.f32 %v4095
  %vm4102 = vmor %vm4100, %vm4101
  %v4103 = vsel %vm4102, %v4095, %v4099
  %v4104 = vand.u32 2147483647, %v4079
  %vm4105 = vcmp.eq.f32.partialorder %v4104, 8.507059e+37
  %v4106 = vand.u32 %v4079, 2147483648
  %v4107 = vor.u32 1.1754944e-38, %v4106
  %v4108 = vsel %vm4105, %v4107, %v4103
  %v4109 = vmul.f32 %v4073, %v4108
  %v4110 = vpack.c.bf16 %v4094, %v4094
  %v4111 = vpack.c.bf16 %v4109, %v4109
  %4112 = vrot.lane.b32.xlu0 %v3828, 80
  %v4113 = vpop.permute.xlu0 %4112
  %v4115 = vsel %vm433, %v4110, 0
  %v4118 = vsel %vm489, %v4113, 0
  %4120 = vmatpush.bf16.msra.mxu0 0
  %4121 = vmatpush.bf16.msra.mxu0 0
  %4122 = vmatpush.bf16.msra.mxu0 0
  %4123 = vmatpush.bf16.msra.mxu0 0
  %4124 = vmatpush.bf16.msra.mxu0 0
  %4125 = vmatpush.bf16.msra.mxu0 0
  %4126 = vmatpush.bf16.msra.mxu0 0
  %4127 = vmatpush.bf16.msra.mxu0 %v4118
  %4128 = vmatmul.bf16.gmra.mxu0 %v4115
  %v4129 = vpop.f32.mrf.mxu0
  %v4130 = vadd.f32 0.0, %v4129
  %v4131 = vpop.f32.mrf.mxu0
  %4132 = vdwg.mxu0
  %4133 = vrot.lane.b32.xlu0 %v3852, 80
  %v4134 = vpop.permute.xlu0 %4133
  %v4136 = vsel %vm433, %v4111, 0
  %v4139 = vsel %vm489, %v4134, 0
  %4141 = vmatpush.bf16.msra.mxu0 0
  %4142 = vmatpush.bf16.msra.mxu0 0
  %4143 = vmatpush.bf16.msra.mxu0 0
  %4144 = vmatpush.bf16.msra.mxu0 0
  %4145 = vmatpush.bf16.msra.mxu0 0
  %4146 = vmatpush.bf16.msra.mxu0 0
  %4147 = vmatpush.bf16.msra.mxu0 0
  %4148 = vmatpush.bf16.msra.mxu0 %v4139
  %4149 = vmatmul.bf16.gmra.mxu0 %v4136
  %v4150 = vpop.f32.mrf.mxu0
  %v4151 = vadd.f32 0.0, %v4150
  %v4152 = vpop.f32.mrf.mxu0
  %4153 = vdwg.mxu0
  %4156 = vrot.lane.b32.xlu0 %v3847, 16
  %v4157 = vpop.permute.xlu0 %4156
  %4158 = vrot.lane.b32.xlu0 %v3871, 16
  %v4159 = vpop.permute.xlu0 %4158
  %4164 = vrot.lane.b32.xlu0 %v3990, 32
  %v4165 = vpop.permute.xlu0 %4164
  %4166 = vrot.lane.b32.xlu0 %v4011, 32
  %v4167 = vpop.permute.xlu0 %4166
  %4172 = vrot.lane.b32.xlu0 %v4130, 48
  %v4173 = vpop.permute.xlu0 %4172
  %4174 = vrot.lane.b32.xlu0 %v4151, 48
  %v4175 = vpop.permute.xlu0 %4174
  %v4178 = vsel %vm87, %v3706, %v4157
  %v4179 = vsel %vm87, %v3725, %v4159
  %v4180 = vsel %vm977, %v4178, %v4165
  %v4181 = vsel %vm977, %v4179, %v4167
  %v4182 = vsel %vm349, %v4180, %v4173
  %v4183 = vsel %vm349, %v4181, %v4175
  %v4184 = vpack.c.bf16 %v4183, %v4182
  %v4186 = vperm.slane %v3474, 0
  %v4196 = vunpack.c.l.b16 %v3465
  %v4197 = vunpack.c.l.b16 %v3466
  %v4198 = vunpack.c.l.b16 %v3467
  %v4199 = vunpack.c.l.b16 %v3468
  %v4200 = vunpack.c.l.b16 %v3469
  %v4201 = vunpack.c.l.b16 %v3470
  %v4202 = vunpack.c.l.b16 %v3471
  %v4203 = vunpack.c.l.b16 %v3472
  %v4204 = vpack.c.b16 %v4197, %v4196
  %v4205 = vpack.c.b16 %v4199, %v4198
  %v4206 = vpack.c.b16 %v4201, %v4200
  %v4207 = vpack.c.b16 %v4203, %v4202
  %v4213 = vsel %vm225, %v4184, 0
  %4215 = vmatpush.bf16.msra.mxu0 0
  %4216 = vmatpush.bf16.msra.mxu0 0
  %4217 = vmatpush.bf16.msra.mxu0 0
  %4218 = vmatpush.bf16.msra.mxu0 0
  %4219 = vmatpush.bf16.msra.mxu0 %v4207
  %4220 = vmatpush.bf16.msra.mxu0 %v4206
  %4221 = vmatpush.bf16.msra.mxu0 %v4205
  %4222 = vmatpush.bf16.msra.mxu0 %v4204
  %4223 = vmatmul.bf16.gmra.mxu0 %v4213
  %v4224 = vpop.f32.mrf.mxu0
  %v4225 = vadd.f32 %v4186, %v4224
  %v4226 = vpop.f32.mrf.mxu0
  %v4227 = vadd.f32 %v4186, %v4226
  %4228 = vdwg.mxu0
  %v4229 = vadd.f32 %v3453, %v4225
  %v4230 = vadd.f32 %v3454, %v4227
  %v4231 = vsel %vm349, %v4229, 0.0
  %4232 = vadd.xlane.f32.xlu0 %v4231
  %v4233 = vpop.xlane.xlu0 %4232
  %v4234 = vsel %vm349, %v4230, 0.0
  %4235 = vadd.xlane.f32.xlu0 %v4234
  %v4236 = vpop.xlane.xlu0 %4235
  %v4237 = vmul.f32 %v4233, %v1041
  %v4238 = vmul.f32 %v4236, %v1041
  %v4239 = vsub.f32 %v4229, %v4237
  %v4240 = vsub.f32 %v4230, %v4238
  %v4241 = vmul.f32 %v4239, %v4239
  %v4242 = vmul.f32 %v4240, %v4240
  %v4243 = vsel %vm349, %v4241, 0.0
  %4244 = vadd.xlane.f32.xlu0 %v4243
  %v4245 = vpop.xlane.xlu0 %4244
  %v4246 = vsel %vm349, %v4242, 0.0
  %4247 = vadd.xlane.f32.xlu0 %v4246
  %v4248 = vpop.xlane.xlu0 %4247
  %v4249 = vmul.f32 %v4245, %v1041
  %v4250 = vmul.f32 %v4248, %v1041
  %v4251 = vadd.f32 %v4249, 1e-05
  %v4252 = vadd.f32 %v4250, 1e-05
  %v4253 = vrsqrt.pop %v4251
  %v4254 = vmul.f32 %v4253, %v4251
  %v4255 = vmul.f32 %v4254, %v4253
  %v4256 = vmul.f32 0.5, %v4255
  %v4257 = vsub.f32 1.5, %v4256
  %v4258 = vmul.f32 %v4253, %v4257
  %vm4259 = vweird.f32 %v4251
  %vm4260 = vweird.f32 %v4253
  %vm4261 = vmor %vm4259, %vm4260
  %v4262 = vsel %vm4261, %v4253, %v4258
  %v4263 = vrsqrt.pop %v4252
  %v4264 = vmul.f32 %v4263, %v4252
  %v4265 = vmul.f32 %v4264, %v4263
  %v4266 = vmul.f32 0.5, %v4265
  %v4267 = vsub.f32 1.5, %v4266
  %v4268 = vmul.f32 %v4263, %v4267
  %vm4269 = vweird.f32 %v4252
  %vm4270 = vweird.f32 %v4263
  %vm4271 = vmor %vm4269, %vm4270
  %v4272 = vsel %vm4271, %v4263, %v4268
  %v4273 = vmul.f32 %v4239, %v4262
  %v4274 = vmul.f32 %v4240, %v4272
  %v4276 = vperm.slane %v3476, 0
  %v4278 = vmul.f32 %v4273, %v4276
  %v4279 = vmul.f32 %v4274, %v4276
  %v4281 = vperm.slane %v3478, 0
  %v4283 = vadd.f32 %v4278, %v4281
  %v4284 = vadd.f32 %v4279, %v4281
  %v4285 = vpack.c.bf16 %v4284, %v4283
  %v4287 = vperm.slane %v3487, 0
  %v4288 = vperm.slane %v3487, 1
  %v4297 = vunpack.c.l.b16 %v3480
  %v4298 = vunpack.c.h.b16 %v3480
  %v4299 = vunpack.c.l.b16 %v3481
  %v4300 = vunpack.c.h.b16 %v3481
  %v4301 = vunpack.c.l.b16 %v3482
  %v4302 = vunpack.c.h.b16 %v3482
  %v4303 = vunpack.c.l.b16 %v3483
  %v4304 = vunpack.c.h.b16 %v3483
  %v4305 = vunpack.c.l.b16 %v3484
  %v4306 = vunpack.c.h.b16 %v3484
  %v4307 = vunpack.c.l.b16 %v3485
  %v4308 = vunpack.c.h.b16 %v3485
  %v4309 = vpack.c.b16 %v4299, %v4297
  %v4310 = vpack.c.b16 %v4300, %v4298
  %v4311 = vpack.c.b16 %v4303, %v4301
  %v4312 = vpack.c.b16 %v4304, %v4302
  %v4313 = vpack.c.b16 %v4307, %v4305
  %v4314 = vpack.c.b16 %v4308, %v4306
  %v4322 = vsel %vm349, %v4285, 0
  %4324 = vmatpush.bf16.msra.mxu0 0
  %4325 = vmatpush.bf16.msra.mxu0 0
  %4326 = vmatpush.bf16.msra.mxu0 0
  %4327 = vmatpush.bf16.msra.mxu0 0
  %4328 = vmatpush.bf16.msra.mxu0 0
  %4329 = vmatpush.bf16.msra.mxu0 %v4313
  %4330 = vmatpush.bf16.msra.mxu0 %v4311
  %4331 = vmatpush.bf16.msra.mxu0 %v4309
  %4332 = vmatmul.bf16.gmra.mxu0 %v4322
  %v4333 = vpop.f32.mrf.mxu0
  %v4334 = vadd.f32 %v4287, %v4333
  %v4335 = vpop.f32.mrf.mxu0
  %v4336 = vadd.f32 %v4287, %v4335
  %4337 = vdwg.mxu0
  %4338 = vmatpush.bf16.msra.mxu0 0
  %4339 = vmatpush.bf16.msra.mxu0 0
  %4340 = vmatpush.bf16.msra.mxu0 0
  %4341 = vmatpush.bf16.msra.mxu0 0
  %4342 = vmatpush.bf16.msra.mxu0 0
  %4343 = vmatpush.bf16.msra.mxu0 %v4314
  %4344 = vmatpush.bf16.msra.mxu0 %v4312
  %4345 = vmatpush.bf16.msra.mxu0 %v4310
  %4346 = vmatmul.bf16.gmra.mxu0 %v4322
  %v4347 = vpop.f32.mrf.mxu0
  %v4348 = vadd.f32 %v4288, %v4347
  %v4349 = vpop.f32.mrf.mxu0
  %v4350 = vadd.f32 %v4288, %v4349
  %4351 = vdwg.mxu0
  %v4352 = vmax.f32 %v4334, 0.0
  %v4353 = vmax.f32 %v4348, 0.0
  %v4354 = vmax.f32 %v4336, 0.0
  %v4355 = vmax.f32 %v4350, 0.0
  %v4356 = vpack.c.bf16 %v4354, %v4352
  %v4357 = vpack.c.bf16 %v4355, %v4353
  %v4359 = vperm.slane %v3514, 0
  %v4385 = vunpack.c.l.b16 %v3489
  %v4386 = vunpack.c.l.b16 %v3490
  %v4387 = vunpack.c.l.b16 %v3491
  %v4388 = vunpack.c.l.b16 %v3492
  %v4389 = vunpack.c.l.b16 %v3493
  %v4390 = vunpack.c.l.b16 %v3494
  %v4391 = vunpack.c.l.b16 %v3495
  %v4392 = vunpack.c.l.b16 %v3496
  %v4393 = vunpack.c.l.b16 %v3497
  %v4394 = vunpack.c.l.b16 %v3498
  %v4395 = vunpack.c.l.b16 %v3499
  %v4396 = vunpack.c.l.b16 %v3500
  %v4397 = vunpack.c.l.b16 %v3501
  %v4398 = vunpack.c.l.b16 %v3502
  %v4399 = vunpack.c.l.b16 %v3503
  %v4400 = vunpack.c.l.b16 %v3504
  %v4401 = vunpack.c.l.b16 %v3505
  %v4402 = vunpack.c.l.b16 %v3506
  %v4403 = vunpack.c.l.b16 %v3507
  %v4404 = vunpack.c.l.b16 %v3508
  %v4405 = vunpack.c.l.b16 %v3509
  %v4406 = vunpack.c.l.b16 %v3510
  %v4407 = vunpack.c.l.b16 %v3511
  %v4408 = vunpack.c.l.b16 %v3512
  %v4409 = vpack.c.b16 %v4386, %v4385
  %v4410 = vpack.c.b16 %v4388, %v4387
  %v4411 = vpack.c.b16 %v4390, %v4389
  %v4412 = vpack.c.b16 %v4392, %v4391
  %v4413 = vpack.c.b16 %v4394, %v4393
  %v4414 = vpack.c.b16 %v4396, %v4395
  %v4415 = vpack.c.b16 %v4398, %v4397
  %v4416 = vpack.c.b16 %v4400, %v4399
  %v4417 = vpack.c.b16 %v4402, %v4401
  %v4418 = vpack.c.b16 %v4404, %v4403
  %v4419 = vpack.c.b16 %v4406, %v4405
  %v4420 = vpack.c.b16 %v4408, %v4407
  %v4434 = vsel %vm225, %v4357, 0
  %4436 = vmatpush.bf16.msra.mxu0 %v4416
  %4437 = vmatpush.bf16.msra.mxu0 %v4415
  %4438 = vmatpush.bf16.msra.mxu0 %v4414
  %4439 = vmatpush.bf16.msra.mxu0 %v4413
  %4440 = vmatpush.bf16.msra.mxu0 %v4412
  %4441 = vmatpush.bf16.msra.mxu0 %v4411
  %4442 = vmatpush.bf16.msra.mxu0 %v4410
  %4443 = vmatpush.bf16.msra.mxu0 %v4409
  %4444 = vmatmul.bf16.gmra.mxu0 %v4356
  %v4445 = vpop.f32.mrf.mxu0
  %v4446 = vadd.f32 %v4359, %v4445
  %v4447 = vpop.f32.mrf.mxu0
  %v4448 = vadd.f32 %v4359, %v4447
  %4449 = vdwg.mxu0
  %4450 = vmatpush.bf16.msra.mxu0 0
  %4451 = vmatpush.bf16.msra.mxu0 0
  %4452 = vmatpush.bf16.msra.mxu0 0
  %4453 = vmatpush.bf16.msra.mxu0 0
  %4454 = vmatpush.bf16.msra.mxu0 %v4420
  %4455 = vmatpush.bf16.msra.mxu0 %v4419
  %4456 = vmatpush.bf16.msra.mxu0 %v4418
  %4457 = vmatpush.bf16.msra.mxu0 %v4417
  %4458 = vmatmul.bf16.gmra.mxu0 %v4434
  %v4459 = vpop.f32.mrf.mxu0
  %v4460 = vadd.f32 %v4446, %v4459
  %v4461 = vpop.f32.mrf.mxu0
  %v4462 = vadd.f32 %v4448, %v4461
  %4463 = vdwg.mxu0
  %v4464 = vadd.f32 %v4283, %v4460
  %v4465 = vadd.f32 %v4284, %v4462
  %v4466 = vsel %vm349, %v4464, 0.0
  %4467 = vadd.xlane.f32.xlu0 %v4466
  %v4468 = vpop.xlane.xlu0 %4467
  %v4469 = vsel %vm349, %v4465, 0.0
  %4470 = vadd.xlane.f32.xlu0 %v4469
  %v4471 = vpop.xlane.xlu0 %4470
  %v4472 = vmul.f32 %v4468, %v1041
  %v4473 = vmul.f32 %v4471, %v1041
  %v4474 = vsub.f32 %v4464, %v4472
  %v4475 = vsub.f32 %v4465, %v4473
  %v4476 = vmul.f32 %v4474, %v4474
  %v4477 = vmul.f32 %v4475, %v4475
  %v4478 = vsel %vm349, %v4476, 0.0
  %4479 = vadd.xlane.f32.xlu0 %v4478
  %v4480 = vpop.xlane.xlu0 %4479
  %v4481 = vsel %vm349, %v4477, 0.0
  %4482 = vadd.xlane.f32.xlu0 %v4481
  %v4483 = vpop.xlane.xlu0 %4482
  %v4484 = vmul.f32 %v4480, %v1041
  %v4485 = vmul.f32 %v4483, %v1041
  %v4486 = vadd.f32 %v4484, 1e-05
  %v4487 = vadd.f32 %v4485, 1e-05
  %v4488 = vrsqrt.pop %v4486
  %v4489 = vmul.f32 %v4488, %v4486
  %v4490 = vmul.f32 %v4489, %v4488
  %v4491 = vmul.f32 0.5, %v4490
  %v4492 = vsub.f32 1.5, %v4491
  %v4493 = vmul.f32 %v4488, %v4492
  %vm4494 = vweird.f32 %v4486
  %vm4495 = vweird.f32 %v4488
  %vm4496 = vmor %vm4494, %vm4495
  %v4497 = vsel %vm4496, %v4488, %v4493
  %v4498 = vrsqrt.pop %v4487
  %v4499 = vmul.f32 %v4498, %v4487
  %v4500 = vmul.f32 %v4499, %v4498
  %v4501 = vmul.f32 0.5, %v4500
  %v4502 = vsub.f32 1.5, %v4501
  %v4503 = vmul.f32 %v4498, %v4502
  %vm4504 = vweird.f32 %v4487
  %vm4505 = vweird.f32 %v4498
  %vm4506 = vmor %vm4504, %vm4505
  %v4507 = vsel %vm4506, %v4498, %v4503
  %v4508 = vmul.f32 %v4474, %v4497
  %v4509 = vmul.f32 %v4475, %v4507
  %v4511 = vperm.slane %v3516, 0
  %v4513 = vmul.f32 %v4508, %v4511
  %v4514 = vmul.f32 %v4509, %v4511
  %v4516 = vperm.slane %v3518, 0
  %v4518 = vadd.f32 %v4513, %v4516
  %v4519 = vadd.f32 %v4514, %v4516
  %v4520 = vld [vmem:[%s18] sm:$0xf]
  %v4521 = vld [vmem:[%s18 + $0x4] sm:$0xf]
  %v4522 = vld [vmem:[%s18 + $0x8] sm:$0xf]
  %v4523 = vld [vmem:[%s18 + $0xc] sm:$0xf]
  %v4524 = vld [vmem:[%s18 + $0x10] sm:$0xf]
  %v4525 = vld [vmem:[%s18 + $0x14] sm:$0xf]
  %v4526 = vld [vmem:[%s19] sm:$0x1]
  %v4527 = vpack.c.bf16 %v4519, %v4518
  %v4529 = vperm.slane %v4526, 0
  %v4537 = vunpack.c.l.b16 %v4520
  %v4538 = vunpack.c.l.b16 %v4521
  %v4539 = vunpack.c.l.b16 %v4522
  %v4540 = vunpack.c.l.b16 %v4523
  %v4541 = vunpack.c.l.b16 %v4524
  %v4542 = vunpack.c.l.b16 %v4525
  %v4543 = vpack.c.b16 %v4538, %v4537
  %v4544 = vpack.c.b16 %v4540, %v4539
  %v4545 = vpack.c.b16 %v4542, %v4541
  %v4550 = vsel %vm349, %v4527, 0
  %4552 = vmatpush.bf16.msra.mxu0 0
  %4553 = vmatpush.bf16.msra.mxu0 0
  %4554 = vmatpush.bf16.msra.mxu0 0
  %4555 = vmatpush.bf16.msra.mxu0 0
  %4556 = vmatpush.bf16.msra.mxu0 0
  %4557 = vmatpush.bf16.msra.mxu0 %v4545
  %4558 = vmatpush.bf16.msra.mxu0 %v4544
  %4559 = vmatpush.bf16.msra.mxu0 %v4543
  %4560 = vmatmul.bf16.gmra.mxu0 %v4550
  %v4561 = vpop.f32.mrf.mxu0
  %v4562 = vadd.f32 %v4529, %v4561
  %v4563 = vpop.f32.mrf.mxu0
  %v4564 = vadd.f32 %v4529, %v4563
  %4565 = vdwg.mxu0
  %4566 = vst [vmem:[%s20] sm:$0xff] %v4562
  %4567 = vst [vmem:[%s20 + $0x8] sm:$0xff] %v4564
  // Predicated region
  $region82: #{forward.3} parent=0 // pred_check
    _
  $region83: #{forward.3} parent=0 // pred_check_branch
    %4569 = sbr.rel (0) target = $region85
  $region84: #{forward.3} parent=0 // pred_region
    _
  $region85: #{forward.3} parent=0 // pred_fallthru
    _
  // Predicated region
  $region86: #{forward.3} parent=0 // pred_check
    _
  $region87: #{forward.3} parent=0 // pred_check_branch
    %4571 = sbr.rel (0) target = $region89
  $region88: #{forward.3} parent=0 // pred_region
    _
  $region89: #{forward.3} parent=0 // pred_fallthru
    _

</llo_original>
